<compile_context>
chip_gen: v7x
topology: tpu7x:2x2x1
jax: 0.10.0
libtpu: 0.0.40
codegen_flags: <defaults>
</compile_context>

<pallas_src>
import math
import jax
import jax.numpy as jnp
from jax.experimental import pallas as pl
from jax.experimental.pallas import tpu as pltpu

# ----------------------------- model config ---------------------------------
IMG_SIZE = 16
IN_CHANS = 3
PATCH = 4                                   # non-overlapping soft split
NUM_PATCHES = (IMG_SIZE // PATCH) ** 2      # 16
PATCH_VEC = IN_CHANS * PATCH * PATCH        # 48
EMBED_DIM = 32
DEPTH = 2
NUM_HEADS = 4
HEAD_DIM = EMBED_DIM // NUM_HEADS           # 8
MLP_HIDDEN = int(EMBED_DIM * 4.0)           # 128
NUM_CLASSES = 10
SCALE = HEAD_DIM ** (-0.5)
LN_EPS = 1e-5
SEQ_LEN = NUM_PATCHES + 1                   # 17 real tokens (cls + patches)
SEQ_PAD = 32                                # padded tokens/image (tile aligned)
PACKED = NUM_HEADS * SEQ_PAD                # 128 = one full lane tile
LANE = 128
BB = 8                                      # images per grid step (mult. of 8;
                                            # 16 also fine on v6e/v7x)
BBS = BB * SEQ_PAD                          # 256 token rows per grid step
NEG_INF = -1e9
_INV_SQRT2 = 1.0 / math.sqrt(2.0)


# ----------------------------- in-kernel helpers ----------------------------
def _layernorm(x, w, b):
    # PyTorch LayerNorm: biased variance over last dim, eps=1e-5.
    mu = jnp.mean(x, axis=-1, keepdims=True)
    xc = x - mu
    var = jnp.mean(xc * xc, axis=-1, keepdims=True)
    return xc * jax.lax.rsqrt(var + LN_EPS) * w + b


def _gelu_exact(x):
    # nn.GELU default (exact erf form).
    return 0.5 * x * (1.0 + jax.lax.erf(x * _INV_SQRT2))


# ----------------------------- fused forward kernel -------------------------
def fused_kernel(tok_ref, patch_w_ref, tok_add_ref, wqkv_ref, wproj_ref,
                 w1_ref, w2_ref, blk_vec_ref, misc_ref, head_w_ref,
                 vmask_ref, ones_ref, out_ref):
    bf16 = jnp.bfloat16
    f32 = jnp.float32

    # ---- patch embedding; cls token + patch bias + pos-encoding are folded
    #      into the additive map tok_add (cls row of tok_ref is all-zero).
    x = jnp.dot(tok_ref[...], patch_w_ref[...], preferred_element_type=f32)
    x = x + tok_add_ref[...]                                   # (BBS, 32) f32

    vmask = vmask_ref[...]                                     # (128, 32) bf16
    ones_blk = ones_ref[...]                                   # (128, 128) f32
    attn_bias = misc_ref[3:4, :]                               # (1, 128) f32

    # ---- transformer blocks (depth statically unrolled, DEPTH=2) ----------
    for di in range(DEPTH):
        vec = blk_vec_ref[di]                                  # (8, 128)
        ln1_w, ln1_b = vec[0:1, :EMBED_DIM], vec[1:2, :EMBED_DIM]
        ln2_w, ln2_b = vec[2:3, :EMBED_DIM], vec[3:4, :EMBED_DIM]
        proj_b, b2 = vec[4:5, :EMBED_DIM], vec[5:6, :EMBED_DIM]
        b1 = vec[6:7, :]                                       # (1, 128)

        # ----- attention branch: x + proj(attn(norm1(x))) -------------------
        h = _layernorm(x, ln1_w, ln1_b).astype(bf16)           # (BBS, 32)
        qkv = jnp.dot(h, wqkv_ref[di], preferred_element_type=f32)  # (BBS, 96)
        qkv3 = qkv.reshape(BB, SEQ_PAD, 3 * EMBED_DIM).astype(bf16)
        q3 = qkv3[:, :, 0:EMBED_DIM]                           # lanes = [head, d]
        k3 = qkv3[:, :, EMBED_DIM:2 * EMBED_DIM]
        v3 = qkv3[:, :, 2 * EMBED_DIM:3 * EMBED_DIM]

        # block-diagonal head packing: row j = h*SEQ_PAD + m holds head h's
        # token m, masked so only lanes h*8:(h+1)*8 survive.
        kbd = jnp.concatenate([k3] * NUM_HEADS, axis=1) * vmask   # (BB,128,32)
        vbd = jnp.concatenate([v3] * NUM_HEADS, axis=1) * vmask   # (BB,128,32)

        # QK^T for all heads in one batched matmul: column j = head(j)'s score
        # against token m(j).  Padded key tokens get a -1e9 additive bias.
        s = jnp.einsum('bnc,bjc->bnj', q3, kbd,
                       preferred_element_type=f32).reshape(BBS, PACKED)
        s = s * SCALE + attn_bias
        s = s - jnp.max(s, axis=-1, keepdims=True)
        e = jnp.exp(s)
        # per-head row sums, broadcast back across each head's 32 columns,
        # via one matmul against the constant block-of-ones matrix.
        denom = jnp.dot(e, ones_blk, preferred_element_type=f32)
        p = (e * pl.reciprocal(denom, approx=True)).astype(bf16)
        p3 = p.reshape(BB, SEQ_PAD, PACKED)

        # PV for all heads in one batched matmul -> concatenated head outputs
        # in [head, head_dim] lane order (same as PyTorch's transpose+reshape).
        o = jnp.einsum('bnj,bjc->bnc', p3, vbd, preferred_element_type=f32)
        o = o.reshape(BBS, EMBED_DIM).astype(bf16)
        x = x + jnp.dot(o, wproj_ref[di], preferred_element_type=f32) + proj_b

        # ----- MLP branch: x + mlp(norm2(x)) ---------------------------------
        h = _layernorm(x, ln2_w, ln2_b).astype(bf16)
        h1 = jnp.dot(h, w1_ref[di], preferred_element_type=f32) + b1
        h1 = _gelu_exact(h1).astype(bf16)
        h2 = jnp.dot(h1, w2_ref[di], preferred_element_type=f32) + b2
        x = x + h2

    # ---- final LayerNorm on cls tokens + lane-padded classifier head ------
    norm_w, norm_b = misc_ref[0:1, :EMBED_DIM], misc_ref[1:2, :EMBED_DIM]
    head_b = misc_ref[2:3, :]                                  # (1, 128)
    cls = x.reshape(BB, SEQ_PAD, EMBED_DIM)[:, 0, :]           # (BB, 32)
    cls = _layernorm(cls, norm_w, norm_b).astype(bf16)
    out_ref[...] = (jnp.dot(cls, head_w_ref[...],
                            preferred_element_type=f32) + head_b)  # (BB, 128)


# ----------------------------- plain-JAX glue --------------------------------
def soft_split(x_nchw):
    # torch.nn.Unfold(kernel=PATCH, stride=PATCH) + transpose(1, 2):
    # patch vector ordering is (c, kh, kw); patches ordered row-major.
    B, Cin, H, W = x_nchw.shape
    ph, pw = H // PATCH, W // PATCH
    p = x_nchw.reshape(B, Cin, ph, PATCH, pw, PATCH)
    p = p.transpose(0, 2, 4, 1, 3, 5)
    return p.reshape(B, ph * pw, Cin * PATCH * PATCH)


@jax.jit
def t2t_vit_forward(x_nchw, params):
    B = x_nchw.shape[0]
    B_pad = ((B + BB - 1) // BB) * BB

    # token layout per image: row 0 = cls slot (zero patch, cls token added via
    # tok_add), rows 1..16 = patches, rows 17..31 = padding tokens (masked out
    # of attention by the -1e9 key bias; never read otherwise).
    patches = soft_split(x_nchw).astype(jnp.bfloat16)              # (B, 16, 48)
    tokens = jnp.zeros((B_pad, SEQ_PAD, PATCH_VEC), jnp.bfloat16)
    tokens = tokens.at[:B, 1:SEQ_LEN, :].set(patches)
    tokens = tokens.reshape(B_pad * SEQ_PAD, PATCH_VEC)            # (B_pad*32, 48)

    tok_add = jnp.tile(params["tok_add"], (BB, 1))                 # (BBS, 32) f32

    out = pl.pallas_call(
        fused_kernel,
        out_shape=jax.ShapeDtypeStruct((B_pad, LANE), jnp.float32),
        grid=(B_pad // BB,),
        in_specs=[
            pl.BlockSpec((BBS, PATCH_VEC), lambda i: (i, 0)),
            pl.BlockSpec((PATCH_VEC, EMBED_DIM), lambda i: (0, 0)),
            pl.BlockSpec((BBS, EMBED_DIM), lambda i: (0, 0)),
            pl.BlockSpec((DEPTH, EMBED_DIM, 3 * EMBED_DIM), lambda i: (0, 0, 0)),
            pl.BlockSpec((DEPTH, EMBED_DIM, EMBED_DIM), lambda i: (0, 0, 0)),
            pl.BlockSpec((DEPTH, EMBED_DIM, MLP_HIDDEN), lambda i: (0, 0, 0)),
            pl.BlockSpec((DEPTH, MLP_HIDDEN, EMBED_DIM), lambda i: (0, 0, 0)),
            pl.BlockSpec((DEPTH, 8, LANE), lambda i: (0, 0, 0)),
            pl.BlockSpec((8, LANE), lambda i: (0, 0)),
            pl.BlockSpec((EMBED_DIM, LANE), lambda i: (0, 0)),
            pl.BlockSpec((PACKED, EMBED_DIM), lambda i: (0, 0)),
            pl.BlockSpec((PACKED, PACKED), lambda i: (0, 0)),
        ],
        out_specs=pl.BlockSpec((BB, LANE), lambda i: (i, 0)),
        compiler_params=pltpu.CompilerParams(
            dimension_semantics=("parallel",)),
    )(tokens, params["patch_w"], tok_add, params["wqkv"], params["wproj"],
      params["w1"], params["w2"], params["blk_vec"], params["misc_vec"],
      params["head_w"], params["vmask"], params["ones_block"])

    return out[:B, :NUM_CLASSES]


# ----------------------------- parameter construction ------------------------
def trunc_normal(key, shape, std=0.02):
    return std * jax.random.truncated_normal(key, -2.0, 2.0, shape, jnp.float32)


def sinusoidal_pe(max_len, d_model):
    position = jnp.arange(max_len, dtype=jnp.float32)[:, None]
    div_term = jnp.exp(
        -math.log(10000.0) * jnp.arange(0, d_model, 2, dtype=jnp.float32) / d_model
    )
    pe = jnp.zeros((max_len, d_model), jnp.float32)
    pe = pe.at[:, 0::2].set(jnp.sin(position * div_term))
    pe = pe.at[:, 1::2].set(jnp.cos(position * div_term))
    return pe


def _pad_lanes(v, width=LANE):
    v = jnp.asarray(v, jnp.float32).reshape(1, -1)
    return jnp.pad(v, ((0, 0), (0, width - v.shape[1])))


def make_params(key):
    keys = iter(jax.random.split(key, 16))
    nk = lambda: next(keys)

    # linear weights pre-transposed to (in, out): kernel's y = x @ W + b
    # matches PyTorch's y = x @ W_pt.T + b.  qkv lane order is [q|k|v], each
    # head-major, exactly as qkv(x).reshape(B,N,3,H,d) produces.
    patch_w = trunc_normal(nk(), (PATCH_VEC, EMBED_DIM))
    patch_b = jnp.zeros((EMBED_DIM,), jnp.float32)
    cls_token = trunc_normal(nk(), (EMBED_DIM,))
    pos = sinusoidal_pe(SEQ_LEN, EMBED_DIM)
    norm_w = jnp.ones((EMBED_DIM,), jnp.float32)
    norm_b = jnp.zeros((EMBED_DIM,), jnp.float32)
    head_w = trunc_normal(nk(), (EMBED_DIM, NUM_CLASSES))
    head_b = jnp.zeros((NUM_CLASSES,), jnp.float32)

    wqkv, wproj, w1, w2, blk_rows = [], [], [], [], []
    for _ in range(DEPTH):
        wqkv.append(trunc_normal(nk(), (EMBED_DIM, 3 * EMBED_DIM)))  # qkv_bias=False
        wproj.append(trunc_normal(nk(), (EMBED_DIM, EMBED_DIM)))
        w1.append(trunc_normal(nk(), (EMBED_DIM, MLP_HIDDEN)))
        w2.append(trunc_normal(nk(), (MLP_HIDDEN, EMBED_DIM)))
        blk_rows.append(jnp.concatenate(
            [_pad_lanes(jnp.ones(EMBED_DIM)), _pad_lanes(jnp.zeros(EMBED_DIM)),   # ln1
             _pad_lanes(jnp.ones(EMBED_DIM)), _pad_lanes(jnp.zeros(EMBED_DIM)),   # ln2
             _pad_lanes(jnp.zeros(EMBED_DIM)),                                    # proj_b
             _pad_lanes(jnp.zeros(EMBED_DIM)),                                    # b2
             _pad_lanes(jnp.zeros(MLP_HIDDEN)),                                   # b1
             jnp.zeros((1, LANE), jnp.float32)], axis=0))                         # (8,128)

    # fold cls token / patch bias / positional encoding into one additive map
    # over the padded per-image token layout (padding rows stay zero).
    tok_add = jnp.zeros((SEQ_PAD, EMBED_DIM), jnp.float32)
    tok_add = tok_add.at[0].set(cls_token + pos[0])
    tok_add = tok_add.at[1:SEQ_LEN].set(patch_b[None, :] + pos[1:SEQ_LEN])

    # constants for the block-diagonal multi-head attention packing
    j = jnp.arange(PACKED)
    c = jnp.arange(EMBED_DIM)
    valid = (j % SEQ_PAD) < SEQ_LEN                                   # real tokens
    vmask = ((j[:, None] // SEQ_PAD) == (c[None, :] // HEAD_DIM)) & valid[:, None]
    ones_block = (j[:, None] // SEQ_PAD) == (j[None, :] // SEQ_PAD)   # (128,128)
    attn_bias = jnp.where(valid, 0.0, NEG_INF).astype(jnp.float32)    # (128,)

    misc = jnp.concatenate(
        [_pad_lanes(norm_w), _pad_lanes(norm_b), _pad_lanes(head_b),
         attn_bias.reshape(1, LANE),
         jnp.zeros((4, LANE), jnp.float32)], axis=0)                  # (8, 128)

    head_w_pad = jnp.pad(head_w, ((0, 0), (0, LANE - NUM_CLASSES)))   # (32, 128)

    return {
        "patch_w": patch_w.astype(jnp.bfloat16),
        "tok_add": tok_add,                              # (32, 32) f32
        "wqkv": jnp.stack(wqkv).astype(jnp.bfloat16),    # (D, 32, 96)
        "wproj": jnp.stack(wproj).astype(jnp.bfloat16),  # (D, 32, 32)
        "w1": jnp.stack(w1).astype(jnp.bfloat16),        # (D, 32, 128)
        "w2": jnp.stack(w2).astype(jnp.bfloat16),        # (D, 128, 32)
        "blk_vec": jnp.stack(blk_rows),                  # (D, 8, 128) f32
        "misc_vec": misc,                                # (8, 128) f32
        "head_w": head_w_pad.astype(jnp.bfloat16),       # (32, 128)
        "vmask": vmask.astype(jnp.bfloat16),             # (128, 32)
        "ones_block": ones_block.astype(jnp.float32),    # (128, 128)
    }


# ----------------------------- main ------------------------------------------
if __name__ == "__main__":
    key = jax.random.PRNGKey(0)
    k_params, k_input = jax.random.split(key)

    params = make_params(k_params)
    x = jax.random.normal(k_input, (2, IN_CHANS, IMG_SIZE, IMG_SIZE), jnp.float32)

    logits = t2t_vit_forward(x, params)
    jax.block_until_ready(logits)
    assert logits.shape == (2, NUM_CLASSES)
    assert bool(jnp.all(jnp.isfinite(logits)))
    print("KERNEL_OK")
</pallas_src>

<mosaic_0001>
module attributes {stable_mosaic.version = 11 : i64} {
  func.func @fused_kernel(%arg0: i32, %arg1: memref<256x48xbf16, #tpu.memory_space<vmem>>, %arg2: memref<48x32xbf16, #tpu.memory_space<vmem>>, %arg3: memref<256x32xf32, #tpu.memory_space<vmem>>, %arg4: memref<2x32x96xbf16, #tpu.memory_space<vmem>>, %arg5: memref<2x32x32xbf16, #tpu.memory_space<vmem>>, %arg6: memref<2x32x128xbf16, #tpu.memory_space<vmem>>, %arg7: memref<2x128x32xbf16, #tpu.memory_space<vmem>>, %arg8: memref<2x8x128xf32, #tpu.memory_space<vmem>>, %arg9: memref<8x128xf32, #tpu.memory_space<vmem>>, %arg10: memref<32x128xbf16, #tpu.memory_space<vmem>>, %arg11: memref<128x32xbf16, #tpu.memory_space<vmem>>, %arg12: memref<128x128xf32, #tpu.memory_space<vmem>>, %arg13: memref<8x128xf32, #tpu.memory_space<vmem>>) attributes {dimension_semantics = [#tpu.dimension_semantics<parallel>], iteration_bounds = array<i64: 1>, scalar_prefetch = 0 : i64, scratch_operands = 0 : i64, tpu.core_type = #tpu.core_type<tc>, window_params = [{transform_indices = @transform_0, window_bounds = array<i64: 256, 48>}, {pipeline_mode = #tpu.pipeline_mode<synchronous>, transform_indices = @transform_1, window_bounds = array<i64: 48, 32>}, {pipeline_mode = #tpu.pipeline_mode<synchronous>, transform_indices = @transform_2, window_bounds = array<i64: 256, 32>}, {pipeline_mode = #tpu.pipeline_mode<synchronous>, transform_indices = @transform_3, window_bounds = array<i64: 2, 32, 96>}, {pipeline_mode = #tpu.pipeline_mode<synchronous>, transform_indices = @transform_4, window_bounds = array<i64: 2, 32, 32>}, {pipeline_mode = #tpu.pipeline_mode<synchronous>, transform_indices = @transform_5, window_bounds = array<i64: 2, 32, 128>}, {pipeline_mode = #tpu.pipeline_mode<synchronous>, transform_indices = @transform_6, window_bounds = array<i64: 2, 128, 32>}, {pipeline_mode = #tpu.pipeline_mode<synchronous>, transform_indices = @transform_7, window_bounds = array<i64: 2, 8, 128>}, {pipeline_mode = #tpu.pipeline_mode<synchronous>, transform_indices = @transform_8, window_bounds = array<i64: 8, 128>}, {pipeline_mode = #tpu.pipeline_mode<synchronous>, transform_indices = @transform_9, window_bounds = array<i64: 32, 128>}, {pipeline_mode = #tpu.pipeline_mode<synchronous>, transform_indices = @transform_10, window_bounds = array<i64: 128, 32>}, {pipeline_mode = #tpu.pipeline_mode<synchronous>, transform_indices = @transform_11, window_bounds = array<i64: 128, 128>}, {transform_indices = @transform_12, window_bounds = array<i64: 8, 128>}]} {
    %c0 = arith.constant 0 : index
    %c0_0 = arith.constant 0 : index
    %0 = vector.load %arg1[%c0, %c0_0] : memref<256x48xbf16, #tpu.memory_space<vmem>>, vector<256x48xbf16>
    %c0_1 = arith.constant 0 : index
    %c0_2 = arith.constant 0 : index
    %1 = vector.load %arg2[%c0_1, %c0_2] : memref<48x32xbf16, #tpu.memory_space<vmem>>, vector<48x32xbf16>
    %cst = arith.constant dense<0.000000e+00> : vector<256x32xf32>
    %2 = tpu.matmul %0, %1, %cst {dimension_numbers = #tpu.dot_dimension_numbers<[1], [0], [0], [1], [0, 0, 1, 1], [], []>} : vector<256x48xbf16>, vector<48x32xbf16>, vector<256x32xf32> -> vector<256x32xf32>
    %c0_3 = arith.constant 0 : index
    %c0_4 = arith.constant 0 : index
    %3 = vector.load %arg3[%c0_3, %c0_4] : memref<256x32xf32, #tpu.memory_space<vmem>>, vector<256x32xf32>
    %4 = arith.addf %2, %3 : vector<256x32xf32>
    %c0_5 = arith.constant 0 : index
    %c0_6 = arith.constant 0 : index
    %5 = vector.load %arg11[%c0_5, %c0_6] : memref<128x32xbf16, #tpu.memory_space<vmem>>, vector<128x32xbf16>
    %c0_7 = arith.constant 0 : index
    %c0_8 = arith.constant 0 : index
    %6 = vector.load %arg12[%c0_7, %c0_8] : memref<128x128xf32, #tpu.memory_space<vmem>>, vector<128x128xf32>
    %c3 = arith.constant 3 : index
    %c0_9 = arith.constant 0 : index
    %7 = vector.load %arg9[%c3, %c0_9] : memref<8x128xf32, #tpu.memory_space<vmem>>, vector<1x128xf32>
    %c0_10 = arith.constant 0 : index
    %c0_11 = arith.constant 0 : index
    %c0_12 = arith.constant 0 : index
    %8 = vector.load %arg8[%c0_10, %c0_11, %c0_12] : memref<2x8x128xf32, #tpu.memory_space<vmem>>, vector<1x8x128xf32>
    %9 = vector.shape_cast %8 : vector<1x8x128xf32> to vector<8x128xf32>
    %10 = vector.extract_strided_slice %9 {offsets = [0, 0], sizes = [1, 32], strides = [1, 1]} : vector<8x128xf32> to vector<1x32xf32>
    %11 = vector.extract_strided_slice %9 {offsets = [1, 0], sizes = [1, 32], strides = [1, 1]} : vector<8x128xf32> to vector<1x32xf32>
    %12 = vector.extract_strided_slice %9 {offsets = [2, 0], sizes = [1, 32], strides = [1, 1]} : vector<8x128xf32> to vector<1x32xf32>
    %13 = vector.extract_strided_slice %9 {offsets = [3, 0], sizes = [1, 32], strides = [1, 1]} : vector<8x128xf32> to vector<1x32xf32>
    %14 = vector.extract_strided_slice %9 {offsets = [4, 0], sizes = [1, 32], strides = [1, 1]} : vector<8x128xf32> to vector<1x32xf32>
    %15 = vector.extract_strided_slice %9 {offsets = [5, 0], sizes = [1, 32], strides = [1, 1]} : vector<8x128xf32> to vector<1x32xf32>
    %16 = vector.extract_strided_slice %9 {offsets = [6, 0], sizes = [1, 128], strides = [1, 1]} : vector<8x128xf32> to vector<1x128xf32>
    %cst_13 = arith.constant dense<0.000000e+00> : vector<256xf32>
    %17 = vector.multi_reduction <add>, %4, %cst_13 [1] : vector<256x32xf32> to vector<256xf32>
    %18 = vector.shape_cast %17 : vector<256xf32> to vector<256x1xf32>
    %cst_14 = arith.constant 3.200000e+01 : f32
    %19 = vector.broadcast %cst_14 : f32 to vector<256x1xf32>
    %20 = arith.divf %18, %19 : vector<256x1xf32>
    %21 = vector.broadcast %20 : vector<256x1xf32> to vector<256x32xf32>
    %22 = arith.subf %4, %21 : vector<256x32xf32>
    %23 = arith.mulf %22, %22 : vector<256x32xf32>
    %cst_15 = arith.constant dense<0.000000e+00> : vector<256xf32>
    %24 = vector.multi_reduction <add>, %23, %cst_15 [1] : vector<256x32xf32> to vector<256xf32>
    %25 = vector.shape_cast %24 : vector<256xf32> to vector<256x1xf32>
    %cst_16 = arith.constant 3.200000e+01 : f32
    %26 = vector.broadcast %cst_16 : f32 to vector<256x1xf32>
    %27 = arith.divf %25, %26 : vector<256x1xf32>
    %cst_17 = arith.constant 9.99999974E-6 : f32
    %28 = vector.broadcast %cst_17 : f32 to vector<256x1xf32>
    %29 = arith.addf %27, %28 : vector<256x1xf32>
    %30 = math.rsqrt %29 : vector<256x1xf32>
    %31 = vector.broadcast %30 : vector<256x1xf32> to vector<256x32xf32>
    %32 = arith.mulf %22, %31 : vector<256x32xf32>
    %33 = vector.broadcast %10 : vector<1x32xf32> to vector<256x32xf32>
    %34 = arith.mulf %32, %33 : vector<256x32xf32>
    %35 = vector.broadcast %11 : vector<1x32xf32> to vector<256x32xf32>
    %36 = arith.addf %34, %35 : vector<256x32xf32>
    %37 = arith.truncf %36 : vector<256x32xf32> to vector<256x32xbf16>
    %c0_18 = arith.constant 0 : index
    %c0_19 = arith.constant 0 : index
    %c0_20 = arith.constant 0 : index
    %38 = vector.load %arg4[%c0_18, %c0_19, %c0_20] : memref<2x32x96xbf16, #tpu.memory_space<vmem>>, vector<1x32x96xbf16>
    %39 = vector.shape_cast %38 : vector<1x32x96xbf16> to vector<32x96xbf16>
    %cst_21 = arith.constant dense<0.000000e+00> : vector<256x96xf32>
    %40 = tpu.matmul %37, %39, %cst_21 {dimension_numbers = #tpu.dot_dimension_numbers<[1], [0], [0], [1], [0, 0, 1, 1], [], []>} : vector<256x32xbf16>, vector<32x96xbf16>, vector<256x96xf32> -> vector<256x96xf32>
    %41 = vector.shape_cast %40 : vector<256x96xf32> to vector<8x32x96xf32>
    %42 = arith.truncf %41 : vector<8x32x96xf32> to vector<8x32x96xbf16>
    %43 = vector.extract_strided_slice %42 {offsets = [0, 0, 0], sizes = [8, 32, 32], strides = [1, 1, 1]} : vector<8x32x96xbf16> to vector<8x32x32xbf16>
    %44 = vector.extract_strided_slice %42 {offsets = [0, 0, 32], sizes = [8, 32, 32], strides = [1, 1, 1]} : vector<8x32x96xbf16> to vector<8x32x32xbf16>
    %45 = vector.extract_strided_slice %42 {offsets = [0, 0, 64], sizes = [8, 32, 32], strides = [1, 1, 1]} : vector<8x32x96xbf16> to vector<8x32x32xbf16>
    %46 = tpu.concatenate %44, %44, %44, %44 in 1 : vector<8x32x32xbf16>, vector<8x32x32xbf16>, vector<8x32x32xbf16>, vector<8x32x32xbf16> -> vector<8x128x32xbf16>
    %47 = vector.shape_cast %5 : vector<128x32xbf16> to vector<1x128x32xbf16>
    %48 = vector.broadcast %47 : vector<1x128x32xbf16> to vector<8x128x32xbf16>
    %49 = arith.mulf %46, %48 : vector<8x128x32xbf16>
    %50 = tpu.concatenate %45, %45, %45, %45 in 1 : vector<8x32x32xbf16>, vector<8x32x32xbf16>, vector<8x32x32xbf16>, vector<8x32x32xbf16> -> vector<8x128x32xbf16>
    %51 = vector.shape_cast %5 : vector<128x32xbf16> to vector<1x128x32xbf16>
    %52 = vector.broadcast %51 : vector<1x128x32xbf16> to vector<8x128x32xbf16>
    %53 = arith.mulf %50, %52 : vector<8x128x32xbf16>
    "tpu.trace_start"() <{level = 10 : i32, message = "bnc,bjc->bnj"}> : () -> ()
    %cst_22 = arith.constant dense<0.000000e+00> : vector<8x32x128xf32>
    %54 = tpu.matmul %43, %49, %cst_22 {dimension_numbers = #tpu.dot_dimension_numbers<[2], [2], [1], [1], [0, 0, 0, 1, 1, 1], [0], [0]>} : vector<8x32x32xbf16>, vector<8x128x32xbf16>, vector<8x32x128xf32> -> vector<8x32x128xf32>
    "tpu.trace_stop"() : () -> ()
    %55 = vector.shape_cast %54 : vector<8x32x128xf32> to vector<256x128xf32>
    %cst_23 = arith.constant 0.353553385 : f32
    %56 = vector.broadcast %cst_23 : f32 to vector<256x128xf32>
    %57 = arith.mulf %55, %56 : vector<256x128xf32>
    %58 = vector.broadcast %7 : vector<1x128xf32> to vector<256x128xf32>
    %59 = arith.addf %57, %58 : vector<256x128xf32>
    %cst_24 = arith.constant dense<0xFF800000> : vector<256xf32>
    %60 = vector.multi_reduction <maximumf>, %59, %cst_24 [1] : vector<256x128xf32> to vector<256xf32>
    %61 = vector.shape_cast %60 : vector<256xf32> to vector<256x1xf32>
    %62 = vector.broadcast %61 : vector<256x1xf32> to vector<256x128xf32>
    %63 = arith.subf %59, %62 : vector<256x128xf32>
    %64 = math.exp %63 : vector<256x128xf32>
    %cst_25 = arith.constant dense<0.000000e+00> : vector<256x128xf32>
    %65 = tpu.matmul %64, %6, %cst_25 {dimension_numbers = #tpu.dot_dimension_numbers<[1], [0], [0], [1], [0, 0, 1, 1], [], []>} : vector<256x128xf32>, vector<128x128xf32>, vector<256x128xf32> -> vector<256x128xf32>
    %66 = tpu.reciprocal %65 {approx = true} : vector<256x128xf32> -> vector<256x128xf32>
    %67 = arith.mulf %64, %66 : vector<256x128xf32>
    %68 = arith.truncf %67 : vector<256x128xf32> to vector<256x128xbf16>
    %69 = vector.shape_cast %68 : vector<256x128xbf16> to vector<8x32x128xbf16>
    "tpu.trace_start"() <{level = 10 : i32, message = "bnj,bjc->bnc"}> : () -> ()
    %cst_26 = arith.constant dense<0.000000e+00> : vector<8x32x32xf32>
    %70 = tpu.matmul %69, %53, %cst_26 {dimension_numbers = #tpu.dot_dimension_numbers<[2], [1], [1], [2], [0, 0, 0, 1, 1, 2], [0], [0]>} : vector<8x32x128xbf16>, vector<8x128x32xbf16>, vector<8x32x32xf32> -> vector<8x32x32xf32>
    "tpu.trace_stop"() : () -> ()
    %71 = vector.shape_cast %70 : vector<8x32x32xf32> to vector<256x32xf32>
    %72 = arith.truncf %71 : vector<256x32xf32> to vector<256x32xbf16>
    %c0_27 = arith.constant 0 : index
    %c0_28 = arith.constant 0 : index
    %c0_29 = arith.constant 0 : index
    %73 = vector.load %arg5[%c0_27, %c0_28, %c0_29] : memref<2x32x32xbf16, #tpu.memory_space<vmem>>, vector<1x32x32xbf16>
    %74 = vector.shape_cast %73 : vector<1x32x32xbf16> to vector<32x32xbf16>
    %cst_30 = arith.constant dense<0.000000e+00> : vector<256x32xf32>
    %75 = tpu.matmul %72, %74, %cst_30 {dimension_numbers = #tpu.dot_dimension_numbers<[1], [0], [0], [1], [0, 0, 1, 1], [], []>} : vector<256x32xbf16>, vector<32x32xbf16>, vector<256x32xf32> -> vector<256x32xf32>
    %76 = arith.addf %4, %75 : vector<256x32xf32>
    %77 = vector.broadcast %14 : vector<1x32xf32> to vector<256x32xf32>
    %78 = arith.addf %76, %77 : vector<256x32xf32>
    %cst_31 = arith.constant dense<0.000000e+00> : vector<256xf32>
    %79 = vector.multi_reduction <add>, %78, %cst_31 [1] : vector<256x32xf32> to vector<256xf32>
    %80 = vector.shape_cast %79 : vector<256xf32> to vector<256x1xf32>
    %cst_32 = arith.constant 3.200000e+01 : f32
    %81 = vector.broadcast %cst_32 : f32 to vector<256x1xf32>
    %82 = arith.divf %80, %81 : vector<256x1xf32>
    %83 = vector.broadcast %82 : vector<256x1xf32> to vector<256x32xf32>
    %84 = arith.subf %78, %83 : vector<256x32xf32>
    %85 = arith.mulf %84, %84 : vector<256x32xf32>
    %cst_33 = arith.constant dense<0.000000e+00> : vector<256xf32>
    %86 = vector.multi_reduction <add>, %85, %cst_33 [1] : vector<256x32xf32> to vector<256xf32>
    %87 = vector.shape_cast %86 : vector<256xf32> to vector<256x1xf32>
    %cst_34 = arith.constant 3.200000e+01 : f32
    %88 = vector.broadcast %cst_34 : f32 to vector<256x1xf32>
    %89 = arith.divf %87, %88 : vector<256x1xf32>
    %cst_35 = arith.constant 9.99999974E-6 : f32
    %90 = vector.broadcast %cst_35 : f32 to vector<256x1xf32>
    %91 = arith.addf %89, %90 : vector<256x1xf32>
    %92 = math.rsqrt %91 : vector<256x1xf32>
    %93 = vector.broadcast %92 : vector<256x1xf32> to vector<256x32xf32>
    %94 = arith.mulf %84, %93 : vector<256x32xf32>
    %95 = vector.broadcast %12 : vector<1x32xf32> to vector<256x32xf32>
    %96 = arith.mulf %94, %95 : vector<256x32xf32>
    %97 = vector.broadcast %13 : vector<1x32xf32> to vector<256x32xf32>
    %98 = arith.addf %96, %97 : vector<256x32xf32>
    %99 = arith.truncf %98 : vector<256x32xf32> to vector<256x32xbf16>
    %c0_36 = arith.constant 0 : index
    %c0_37 = arith.constant 0 : index
    %c0_38 = arith.constant 0 : index
    %100 = vector.load %arg6[%c0_36, %c0_37, %c0_38] : memref<2x32x128xbf16, #tpu.memory_space<vmem>>, vector<1x32x128xbf16>
    %101 = vector.shape_cast %100 : vector<1x32x128xbf16> to vector<32x128xbf16>
    %cst_39 = arith.constant dense<0.000000e+00> : vector<256x128xf32>
    %102 = tpu.matmul %99, %101, %cst_39 {dimension_numbers = #tpu.dot_dimension_numbers<[1], [0], [0], [1], [0, 0, 1, 1], [], []>} : vector<256x32xbf16>, vector<32x128xbf16>, vector<256x128xf32> -> vector<256x128xf32>
    %103 = vector.broadcast %16 : vector<1x128xf32> to vector<256x128xf32>
    %104 = arith.addf %102, %103 : vector<256x128xf32>
    %cst_40 = arith.constant 5.000000e-01 : f32
    %105 = vector.broadcast %cst_40 : f32 to vector<256x128xf32>
    %106 = arith.mulf %105, %104 : vector<256x128xf32>
    %cst_41 = arith.constant 0.707106769 : f32
    %107 = vector.broadcast %cst_41 : f32 to vector<256x128xf32>
    %108 = arith.mulf %104, %107 : vector<256x128xf32>
    %109 = math.erf %108 : vector<256x128xf32>
    %cst_42 = arith.constant 1.000000e+00 : f32
    %110 = vector.broadcast %cst_42 : f32 to vector<256x128xf32>
    %111 = arith.addf %110, %109 : vector<256x128xf32>
    %112 = arith.mulf %106, %111 : vector<256x128xf32>
    %113 = arith.truncf %112 : vector<256x128xf32> to vector<256x128xbf16>
    %c0_43 = arith.constant 0 : index
    %c0_44 = arith.constant 0 : index
    %c0_45 = arith.constant 0 : index
    %114 = vector.load %arg7[%c0_43, %c0_44, %c0_45] : memref<2x128x32xbf16, #tpu.memory_space<vmem>>, vector<1x128x32xbf16>
    %115 = vector.shape_cast %114 : vector<1x128x32xbf16> to vector<128x32xbf16>
    %cst_46 = arith.constant dense<0.000000e+00> : vector<256x32xf32>
    %116 = tpu.matmul %113, %115, %cst_46 {dimension_numbers = #tpu.dot_dimension_numbers<[1], [0], [0], [1], [0, 0, 1, 1], [], []>} : vector<256x128xbf16>, vector<128x32xbf16>, vector<256x32xf32> -> vector<256x32xf32>
    %117 = vector.broadcast %15 : vector<1x32xf32> to vector<256x32xf32>
    %118 = arith.addf %116, %117 : vector<256x32xf32>
    %119 = arith.addf %78, %118 : vector<256x32xf32>
    %c1 = arith.constant 1 : index
    %c0_47 = arith.constant 0 : index
    %c0_48 = arith.constant 0 : index
    %120 = vector.load %arg8[%c1, %c0_47, %c0_48] : memref<2x8x128xf32, #tpu.memory_space<vmem>>, vector<1x8x128xf32>
    %121 = vector.shape_cast %120 : vector<1x8x128xf32> to vector<8x128xf32>
    %122 = vector.extract_strided_slice %121 {offsets = [0, 0], sizes = [1, 32], strides = [1, 1]} : vector<8x128xf32> to vector<1x32xf32>
    %123 = vector.extract_strided_slice %121 {offsets = [1, 0], sizes = [1, 32], strides = [1, 1]} : vector<8x128xf32> to vector<1x32xf32>
    %124 = vector.extract_strided_slice %121 {offsets = [2, 0], sizes = [1, 32], strides = [1, 1]} : vector<8x128xf32> to vector<1x32xf32>
    %125 = vector.extract_strided_slice %121 {offsets = [3, 0], sizes = [1, 32], strides = [1, 1]} : vector<8x128xf32> to vector<1x32xf32>
    %126 = vector.extract_strided_slice %121 {offsets = [4, 0], sizes = [1, 32], strides = [1, 1]} : vector<8x128xf32> to vector<1x32xf32>
    %127 = vector.extract_strided_slice %121 {offsets = [5, 0], sizes = [1, 32], strides = [1, 1]} : vector<8x128xf32> to vector<1x32xf32>
    %128 = vector.extract_strided_slice %121 {offsets = [6, 0], sizes = [1, 128], strides = [1, 1]} : vector<8x128xf32> to vector<1x128xf32>
    %cst_49 = arith.constant dense<0.000000e+00> : vector<256xf32>
    %129 = vector.multi_reduction <add>, %119, %cst_49 [1] : vector<256x32xf32> to vector<256xf32>
    %130 = vector.shape_cast %129 : vector<256xf32> to vector<256x1xf32>
    %cst_50 = arith.constant 3.200000e+01 : f32
    %131 = vector.broadcast %cst_50 : f32 to vector<256x1xf32>
    %132 = arith.divf %130, %131 : vector<256x1xf32>
    %133 = vector.broadcast %132 : vector<256x1xf32> to vector<256x32xf32>
    %134 = arith.subf %119, %133 : vector<256x32xf32>
    %135 = arith.mulf %134, %134 : vector<256x32xf32>
    %cst_51 = arith.constant dense<0.000000e+00> : vector<256xf32>
    %136 = vector.multi_reduction <add>, %135, %cst_51 [1] : vector<256x32xf32> to vector<256xf32>
    %137 = vector.shape_cast %136 : vector<256xf32> to vector<256x1xf32>
    %cst_52 = arith.constant 3.200000e+01 : f32
    %138 = vector.broadcast %cst_52 : f32 to vector<256x1xf32>
    %139 = arith.divf %137, %138 : vector<256x1xf32>
    %cst_53 = arith.constant 9.99999974E-6 : f32
    %140 = vector.broadcast %cst_53 : f32 to vector<256x1xf32>
    %141 = arith.addf %139, %140 : vector<256x1xf32>
    %142 = math.rsqrt %141 : vector<256x1xf32>
    %143 = vector.broadcast %142 : vector<256x1xf32> to vector<256x32xf32>
    %144 = arith.mulf %134, %143 : vector<256x32xf32>
    %145 = vector.broadcast %122 : vector<1x32xf32> to vector<256x32xf32>
    %146 = arith.mulf %144, %145 : vector<256x32xf32>
    %147 = vector.broadcast %123 : vector<1x32xf32> to vector<256x32xf32>
    %148 = arith.addf %146, %147 : vector<256x32xf32>
    %149 = arith.truncf %148 : vector<256x32xf32> to vector<256x32xbf16>
    %c1_54 = arith.constant 1 : index
    %c0_55 = arith.constant 0 : index
    %c0_56 = arith.constant 0 : index
    %150 = vector.load %arg4[%c1_54, %c0_55, %c0_56] : memref<2x32x96xbf16, #tpu.memory_space<vmem>>, vector<1x32x96xbf16>
    %151 = vector.shape_cast %150 : vector<1x32x96xbf16> to vector<32x96xbf16>
    %cst_57 = arith.constant dense<0.000000e+00> : vector<256x96xf32>
    %152 = tpu.matmul %149, %151, %cst_57 {dimension_numbers = #tpu.dot_dimension_numbers<[1], [0], [0], [1], [0, 0, 1, 1], [], []>} : vector<256x32xbf16>, vector<32x96xbf16>, vector<256x96xf32> -> vector<256x96xf32>
    %153 = vector.shape_cast %152 : vector<256x96xf32> to vector<8x32x96xf32>
    %154 = arith.truncf %153 : vector<8x32x96xf32> to vector<8x32x96xbf16>
    %155 = vector.extract_strided_slice %154 {offsets = [0, 0, 0], sizes = [8, 32, 32], strides = [1, 1, 1]} : vector<8x32x96xbf16> to vector<8x32x32xbf16>
    %156 = vector.extract_strided_slice %154 {offsets = [0, 0, 32], sizes = [8, 32, 32], strides = [1, 1, 1]} : vector<8x32x96xbf16> to vector<8x32x32xbf16>
    %157 = vector.extract_strided_slice %154 {offsets = [0, 0, 64], sizes = [8, 32, 32], strides = [1, 1, 1]} : vector<8x32x96xbf16> to vector<8x32x32xbf16>
    %158 = tpu.concatenate %156, %156, %156, %156 in 1 : vector<8x32x32xbf16>, vector<8x32x32xbf16>, vector<8x32x32xbf16>, vector<8x32x32xbf16> -> vector<8x128x32xbf16>
    %159 = vector.shape_cast %5 : vector<128x32xbf16> to vector<1x128x32xbf16>
    %160 = vector.broadcast %159 : vector<1x128x32xbf16> to vector<8x128x32xbf16>
    %161 = arith.mulf %158, %160 : vector<8x128x32xbf16>
    %162 = tpu.concatenate %157, %157, %157, %157 in 1 : vector<8x32x32xbf16>, vector<8x32x32xbf16>, vector<8x32x32xbf16>, vector<8x32x32xbf16> -> vector<8x128x32xbf16>
    %163 = vector.shape_cast %5 : vector<128x32xbf16> to vector<1x128x32xbf16>
    %164 = vector.broadcast %163 : vector<1x128x32xbf16> to vector<8x128x32xbf16>
    %165 = arith.mulf %162, %164 : vector<8x128x32xbf16>
    "tpu.trace_start"() <{level = 10 : i32, message = "bnc,bjc->bnj"}> : () -> ()
    %cst_58 = arith.constant dense<0.000000e+00> : vector<8x32x128xf32>
    %166 = tpu.matmul %155, %161, %cst_58 {dimension_numbers = #tpu.dot_dimension_numbers<[2], [2], [1], [1], [0, 0, 0, 1, 1, 1], [0], [0]>} : vector<8x32x32xbf16>, vector<8x128x32xbf16>, vector<8x32x128xf32> -> vector<8x32x128xf32>
    "tpu.trace_stop"() : () -> ()
    %167 = vector.shape_cast %166 : vector<8x32x128xf32> to vector<256x128xf32>
    %cst_59 = arith.constant 0.353553385 : f32
    %168 = vector.broadcast %cst_59 : f32 to vector<256x128xf32>
    %169 = arith.mulf %167, %168 : vector<256x128xf32>
    %170 = vector.broadcast %7 : vector<1x128xf32> to vector<256x128xf32>
    %171 = arith.addf %169, %170 : vector<256x128xf32>
    %cst_60 = arith.constant dense<0xFF800000> : vector<256xf32>
    %172 = vector.multi_reduction <maximumf>, %171, %cst_60 [1] : vector<256x128xf32> to vector<256xf32>
    %173 = vector.shape_cast %172 : vector<256xf32> to vector<256x1xf32>
    %174 = vector.broadcast %173 : vector<256x1xf32> to vector<256x128xf32>
    %175 = arith.subf %171, %174 : vector<256x128xf32>
    %176 = math.exp %175 : vector<256x128xf32>
    %cst_61 = arith.constant dense<0.000000e+00> : vector<256x128xf32>
    %177 = tpu.matmul %176, %6, %cst_61 {dimension_numbers = #tpu.dot_dimension_numbers<[1], [0], [0], [1], [0, 0, 1, 1], [], []>} : vector<256x128xf32>, vector<128x128xf32>, vector<256x128xf32> -> vector<256x128xf32>
    %178 = tpu.reciprocal %177 {approx = true} : vector<256x128xf32> -> vector<256x128xf32>
    %179 = arith.mulf %176, %178 : vector<256x128xf32>
    %180 = arith.truncf %179 : vector<256x128xf32> to vector<256x128xbf16>
    %181 = vector.shape_cast %180 : vector<256x128xbf16> to vector<8x32x128xbf16>
    "tpu.trace_start"() <{level = 10 : i32, message = "bnj,bjc->bnc"}> : () -> ()
    %cst_62 = arith.constant dense<0.000000e+00> : vector<8x32x32xf32>
    %182 = tpu.matmul %181, %165, %cst_62 {dimension_numbers = #tpu.dot_dimension_numbers<[2], [1], [1], [2], [0, 0, 0, 1, 1, 2], [0], [0]>} : vector<8x32x128xbf16>, vector<8x128x32xbf16>, vector<8x32x32xf32> -> vector<8x32x32xf32>
    "tpu.trace_stop"() : () -> ()
    %183 = vector.shape_cast %182 : vector<8x32x32xf32> to vector<256x32xf32>
    %184 = arith.truncf %183 : vector<256x32xf32> to vector<256x32xbf16>
    %c1_63 = arith.constant 1 : index
    %c0_64 = arith.constant 0 : index
    %c0_65 = arith.constant 0 : index
    %185 = vector.load %arg5[%c1_63, %c0_64, %c0_65] : memref<2x32x32xbf16, #tpu.memory_space<vmem>>, vector<1x32x32xbf16>
    %186 = vector.shape_cast %185 : vector<1x32x32xbf16> to vector<32x32xbf16>
    %cst_66 = arith.constant dense<0.000000e+00> : vector<256x32xf32>
    %187 = tpu.matmul %184, %186, %cst_66 {dimension_numbers = #tpu.dot_dimension_numbers<[1], [0], [0], [1], [0, 0, 1, 1], [], []>} : vector<256x32xbf16>, vector<32x32xbf16>, vector<256x32xf32> -> vector<256x32xf32>
    %188 = arith.addf %119, %187 : vector<256x32xf32>
    %189 = vector.broadcast %126 : vector<1x32xf32> to vector<256x32xf32>
    %190 = arith.addf %188, %189 : vector<256x32xf32>
    %cst_67 = arith.constant dense<0.000000e+00> : vector<256xf32>
    %191 = vector.multi_reduction <add>, %190, %cst_67 [1] : vector<256x32xf32> to vector<256xf32>
    %192 = vector.shape_cast %191 : vector<256xf32> to vector<256x1xf32>
    %cst_68 = arith.constant 3.200000e+01 : f32
    %193 = vector.broadcast %cst_68 : f32 to vector<256x1xf32>
    %194 = arith.divf %192, %193 : vector<256x1xf32>
    %195 = vector.broadcast %194 : vector<256x1xf32> to vector<256x32xf32>
    %196 = arith.subf %190, %195 : vector<256x32xf32>
    %197 = arith.mulf %196, %196 : vector<256x32xf32>
    %cst_69 = arith.constant dense<0.000000e+00> : vector<256xf32>
    %198 = vector.multi_reduction <add>, %197, %cst_69 [1] : vector<256x32xf32> to vector<256xf32>
    %199 = vector.shape_cast %198 : vector<256xf32> to vector<256x1xf32>
    %cst_70 = arith.constant 3.200000e+01 : f32
    %200 = vector.broadcast %cst_70 : f32 to vector<256x1xf32>
    %201 = arith.divf %199, %200 : vector<256x1xf32>
    %cst_71 = arith.constant 9.99999974E-6 : f32
    %202 = vector.broadcast %cst_71 : f32 to vector<256x1xf32>
    %203 = arith.addf %201, %202 : vector<256x1xf32>
    %204 = math.rsqrt %203 : vector<256x1xf32>
    %205 = vector.broadcast %204 : vector<256x1xf32> to vector<256x32xf32>
    %206 = arith.mulf %196, %205 : vector<256x32xf32>
    %207 = vector.broadcast %124 : vector<1x32xf32> to vector<256x32xf32>
    %208 = arith.mulf %206, %207 : vector<256x32xf32>
    %209 = vector.broadcast %125 : vector<1x32xf32> to vector<256x32xf32>
    %210 = arith.addf %208, %209 : vector<256x32xf32>
    %211 = arith.truncf %210 : vector<256x32xf32> to vector<256x32xbf16>
    %c1_72 = arith.constant 1 : index
    %c0_73 = arith.constant 0 : index
    %c0_74 = arith.constant 0 : index
    %212 = vector.load %arg6[%c1_72, %c0_73, %c0_74] : memref<2x32x128xbf16, #tpu.memory_space<vmem>>, vector<1x32x128xbf16>
    %213 = vector.shape_cast %212 : vector<1x32x128xbf16> to vector<32x128xbf16>
    %cst_75 = arith.constant dense<0.000000e+00> : vector<256x128xf32>
    %214 = tpu.matmul %211, %213, %cst_75 {dimension_numbers = #tpu.dot_dimension_numbers<[1], [0], [0], [1], [0, 0, 1, 1], [], []>} : vector<256x32xbf16>, vector<32x128xbf16>, vector<256x128xf32> -> vector<256x128xf32>
    %215 = vector.broadcast %128 : vector<1x128xf32> to vector<256x128xf32>
    %216 = arith.addf %214, %215 : vector<256x128xf32>
    %cst_76 = arith.constant 5.000000e-01 : f32
    %217 = vector.broadcast %cst_76 : f32 to vector<256x128xf32>
    %218 = arith.mulf %217, %216 : vector<256x128xf32>
    %cst_77 = arith.constant 0.707106769 : f32
    %219 = vector.broadcast %cst_77 : f32 to vector<256x128xf32>
    %220 = arith.mulf %216, %219 : vector<256x128xf32>
    %221 = math.erf %220 : vector<256x128xf32>
    %cst_78 = arith.constant 1.000000e+00 : f32
    %222 = vector.broadcast %cst_78 : f32 to vector<256x128xf32>
    %223 = arith.addf %222, %221 : vector<256x128xf32>
    %224 = arith.mulf %218, %223 : vector<256x128xf32>
    %225 = arith.truncf %224 : vector<256x128xf32> to vector<256x128xbf16>
    %c1_79 = arith.constant 1 : index
    %c0_80 = arith.constant 0 : index
    %c0_81 = arith.constant 0 : index
    %226 = vector.load %arg7[%c1_79, %c0_80, %c0_81] : memref<2x128x32xbf16, #tpu.memory_space<vmem>>, vector<1x128x32xbf16>
    %227 = vector.shape_cast %226 : vector<1x128x32xbf16> to vector<128x32xbf16>
    %cst_82 = arith.constant dense<0.000000e+00> : vector<256x32xf32>
    %228 = tpu.matmul %225, %227, %cst_82 {dimension_numbers = #tpu.dot_dimension_numbers<[1], [0], [0], [1], [0, 0, 1, 1], [], []>} : vector<256x128xbf16>, vector<128x32xbf16>, vector<256x32xf32> -> vector<256x32xf32>
    %229 = vector.broadcast %127 : vector<1x32xf32> to vector<256x32xf32>
    %230 = arith.addf %228, %229 : vector<256x32xf32>
    %231 = arith.addf %190, %230 : vector<256x32xf32>
    %c0_83 = arith.constant 0 : index
    %c0_84 = arith.constant 0 : index
    %232 = vector.load %arg9[%c0_83, %c0_84] : memref<8x128xf32, #tpu.memory_space<vmem>>, vector<1x32xf32>
    %c1_85 = arith.constant 1 : index
    %c0_86 = arith.constant 0 : index
    %233 = vector.load %arg9[%c1_85, %c0_86] : memref<8x128xf32, #tpu.memory_space<vmem>>, vector<1x32xf32>
    %c2 = arith.constant 2 : index
    %c0_87 = arith.constant 0 : index
    %234 = vector.load %arg9[%c2, %c0_87] : memref<8x128xf32, #tpu.memory_space<vmem>>, vector<1x128xf32>
    %235 = vector.shape_cast %231 : vector<256x32xf32> to vector<8x32x32xf32>
    %236 = vector.extract_strided_slice %235 {offsets = [0, 0, 0], sizes = [8, 1, 32], strides = [1, 1, 1]} : vector<8x32x32xf32> to vector<8x1x32xf32>
    %237 = vector.shape_cast %236 : vector<8x1x32xf32> to vector<8x32xf32>
    %cst_88 = arith.constant dense<0.000000e+00> : vector<8xf32>
    %238 = vector.multi_reduction <add>, %237, %cst_88 [1] : vector<8x32xf32> to vector<8xf32>
    %239 = vector.shape_cast %238 : vector<8xf32> to vector<8x1xf32>
    %cst_89 = arith.constant 3.200000e+01 : f32
    %240 = vector.broadcast %cst_89 : f32 to vector<8x1xf32>
    %241 = arith.divf %239, %240 : vector<8x1xf32>
    %242 = vector.broadcast %241 : vector<8x1xf32> to vector<8x32xf32>
    %243 = arith.subf %237, %242 : vector<8x32xf32>
    %244 = arith.mulf %243, %243 : vector<8x32xf32>
    %cst_90 = arith.constant dense<0.000000e+00> : vector<8xf32>
    %245 = vector.multi_reduction <add>, %244, %cst_90 [1] : vector<8x32xf32> to vector<8xf32>
    %246 = vector.shape_cast %245 : vector<8xf32> to vector<8x1xf32>
    %cst_91 = arith.constant 3.200000e+01 : f32
    %247 = vector.broadcast %cst_91 : f32 to vector<8x1xf32>
    %248 = arith.divf %246, %247 : vector<8x1xf32>
    %cst_92 = arith.constant 9.99999974E-6 : f32
    %249 = vector.broadcast %cst_92 : f32 to vector<8x1xf32>
    %250 = arith.addf %248, %249 : vector<8x1xf32>
    %251 = math.rsqrt %250 : vector<8x1xf32>
    %252 = vector.broadcast %251 : vector<8x1xf32> to vector<8x32xf32>
    %253 = arith.mulf %243, %252 : vector<8x32xf32>
    %254 = vector.broadcast %232 : vector<1x32xf32> to vector<8x32xf32>
    %255 = arith.mulf %253, %254 : vector<8x32xf32>
    %256 = vector.broadcast %233 : vector<1x32xf32> to vector<8x32xf32>
    %257 = arith.addf %255, %256 : vector<8x32xf32>
    %258 = arith.truncf %257 : vector<8x32xf32> to vector<8x32xbf16>
    %c0_93 = arith.constant 0 : index
    %c0_94 = arith.constant 0 : index
    %259 = vector.load %arg10[%c0_93, %c0_94] : memref<32x128xbf16, #tpu.memory_space<vmem>>, vector<32x128xbf16>
    %cst_95 = arith.constant dense<0.000000e+00> : vector<8x128xf32>
    %260 = tpu.matmul %258, %259, %cst_95 {dimension_numbers = #tpu.dot_dimension_numbers<[1], [0], [0], [1], [0, 0, 1, 1], [], []>} : vector<8x32xbf16>, vector<32x128xbf16>, vector<8x128xf32> -> vector<8x128xf32>
    %261 = vector.broadcast %234 : vector<1x128xf32> to vector<8x128xf32>
    %262 = arith.addf %260, %261 : vector<8x128xf32>
    %c0_96 = arith.constant 0 : index
    %c0_97 = arith.constant 0 : index
    %263 = vector.load %arg13[%c0_96, %c0_97] : memref<8x128xf32, #tpu.memory_space<vmem>>, vector<8x128xf32>
    tpu.vector_store %arg13[%c0_96, %c0_97], %262 {strides = array<i32>} : memref<8x128xf32, #tpu.memory_space<vmem>>, vector<8x128xf32>,
    return
  }
  func.func @transform_0(%arg0: i32) -> (i32, i32) {
    %c0_i32 = arith.constant 0 : i32
    %c0_i32_0 = arith.constant 0 : i32
    return %arg0, %c0_i32 : i32, i32
  }
  func.func @transform_1(%arg0: i32) -> (i32, i32) {
    %c0_i32 = arith.constant 0 : i32
    %c0_i32_0 = arith.constant 0 : i32
    %c0_i32_1 = arith.constant 0 : i32
    return %c0_i32, %c0_i32_0 : i32, i32
  }
  func.func @transform_2(%arg0: i32) -> (i32, i32) {
    %c0_i32 = arith.constant 0 : i32
    %c0_i32_0 = arith.constant 0 : i32
    %c0_i32_1 = arith.constant 0 : i32
    return %c0_i32, %c0_i32_0 : i32, i32
  }
  func.func @transform_3(%arg0: i32) -> (i32, i32, i32) {
    %c0_i32 = arith.constant 0 : i32
    %c0_i32_0 = arith.constant 0 : i32
    %c0_i32_1 = arith.constant 0 : i32
    %c0_i32_2 = arith.constant 0 : i32
    return %c0_i32, %c0_i32_0, %c0_i32_1 : i32, i32, i32
  }
  func.func @transform_4(%arg0: i32) -> (i32, i32, i32) {
    %c0_i32 = arith.constant 0 : i32
    %c0_i32_0 = arith.constant 0 : i32
    %c0_i32_1 = arith.constant 0 : i32
    %c0_i32_2 = arith.constant 0 : i32
    return %c0_i32, %c0_i32_0, %c0_i32_1 : i32, i32, i32
  }
  func.func @transform_5(%arg0: i32) -> (i32, i32, i32) {
    %c0_i32 = arith.constant 0 : i32
    %c0_i32_0 = arith.constant 0 : i32
    %c0_i32_1 = arith.constant 0 : i32
    %c0_i32_2 = arith.constant 0 : i32
    return %c0_i32, %c0_i32_0, %c0_i32_1 : i32, i32, i32
  }
  func.func @transform_6(%arg0: i32) -> (i32, i32, i32) {
    %c0_i32 = arith.constant 0 : i32
    %c0_i32_0 = arith.constant 0 : i32
    %c0_i32_1 = arith.constant 0 : i32
    %c0_i32_2 = arith.constant 0 : i32
    return %c0_i32, %c0_i32_0, %c0_i32_1 : i32, i32, i32
  }
  func.func @transform_7(%arg0: i32) -> (i32, i32, i32) {
    %c0_i32 = arith.constant 0 : i32
    %c0_i32_0 = arith.constant 0 : i32
    %c0_i32_1 = arith.constant 0 : i32
    %c0_i32_2 = arith.constant 0 : i32
    return %c0_i32, %c0_i32_0, %c0_i32_1 : i32, i32, i32
  }
  func.func @transform_8(%arg0: i32) -> (i32, i32) {
    %c0_i32 = arith.constant 0 : i32
    %c0_i32_0 = arith.constant 0 : i32
    %c0_i32_1 = arith.constant 0 : i32
    return %c0_i32, %c0_i32_0 : i32, i32
  }
  func.func @transform_9(%arg0: i32) -> (i32, i32) {
    %c0_i32 = arith.constant 0 : i32
    %c0_i32_0 = arith.constant 0 : i32
    %c0_i32_1 = arith.constant 0 : i32
    return %c0_i32, %c0_i32_0 : i32, i32
  }
  func.func @transform_10(%arg0: i32) -> (i32, i32) {
    %c0_i32 = arith.constant 0 : i32
    %c0_i32_0 = arith.constant 0 : i32
    %c0_i32_1 = arith.constant 0 : i32
    return %c0_i32, %c0_i32_0 : i32, i32
  }
  func.func @transform_11(%arg0: i32) -> (i32, i32) {
    %c0_i32 = arith.constant 0 : i32
    %c0_i32_0 = arith.constant 0 : i32
    %c0_i32_1 = arith.constant 0 : i32
    return %c0_i32, %c0_i32_0 : i32, i32
  }
  func.func @transform_12(%arg0: i32) -> (i32, i32) {
    %c0_i32 = arith.constant 0 : i32
    %c0_i32_0 = arith.constant 0 : i32
    return %arg0, %c0_i32 : i32, i32
  }
}

</mosaic_0001>

<llo_original>
// kernel: t2t_vit_forward.1
$region0: #{t2t_vit_forward.1}
  #allocation0 [shape = 'u32[]', space=smem, size = 0x4, offset = 0x4, fixed_abs, tag = 'smem constant byte address 0x4 - core index']
  #allocation1 [shape = 'u32[144,128]{1,0:T(1,128)}', space=vmem, size = 0x12000, scoped, tag = 'internal scratch']
  %s0 = inlined_call_operand.vmem [shape: bf16[256,48], index: 0, kind: input, shape index: {}]
  %s1 = inlined_call_operand.vmem [shape: bf16[48,32], index: 1, kind: input, shape index: {}]
  %s2 = inlined_call_operand.vmem [shape: f32[256,32], index: 2, kind: input, shape index: {}]
  %s3 = inlined_call_operand.vmem [shape: bf16[2,32,96], index: 3, kind: input, shape index: {}]
  %s4 = inlined_call_operand.vmem [shape: bf16[2,32,32], index: 4, kind: input, shape index: {}]
  %s5 = inlined_call_operand.vmem [shape: bf16[2,32,128], index: 5, kind: input, shape index: {}]
  %s6 = inlined_call_operand.vmem [shape: bf16[2,128,32], index: 6, kind: input, shape index: {}]
  %s7 = inlined_call_operand.vmem [shape: f32[2,8,128], index: 7, kind: input, shape index: {}]
  %s8 = inlined_call_operand.vmem [shape: f32[8,128], index: 8, kind: input, shape index: {}]
  %s9 = inlined_call_operand.vmem [shape: bf16[32,128], index: 9, kind: input, shape index: {}]
  %s10 = inlined_call_operand.vmem [shape: bf16[128,32], index: 10, kind: input, shape index: {}]
  %s11 = inlined_call_operand.vmem [shape: f32[128,128], index: 11, kind: input, shape index: {}]
  %s12 = inlined_call_operand.vmem [shape: f32[8,128], index: 12, kind: output, shape index: {}]
  %s13 = sld [smem:[#allocation0]]
  $region58: #{t2t_vit_forward.1} parent=0
    _
  %s15 = ssub.s32 1, %s13
  %s16 = scalar_select 0, %s15, %s13
  // Predicated region
  $region2: #{t2t_vit_forward.1} parent=0 // pred_check
    _
  $region3: #{t2t_vit_forward.1} parent=0 // pred_check_branch
    %18 = sbr.rel (0) target = $region5
  $region4: #{t2t_vit_forward.1} parent=0 // pred_region
    _
  $region5: #{t2t_vit_forward.1} parent=0 // pred_fallthru
    _
  // Predicated region
  $region6: #{t2t_vit_forward.1} parent=0 // pred_check
    _
  $region7: #{t2t_vit_forward.1} parent=0 // pred_check_branch
    %20 = sbr.rel (0) target = $region9
  $region8: #{t2t_vit_forward.1} parent=0 // pred_region
    _
  $region9: #{t2t_vit_forward.1} parent=0 // pred_fallthru
    _
  // Predicated region
  $region10: #{t2t_vit_forward.1} parent=0 // pred_check
    _
  $region11: #{t2t_vit_forward.1} parent=0 // pred_check_branch
    %22 = sbr.rel (0) target = $region13
  $region12: #{t2t_vit_forward.1} parent=0 // pred_region
    _
  $region13: #{t2t_vit_forward.1} parent=0 // pred_fallthru
    _
  // Predicated region
  $region14: #{t2t_vit_forward.1} parent=0 // pred_check
    _
  $region15: #{t2t_vit_forward.1} parent=0 // pred_check_branch
    %24 = sbr.rel (0) target = $region17
  $region16: #{t2t_vit_forward.1} parent=0 // pred_region
    _
  $region17: #{t2t_vit_forward.1} parent=0 // pred_fallthru
    _
  // Predicated region
  $region18: #{t2t_vit_forward.1} parent=0 // pred_check
    _
  $region19: #{t2t_vit_forward.1} parent=0 // pred_check_branch
    %26 = sbr.rel (0) target = $region21
  $region20: #{t2t_vit_forward.1} parent=0 // pred_region
    _
  $region21: #{t2t_vit_forward.1} parent=0 // pred_fallthru
    _
  // Predicated region
  $region22: #{t2t_vit_forward.1} parent=0 // pred_check
    _
  $region23: #{t2t_vit_forward.1} parent=0 // pred_check_branch
    %28 = sbr.rel (0) target = $region25
  $region24: #{t2t_vit_forward.1} parent=0 // pred_region
    _
  $region25: #{t2t_vit_forward.1} parent=0 // pred_fallthru
    _
  // Predicated region
  $region26: #{t2t_vit_forward.1} parent=0 // pred_check
    _
  $region27: #{t2t_vit_forward.1} parent=0 // pred_check_branch
    %30 = sbr.rel (0) target = $region29
  $region28: #{t2t_vit_forward.1} parent=0 // pred_region
    _
  $region29: #{t2t_vit_forward.1} parent=0 // pred_fallthru
    _
  // Predicated region
  $region30: #{t2t_vit_forward.1} parent=0 // pred_check
    _
  $region31: #{t2t_vit_forward.1} parent=0 // pred_check_branch
    %32 = sbr.rel (0) target = $region33
  $region32: #{t2t_vit_forward.1} parent=0 // pred_region
    _
  $region33: #{t2t_vit_forward.1} parent=0 // pred_fallthru
    _
  // Predicated region
  $region34: #{t2t_vit_forward.1} parent=0 // pred_check
    _
  $region35: #{t2t_vit_forward.1} parent=0 // pred_check_branch
    %34 = sbr.rel (0) target = $region37
  $region36: #{t2t_vit_forward.1} parent=0 // pred_region
    _
  $region37: #{t2t_vit_forward.1} parent=0 // pred_fallthru
    _
  // Predicated region
  $region38: #{t2t_vit_forward.1} parent=0 // pred_check
    _
  $region39: #{t2t_vit_forward.1} parent=0 // pred_check_branch
    %36 = sbr.rel (0) target = $region41
  $region40: #{t2t_vit_forward.1} parent=0 // pred_region
    _
  $region41: #{t2t_vit_forward.1} parent=0 // pred_fallthru
    _
  // Predicated region
  $region42: #{t2t_vit_forward.1} parent=0 // pred_check
    _
  $region43: #{t2t_vit_forward.1} parent=0 // pred_check_branch
    %38 = sbr.rel (0) target = $region45
  $region44: #{t2t_vit_forward.1} parent=0 // pred_region
    _
  $region45: #{t2t_vit_forward.1} parent=0 // pred_fallthru
    _
  // Predicated region
  $region46: #{t2t_vit_forward.1} parent=0 // pred_check
    _
  $region47: #{t2t_vit_forward.1} parent=0 // pred_check_branch
    %40 = sbr.rel (0) target = $region49
  $region48: #{t2t_vit_forward.1} parent=0 // pred_region
    _
  $region49: #{t2t_vit_forward.1} parent=0 // pred_fallthru
    _
  %v42 = vld [vmem:[%s0] sm:$0xf]
  %v43 = vld [vmem:[%s0 + $0x4] sm:$0xf]
  %v44 = vld [vmem:[%s0 + $0x8] sm:$0xf]
  %v45 = vld [vmem:[%s0 + $0xc] sm:$0xf]
  %v46 = vld [vmem:[%s0 + $0x10] sm:$0xf]
  %v47 = vld [vmem:[%s0 + $0x14] sm:$0xf]
  %v48 = vld [vmem:[%s0 + $0x18] sm:$0xf]
  %v49 = vld [vmem:[%s0 + $0x1c] sm:$0xf]
  %v50 = vld [vmem:[%s0 + $0x20] sm:$0xf]
  %v51 = vld [vmem:[%s0 + $0x24] sm:$0xf]
  %v52 = vld [vmem:[%s0 + $0x28] sm:$0xf]
  %v53 = vld [vmem:[%s0 + $0x2c] sm:$0xf]
  %v54 = vld [vmem:[%s0 + $0x30] sm:$0xf]
  %v55 = vld [vmem:[%s0 + $0x34] sm:$0xf]
  %v56 = vld [vmem:[%s0 + $0x38] sm:$0xf]
  %v57 = vld [vmem:[%s0 + $0x3c] sm:$0xf]
  %v58 = vld [vmem:[%s0 + $0x40] sm:$0xf]
  %v59 = vld [vmem:[%s0 + $0x44] sm:$0xf]
  %v60 = vld [vmem:[%s0 + $0x48] sm:$0xf]
  %v61 = vld [vmem:[%s0 + $0x4c] sm:$0xf]
  %v62 = vld [vmem:[%s0 + $0x50] sm:$0xf]
  %v63 = vld [vmem:[%s0 + $0x54] sm:$0xf]
  %v64 = vld [vmem:[%s0 + $0x58] sm:$0xf]
  %v65 = vld [vmem:[%s0 + $0x5c] sm:$0xf]
  %v66 = vld [vmem:[%s0 + $0x60] sm:$0xf]
  %v67 = vld [vmem:[%s0 + $0x64] sm:$0xf]
  %v68 = vld [vmem:[%s0 + $0x68] sm:$0xf]
  %v69 = vld [vmem:[%s0 + $0x6c] sm:$0xf]
  %v70 = vld [vmem:[%s0 + $0x70] sm:$0xf]
  %v71 = vld [vmem:[%s0 + $0x74] sm:$0xf]
  %v72 = vld [vmem:[%s0 + $0x78] sm:$0xf]
  %v73 = vld [vmem:[%s0 + $0x7c] sm:$0xf]
  %v74 = vld [vmem:[%s1] sm:$0xf]
  %v75 = vld [vmem:[%s1 + $0x4] sm:$0xf]
  %v76 = vld [vmem:[%s1 + $0x8] sm:$0xf]
  %v77 = vld [vmem:[%s1 + $0xc] sm:$0xf]
  %v78 = vld [vmem:[%s1 + $0x10] sm:$0xf]
  %v79 = vld [vmem:[%s1 + $0x14] sm:$0xf]
  %v80 = vld [vmem:[%s2] sm:$0xff]
  %v81 = vld [vmem:[%s2 + $0x8] sm:$0xff]
  %v82 = vld [vmem:[%s2 + $0x10] sm:$0xff]
  %v83 = vld [vmem:[%s2 + $0x18] sm:$0xff]
  %v84 = vld [vmem:[%s2 + $0x20] sm:$0xff]
  %v85 = vld [vmem:[%s2 + $0x28] sm:$0xff]
  %v86 = vld [vmem:[%s2 + $0x30] sm:$0xff]
  %v87 = vld [vmem:[%s2 + $0x38] sm:$0xff]
  %v88 = vld [vmem:[%s2 + $0x40] sm:$0xff]
  %v89 = vld [vmem:[%s2 + $0x48] sm:$0xff]
  %v90 = vld [vmem:[%s2 + $0x50] sm:$0xff]
  %v91 = vld [vmem:[%s2 + $0x58] sm:$0xff]
  %v92 = vld [vmem:[%s2 + $0x60] sm:$0xff]
  %v93 = vld [vmem:[%s2 + $0x68] sm:$0xff]
  %v94 = vld [vmem:[%s2 + $0x70] sm:$0xff]
  %v95 = vld [vmem:[%s2 + $0x78] sm:$0xff]
  %v96 = vld [vmem:[%s2 + $0x80] sm:$0xff]
  %v97 = vld [vmem:[%s2 + $0x88] sm:$0xff]
  %v98 = vld [vmem:[%s2 + $0x90] sm:$0xff]
  %v99 = vld [vmem:[%s2 + $0x98] sm:$0xff]
  %v100 = vld [vmem:[%s2 + $0xa0] sm:$0xff]
  %v101 = vld [vmem:[%s2 + $0xa8] sm:$0xff]
  %v102 = vld [vmem:[%s2 + $0xb0] sm:$0xff]
  %v103 = vld [vmem:[%s2 + $0xb8] sm:$0xff]
  %v104 = vld [vmem:[%s2 + $0xc0] sm:$0xff]
  %v105 = vld [vmem:[%s2 + $0xc8] sm:$0xff]
  %v106 = vld [vmem:[%s2 + $0xd0] sm:$0xff]
  %v107 = vld [vmem:[%s2 + $0xd8] sm:$0xff]
  %v108 = vld [vmem:[%s2 + $0xe0] sm:$0xff]
  %v109 = vld [vmem:[%s2 + $0xe8] sm:$0xff]
  %v110 = vld [vmem:[%s2 + $0xf0] sm:$0xff]
  %v111 = vld [vmem:[%s2 + $0xf8] sm:$0xff]
  %v144 = vunpack.c.l.b16 %v42
  %v145 = vunpack.c.l.b16 %v43
  %v146 = vunpack.c.l.b16 %v44
  %v147 = vunpack.c.l.b16 %v45
  %v148 = vunpack.c.l.b16 %v46
  %v149 = vunpack.c.l.b16 %v47
  %v150 = vunpack.c.l.b16 %v48
  %v151 = vunpack.c.l.b16 %v49
  %v152 = vunpack.c.l.b16 %v50
  %v153 = vunpack.c.l.b16 %v51
  %v154 = vunpack.c.l.b16 %v52
  %v155 = vunpack.c.l.b16 %v53
  %v156 = vunpack.c.l.b16 %v54
  %v157 = vunpack.c.l.b16 %v55
  %v158 = vunpack.c.l.b16 %v56
  %v159 = vunpack.c.l.b16 %v57
  %v160 = vunpack.c.l.b16 %v58
  %v161 = vunpack.c.l.b16 %v59
  %v162 = vunpack.c.l.b16 %v60
  %v163 = vunpack.c.l.b16 %v61
  %v164 = vunpack.c.l.b16 %v62
  %v165 = vunpack.c.l.b16 %v63
  %v166 = vunpack.c.l.b16 %v64
  %v167 = vunpack.c.l.b16 %v65
  %v168 = vunpack.c.l.b16 %v66
  %v169 = vunpack.c.l.b16 %v67
  %v170 = vunpack.c.l.b16 %v68
  %v171 = vunpack.c.l.b16 %v69
  %v172 = vunpack.c.l.b16 %v70
  %v173 = vunpack.c.l.b16 %v71
  %v174 = vunpack.c.l.b16 %v72
  %v175 = vunpack.c.l.b16 %v73
  %v176 = vpack.c.b16 %v145, %v144
  %v177 = vpack.c.b16 %v147, %v146
  %v178 = vpack.c.b16 %v149, %v148
  %v179 = vpack.c.b16 %v151, %v150
  %v180 = vpack.c.b16 %v153, %v152
  %v181 = vpack.c.b16 %v155, %v154
  %v182 = vpack.c.b16 %v157, %v156
  %v183 = vpack.c.b16 %v159, %v158
  %v184 = vpack.c.b16 %v161, %v160
  %v185 = vpack.c.b16 %v163, %v162
  %v186 = vpack.c.b16 %v165, %v164
  %v187 = vpack.c.b16 %v167, %v166
  %v188 = vpack.c.b16 %v169, %v168
  %v189 = vpack.c.b16 %v171, %v170
  %v190 = vpack.c.b16 %v173, %v172
  %v191 = vpack.c.b16 %v175, %v174
  %v198 = vunpack.c.l.b16 %v74
  %v199 = vunpack.c.l.b16 %v75
  %v200 = vunpack.c.l.b16 %v76
  %v201 = vunpack.c.l.b16 %v77
  %v202 = vunpack.c.l.b16 %v78
  %v203 = vunpack.c.l.b16 %v79
  %v204 = vpack.c.b16 %v199, %v198
  %v205 = vpack.c.b16 %v201, %v200
  %v206 = vpack.c.b16 %v203, %v202
  %vm210 = vcmask 392192
  %v212 = vsel %vm210, %v176, 0
  %v215 = vsel %vm210, %v177, 0
  %v218 = vsel %vm210, %v178, 0
  %v221 = vsel %vm210, %v179, 0
  %v224 = vsel %vm210, %v180, 0
  %v227 = vsel %vm210, %v181, 0
  %v230 = vsel %vm210, %v182, 0
  %v233 = vsel %vm210, %v183, 0
  %v236 = vsel %vm210, %v184, 0
  %v239 = vsel %vm210, %v185, 0
  %v242 = vsel %vm210, %v186, 0
  %v245 = vsel %vm210, %v187, 0
  %v248 = vsel %vm210, %v188, 0
  %v251 = vsel %vm210, %v189, 0
  %v254 = vsel %vm210, %v190, 0
  %v257 = vsel %vm210, %v191, 0
  %259 = vmatprep.subr.bf16.mxu0 0
  %260 = vmatpush1.bf16.msra.mxu0 %v204
  %261 = vmatprep.subr.bf16.mxu0 0
  %262 = vmatpush1.bf16.msra.mxu0 %v205
  %263 = vmatprep.subr.bf16.mxu0 0
  %264 = vmatpush1.bf16.msra.mxu0 %v206
  %265 = vmatprep.subr.bf16.mxu0 0
  %266 = vmatpush1.bf16.msra.mxu0 0
  %267 = vmatprep.subr.bf16.mxu0 0
  %268 = vmatpush1.bf16.msra.mxu0 0
  %269 = vmatprep.subr.bf16.mxu0 0
  %270 = vmatpush1.bf16.msra.mxu0 0
  %271 = vmatprep.subr.bf16.mxu0 0
  %272 = vmatpush1.bf16.msra.mxu0 0
  %273 = vmatprep.subr.bf16.mxu0 0
  %274 = vmatpush1.bf16.msra.mxu0 0
  %275 = vmatprep.subr.bf16.mxu0 0
  %276 = vmatpush1.bf16.msra.mxu0 0
  %277 = vmatprep.subr.bf16.mxu0 0
  %278 = vmatpush1.bf16.msra.mxu0 0
  %279 = vmatprep.subr.bf16.mxu0 0
  %280 = vmatpush1.bf16.msra.mxu0 0
  %281 = vmatprep.subr.bf16.mxu0 0
  %282 = vmatpush1.bf16.msra.mxu0 0
  %283 = vmatprep.subr.bf16.mxu0 0
  %284 = vmatpush1.bf16.msra.mxu0 0
  %285 = vmatprep.subr.bf16.mxu0 0
  %286 = vmatpush1.bf16.msra.mxu0 0
  %287 = vmatprep.subr.bf16.mxu0 0
  %288 = vmatpush1.bf16.msra.mxu0 0
  %289 = vmatprep.subr.bf16.mxu0 0
  %290 = vmatpush1.bf16.msra.mxu0 0
  %291 = vmatprep.mubr.bf16.mxu0 0
  %292 = vmatmul.mubr.bf16.gmra.mrb[0].mxu0 %v212
  %v293 = vpop.f32.mrb[0].mxu0
  %v294 = vadd.f32 %v80, %v293
  %v295 = vpop.f32.mrb[0].mxu0
  %v296 = vpop.f32.mrb[0].mxu0
  %v297 = vadd.f32 %v81, %v296
  %v298 = vpop.f32.mrb[0].mxu0
  %299 = vmatprep.mubr.bf16.mxu0 0
  %300 = vmatmul.mubr.bf16.gmra.mrb[0].mxu0 %v215
  %v301 = vpop.f32.mrb[0].mxu0
  %v302 = vadd.f32 %v82, %v301
  %v303 = vpop.f32.mrb[0].mxu0
  %v304 = vpop.f32.mrb[0].mxu0
  %v305 = vadd.f32 %v83, %v304
  %v306 = vpop.f32.mrb[0].mxu0
  %307 = vmatprep.mubr.bf16.mxu0 0
  %308 = vmatmul.mubr.bf16.gmra.mrb[0].mxu0 %v218
  %v309 = vpop.f32.mrb[0].mxu0
  %v310 = vadd.f32 %v84, %v309
  %v311 = vpop.f32.mrb[0].mxu0
  %v312 = vpop.f32.mrb[0].mxu0
  %v313 = vadd.f32 %v85, %v312
  %v314 = vpop.f32.mrb[0].mxu0
  %315 = vmatprep.mubr.bf16.mxu0 0
  %316 = vmatmul.mubr.bf16.gmra.mrb[0].mxu0 %v221
  %v317 = vpop.f32.mrb[0].mxu0
  %v318 = vadd.f32 %v86, %v317
  %v319 = vpop.f32.mrb[0].mxu0
  %v320 = vpop.f32.mrb[0].mxu0
  %v321 = vadd.f32 %v87, %v320
  %v322 = vpop.f32.mrb[0].mxu0
  %323 = vmatprep.mubr.bf16.mxu0 0
  %324 = vmatmul.mubr.bf16.gmra.mrb[0].mxu0 %v224
  %v325 = vpop.f32.mrb[0].mxu0
  %v326 = vadd.f32 %v88, %v325
  %v327 = vpop.f32.mrb[0].mxu0
  %v328 = vpop.f32.mrb[0].mxu0
  %v329 = vadd.f32 %v89, %v328
  %v330 = vpop.f32.mrb[0].mxu0
  %331 = vmatprep.mubr.bf16.mxu0 0
  %332 = vmatmul.mubr.bf16.gmra.mrb[0].mxu0 %v227
  %v333 = vpop.f32.mrb[0].mxu0
  %v334 = vadd.f32 %v90, %v333
  %v335 = vpop.f32.mrb[0].mxu0
  %v336 = vpop.f32.mrb[0].mxu0
  %v337 = vadd.f32 %v91, %v336
  %v338 = vpop.f32.mrb[0].mxu0
  %339 = vmatprep.mubr.bf16.mxu0 0
  %340 = vmatmul.mubr.bf16.gmra.mrb[0].mxu0 %v230
  %v341 = vpop.f32.mrb[0].mxu0
  %v342 = vadd.f32 %v92, %v341
  %v343 = vpop.f32.mrb[0].mxu0
  %v344 = vpop.f32.mrb[0].mxu0
  %v345 = vadd.f32 %v93, %v344
  %v346 = vpop.f32.mrb[0].mxu0
  %347 = vmatprep.mubr.bf16.mxu0 0
  %348 = vmatmul.mubr.bf16.gmra.mrb[0].mxu0 %v233
  %v349 = vpop.f32.mrb[0].mxu0
  %v350 = vadd.f32 %v94, %v349
  %v351 = vpop.f32.mrb[0].mxu0
  %v352 = vpop.f32.mrb[0].mxu0
  %v353 = vadd.f32 %v95, %v352
  %v354 = vpop.f32.mrb[0].mxu0
  %355 = vmatprep.mubr.bf16.mxu0 0
  %356 = vmatmul.mubr.bf16.gmra.mrb[0].mxu0 %v236
  %v357 = vpop.f32.mrb[0].mxu0
  %v358 = vadd.f32 %v96, %v357
  %v359 = vpop.f32.mrb[0].mxu0
  %v360 = vpop.f32.mrb[0].mxu0
  %v361 = vadd.f32 %v97, %v360
  %v362 = vpop.f32.mrb[0].mxu0
  %363 = vmatprep.mubr.bf16.mxu0 0
  %364 = vmatmul.mubr.bf16.gmra.mrb[0].mxu0 %v239
  %v365 = vpop.f32.mrb[0].mxu0
  %v366 = vadd.f32 %v98, %v365
  %v367 = vpop.f32.mrb[0].mxu0
  %v368 = vpop.f32.mrb[0].mxu0
  %v369 = vadd.f32 %v99, %v368
  %v370 = vpop.f32.mrb[0].mxu0
  %371 = vmatprep.mubr.bf16.mxu0 0
  %372 = vmatmul.mubr.bf16.gmra.mrb[0].mxu0 %v242
  %v373 = vpop.f32.mrb[0].mxu0
  %v374 = vadd.f32 %v100, %v373
  %v375 = vpop.f32.mrb[0].mxu0
  %v376 = vpop.f32.mrb[0].mxu0
  %v377 = vadd.f32 %v101, %v376
  %v378 = vpop.f32.mrb[0].mxu0
  %379 = vmatprep.mubr.bf16.mxu0 0
  %380 = vmatmul.mubr.bf16.gmra.mrb[0].mxu0 %v245
  %v381 = vpop.f32.mrb[0].mxu0
  %v382 = vadd.f32 %v102, %v381
  %v383 = vpop.f32.mrb[0].mxu0
  %v384 = vpop.f32.mrb[0].mxu0
  %v385 = vadd.f32 %v103, %v384
  %v386 = vpop.f32.mrb[0].mxu0
  %387 = vmatprep.mubr.bf16.mxu0 0
  %388 = vmatmul.mubr.bf16.gmra.mrb[0].mxu0 %v248
  %v389 = vpop.f32.mrb[0].mxu0
  %v390 = vadd.f32 %v104, %v389
  %v391 = vpop.f32.mrb[0].mxu0
  %v392 = vpop.f32.mrb[0].mxu0
  %v393 = vadd.f32 %v105, %v392
  %v394 = vpop.f32.mrb[0].mxu0
  %395 = vmatprep.mubr.bf16.mxu0 0
  %396 = vmatmul.mubr.bf16.gmra.mrb[0].mxu0 %v251
  %v397 = vpop.f32.mrb[0].mxu0
  %v398 = vadd.f32 %v106, %v397
  %v399 = vpop.f32.mrb[0].mxu0
  %v400 = vpop.f32.mrb[0].mxu0
  %v401 = vadd.f32 %v107, %v400
  %v402 = vpop.f32.mrb[0].mxu0
  %403 = vmatprep.mubr.bf16.mxu0 0
  %404 = vmatmul.mubr.bf16.gmra.mrb[0].mxu0 %v254
  %v405 = vpop.f32.mrb[0].mxu0
  %v406 = vadd.f32 %v108, %v405
  %v407 = vpop.f32.mrb[0].mxu0
  %v408 = vpop.f32.mrb[0].mxu0
  %v409 = vadd.f32 %v109, %v408
  %v410 = vpop.f32.mrb[0].mxu0
  %411 = vmatprep.mubr.bf16.mxu0 0
  %412 = vmatmul.mubr.bf16.gmra.mrb[0].mxu0 %v257
  %v413 = vpop.f32.mrb[0].mxu0
  %v414 = vadd.f32 %v110, %v413
  %v415 = vpop.f32.mrb[0].mxu0
  %v416 = vpop.f32.mrb[0].mxu0
  %v417 = vadd.f32 %v111, %v416
  %v418 = vpop.f32.mrb[0].mxu0
  %419 = vdwg.mxu0
  %v420 = vld [vmem:[%s10] sm:$0xf]
  %v421 = vld [vmem:[%s10 + $0x4] sm:$0xf]
  %v422 = vld [vmem:[%s10 + $0x8] sm:$0xf]
  %v423 = vld [vmem:[%s10 + $0xc] sm:$0xf]
  %v424 = vld [vmem:[%s10 + $0x10] sm:$0xf]
  %v425 = vld [vmem:[%s10 + $0x14] sm:$0xf]
  %v426 = vld [vmem:[%s10 + $0x18] sm:$0xf]
  %v427 = vld [vmem:[%s10 + $0x1c] sm:$0xf]
  %v428 = vld [vmem:[%s10 + $0x20] sm:$0xf]
  %v429 = vld [vmem:[%s10 + $0x24] sm:$0xf]
  %v430 = vld [vmem:[%s10 + $0x28] sm:$0xf]
  %v431 = vld [vmem:[%s10 + $0x2c] sm:$0xf]
  %v432 = vld [vmem:[%s10 + $0x30] sm:$0xf]
  %v433 = vld [vmem:[%s10 + $0x34] sm:$0xf]
  %v434 = vld [vmem:[%s10 + $0x38] sm:$0xf]
  %v435 = vld [vmem:[%s10 + $0x3c] sm:$0xf]
  %v436 = vld [vmem:[%s11] sm:$0xff]
  %v437 = vld [vmem:[%s11 + $0x8] sm:$0xff]
  %v438 = vld [vmem:[%s11 + $0x10] sm:$0xff]
  %v439 = vld [vmem:[%s11 + $0x18] sm:$0xff]
  %v440 = vld [vmem:[%s11 + $0x20] sm:$0xff]
  %v441 = vld [vmem:[%s11 + $0x28] sm:$0xff]
  %v442 = vld [vmem:[%s11 + $0x30] sm:$0xff]
  %v443 = vld [vmem:[%s11 + $0x38] sm:$0xff]
  %v444 = vld [vmem:[%s11 + $0x40] sm:$0xff]
  %v445 = vld [vmem:[%s11 + $0x48] sm:$0xff]
  %v446 = vld [vmem:[%s11 + $0x50] sm:$0xff]
  %v447 = vld [vmem:[%s11 + $0x58] sm:$0xff]
  %v448 = vld [vmem:[%s11 + $0x60] sm:$0xff]
  %v449 = vld [vmem:[%s11 + $0x68] sm:$0xff]
  %v450 = vld [vmem:[%s11 + $0x70] sm:$0xff]
  %v451 = vld [vmem:[%s11 + $0x78] sm:$0xff]
  %v452 = vld [vmem:[%s8 + $0x3] sm:$0x1]
  %v453 = vld [vmem:[%s7] sm:$0xff]
  %vm454 = vcmask 261120
  %v455 = vsel %vm454, %v294, 0.0
  %456 = vadd.xlane.f32.xlu0 %v455
  %v457 = vpop.xlane.xlu0 %456
  %v458 = vsel %vm454, %v297, 0.0
  %459 = vadd.xlane.f32.xlu0 %v458
  %v460 = vpop.xlane.xlu0 %459
  %v461 = vsel %vm454, %v302, 0.0
  %462 = vadd.xlane.f32.xlu0 %v461
  %v463 = vpop.xlane.xlu0 %462
  %v464 = vsel %vm454, %v305, 0.0
  %465 = vadd.xlane.f32.xlu0 %v464
  %v466 = vpop.xlane.xlu0 %465
  %v467 = vsel %vm454, %v310, 0.0
  %468 = vadd.xlane.f32.xlu0 %v467
  %v469 = vpop.xlane.xlu0 %468
  %v470 = vsel %vm454, %v313, 0.0
  %471 = vadd.xlane.f32.xlu0 %v470
  %v472 = vpop.xlane.xlu0 %471
  %v473 = vsel %vm454, %v318, 0.0
  %474 = vadd.xlane.f32.xlu0 %v473
  %v475 = vpop.xlane.xlu0 %474
  %v476 = vsel %vm454, %v321, 0.0
  %477 = vadd.xlane.f32.xlu0 %v476
  %v478 = vpop.xlane.xlu0 %477
  %v479 = vsel %vm454, %v326, 0.0
  %480 = vadd.xlane.f32.xlu0 %v479
  %v481 = vpop.xlane.xlu0 %480
  %v482 = vsel %vm454, %v329, 0.0
  %483 = vadd.xlane.f32.xlu0 %v482
  %v484 = vpop.xlane.xlu0 %483
  %v485 = vsel %vm454, %v334, 0.0
  %486 = vadd.xlane.f32.xlu0 %v485
  %v487 = vpop.xlane.xlu0 %486
  %v488 = vsel %vm454, %v337, 0.0
  %489 = vadd.xlane.f32.xlu0 %v488
  %v490 = vpop.xlane.xlu0 %489
  %v491 = vsel %vm454, %v342, 0.0
  %492 = vadd.xlane.f32.xlu0 %v491
  %v493 = vpop.xlane.xlu0 %492
  %v494 = vsel %vm454, %v345, 0.0
  %495 = vadd.xlane.f32.xlu0 %v494
  %v496 = vpop.xlane.xlu0 %495
  %v497 = vsel %vm454, %v350, 0.0
  %498 = vadd.xlane.f32.xlu0 %v497
  %v499 = vpop.xlane.xlu0 %498
  %v500 = vsel %vm454, %v353, 0.0
  %501 = vadd.xlane.f32.xlu0 %v500
  %v502 = vpop.xlane.xlu0 %501
  %v503 = vsel %vm454, %v358, 0.0
  %504 = vadd.xlane.f32.xlu0 %v503
  %v505 = vpop.xlane.xlu0 %504
  %v506 = vsel %vm454, %v361, 0.0
  %507 = vadd.xlane.f32.xlu0 %v506
  %v508 = vpop.xlane.xlu0 %507
  %v509 = vsel %vm454, %v366, 0.0
  %510 = vadd.xlane.f32.xlu0 %v509
  %v511 = vpop.xlane.xlu0 %510
  %v512 = vsel %vm454, %v369, 0.0
  %513 = vadd.xlane.f32.xlu0 %v512
  %v514 = vpop.xlane.xlu0 %513
  %v515 = vsel %vm454, %v374, 0.0
  %516 = vadd.xlane.f32.xlu0 %v515
  %v517 = vpop.xlane.xlu0 %516
  %v518 = vsel %vm454, %v377, 0.0
  %519 = vadd.xlane.f32.xlu0 %v518
  %v520 = vpop.xlane.xlu0 %519
  %v521 = vsel %vm454, %v382, 0.0
  %522 = vadd.xlane.f32.xlu0 %v521
  %v523 = vpop.xlane.xlu0 %522
  %v524 = vsel %vm454, %v385, 0.0
  %525 = vadd.xlane.f32.xlu0 %v524
  %v526 = vpop.xlane.xlu0 %525
  %v527 = vsel %vm454, %v390, 0.0
  %528 = vadd.xlane.f32.xlu0 %v527
  %v529 = vpop.xlane.xlu0 %528
  %v530 = vsel %vm454, %v393, 0.0
  %531 = vadd.xlane.f32.xlu0 %v530
  %v532 = vpop.xlane.xlu0 %531
  %v533 = vsel %vm454, %v398, 0.0
  %534 = vadd.xlane.f32.xlu0 %v533
  %v535 = vpop.xlane.xlu0 %534
  %v536 = vsel %vm454, %v401, 0.0
  %537 = vadd.xlane.f32.xlu0 %v536
  %v538 = vpop.xlane.xlu0 %537
  %v539 = vsel %vm454, %v406, 0.0
  %540 = vadd.xlane.f32.xlu0 %v539
  %v541 = vpop.xlane.xlu0 %540
  %v542 = vsel %vm454, %v409, 0.0
  %543 = vadd.xlane.f32.xlu0 %v542
  %v544 = vpop.xlane.xlu0 %543
  %v545 = vsel %vm454, %v414, 0.0
  %546 = vadd.xlane.f32.xlu0 %v545
  %v547 = vpop.xlane.xlu0 %546
  %v548 = vsel %vm454, %v417, 0.0
  %549 = vadd.xlane.f32.xlu0 %v548
  %v550 = vpop.xlane.xlu0 %549
  %v551 = vrcp.pop 32.0
  %v552 = vmul.f32 %v457, %v551
  %v553 = vmul.f32 %v460, %v551
  %v554 = vmul.f32 %v463, %v551
  %v555 = vmul.f32 %v466, %v551
  %v556 = vmul.f32 %v469, %v551
  %v557 = vmul.f32 %v472, %v551
  %v558 = vmul.f32 %v475, %v551
  %v559 = vmul.f32 %v478, %v551
  %v560 = vmul.f32 %v481, %v551
  %v561 = vmul.f32 %v484, %v551
  %v562 = vmul.f32 %v487, %v551
  %v563 = vmul.f32 %v490, %v551
  %v564 = vmul.f32 %v493, %v551
  %v565 = vmul.f32 %v496, %v551
  %v566 = vmul.f32 %v499, %v551
  %v567 = vmul.f32 %v502, %v551
  %v568 = vmul.f32 %v505, %v551
  %v569 = vmul.f32 %v508, %v551
  %v570 = vmul.f32 %v511, %v551
  %v571 = vmul.f32 %v514, %v551
  %v572 = vmul.f32 %v517, %v551
  %v573 = vmul.f32 %v520, %v551
  %v574 = vmul.f32 %v523, %v551
  %v575 = vmul.f32 %v526, %v551
  %v576 = vmul.f32 %v529, %v551
  %v577 = vmul.f32 %v532, %v551
  %v578 = vmul.f32 %v535, %v551
  %v579 = vmul.f32 %v538, %v551
  %v580 = vmul.f32 %v541, %v551
  %v581 = vmul.f32 %v544, %v551
  %v582 = vmul.f32 %v547, %v551
  %v583 = vmul.f32 %v550, %v551
  %v584 = vsub.f32 %v294, %v552
  %v585 = vsub.f32 %v297, %v553
  %v586 = vsub.f32 %v302, %v554
  %v587 = vsub.f32 %v305, %v555
  %v588 = vsub.f32 %v310, %v556
  %v589 = vsub.f32 %v313, %v557
  %v590 = vsub.f32 %v318, %v558
  %v591 = vsub.f32 %v321, %v559
  %v592 = vsub.f32 %v326, %v560
  %v593 = vsub.f32 %v329, %v561
  %v594 = vsub.f32 %v334, %v562
  %v595 = vsub.f32 %v337, %v563
  %v596 = vsub.f32 %v342, %v564
  %v597 = vsub.f32 %v345, %v565
  %v598 = vsub.f32 %v350, %v566
  %v599 = vsub.f32 %v353, %v567
  %v600 = vsub.f32 %v358, %v568
  %v601 = vsub.f32 %v361, %v569
  %v602 = vsub.f32 %v366, %v570
  %v603 = vsub.f32 %v369, %v571
  %v604 = vsub.f32 %v374, %v572
  %v605 = vsub.f32 %v377, %v573
  %v606 = vsub.f32 %v382, %v574
  %v607 = vsub.f32 %v385, %v575
  %v608 = vsub.f32 %v390, %v576
  %v609 = vsub.f32 %v393, %v577
  %v610 = vsub.f32 %v398, %v578
  %v611 = vsub.f32 %v401, %v579
  %v612 = vsub.f32 %v406, %v580
  %v613 = vsub.f32 %v409, %v581
  %v614 = vsub.f32 %v414, %v582
  %v615 = vsub.f32 %v417, %v583
  %v616 = vmul.f32 %v584, %v584
  %v617 = vmul.f32 %v585, %v585
  %v618 = vmul.f32 %v586, %v586
  %v619 = vmul.f32 %v587, %v587
  %v620 = vmul.f32 %v588, %v588
  %v621 = vmul.f32 %v589, %v589
  %v622 = vmul.f32 %v590, %v590
  %v623 = vmul.f32 %v591, %v591
  %v624 = vmul.f32 %v592, %v592
  %v625 = vmul.f32 %v593, %v593
  %v626 = vmul.f32 %v594, %v594
  %v627 = vmul.f32 %v595, %v595
  %v628 = vmul.f32 %v596, %v596
  %v629 = vmul.f32 %v597, %v597
  %v630 = vmul.f32 %v598, %v598
  %v631 = vmul.f32 %v599, %v599
  %v632 = vmul.f32 %v600, %v600
  %v633 = vmul.f32 %v601, %v601
  %v634 = vmul.f32 %v602, %v602
  %v635 = vmul.f32 %v603, %v603
  %v636 = vmul.f32 %v604, %v604
  %v637 = vmul.f32 %v605, %v605
  %v638 = vmul.f32 %v606, %v606
  %v639 = vmul.f32 %v607, %v607
  %v640 = vmul.f32 %v608, %v608
  %v641 = vmul.f32 %v609, %v609
  %v642 = vmul.f32 %v610, %v610
  %v643 = vmul.f32 %v611, %v611
  %v644 = vmul.f32 %v612, %v612
  %v645 = vmul.f32 %v613, %v613
  %v646 = vmul.f32 %v614, %v614
  %v647 = vmul.f32 %v615, %v615
  %v648 = vsel %vm454, %v616, 0.0
  %649 = vadd.xlane.f32.xlu0 %v648
  %v650 = vpop.xlane.xlu0 %649
  %v651 = vsel %vm454, %v617, 0.0
  %652 = vadd.xlane.f32.xlu0 %v651
  %v653 = vpop.xlane.xlu0 %652
  %v654 = vsel %vm454, %v618, 0.0
  %655 = vadd.xlane.f32.xlu0 %v654
  %v656 = vpop.xlane.xlu0 %655
  %v657 = vsel %vm454, %v619, 0.0
  %658 = vadd.xlane.f32.xlu0 %v657
  %v659 = vpop.xlane.xlu0 %658
  %v660 = vsel %vm454, %v620, 0.0
  %661 = vadd.xlane.f32.xlu0 %v660
  %v662 = vpop.xlane.xlu0 %661
  %v663 = vsel %vm454, %v621, 0.0
  %664 = vadd.xlane.f32.xlu0 %v663
  %v665 = vpop.xlane.xlu0 %664
  %v666 = vsel %vm454, %v622, 0.0
  %667 = vadd.xlane.f32.xlu0 %v666
  %v668 = vpop.xlane.xlu0 %667
  %v669 = vsel %vm454, %v623, 0.0
  %670 = vadd.xlane.f32.xlu0 %v669
  %v671 = vpop.xlane.xlu0 %670
  %v672 = vsel %vm454, %v624, 0.0
  %673 = vadd.xlane.f32.xlu0 %v672
  %v674 = vpop.xlane.xlu0 %673
  %v675 = vsel %vm454, %v625, 0.0
  %676 = vadd.xlane.f32.xlu0 %v675
  %v677 = vpop.xlane.xlu0 %676
  %v678 = vsel %vm454, %v626, 0.0
  %679 = vadd.xlane.f32.xlu0 %v678
  %v680 = vpop.xlane.xlu0 %679
  %v681 = vsel %vm454, %v627, 0.0
  %682 = vadd.xlane.f32.xlu0 %v681
  %v683 = vpop.xlane.xlu0 %682
  %v684 = vsel %vm454, %v628, 0.0
  %685 = vadd.xlane.f32.xlu0 %v684
  %v686 = vpop.xlane.xlu0 %685
  %v687 = vsel %vm454, %v629, 0.0
  %688 = vadd.xlane.f32.xlu0 %v687
  %v689 = vpop.xlane.xlu0 %688
  %v690 = vsel %vm454, %v630, 0.0
  %691 = vadd.xlane.f32.xlu0 %v690
  %v692 = vpop.xlane.xlu0 %691
  %v693 = vsel %vm454, %v631, 0.0
  %694 = vadd.xlane.f32.xlu0 %v693
  %v695 = vpop.xlane.xlu0 %694
  %v696 = vsel %vm454, %v632, 0.0
  %697 = vadd.xlane.f32.xlu0 %v696
  %v698 = vpop.xlane.xlu0 %697
  %v699 = vsel %vm454, %v633, 0.0
  %700 = vadd.xlane.f32.xlu0 %v699
  %v701 = vpop.xlane.xlu0 %700
  %v702 = vsel %vm454, %v634, 0.0
  %703 = vadd.xlane.f32.xlu0 %v702
  %v704 = vpop.xlane.xlu0 %703
  %v705 = vsel %vm454, %v635, 0.0
  %706 = vadd.xlane.f32.xlu0 %v705
  %v707 = vpop.xlane.xlu0 %706
  %v708 = vsel %vm454, %v636, 0.0
  %709 = vadd.xlane.f32.xlu0 %v708
  %v710 = vpop.xlane.xlu0 %709
  %v711 = vsel %vm454, %v637, 0.0
  %712 = vadd.xlane.f32.xlu0 %v711
  %v713 = vpop.xlane.xlu0 %712
  %v714 = vsel %vm454, %v638, 0.0
  %715 = vadd.xlane.f32.xlu0 %v714
  %v716 = vpop.xlane.xlu0 %715
  %v717 = vsel %vm454, %v639, 0.0
  %718 = vadd.xlane.f32.xlu0 %v717
  %v719 = vpop.xlane.xlu0 %718
  %v720 = vsel %vm454, %v640, 0.0
  %721 = vadd.xlane.f32.xlu0 %v720
  %v722 = vpop.xlane.xlu0 %721
  %v723 = vsel %vm454, %v641, 0.0
  %724 = vadd.xlane.f32.xlu0 %v723
  %v725 = vpop.xlane.xlu0 %724
  %v726 = vsel %vm454, %v642, 0.0
  %727 = vadd.xlane.f32.xlu0 %v726
  %v728 = vpop.xlane.xlu0 %727
  %v729 = vsel %vm454, %v643, 0.0
  %730 = vadd.xlane.f32.xlu0 %v729
  %v731 = vpop.xlane.xlu0 %730
  %v732 = vsel %vm454, %v644, 0.0
  %733 = vadd.xlane.f32.xlu0 %v732
  %v734 = vpop.xlane.xlu0 %733
  %v735 = vsel %vm454, %v645, 0.0
  %736 = vadd.xlane.f32.xlu0 %v735
  %v737 = vpop.xlane.xlu0 %736
  %v738 = vsel %vm454, %v646, 0.0
  %739 = vadd.xlane.f32.xlu0 %v738
  %v740 = vpop.xlane.xlu0 %739
  %v741 = vsel %vm454, %v647, 0.0
  %742 = vadd.xlane.f32.xlu0 %v741
  %v743 = vpop.xlane.xlu0 %742
  %v744 = vmul.f32 %v650, %v551
  %v745 = vmul.f32 %v653, %v551
  %v746 = vmul.f32 %v656, %v551
  %v747 = vmul.f32 %v659, %v551
  %v748 = vmul.f32 %v662, %v551
  %v749 = vmul.f32 %v665, %v551
  %v750 = vmul.f32 %v668, %v551
  %v751 = vmul.f32 %v671, %v551
  %v752 = vmul.f32 %v674, %v551
  %v753 = vmul.f32 %v677, %v551
  %v754 = vmul.f32 %v680, %v551
  %v755 = vmul.f32 %v683, %v551
  %v756 = vmul.f32 %v686, %v551
  %v757 = vmul.f32 %v689, %v551
  %v758 = vmul.f32 %v692, %v551
  %v759 = vmul.f32 %v695, %v551
  %v760 = vmul.f32 %v698, %v551
  %v761 = vmul.f32 %v701, %v551
  %v762 = vmul.f32 %v704, %v551
  %v763 = vmul.f32 %v707, %v551
  %v764 = vmul.f32 %v710, %v551
  %v765 = vmul.f32 %v713, %v551
  %v766 = vmul.f32 %v716, %v551
  %v767 = vmul.f32 %v719, %v551
  %v768 = vmul.f32 %v722, %v551
  %v769 = vmul.f32 %v725, %v551
  %v770 = vmul.f32 %v728, %v551
  %v771 = vmul.f32 %v731, %v551
  %v772 = vmul.f32 %v734, %v551
  %v773 = vmul.f32 %v737, %v551
  %v774 = vmul.f32 %v740, %v551
  %v775 = vmul.f32 %v743, %v551
  %v776 = vadd.f32 %v744, 1e-05
  %v777 = vadd.f32 %v745, 1e-05
  %v778 = vadd.f32 %v746, 1e-05
  %v779 = vadd.f32 %v747, 1e-05
  %v780 = vadd.f32 %v748, 1e-05
  %v781 = vadd.f32 %v749, 1e-05
  %v782 = vadd.f32 %v750, 1e-05
  %v783 = vadd.f32 %v751, 1e-05
  %v784 = vadd.f32 %v752, 1e-05
  %v785 = vadd.f32 %v753, 1e-05
  %v786 = vadd.f32 %v754, 1e-05
  %v787 = vadd.f32 %v755, 1e-05
  %v788 = vadd.f32 %v756, 1e-05
  %v789 = vadd.f32 %v757, 1e-05
  %v790 = vadd.f32 %v758, 1e-05
  %v791 = vadd.f32 %v759, 1e-05
  %v792 = vadd.f32 %v760, 1e-05
  %v793 = vadd.f32 %v761, 1e-05
  %v794 = vadd.f32 %v762, 1e-05
  %v795 = vadd.f32 %v763, 1e-05
  %v796 = vadd.f32 %v764, 1e-05
  %v797 = vadd.f32 %v765, 1e-05
  %v798 = vadd.f32 %v766, 1e-05
  %v799 = vadd.f32 %v767, 1e-05
  %v800 = vadd.f32 %v768, 1e-05
  %v801 = vadd.f32 %v769, 1e-05
  %v802 = vadd.f32 %v770, 1e-05
  %v803 = vadd.f32 %v771, 1e-05
  %v804 = vadd.f32 %v772, 1e-05
  %v805 = vadd.f32 %v773, 1e-05
  %v806 = vadd.f32 %v774, 1e-05
  %v807 = vadd.f32 %v775, 1e-05
  %v808 = vrsqrt.pop %v776
  %v809 = vrsqrt.pop %v777
  %v810 = vrsqrt.pop %v778
  %v811 = vrsqrt.pop %v779
  %v812 = vrsqrt.pop %v780
  %v813 = vrsqrt.pop %v781
  %v814 = vrsqrt.pop %v782
  %v815 = vrsqrt.pop %v783
  %v816 = vrsqrt.pop %v784
  %v817 = vrsqrt.pop %v785
  %v818 = vrsqrt.pop %v786
  %v819 = vrsqrt.pop %v787
  %v820 = vrsqrt.pop %v788
  %v821 = vrsqrt.pop %v789
  %v822 = vrsqrt.pop %v790
  %v823 = vrsqrt.pop %v791
  %v824 = vrsqrt.pop %v792
  %v825 = vrsqrt.pop %v793
  %v826 = vrsqrt.pop %v794
  %v827 = vrsqrt.pop %v795
  %v828 = vrsqrt.pop %v796
  %v829 = vrsqrt.pop %v797
  %v830 = vrsqrt.pop %v798
  %v831 = vrsqrt.pop %v799
  %v832 = vrsqrt.pop %v800
  %v833 = vrsqrt.pop %v801
  %v834 = vrsqrt.pop %v802
  %v835 = vrsqrt.pop %v803
  %v836 = vrsqrt.pop %v804
  %v837 = vrsqrt.pop %v805
  %v838 = vrsqrt.pop %v806
  %v839 = vrsqrt.pop %v807
  %v840 = vmul.f32 %v584, %v808
  %v841 = vmul.f32 %v585, %v809
  %v842 = vmul.f32 %v586, %v810
  %v843 = vmul.f32 %v587, %v811
  %v844 = vmul.f32 %v588, %v812
  %v845 = vmul.f32 %v589, %v813
  %v846 = vmul.f32 %v590, %v814
  %v847 = vmul.f32 %v591, %v815
  %v848 = vmul.f32 %v592, %v816
  %v849 = vmul.f32 %v593, %v817
  %v850 = vmul.f32 %v594, %v818
  %v851 = vmul.f32 %v595, %v819
  %v852 = vmul.f32 %v596, %v820
  %v853 = vmul.f32 %v597, %v821
  %v854 = vmul.f32 %v598, %v822
  %v855 = vmul.f32 %v599, %v823
  %v856 = vmul.f32 %v600, %v824
  %v857 = vmul.f32 %v601, %v825
  %v858 = vmul.f32 %v602, %v826
  %v859 = vmul.f32 %v603, %v827
  %v860 = vmul.f32 %v604, %v828
  %v861 = vmul.f32 %v605, %v829
  %v862 = vmul.f32 %v606, %v830
  %v863 = vmul.f32 %v607, %v831
  %v864 = vmul.f32 %v608, %v832
  %v865 = vmul.f32 %v609, %v833
  %v866 = vmul.f32 %v610, %v834
  %v867 = vmul.f32 %v611, %v835
  %v868 = vmul.f32 %v612, %v836
  %v869 = vmul.f32 %v613, %v837
  %v870 = vmul.f32 %v614, %v838
  %v871 = vmul.f32 %v615, %v839
  %v872 = vlaneseq
  %v873 = vshrl.u32 %v872, 7
  %v874 = vsub.s32 0, %v873
  %v875 = vrot.slane %v453, %v874
  %v876 = vmul.f32 %v840, %v875
  %v877 = vmul.f32 %v841, %v875
  %v878 = vmul.f32 %v842, %v875
  %v879 = vmul.f32 %v843, %v875
  %v880 = vmul.f32 %v844, %v875
  %v881 = vmul.f32 %v845, %v875
  %v882 = vmul.f32 %v846, %v875
  %v883 = vmul.f32 %v847, %v875
  %v884 = vmul.f32 %v848, %v875
  %v885 = vmul.f32 %v849, %v875
  %v886 = vmul.f32 %v850, %v875
  %v887 = vmul.f32 %v851, %v875
  %v888 = vmul.f32 %v852, %v875
  %v889 = vmul.f32 %v853, %v875
  %v890 = vmul.f32 %v854, %v875
  %v891 = vmul.f32 %v855, %v875
  %v892 = vmul.f32 %v856, %v875
  %v893 = vmul.f32 %v857, %v875
  %v894 = vmul.f32 %v858, %v875
  %v895 = vmul.f32 %v859, %v875
  %v896 = vmul.f32 %v860, %v875
  %v897 = vmul.f32 %v861, %v875
  %v898 = vmul.f32 %v862, %v875
  %v899 = vmul.f32 %v863, %v875
  %v900 = vmul.f32 %v864, %v875
  %v901 = vmul.f32 %v865, %v875
  %v902 = vmul.f32 %v866, %v875
  %v903 = vmul.f32 %v867, %v875
  %v904 = vmul.f32 %v868, %v875
  %v905 = vmul.f32 %v869, %v875
  %v906 = vmul.f32 %v870, %v875
  %v907 = vmul.f32 %v871, %v875
  %v908 = vlaneseq
  %v909 = vshrl.u32 %v908, 7
  %v910 = vsub.s32 1, %v909
  %v911 = vrot.slane %v453, %v910
  %v912 = vadd.f32 %v876, %v911
  %v913 = vadd.f32 %v877, %v911
  %v914 = vadd.f32 %v878, %v911
  %v915 = vadd.f32 %v879, %v911
  %v916 = vadd.f32 %v880, %v911
  %v917 = vadd.f32 %v881, %v911
  %v918 = vadd.f32 %v882, %v911
  %v919 = vadd.f32 %v883, %v911
  %v920 = vadd.f32 %v884, %v911
  %v921 = vadd.f32 %v885, %v911
  %v922 = vadd.f32 %v886, %v911
  %v923 = vadd.f32 %v887, %v911
  %v924 = vadd.f32 %v888, %v911
  %v925 = vadd.f32 %v889, %v911
  %v926 = vadd.f32 %v890, %v911
  %v927 = vadd.f32 %v891, %v911
  %v928 = vadd.f32 %v892, %v911
  %v929 = vadd.f32 %v893, %v911
  %v930 = vadd.f32 %v894, %v911
  %v931 = vadd.f32 %v895, %v911
  %v932 = vadd.f32 %v896, %v911
  %v933 = vadd.f32 %v897, %v911
  %v934 = vadd.f32 %v898, %v911
  %v935 = vadd.f32 %v899, %v911
  %v936 = vadd.f32 %v900, %v911
  %v937 = vadd.f32 %v901, %v911
  %v938 = vadd.f32 %v902, %v911
  %v939 = vadd.f32 %v903, %v911
  %v940 = vadd.f32 %v904, %v911
  %v941 = vadd.f32 %v905, %v911
  %v942 = vadd.f32 %v906, %v911
  %v943 = vadd.f32 %v907, %v911
  %v944 = vpack.c.bf16 %v913, %v912
  %v945 = vpack.c.bf16 %v915, %v914
  %v946 = vpack.c.bf16 %v917, %v916
  %v947 = vpack.c.bf16 %v919, %v918
  %v948 = vpack.c.bf16 %v921, %v920
  %v949 = vpack.c.bf16 %v923, %v922
  %v950 = vpack.c.bf16 %v925, %v924
  %v951 = vpack.c.bf16 %v927, %v926
  %v952 = vpack.c.bf16 %v929, %v928
  %v953 = vpack.c.bf16 %v931, %v930
  %v954 = vpack.c.bf16 %v933, %v932
  %v955 = vpack.c.bf16 %v935, %v934
  %v956 = vpack.c.bf16 %v937, %v936
  %v957 = vpack.c.bf16 %v939, %v938
  %v958 = vpack.c.bf16 %v941, %v940
  %v959 = vpack.c.bf16 %v943, %v942
  %v960 = vld [vmem:[%s3] sm:$0xf]
  %v961 = vld [vmem:[%s3 + $0x4] sm:$0xf]
  %v962 = vld [vmem:[%s3 + $0x8] sm:$0xf]
  %v963 = vld [vmem:[%s3 + $0xc] sm:$0xf]
  %v968 = vunpack.c.l.b16 %v960
  %v969 = vunpack.c.l.b16 %v961
  %v970 = vunpack.c.l.b16 %v962
  %v971 = vunpack.c.l.b16 %v963
  %v972 = vpack.c.b16 %v969, %v968
  %v973 = vpack.c.b16 %v971, %v970
  %v977 = vsel %vm454, %v944, 0
  %v980 = vsel %vm454, %v945, 0
  %v983 = vsel %vm454, %v946, 0
  %v986 = vsel %vm454, %v947, 0
  %v989 = vsel %vm454, %v948, 0
  %v992 = vsel %vm454, %v949, 0
  %v995 = vsel %vm454, %v950, 0
  %v998 = vsel %vm454, %v951, 0
  %v1001 = vsel %vm454, %v952, 0
  %v1004 = vsel %vm454, %v953, 0
  %v1007 = vsel %vm454, %v954, 0
  %v1010 = vsel %vm454, %v955, 0
  %v1013 = vsel %vm454, %v956, 0
  %v1016 = vsel %vm454, %v957, 0
  %v1019 = vsel %vm454, %v958, 0
  %v1022 = vsel %vm454, %v959, 0
  %1024 = vmatprep.subr.bf16.mxu0 0
  %1025 = vmatpush1.bf16.msra.mxu0 %v972
  %1026 = vmatprep.subr.bf16.mxu0 0
  %1027 = vmatpush1.bf16.msra.mxu0 %v973
  %1028 = vmatprep.subr.bf16.mxu0 0
  %1029 = vmatpush1.bf16.msra.mxu0 0
  %1030 = vmatprep.subr.bf16.mxu0 0
  %1031 = vmatpush1.bf16.msra.mxu0 0
  %1032 = vmatprep.subr.bf16.mxu0 0
  %1033 = vmatpush1.bf16.msra.mxu0 0
  %1034 = vmatprep.subr.bf16.mxu0 0
  %1035 = vmatpush1.bf16.msra.mxu0 0
  %1036 = vmatprep.subr.bf16.mxu0 0
  %1037 = vmatpush1.bf16.msra.mxu0 0
  %1038 = vmatprep.subr.bf16.mxu0 0
  %1039 = vmatpush1.bf16.msra.mxu0 0
  %1040 = vmatprep.subr.bf16.mxu0 0
  %1041 = vmatpush1.bf16.msra.mxu0 0
  %1042 = vmatprep.subr.bf16.mxu0 0
  %1043 = vmatpush1.bf16.msra.mxu0 0
  %1044 = vmatprep.subr.bf16.mxu0 0
  %1045 = vmatpush1.bf16.msra.mxu0 0
  %1046 = vmatprep.subr.bf16.mxu0 0
  %1047 = vmatpush1.bf16.msra.mxu0 0
  %1048 = vmatprep.subr.bf16.mxu0 0
  %1049 = vmatpush1.bf16.msra.mxu0 0
  %1050 = vmatprep.subr.bf16.mxu0 0
  %1051 = vmatpush1.bf16.msra.mxu0 0
  %1052 = vmatprep.subr.bf16.mxu0 0
  %1053 = vmatpush1.bf16.msra.mxu0 0
  %1054 = vmatprep.subr.bf16.mxu0 0
  %1055 = vmatpush1.bf16.msra.mxu0 0
  %1056 = vmatprep.mubr.bf16.mxu0 0
  %1057 = vmatmul.mubr.bf16.gmra.mrb[0].mxu0 %v977
  %v1058 = vpop.f32.mrb[0].mxu0
  %v1059 = vadd.f32 0.0, %v1058
  %v1060 = vpop.f32.mrb[0].mxu0
  %v1061 = vpop.f32.mrb[0].mxu0
  %v1062 = vadd.f32 0.0, %v1061
  %v1063 = vpop.f32.mrb[0].mxu0
  %1064 = vmatprep.mubr.bf16.mxu0 0
  %1065 = vmatmul.mubr.bf16.gmra.mrb[0].mxu0 %v980
  %v1066 = vpop.f32.mrb[0].mxu0
  %v1067 = vadd.f32 0.0, %v1066
  %v1068 = vpop.f32.mrb[0].mxu0
  %v1069 = vpop.f32.mrb[0].mxu0
  %v1070 = vadd.f32 0.0, %v1069
  %v1071 = vpop.f32.mrb[0].mxu0
  %1072 = vmatprep.mubr.bf16.mxu0 0
  %1073 = vmatmul.mubr.bf16.gmra.mrb[0].mxu0 %v983
  %v1074 = vpop.f32.mrb[0].mxu0
  %v1075 = vadd.f32 0.0, %v1074
  %v1076 = vpop.f32.mrb[0].mxu0
  %v1077 = vpop.f32.mrb[0].mxu0
  %v1078 = vadd.f32 0.0, %v1077
  %v1079 = vpop.f32.mrb[0].mxu0
  %1080 = vmatprep.mubr.bf16.mxu0 0
  %1081 = vmatmul.mubr.bf16.gmra.mrb[0].mxu0 %v986
  %v1082 = vpop.f32.mrb[0].mxu0
  %v1083 = vadd.f32 0.0, %v1082
  %v1084 = vpop.f32.mrb[0].mxu0
  %v1085 = vpop.f32.mrb[0].mxu0
  %v1086 = vadd.f32 0.0, %v1085
  %v1087 = vpop.f32.mrb[0].mxu0
  %1088 = vmatprep.mubr.bf16.mxu0 0
  %1089 = vmatmul.mubr.bf16.gmra.mrb[0].mxu0 %v989
  %v1090 = vpop.f32.mrb[0].mxu0
  %v1091 = vadd.f32 0.0, %v1090
  %v1092 = vpop.f32.mrb[0].mxu0
  %v1093 = vpop.f32.mrb[0].mxu0
  %v1094 = vadd.f32 0.0, %v1093
  %v1095 = vpop.f32.mrb[0].mxu0
  %1096 = vmatprep.mubr.bf16.mxu0 0
  %1097 = vmatmul.mubr.bf16.gmra.mrb[0].mxu0 %v992
  %v1098 = vpop.f32.mrb[0].mxu0
  %v1099 = vadd.f32 0.0, %v1098
  %v1100 = vpop.f32.mrb[0].mxu0
  %v1101 = vpop.f32.mrb[0].mxu0
  %v1102 = vadd.f32 0.0, %v1101
  %v1103 = vpop.f32.mrb[0].mxu0
  %1104 = vmatprep.mubr.bf16.mxu0 0
  %1105 = vmatmul.mubr.bf16.gmra.mrb[0].mxu0 %v995
  %v1106 = vpop.f32.mrb[0].mxu0
  %v1107 = vadd.f32 0.0, %v1106
  %v1108 = vpop.f32.mrb[0].mxu0
  %v1109 = vpop.f32.mrb[0].mxu0
  %v1110 = vadd.f32 0.0, %v1109
  %v1111 = vpop.f32.mrb[0].mxu0
  %1112 = vmatprep.mubr.bf16.mxu0 0
  %1113 = vmatmul.mubr.bf16.gmra.mrb[0].mxu0 %v998
  %v1114 = vpop.f32.mrb[0].mxu0
  %v1115 = vadd.f32 0.0, %v1114
  %v1116 = vpop.f32.mrb[0].mxu0
  %v1117 = vpop.f32.mrb[0].mxu0
  %v1118 = vadd.f32 0.0, %v1117
  %v1119 = vpop.f32.mrb[0].mxu0
  %1120 = vmatprep.mubr.bf16.mxu0 0
  %1121 = vmatmul.mubr.bf16.gmra.mrb[0].mxu0 %v1001
  %v1122 = vpop.f32.mrb[0].mxu0
  %v1123 = vadd.f32 0.0, %v1122
  %v1124 = vpop.f32.mrb[0].mxu0
  %v1125 = vpop.f32.mrb[0].mxu0
  %v1126 = vadd.f32 0.0, %v1125
  %v1127 = vpop.f32.mrb[0].mxu0
  %1128 = vmatprep.mubr.bf16.mxu0 0
  %1129 = vmatmul.mubr.bf16.gmra.mrb[0].mxu0 %v1004
  %v1130 = vpop.f32.mrb[0].mxu0
  %v1131 = vadd.f32 0.0, %v1130
  %v1132 = vpop.f32.mrb[0].mxu0
  %v1133 = vpop.f32.mrb[0].mxu0
  %v1134 = vadd.f32 0.0, %v1133
  %v1135 = vpop.f32.mrb[0].mxu0
  %1136 = vmatprep.mubr.bf16.mxu0 0
  %1137 = vmatmul.mubr.bf16.gmra.mrb[0].mxu0 %v1007
  %v1138 = vpop.f32.mrb[0].mxu0
  %v1139 = vadd.f32 0.0, %v1138
  %v1140 = vpop.f32.mrb[0].mxu0
  %v1141 = vpop.f32.mrb[0].mxu0
  %v1142 = vadd.f32 0.0, %v1141
  %v1143 = vpop.f32.mrb[0].mxu0
  %1144 = vmatprep.mubr.bf16.mxu0 0
  %1145 = vmatmul.mubr.bf16.gmra.mrb[0].mxu0 %v1010
  %v1146 = vpop.f32.mrb[0].mxu0
  %v1147 = vadd.f32 0.0, %v1146
  %v1148 = vpop.f32.mrb[0].mxu0
  %v1149 = vpop.f32.mrb[0].mxu0
  %v1150 = vadd.f32 0.0, %v1149
  %v1151 = vpop.f32.mrb[0].mxu0
  %1152 = vmatprep.mubr.bf16.mxu0 0
  %1153 = vmatmul.mubr.bf16.gmra.mrb[0].mxu0 %v1013
  %v1154 = vpop.f32.mrb[0].mxu0
  %v1155 = vadd.f32 0.0, %v1154
  %v1156 = vpop.f32.mrb[0].mxu0
  %v1157 = vpop.f32.mrb[0].mxu0
  %v1158 = vadd.f32 0.0, %v1157
  %v1159 = vpop.f32.mrb[0].mxu0
  %1160 = vmatprep.mubr.bf16.mxu0 0
  %1161 = vmatmul.mubr.bf16.gmra.mrb[0].mxu0 %v1016
  %v1162 = vpop.f32.mrb[0].mxu0
  %v1163 = vadd.f32 0.0, %v1162
  %v1164 = vpop.f32.mrb[0].mxu0
  %v1165 = vpop.f32.mrb[0].mxu0
  %v1166 = vadd.f32 0.0, %v1165
  %v1167 = vpop.f32.mrb[0].mxu0
  %1168 = vmatprep.mubr.bf16.mxu0 0
  %1169 = vmatmul.mubr.bf16.gmra.mrb[0].mxu0 %v1019
  %v1170 = vpop.f32.mrb[0].mxu0
  %v1171 = vadd.f32 0.0, %v1170
  %v1172 = vpop.f32.mrb[0].mxu0
  %v1173 = vpop.f32.mrb[0].mxu0
  %v1174 = vadd.f32 0.0, %v1173
  %v1175 = vpop.f32.mrb[0].mxu0
  %1176 = vmatprep.mubr.bf16.mxu0 0
  %1177 = vmatmul.mubr.bf16.gmra.mrb[0].mxu0 %v1022
  %v1178 = vpop.f32.mrb[0].mxu0
  %v1179 = vadd.f32 0.0, %v1178
  %v1180 = vpop.f32.mrb[0].mxu0
  %v1181 = vpop.f32.mrb[0].mxu0
  %v1182 = vadd.f32 0.0, %v1181
  %v1183 = vpop.f32.mrb[0].mxu0
  %1184 = vdwg.mxu0
  %v1185 = vpack.c.bf16 %v1062, %v1059
  %v1186 = vpack.c.bf16 %v1070, %v1067
  %v1187 = vpack.c.bf16 %v1078, %v1075
  %v1188 = vpack.c.bf16 %v1086, %v1083
  %v1189 = vpack.c.bf16 %v1094, %v1091
  %v1190 = vpack.c.bf16 %v1102, %v1099
  %v1191 = vpack.c.bf16 %v1110, %v1107
  %v1192 = vpack.c.bf16 %v1118, %v1115
  %v1193 = vpack.c.bf16 %v1126, %v1123
  %v1194 = vpack.c.bf16 %v1134, %v1131
  %v1195 = vpack.c.bf16 %v1142, %v1139
  %v1196 = vpack.c.bf16 %v1150, %v1147
  %v1197 = vpack.c.bf16 %v1158, %v1155
  %v1198 = vpack.c.bf16 %v1166, %v1163
  %v1199 = vpack.c.bf16 %v1174, %v1171
  %v1200 = vpack.c.bf16 %v1182, %v1179
  %v1217 = vunpack.c.l.b16 %v420
  %v1218 = vunpack.c.l.b16 %v421
  %v1219 = vunpack.c.l.b16 %v422
  %v1220 = vunpack.c.l.b16 %v423
  %v1221 = vunpack.c.l.b16 %v424
  %v1222 = vunpack.c.l.b16 %v425
  %v1223 = vunpack.c.l.b16 %v426
  %v1224 = vunpack.c.l.b16 %v427
  %v1225 = vunpack.c.l.b16 %v428
  %v1226 = vunpack.c.l.b16 %v429
  %v1227 = vunpack.c.l.b16 %v430
  %v1228 = vunpack.c.l.b16 %v431
  %v1229 = vunpack.c.l.b16 %v432
  %v1230 = vunpack.c.l.b16 %v433
  %v1231 = vunpack.c.l.b16 %v434
  %v1232 = vunpack.c.l.b16 %v435
  %v1233 = vpack.c.b16 %v1218, %v1217
  %v1234 = vpack.c.b16 %v1220, %v1219
  %v1235 = vpack.c.b16 %v1222, %v1221
  %v1236 = vpack.c.b16 %v1224, %v1223
  %v1237 = vpack.c.b16 %v1226, %v1225
  %v1238 = vpack.c.b16 %v1228, %v1227
  %v1239 = vpack.c.b16 %v1230, %v1229
  %v1240 = vpack.c.b16 %v1232, %v1231
  %1241 = vrot.lane.b32.xlu0 %v1233, 32
  %v1242 = vpop.permute.xlu0 %1241
  %1243 = vrot.lane.b32.xlu0 %v1234, 32
  %v1244 = vpop.permute.xlu0 %1243
  %1245 = vrot.lane.b32.xlu0 %v1235, 32
  %v1246 = vpop.permute.xlu0 %1245
  %1247 = vrot.lane.b32.xlu0 %v1236, 32
  %v1248 = vpop.permute.xlu0 %1247
  %1249 = vrot.lane.b32.xlu0 %v1237, 32
  %v1250 = vpop.permute.xlu0 %1249
  %1251 = vrot.lane.b32.xlu0 %v1238, 32
  %v1252 = vpop.permute.xlu0 %1251
  %1253 = vrot.lane.b32.xlu0 %v1239, 32
  %v1254 = vpop.permute.xlu0 %1253
  %1255 = vrot.lane.b32.xlu0 %v1240, 32
  %v1256 = vpop.permute.xlu0 %1255
  %v1265 = vmul.bf16 %v1185, %v1242
  %v1266 = vmul.bf16 %v1186, %v1244
  %v1267 = vmul.bf16 %v1185, %v1246
  %v1268 = vmul.bf16 %v1186, %v1248
  %v1269 = vmul.bf16 %v1185, %v1250
  %v1270 = vmul.bf16 %v1186, %v1252
  %v1271 = vmul.bf16 %v1185, %v1254
  %v1272 = vmul.bf16 %v1186, %v1256
  %v1273 = vmul.bf16 %v1187, %v1242
  %v1274 = vmul.bf16 %v1188, %v1244
  %v1275 = vmul.bf16 %v1187, %v1246
  %v1276 = vmul.bf16 %v1188, %v1248
  %v1277 = vmul.bf16 %v1187, %v1250
  %v1278 = vmul.bf16 %v1188, %v1252
  %v1279 = vmul.bf16 %v1187, %v1254
  %v1280 = vmul.bf16 %v1188, %v1256
  %v1281 = vmul.bf16 %v1189, %v1242
  %v1282 = vmul.bf16 %v1190, %v1244
  %v1283 = vmul.bf16 %v1189, %v1246
  %v1284 = vmul.bf16 %v1190, %v1248
  %v1285 = vmul.bf16 %v1189, %v1250
  %v1286 = vmul.bf16 %v1190, %v1252
  %v1287 = vmul.bf16 %v1189, %v1254
  %v1288 = vmul.bf16 %v1190, %v1256
  %v1289 = vmul.bf16 %v1191, %v1242
  %v1290 = vmul.bf16 %v1192, %v1244
  %v1291 = vmul.bf16 %v1191, %v1246
  %v1292 = vmul.bf16 %v1192, %v1248
  %v1293 = vmul.bf16 %v1191, %v1250
  %v1294 = vmul.bf16 %v1192, %v1252
  %v1295 = vmul.bf16 %v1191, %v1254
  %v1296 = vmul.bf16 %v1192, %v1256
  %v1297 = vmul.bf16 %v1193, %v1242
  %v1298 = vmul.bf16 %v1194, %v1244
  %v1299 = vmul.bf16 %v1193, %v1246
  %v1300 = vmul.bf16 %v1194, %v1248
  %v1301 = vmul.bf16 %v1193, %v1250
  %v1302 = vmul.bf16 %v1194, %v1252
  %v1303 = vmul.bf16 %v1193, %v1254
  %v1304 = vmul.bf16 %v1194, %v1256
  %v1305 = vmul.bf16 %v1195, %v1242
  %v1306 = vmul.bf16 %v1196, %v1244
  %v1307 = vmul.bf16 %v1195, %v1246
  %v1308 = vmul.bf16 %v1196, %v1248
  %v1309 = vmul.bf16 %v1195, %v1250
  %v1310 = vmul.bf16 %v1196, %v1252
  %v1311 = vmul.bf16 %v1195, %v1254
  %v1312 = vmul.bf16 %v1196, %v1256
  %v1313 = vmul.bf16 %v1197, %v1242
  %v1314 = vmul.bf16 %v1198, %v1244
  %v1315 = vmul.bf16 %v1197, %v1246
  %v1316 = vmul.bf16 %v1198, %v1248
  %v1317 = vmul.bf16 %v1197, %v1250
  %v1318 = vmul.bf16 %v1198, %v1252
  %v1319 = vmul.bf16 %v1197, %v1254
  %v1320 = vmul.bf16 %v1198, %v1256
  %v1321 = vmul.bf16 %v1199, %v1242
  %v1322 = vmul.bf16 %v1200, %v1244
  %v1323 = vmul.bf16 %v1199, %v1246
  %v1324 = vmul.bf16 %v1200, %v1248
  %v1325 = vmul.bf16 %v1199, %v1250
  %v1326 = vmul.bf16 %v1200, %v1252
  %v1327 = vmul.bf16 %v1199, %v1254
  %v1328 = vmul.bf16 %v1200, %v1256
  %1329 = vrot.lane.b32.xlu0 %v1233, 64
  %v1330 = vpop.permute.xlu0 %1329
  %1331 = vrot.lane.b32.xlu0 %v1234, 64
  %v1332 = vpop.permute.xlu0 %1331
  %1333 = vrot.lane.b32.xlu0 %v1235, 64
  %v1334 = vpop.permute.xlu0 %1333
  %1335 = vrot.lane.b32.xlu0 %v1236, 64
  %v1336 = vpop.permute.xlu0 %1335
  %1337 = vrot.lane.b32.xlu0 %v1237, 64
  %v1338 = vpop.permute.xlu0 %1337
  %1339 = vrot.lane.b32.xlu0 %v1238, 64
  %v1340 = vpop.permute.xlu0 %1339
  %1341 = vrot.lane.b32.xlu0 %v1239, 64
  %v1342 = vpop.permute.xlu0 %1341
  %1343 = vrot.lane.b32.xlu0 %v1240, 64
  %v1344 = vpop.permute.xlu0 %1343
  %v1353 = vmul.bf16 %v1185, %v1330
  %v1354 = vmul.bf16 %v1186, %v1332
  %v1355 = vmul.bf16 %v1185, %v1334
  %v1356 = vmul.bf16 %v1186, %v1336
  %v1357 = vmul.bf16 %v1185, %v1338
  %v1358 = vmul.bf16 %v1186, %v1340
  %v1359 = vmul.bf16 %v1185, %v1342
  %v1360 = vmul.bf16 %v1186, %v1344
  %v1361 = vmul.bf16 %v1187, %v1330
  %v1362 = vmul.bf16 %v1188, %v1332
  %v1363 = vmul.bf16 %v1187, %v1334
  %v1364 = vmul.bf16 %v1188, %v1336
  %v1365 = vmul.bf16 %v1187, %v1338
  %v1366 = vmul.bf16 %v1188, %v1340
  %v1367 = vmul.bf16 %v1187, %v1342
  %v1368 = vmul.bf16 %v1188, %v1344
  %v1369 = vmul.bf16 %v1189, %v1330
  %v1370 = vmul.bf16 %v1190, %v1332
  %v1371 = vmul.bf16 %v1189, %v1334
  %v1372 = vmul.bf16 %v1190, %v1336
  %v1373 = vmul.bf16 %v1189, %v1338
  %v1374 = vmul.bf16 %v1190, %v1340
  %v1375 = vmul.bf16 %v1189, %v1342
  %v1376 = vmul.bf16 %v1190, %v1344
  %v1377 = vmul.bf16 %v1191, %v1330
  %v1378 = vmul.bf16 %v1192, %v1332
  %v1379 = vmul.bf16 %v1191, %v1334
  %v1380 = vmul.bf16 %v1192, %v1336
  %v1381 = vmul.bf16 %v1191, %v1338
  %v1382 = vmul.bf16 %v1192, %v1340
  %v1383 = vmul.bf16 %v1191, %v1342
  %v1384 = vmul.bf16 %v1192, %v1344
  %v1385 = vmul.bf16 %v1193, %v1330
  %v1386 = vmul.bf16 %v1194, %v1332
  %v1387 = vmul.bf16 %v1193, %v1334
  %v1388 = vmul.bf16 %v1194, %v1336
  %v1389 = vmul.bf16 %v1193, %v1338
  %v1390 = vmul.bf16 %v1194, %v1340
  %v1391 = vmul.bf16 %v1193, %v1342
  %v1392 = vmul.bf16 %v1194, %v1344
  %v1393 = vmul.bf16 %v1195, %v1330
  %v1394 = vmul.bf16 %v1196, %v1332
  %v1395 = vmul.bf16 %v1195, %v1334
  %v1396 = vmul.bf16 %v1196, %v1336
  %v1397 = vmul.bf16 %v1195, %v1338
  %v1398 = vmul.bf16 %v1196, %v1340
  %v1399 = vmul.bf16 %v1195, %v1342
  %v1400 = vmul.bf16 %v1196, %v1344
  %v1401 = vmul.bf16 %v1197, %v1330
  %v1402 = vmul.bf16 %v1198, %v1332
  %v1403 = vmul.bf16 %v1197, %v1334
  %v1404 = vmul.bf16 %v1198, %v1336
  %v1405 = vmul.bf16 %v1197, %v1338
  %v1406 = vmul.bf16 %v1198, %v1340
  %v1407 = vmul.bf16 %v1197, %v1342
  %v1408 = vmul.bf16 %v1198, %v1344
  %v1409 = vmul.bf16 %v1199, %v1330
  %v1410 = vmul.bf16 %v1200, %v1332
  %v1411 = vmul.bf16 %v1199, %v1334
  %v1412 = vmul.bf16 %v1200, %v1336
  %v1413 = vmul.bf16 %v1199, %v1338
  %v1414 = vmul.bf16 %v1200, %v1340
  %v1415 = vmul.bf16 %v1199, %v1342
  %v1416 = vmul.bf16 %v1200, %v1344
  %1425 = vrot.lane.b32.xlu0 %v1265, 96
  %v1426 = vpop.permute.xlu0 %1425
  %1427 = vrot.lane.b32.xlu0 %v1266, 96
  %v1428 = vpop.permute.xlu0 %1427
  %1429 = vrot.lane.b32.xlu0 %v1267, 96
  %v1430 = vpop.permute.xlu0 %1429
  %1431 = vrot.lane.b32.xlu0 %v1268, 96
  %v1432 = vpop.permute.xlu0 %1431
  %1433 = vrot.lane.b32.xlu0 %v1269, 96
  %v1434 = vpop.permute.xlu0 %1433
  %1435 = vrot.lane.b32.xlu0 %v1270, 96
  %v1436 = vpop.permute.xlu0 %1435
  %1437 = vrot.lane.b32.xlu0 %v1271, 96
  %v1438 = vpop.permute.xlu0 %1437
  %1439 = vrot.lane.b32.xlu0 %v1272, 96
  %v1440 = vpop.permute.xlu0 %1439
  %v1442 = vsel %vm454, %v1185, 0
  %v1445 = vsel %vm454, %v1186, 0
  %v1448 = vsel %vm454, %v1426, 0
  %v1451 = vsel %vm454, %v1428, 0
  %v1454 = vsel %vm454, %v1430, 0
  %v1457 = vsel %vm454, %v1432, 0
  %v1460 = vsel %vm454, %v1434, 0
  %v1463 = vsel %vm454, %v1436, 0
  %v1466 = vsel %vm454, %v1438, 0
  %v1469 = vsel %vm454, %v1440, 0
  %1471 = vmatprep.subr.bf16.mxu0 0
  %1472 = vmatpush1.bf16.xpose.msra.mxu0 %v1448
  %1473 = vmatprep.subr.bf16.mxu0 0
  %1474 = vmatpush1.bf16.xpose.msra.mxu0 %v1451
  %1475 = vmatprep.subr.bf16.mxu0 0
  %1476 = vmatpush1.bf16.xpose.msra.mxu0 %v1454
  %1477 = vmatprep.subr.bf16.mxu0 0
  %1478 = vmatpush1.bf16.xpose.msra.mxu0 %v1457
  %1479 = vmatprep.subr.bf16.mxu0 0
  %1480 = vmatpush1.bf16.xpose.msra.mxu0 %v1460
  %1481 = vmatprep.subr.bf16.mxu0 0
  %1482 = vmatpush1.bf16.xpose.msra.mxu0 %v1463
  %1483 = vmatprep.subr.bf16.mxu0 0
  %1484 = vmatpush1.bf16.xpose.msra.mxu0 %v1466
  %1485 = vmatprep.subr.bf16.mxu0 0
  %1486 = vmatpush1.bf16.xpose.msra.mxu0 %v1469
  %1487 = vmatprep.subr.bf16.mxu0 0
  %1488 = vmatpush1.bf16.xpose.msra.mxu0 0
  %1489 = vmatprep.subr.bf16.mxu0 0
  %1490 = vmatpush1.bf16.xpose.msra.mxu0 0
  %1491 = vmatprep.subr.bf16.mxu0 0
  %1492 = vmatpush1.bf16.xpose.msra.mxu0 0
  %1493 = vmatprep.subr.bf16.mxu0 0
  %1494 = vmatpush1.bf16.xpose.msra.mxu0 0
  %1495 = vmatprep.subr.bf16.mxu0 0
  %1496 = vmatpush1.bf16.xpose.msra.mxu0 0
  %1497 = vmatprep.subr.bf16.mxu0 0
  %1498 = vmatpush1.bf16.xpose.msra.mxu0 0
  %1499 = vmatprep.subr.bf16.mxu0 0
  %1500 = vmatpush1.bf16.xpose.msra.mxu0 0
  %1501 = vmatprep.subr.bf16.mxu0 0
  %1502 = vmatpush1.bf16.xpose.msra.mxu0 0
  %1503 = vmatprep.mubr.bf16.mxu0 0
  %1504 = vmatmul.mubr.bf16.gmra.mrb[0].mxu0 %v1442
  %v1505 = vpop.f32.mrb[0].mxu0
  %v1506 = vadd.f32 0.0, %v1505
  %v1507 = vpop.f32.mrb[0].mxu0
  %v1508 = vpop.f32.mrb[0].mxu0
  %v1509 = vadd.f32 0.0, %v1508
  %v1510 = vpop.f32.mrb[0].mxu0
  %1511 = vmatprep.mubr.bf16.mxu0 0
  %1512 = vmatmul.mubr.bf16.gmra.mrb[0].mxu0 %v1445
  %v1513 = vpop.f32.mrb[0].mxu0
  %v1514 = vadd.f32 0.0, %v1513
  %v1515 = vpop.f32.mrb[0].mxu0
  %v1516 = vpop.f32.mrb[0].mxu0
  %v1517 = vadd.f32 0.0, %v1516
  %v1518 = vpop.f32.mrb[0].mxu0
  %1519 = vdwg.mxu0
  %1528 = vrot.lane.b32.xlu0 %v1273, 96
  %v1529 = vpop.permute.xlu0 %1528
  %1530 = vrot.lane.b32.xlu0 %v1274, 96
  %v1531 = vpop.permute.xlu0 %1530
  %1532 = vrot.lane.b32.xlu0 %v1275, 96
  %v1533 = vpop.permute.xlu0 %1532
  %1534 = vrot.lane.b32.xlu0 %v1276, 96
  %v1535 = vpop.permute.xlu0 %1534
  %1536 = vrot.lane.b32.xlu0 %v1277, 96
  %v1537 = vpop.permute.xlu0 %1536
  %1538 = vrot.lane.b32.xlu0 %v1278, 96
  %v1539 = vpop.permute.xlu0 %1538
  %1540 = vrot.lane.b32.xlu0 %v1279, 96
  %v1541 = vpop.permute.xlu0 %1540
  %1542 = vrot.lane.b32.xlu0 %v1280, 96
  %v1543 = vpop.permute.xlu0 %1542
  %v1545 = vsel %vm454, %v1187, 0
  %v1548 = vsel %vm454, %v1188, 0
  %v1551 = vsel %vm454, %v1529, 0
  %v1554 = vsel %vm454, %v1531, 0
  %v1557 = vsel %vm454, %v1533, 0
  %v1560 = vsel %vm454, %v1535, 0
  %v1563 = vsel %vm454, %v1537, 0
  %v1566 = vsel %vm454, %v1539, 0
  %v1569 = vsel %vm454, %v1541, 0
  %v1572 = vsel %vm454, %v1543, 0
  %1574 = vmatprep.subr.bf16.mxu0 0
  %1575 = vmatpush1.bf16.xpose.msra.mxu0 %v1551
  %1576 = vmatprep.subr.bf16.mxu0 0
  %1577 = vmatpush1.bf16.xpose.msra.mxu0 %v1554
  %1578 = vmatprep.subr.bf16.mxu0 0
  %1579 = vmatpush1.bf16.xpose.msra.mxu0 %v1557
  %1580 = vmatprep.subr.bf16.mxu0 0
  %1581 = vmatpush1.bf16.xpose.msra.mxu0 %v1560
  %1582 = vmatprep.subr.bf16.mxu0 0
  %1583 = vmatpush1.bf16.xpose.msra.mxu0 %v1563
  %1584 = vmatprep.subr.bf16.mxu0 0
  %1585 = vmatpush1.bf16.xpose.msra.mxu0 %v1566
  %1586 = vmatprep.subr.bf16.mxu0 0
  %1587 = vmatpush1.bf16.xpose.msra.mxu0 %v1569
  %1588 = vmatprep.subr.bf16.mxu0 0
  %1589 = vmatpush1.bf16.xpose.msra.mxu0 %v1572
  %1590 = vmatprep.subr.bf16.mxu0 0
  %1591 = vmatpush1.bf16.xpose.msra.mxu0 0
  %1592 = vmatprep.subr.bf16.mxu0 0
  %1593 = vmatpush1.bf16.xpose.msra.mxu0 0
  %1594 = vmatprep.subr.bf16.mxu0 0
  %1595 = vmatpush1.bf16.xpose.msra.mxu0 0
  %1596 = vmatprep.subr.bf16.mxu0 0
  %1597 = vmatpush1.bf16.xpose.msra.mxu0 0
  %1598 = vmatprep.subr.bf16.mxu0 0
  %1599 = vmatpush1.bf16.xpose.msra.mxu0 0
  %1600 = vmatprep.subr.bf16.mxu0 0
  %1601 = vmatpush1.bf16.xpose.msra.mxu0 0
  %1602 = vmatprep.subr.bf16.mxu0 0
  %1603 = vmatpush1.bf16.xpose.msra.mxu0 0
  %1604 = vmatprep.subr.bf16.mxu0 0
  %1605 = vmatpush1.bf16.xpose.msra.mxu0 0
  %1606 = vmatprep.mubr.bf16.mxu0 0
  %1607 = vmatmul.mubr.bf16.gmra.mrb[0].mxu0 %v1545
  %v1608 = vpop.f32.mrb[0].mxu0
  %v1609 = vadd.f32 0.0, %v1608
  %v1610 = vpop.f32.mrb[0].mxu0
  %v1611 = vpop.f32.mrb[0].mxu0
  %v1612 = vadd.f32 0.0, %v1611
  %v1613 = vpop.f32.mrb[0].mxu0
  %1614 = vmatprep.mubr.bf16.mxu0 0
  %1615 = vmatmul.mubr.bf16.gmra.mrb[0].mxu0 %v1548
  %v1616 = vpop.f32.mrb[0].mxu0
  %v1617 = vadd.f32 0.0, %v1616
  %v1618 = vpop.f32.mrb[0].mxu0
  %v1619 = vpop.f32.mrb[0].mxu0
  %v1620 = vadd.f32 0.0, %v1619
  %v1621 = vpop.f32.mrb[0].mxu0
  %1622 = vdwg.mxu0
  %1631 = vrot.lane.b32.xlu0 %v1281, 96
  %v1632 = vpop.permute.xlu0 %1631
  %1633 = vrot.lane.b32.xlu0 %v1282, 96
  %v1634 = vpop.permute.xlu0 %1633
  %1635 = vrot.lane.b32.xlu0 %v1283, 96
  %v1636 = vpop.permute.xlu0 %1635
  %1637 = vrot.lane.b32.xlu0 %v1284, 96
  %v1638 = vpop.permute.xlu0 %1637
  %1639 = vrot.lane.b32.xlu0 %v1285, 96
  %v1640 = vpop.permute.xlu0 %1639
  %1641 = vrot.lane.b32.xlu0 %v1286, 96
  %v1642 = vpop.permute.xlu0 %1641
  %1643 = vrot.lane.b32.xlu0 %v1287, 96
  %v1644 = vpop.permute.xlu0 %1643
  %1645 = vrot.lane.b32.xlu0 %v1288, 96
  %v1646 = vpop.permute.xlu0 %1645
  %v1648 = vsel %vm454, %v1189, 0
  %v1651 = vsel %vm454, %v1190, 0
  %v1654 = vsel %vm454, %v1632, 0
  %v1657 = vsel %vm454, %v1634, 0
  %v1660 = vsel %vm454, %v1636, 0
  %v1663 = vsel %vm454, %v1638, 0
  %v1666 = vsel %vm454, %v1640, 0
  %v1669 = vsel %vm454, %v1642, 0
  %v1672 = vsel %vm454, %v1644, 0
  %v1675 = vsel %vm454, %v1646, 0
  %1677 = vmatprep.subr.bf16.mxu0 0
  %1678 = vmatpush1.bf16.xpose.msra.mxu0 %v1654
  %1679 = vmatprep.subr.bf16.mxu0 0
  %1680 = vmatpush1.bf16.xpose.msra.mxu0 %v1657
  %1681 = vmatprep.subr.bf16.mxu0 0
  %1682 = vmatpush1.bf16.xpose.msra.mxu0 %v1660
  %1683 = vmatprep.subr.bf16.mxu0 0
  %1684 = vmatpush1.bf16.xpose.msra.mxu0 %v1663
  %1685 = vmatprep.subr.bf16.mxu0 0
  %1686 = vmatpush1.bf16.xpose.msra.mxu0 %v1666
  %1687 = vmatprep.subr.bf16.mxu0 0
  %1688 = vmatpush1.bf16.xpose.msra.mxu0 %v1669
  %1689 = vmatprep.subr.bf16.mxu0 0
  %1690 = vmatpush1.bf16.xpose.msra.mxu0 %v1672
  %1691 = vmatprep.subr.bf16.mxu0 0
  %1692 = vmatpush1.bf16.xpose.msra.mxu0 %v1675
  %1693 = vmatprep.subr.bf16.mxu0 0
  %1694 = vmatpush1.bf16.xpose.msra.mxu0 0
  %1695 = vmatprep.subr.bf16.mxu0 0
  %1696 = vmatpush1.bf16.xpose.msra.mxu0 0
  %1697 = vmatprep.subr.bf16.mxu0 0
  %1698 = vmatpush1.bf16.xpose.msra.mxu0 0
  %1699 = vmatprep.subr.bf16.mxu0 0
  %1700 = vmatpush1.bf16.xpose.msra.mxu0 0
  %1701 = vmatprep.subr.bf16.mxu0 0
  %1702 = vmatpush1.bf16.xpose.msra.mxu0 0
  %1703 = vmatprep.subr.bf16.mxu0 0
  %1704 = vmatpush1.bf16.xpose.msra.mxu0 0
  %1705 = vmatprep.subr.bf16.mxu0 0
  %1706 = vmatpush1.bf16.xpose.msra.mxu0 0
  %1707 = vmatprep.subr.bf16.mxu0 0
  %1708 = vmatpush1.bf16.xpose.msra.mxu0 0
  %1709 = vmatprep.mubr.bf16.mxu0 0
  %1710 = vmatmul.mubr.bf16.gmra.mrb[0].mxu0 %v1648
  %v1711 = vpop.f32.mrb[0].mxu0
  %v1712 = vadd.f32 0.0, %v1711
  %v1713 = vpop.f32.mrb[0].mxu0
  %v1714 = vpop.f32.mrb[0].mxu0
  %v1715 = vadd.f32 0.0, %v1714
  %v1716 = vpop.f32.mrb[0].mxu0
  %1717 = vmatprep.mubr.bf16.mxu0 0
  %1718 = vmatmul.mubr.bf16.gmra.mrb[0].mxu0 %v1651
  %v1719 = vpop.f32.mrb[0].mxu0
  %v1720 = vadd.f32 0.0, %v1719
  %v1721 = vpop.f32.mrb[0].mxu0
  %v1722 = vpop.f32.mrb[0].mxu0
  %v1723 = vadd.f32 0.0, %v1722
  %v1724 = vpop.f32.mrb[0].mxu0
  %1725 = vdwg.mxu0
  %1734 = vrot.lane.b32.xlu0 %v1289, 96
  %v1735 = vpop.permute.xlu0 %1734
  %1736 = vrot.lane.b32.xlu0 %v1290, 96
  %v1737 = vpop.permute.xlu0 %1736
  %1738 = vrot.lane.b32.xlu0 %v1291, 96
  %v1739 = vpop.permute.xlu0 %1738
  %1740 = vrot.lane.b32.xlu0 %v1292, 96
  %v1741 = vpop.permute.xlu0 %1740
  %1742 = vrot.lane.b32.xlu0 %v1293, 96
  %v1743 = vpop.permute.xlu0 %1742
  %1744 = vrot.lane.b32.xlu0 %v1294, 96
  %v1745 = vpop.permute.xlu0 %1744
  %1746 = vrot.lane.b32.xlu0 %v1295, 96
  %v1747 = vpop.permute.xlu0 %1746
  %1748 = vrot.lane.b32.xlu0 %v1296, 96
  %v1749 = vpop.permute.xlu0 %1748
  %v1751 = vsel %vm454, %v1191, 0
  %v1754 = vsel %vm454, %v1192, 0
  %v1757 = vsel %vm454, %v1735, 0
  %v1760 = vsel %vm454, %v1737, 0
  %v1763 = vsel %vm454, %v1739, 0
  %v1766 = vsel %vm454, %v1741, 0
  %v1769 = vsel %vm454, %v1743, 0
  %v1772 = vsel %vm454, %v1745, 0
  %v1775 = vsel %vm454, %v1747, 0
  %v1778 = vsel %vm454, %v1749, 0
  %1780 = vmatprep.subr.bf16.mxu0 0
  %1781 = vmatpush1.bf16.xpose.msra.mxu0 %v1757
  %1782 = vmatprep.subr.bf16.mxu0 0
  %1783 = vmatpush1.bf16.xpose.msra.mxu0 %v1760
  %1784 = vmatprep.subr.bf16.mxu0 0
  %1785 = vmatpush1.bf16.xpose.msra.mxu0 %v1763
  %1786 = vmatprep.subr.bf16.mxu0 0
  %1787 = vmatpush1.bf16.xpose.msra.mxu0 %v1766
  %1788 = vmatprep.subr.bf16.mxu0 0
  %1789 = vmatpush1.bf16.xpose.msra.mxu0 %v1769
  %1790 = vmatprep.subr.bf16.mxu0 0
  %1791 = vmatpush1.bf16.xpose.msra.mxu0 %v1772
  %1792 = vmatprep.subr.bf16.mxu0 0
  %1793 = vmatpush1.bf16.xpose.msra.mxu0 %v1775
  %1794 = vmatprep.subr.bf16.mxu0 0
  %1795 = vmatpush1.bf16.xpose.msra.mxu0 %v1778
  %1796 = vmatprep.subr.bf16.mxu0 0
  %1797 = vmatpush1.bf16.xpose.msra.mxu0 0
  %1798 = vmatprep.subr.bf16.mxu0 0
  %1799 = vmatpush1.bf16.xpose.msra.mxu0 0
  %1800 = vmatprep.subr.bf16.mxu0 0
  %1801 = vmatpush1.bf16.xpose.msra.mxu0 0
  %1802 = vmatprep.subr.bf16.mxu0 0
  %1803 = vmatpush1.bf16.xpose.msra.mxu0 0
  %1804 = vmatprep.subr.bf16.mxu0 0
  %1805 = vmatpush1.bf16.xpose.msra.mxu0 0
  %1806 = vmatprep.subr.bf16.mxu0 0
  %1807 = vmatpush1.bf16.xpose.msra.mxu0 0
  %1808 = vmatprep.subr.bf16.mxu0 0
  %1809 = vmatpush1.bf16.xpose.msra.mxu0 0
  %1810 = vmatprep.subr.bf16.mxu0 0
  %1811 = vmatpush1.bf16.xpose.msra.mxu0 0
  %1812 = vmatprep.mubr.bf16.mxu0 0
  %1813 = vmatmul.mubr.bf16.gmra.mrb[0].mxu0 %v1751
  %v1814 = vpop.f32.mrb[0].mxu0
  %v1815 = vadd.f32 0.0, %v1814
  %v1816 = vpop.f32.mrb[0].mxu0
  %v1817 = vpop.f32.mrb[0].mxu0
  %v1818 = vadd.f32 0.0, %v1817
  %v1819 = vpop.f32.mrb[0].mxu0
  %1820 = vmatprep.mubr.bf16.mxu0 0
  %1821 = vmatmul.mubr.bf16.gmra.mrb[0].mxu0 %v1754
  %v1822 = vpop.f32.mrb[0].mxu0
  %v1823 = vadd.f32 0.0, %v1822
  %v1824 = vpop.f32.mrb[0].mxu0
  %v1825 = vpop.f32.mrb[0].mxu0
  %v1826 = vadd.f32 0.0, %v1825
  %v1827 = vpop.f32.mrb[0].mxu0
  %1828 = vdwg.mxu0
  %1837 = vrot.lane.b32.xlu0 %v1297, 96
  %v1838 = vpop.permute.xlu0 %1837
  %1839 = vrot.lane.b32.xlu0 %v1298, 96
  %v1840 = vpop.permute.xlu0 %1839
  %1841 = vrot.lane.b32.xlu0 %v1299, 96
  %v1842 = vpop.permute.xlu0 %1841
  %1843 = vrot.lane.b32.xlu0 %v1300, 96
  %v1844 = vpop.permute.xlu0 %1843
  %1845 = vrot.lane.b32.xlu0 %v1301, 96
  %v1846 = vpop.permute.xlu0 %1845
  %1847 = vrot.lane.b32.xlu0 %v1302, 96
  %v1848 = vpop.permute.xlu0 %1847
  %1849 = vrot.lane.b32.xlu0 %v1303, 96
  %v1850 = vpop.permute.xlu0 %1849
  %1851 = vrot.lane.b32.xlu0 %v1304, 96
  %v1852 = vpop.permute.xlu0 %1851
  %v1854 = vsel %vm454, %v1193, 0
  %v1857 = vsel %vm454, %v1194, 0
  %v1860 = vsel %vm454, %v1838, 0
  %v1863 = vsel %vm454, %v1840, 0
  %v1866 = vsel %vm454, %v1842, 0
  %v1869 = vsel %vm454, %v1844, 0
  %v1872 = vsel %vm454, %v1846, 0
  %v1875 = vsel %vm454, %v1848, 0
  %v1878 = vsel %vm454, %v1850, 0
  %v1881 = vsel %vm454, %v1852, 0
  %1883 = vmatprep.subr.bf16.mxu0 0
  %1884 = vmatpush1.bf16.xpose.msra.mxu0 %v1860
  %1885 = vmatprep.subr.bf16.mxu0 0
  %1886 = vmatpush1.bf16.xpose.msra.mxu0 %v1863
  %1887 = vmatprep.subr.bf16.mxu0 0
  %1888 = vmatpush1.bf16.xpose.msra.mxu0 %v1866
  %1889 = vmatprep.subr.bf16.mxu0 0
  %1890 = vmatpush1.bf16.xpose.msra.mxu0 %v1869
  %1891 = vmatprep.subr.bf16.mxu0 0
  %1892 = vmatpush1.bf16.xpose.msra.mxu0 %v1872
  %1893 = vmatprep.subr.bf16.mxu0 0
  %1894 = vmatpush1.bf16.xpose.msra.mxu0 %v1875
  %1895 = vmatprep.subr.bf16.mxu0 0
  %1896 = vmatpush1.bf16.xpose.msra.mxu0 %v1878
  %1897 = vmatprep.subr.bf16.mxu0 0
  %1898 = vmatpush1.bf16.xpose.msra.mxu0 %v1881
  %1899 = vmatprep.subr.bf16.mxu0 0
  %1900 = vmatpush1.bf16.xpose.msra.mxu0 0
  %1901 = vmatprep.subr.bf16.mxu0 0
  %1902 = vmatpush1.bf16.xpose.msra.mxu0 0
  %1903 = vmatprep.subr.bf16.mxu0 0
  %1904 = vmatpush1.bf16.xpose.msra.mxu0 0
  %1905 = vmatprep.subr.bf16.mxu0 0
  %1906 = vmatpush1.bf16.xpose.msra.mxu0 0
  %1907 = vmatprep.subr.bf16.mxu0 0
  %1908 = vmatpush1.bf16.xpose.msra.mxu0 0
  %1909 = vmatprep.subr.bf16.mxu0 0
  %1910 = vmatpush1.bf16.xpose.msra.mxu0 0
  %1911 = vmatprep.subr.bf16.mxu0 0
  %1912 = vmatpush1.bf16.xpose.msra.mxu0 0
  %1913 = vmatprep.subr.bf16.mxu0 0
  %1914 = vmatpush1.bf16.xpose.msra.mxu0 0
  %1915 = vmatprep.mubr.bf16.mxu0 0
  %1916 = vmatmul.mubr.bf16.gmra.mrb[0].mxu0 %v1854
  %v1917 = vpop.f32.mrb[0].mxu0
  %v1918 = vadd.f32 0.0, %v1917
  %v1919 = vpop.f32.mrb[0].mxu0
  %v1920 = vpop.f32.mrb[0].mxu0
  %v1921 = vadd.f32 0.0, %v1920
  %v1922 = vpop.f32.mrb[0].mxu0
  %1923 = vmatprep.mubr.bf16.mxu0 0
  %1924 = vmatmul.mubr.bf16.gmra.mrb[0].mxu0 %v1857
  %v1925 = vpop.f32.mrb[0].mxu0
  %v1926 = vadd.f32 0.0, %v1925
  %v1927 = vpop.f32.mrb[0].mxu0
  %v1928 = vpop.f32.mrb[0].mxu0
  %v1929 = vadd.f32 0.0, %v1928
  %v1930 = vpop.f32.mrb[0].mxu0
  %1931 = vdwg.mxu0
  %1940 = vrot.lane.b32.xlu0 %v1305, 96
  %v1941 = vpop.permute.xlu0 %1940
  %1942 = vrot.lane.b32.xlu0 %v1306, 96
  %v1943 = vpop.permute.xlu0 %1942
  %1944 = vrot.lane.b32.xlu0 %v1307, 96
  %v1945 = vpop.permute.xlu0 %1944
  %1946 = vrot.lane.b32.xlu0 %v1308, 96
  %v1947 = vpop.permute.xlu0 %1946
  %1948 = vrot.lane.b32.xlu0 %v1309, 96
  %v1949 = vpop.permute.xlu0 %1948
  %1950 = vrot.lane.b32.xlu0 %v1310, 96
  %v1951 = vpop.permute.xlu0 %1950
  %1952 = vrot.lane.b32.xlu0 %v1311, 96
  %v1953 = vpop.permute.xlu0 %1952
  %1954 = vrot.lane.b32.xlu0 %v1312, 96
  %v1955 = vpop.permute.xlu0 %1954
  %v1957 = vsel %vm454, %v1195, 0
  %v1960 = vsel %vm454, %v1196, 0
  %v1963 = vsel %vm454, %v1941, 0
  %v1966 = vsel %vm454, %v1943, 0
  %v1969 = vsel %vm454, %v1945, 0
  %v1972 = vsel %vm454, %v1947, 0
  %v1975 = vsel %vm454, %v1949, 0
  %v1978 = vsel %vm454, %v1951, 0
  %v1981 = vsel %vm454, %v1953, 0
  %v1984 = vsel %vm454, %v1955, 0
  %1986 = vmatprep.subr.bf16.mxu0 0
  %1987 = vmatpush1.bf16.xpose.msra.mxu0 %v1963
  %1988 = vmatprep.subr.bf16.mxu0 0
  %1989 = vmatpush1.bf16.xpose.msra.mxu0 %v1966
  %1990 = vmatprep.subr.bf16.mxu0 0
  %1991 = vmatpush1.bf16.xpose.msra.mxu0 %v1969
  %1992 = vmatprep.subr.bf16.mxu0 0
  %1993 = vmatpush1.bf16.xpose.msra.mxu0 %v1972
  %1994 = vmatprep.subr.bf16.mxu0 0
  %1995 = vmatpush1.bf16.xpose.msra.mxu0 %v1975
  %1996 = vmatprep.subr.bf16.mxu0 0
  %1997 = vmatpush1.bf16.xpose.msra.mxu0 %v1978
  %1998 = vmatprep.subr.bf16.mxu0 0
  %1999 = vmatpush1.bf16.xpose.msra.mxu0 %v1981
  %2000 = vmatprep.subr.bf16.mxu0 0
  %2001 = vmatpush1.bf16.xpose.msra.mxu0 %v1984
  %2002 = vmatprep.subr.bf16.mxu0 0
  %2003 = vmatpush1.bf16.xpose.msra.mxu0 0
  %2004 = vmatprep.subr.bf16.mxu0 0
  %2005 = vmatpush1.bf16.xpose.msra.mxu0 0
  %2006 = vmatprep.subr.bf16.mxu0 0
  %2007 = vmatpush1.bf16.xpose.msra.mxu0 0
  %2008 = vmatprep.subr.bf16.mxu0 0
  %2009 = vmatpush1.bf16.xpose.msra.mxu0 0
  %2010 = vmatprep.subr.bf16.mxu0 0
  %2011 = vmatpush1.bf16.xpose.msra.mxu0 0
  %2012 = vmatprep.subr.bf16.mxu0 0
  %2013 = vmatpush1.bf16.xpose.msra.mxu0 0
  %2014 = vmatprep.subr.bf16.mxu0 0
  %2015 = vmatpush1.bf16.xpose.msra.mxu0 0
  %2016 = vmatprep.subr.bf16.mxu0 0
  %2017 = vmatpush1.bf16.xpose.msra.mxu0 0
  %2018 = vmatprep.mubr.bf16.mxu0 0
  %2019 = vmatmul.mubr.bf16.gmra.mrb[0].mxu0 %v1957
  %v2020 = vpop.f32.mrb[0].mxu0
  %v2021 = vadd.f32 0.0, %v2020
  %v2022 = vpop.f32.mrb[0].mxu0
  %v2023 = vpop.f32.mrb[0].mxu0
  %v2024 = vadd.f32 0.0, %v2023
  %v2025 = vpop.f32.mrb[0].mxu0
  %2026 = vmatprep.mubr.bf16.mxu0 0
  %2027 = vmatmul.mubr.bf16.gmra.mrb[0].mxu0 %v1960
  %v2028 = vpop.f32.mrb[0].mxu0
  %v2029 = vadd.f32 0.0, %v2028
  %v2030 = vpop.f32.mrb[0].mxu0
  %v2031 = vpop.f32.mrb[0].mxu0
  %v2032 = vadd.f32 0.0, %v2031
  %v2033 = vpop.f32.mrb[0].mxu0
  %2034 = vdwg.mxu0
  %2043 = vrot.lane.b32.xlu0 %v1313, 96
  %v2044 = vpop.permute.xlu0 %2043
  %2045 = vrot.lane.b32.xlu0 %v1314, 96
  %v2046 = vpop.permute.xlu0 %2045
  %2047 = vrot.lane.b32.xlu0 %v1315, 96
  %v2048 = vpop.permute.xlu0 %2047
  %2049 = vrot.lane.b32.xlu0 %v1316, 96
  %v2050 = vpop.permute.xlu0 %2049
  %2051 = vrot.lane.b32.xlu0 %v1317, 96
  %v2052 = vpop.permute.xlu0 %2051
  %2053 = vrot.lane.b32.xlu0 %v1318, 96
  %v2054 = vpop.permute.xlu0 %2053
  %2055 = vrot.lane.b32.xlu0 %v1319, 96
  %v2056 = vpop.permute.xlu0 %2055
  %2057 = vrot.lane.b32.xlu0 %v1320, 96
  %v2058 = vpop.permute.xlu0 %2057
  %v2060 = vsel %vm454, %v1197, 0
  %v2063 = vsel %vm454, %v1198, 0
  %v2066 = vsel %vm454, %v2044, 0
  %v2069 = vsel %vm454, %v2046, 0
  %v2072 = vsel %vm454, %v2048, 0
  %v2075 = vsel %vm454, %v2050, 0
  %v2078 = vsel %vm454, %v2052, 0
  %v2081 = vsel %vm454, %v2054, 0
  %v2084 = vsel %vm454, %v2056, 0
  %v2087 = vsel %vm454, %v2058, 0
  %2089 = vmatprep.subr.bf16.mxu0 0
  %2090 = vmatpush1.bf16.xpose.msra.mxu0 %v2066
  %2091 = vmatprep.subr.bf16.mxu0 0
  %2092 = vmatpush1.bf16.xpose.msra.mxu0 %v2069
  %2093 = vmatprep.subr.bf16.mxu0 0
  %2094 = vmatpush1.bf16.xpose.msra.mxu0 %v2072
  %2095 = vmatprep.subr.bf16.mxu0 0
  %2096 = vmatpush1.bf16.xpose.msra.mxu0 %v2075
  %2097 = vmatprep.subr.bf16.mxu0 0
  %2098 = vmatpush1.bf16.xpose.msra.mxu0 %v2078
  %2099 = vmatprep.subr.bf16.mxu0 0
  %2100 = vmatpush1.bf16.xpose.msra.mxu0 %v2081
  %2101 = vmatprep.subr.bf16.mxu0 0
  %2102 = vmatpush1.bf16.xpose.msra.mxu0 %v2084
  %2103 = vmatprep.subr.bf16.mxu0 0
  %2104 = vmatpush1.bf16.xpose.msra.mxu0 %v2087
  %2105 = vmatprep.subr.bf16.mxu0 0
  %2106 = vmatpush1.bf16.xpose.msra.mxu0 0
  %2107 = vmatprep.subr.bf16.mxu0 0
  %2108 = vmatpush1.bf16.xpose.msra.mxu0 0
  %2109 = vmatprep.subr.bf16.mxu0 0
  %2110 = vmatpush1.bf16.xpose.msra.mxu0 0
  %2111 = vmatprep.subr.bf16.mxu0 0
  %2112 = vmatpush1.bf16.xpose.msra.mxu0 0
  %2113 = vmatprep.subr.bf16.mxu0 0
  %2114 = vmatpush1.bf16.xpose.msra.mxu0 0
  %2115 = vmatprep.subr.bf16.mxu0 0
  %2116 = vmatpush1.bf16.xpose.msra.mxu0 0
  %2117 = vmatprep.subr.bf16.mxu0 0
  %2118 = vmatpush1.bf16.xpose.msra.mxu0 0
  %2119 = vmatprep.subr.bf16.mxu0 0
  %2120 = vmatpush1.bf16.xpose.msra.mxu0 0
  %2121 = vmatprep.mubr.bf16.mxu0 0
  %2122 = vmatmul.mubr.bf16.gmra.mrb[0].mxu0 %v2060
  %v2123 = vpop.f32.mrb[0].mxu0
  %v2124 = vadd.f32 0.0, %v2123
  %v2125 = vpop.f32.mrb[0].mxu0
  %v2126 = vpop.f32.mrb[0].mxu0
  %v2127 = vadd.f32 0.0, %v2126
  %v2128 = vpop.f32.mrb[0].mxu0
  %2129 = vmatprep.mubr.bf16.mxu0 0
  %2130 = vmatmul.mubr.bf16.gmra.mrb[0].mxu0 %v2063
  %v2131 = vpop.f32.mrb[0].mxu0
  %v2132 = vadd.f32 0.0, %v2131
  %v2133 = vpop.f32.mrb[0].mxu0
  %v2134 = vpop.f32.mrb[0].mxu0
  %v2135 = vadd.f32 0.0, %v2134
  %v2136 = vpop.f32.mrb[0].mxu0
  %2137 = vdwg.mxu0
  %2146 = vrot.lane.b32.xlu0 %v1321, 96
  %v2147 = vpop.permute.xlu0 %2146
  %2148 = vrot.lane.b32.xlu0 %v1322, 96
  %v2149 = vpop.permute.xlu0 %2148
  %2150 = vrot.lane.b32.xlu0 %v1323, 96
  %v2151 = vpop.permute.xlu0 %2150
  %2152 = vrot.lane.b32.xlu0 %v1324, 96
  %v2153 = vpop.permute.xlu0 %2152
  %2154 = vrot.lane.b32.xlu0 %v1325, 96
  %v2155 = vpop.permute.xlu0 %2154
  %2156 = vrot.lane.b32.xlu0 %v1326, 96
  %v2157 = vpop.permute.xlu0 %2156
  %2158 = vrot.lane.b32.xlu0 %v1327, 96
  %v2159 = vpop.permute.xlu0 %2158
  %2160 = vrot.lane.b32.xlu0 %v1328, 96
  %v2161 = vpop.permute.xlu0 %2160
  %v2163 = vsel %vm454, %v1199, 0
  %v2166 = vsel %vm454, %v1200, 0
  %v2169 = vsel %vm454, %v2147, 0
  %v2172 = vsel %vm454, %v2149, 0
  %v2175 = vsel %vm454, %v2151, 0
  %v2178 = vsel %vm454, %v2153, 0
  %v2181 = vsel %vm454, %v2155, 0
  %v2184 = vsel %vm454, %v2157, 0
  %v2187 = vsel %vm454, %v2159, 0
  %v2190 = vsel %vm454, %v2161, 0
  %2192 = vmatprep.subr.bf16.mxu0 0
  %2193 = vmatpush1.bf16.xpose.msra.mxu0 %v2169
  %2194 = vmatprep.subr.bf16.mxu0 0
  %2195 = vmatpush1.bf16.xpose.msra.mxu0 %v2172
  %2196 = vmatprep.subr.bf16.mxu0 0
  %2197 = vmatpush1.bf16.xpose.msra.mxu0 %v2175
  %2198 = vmatprep.subr.bf16.mxu0 0
  %2199 = vmatpush1.bf16.xpose.msra.mxu0 %v2178
  %2200 = vmatprep.subr.bf16.mxu0 0
  %2201 = vmatpush1.bf16.xpose.msra.mxu0 %v2181
  %2202 = vmatprep.subr.bf16.mxu0 0
  %2203 = vmatpush1.bf16.xpose.msra.mxu0 %v2184
  %2204 = vmatprep.subr.bf16.mxu0 0
  %2205 = vmatpush1.bf16.xpose.msra.mxu0 %v2187
  %2206 = vmatprep.subr.bf16.mxu0 0
  %2207 = vmatpush1.bf16.xpose.msra.mxu0 %v2190
  %2208 = vmatprep.subr.bf16.mxu0 0
  %2209 = vmatpush1.bf16.xpose.msra.mxu0 0
  %2210 = vmatprep.subr.bf16.mxu0 0
  %2211 = vmatpush1.bf16.xpose.msra.mxu0 0
  %2212 = vmatprep.subr.bf16.mxu0 0
  %2213 = vmatpush1.bf16.xpose.msra.mxu0 0
  %2214 = vmatprep.subr.bf16.mxu0 0
  %2215 = vmatpush1.bf16.xpose.msra.mxu0 0
  %2216 = vmatprep.subr.bf16.mxu0 0
  %2217 = vmatpush1.bf16.xpose.msra.mxu0 0
  %2218 = vmatprep.subr.bf16.mxu0 0
  %2219 = vmatpush1.bf16.xpose.msra.mxu0 0
  %2220 = vmatprep.subr.bf16.mxu0 0
  %2221 = vmatpush1.bf16.xpose.msra.mxu0 0
  %2222 = vmatprep.subr.bf16.mxu0 0
  %2223 = vmatpush1.bf16.xpose.msra.mxu0 0
  %2224 = vmatprep.mubr.bf16.mxu0 0
  %2225 = vmatmul.mubr.bf16.gmra.mrb[0].mxu0 %v2163
  %v2226 = vpop.f32.mrb[0].mxu0
  %v2227 = vadd.f32 0.0, %v2226
  %v2228 = vpop.f32.mrb[0].mxu0
  %v2229 = vpop.f32.mrb[0].mxu0
  %v2230 = vadd.f32 0.0, %v2229
  %v2231 = vpop.f32.mrb[0].mxu0
  %2232 = vmatprep.mubr.bf16.mxu0 0
  %2233 = vmatmul.mubr.bf16.gmra.mrb[0].mxu0 %v2166
  %v2234 = vpop.f32.mrb[0].mxu0
  %v2235 = vadd.f32 0.0, %v2234
  %v2236 = vpop.f32.mrb[0].mxu0
  %v2237 = vpop.f32.mrb[0].mxu0
  %v2238 = vadd.f32 0.0, %v2237
  %v2239 = vpop.f32.mrb[0].mxu0
  %2240 = vdwg.mxu0
  %v2241 = vmul.f32 %v1506, 0.35355338
  %v2242 = vmul.f32 %v1509, 0.35355338
  %v2243 = vmul.f32 %v1514, 0.35355338
  %v2244 = vmul.f32 %v1517, 0.35355338
  %v2245 = vmul.f32 %v1609, 0.35355338
  %v2246 = vmul.f32 %v1612, 0.35355338
  %v2247 = vmul.f32 %v1617, 0.35355338
  %v2248 = vmul.f32 %v1620, 0.35355338
  %v2249 = vmul.f32 %v1712, 0.35355338
  %v2250 = vmul.f32 %v1715, 0.35355338
  %v2251 = vmul.f32 %v1720, 0.35355338
  %v2252 = vmul.f32 %v1723, 0.35355338
  %v2253 = vmul.f32 %v1815, 0.35355338
  %v2254 = vmul.f32 %v1818, 0.35355338
  %v2255 = vmul.f32 %v1823, 0.35355338
  %v2256 = vmul.f32 %v1826, 0.35355338
  %v2257 = vmul.f32 %v1918, 0.35355338
  %v2258 = vmul.f32 %v1921, 0.35355338
  %v2259 = vmul.f32 %v1926, 0.35355338
  %v2260 = vmul.f32 %v1929, 0.35355338
  %v2261 = vmul.f32 %v2021, 0.35355338
  %v2262 = vmul.f32 %v2024, 0.35355338
  %v2263 = vmul.f32 %v2029, 0.35355338
  %v2264 = vmul.f32 %v2032, 0.35355338
  %v2265 = vmul.f32 %v2124, 0.35355338
  %v2266 = vmul.f32 %v2127, 0.35355338
  %v2267 = vmul.f32 %v2132, 0.35355338
  %v2268 = vmul.f32 %v2135, 0.35355338
  %v2269 = vmul.f32 %v2227, 0.35355338
  %v2270 = vmul.f32 %v2230, 0.35355338
  %v2271 = vmul.f32 %v2235, 0.35355338
  %v2272 = vmul.f32 %v2238, 0.35355338
  %v2273 = vlaneseq
  %v2274 = vshrl.u32 %v2273, 7
  %v2275 = vsub.s32 0, %v2274
  %v2276 = vrot.slane %v452, %v2275
  %v2277 = vadd.f32 %v2241, %v2276
  %v2278 = vadd.f32 %v2242, %v2276
  %v2279 = vadd.f32 %v2243, %v2276
  %v2280 = vadd.f32 %v2244, %v2276
  %v2281 = vadd.f32 %v2245, %v2276
  %v2282 = vadd.f32 %v2246, %v2276
  %v2283 = vadd.f32 %v2247, %v2276
  %v2284 = vadd.f32 %v2248, %v2276
  %v2285 = vadd.f32 %v2249, %v2276
  %v2286 = vadd.f32 %v2250, %v2276
  %v2287 = vadd.f32 %v2251, %v2276
  %v2288 = vadd.f32 %v2252, %v2276
  %v2289 = vadd.f32 %v2253, %v2276
  %v2290 = vadd.f32 %v2254, %v2276
  %v2291 = vadd.f32 %v2255, %v2276
  %v2292 = vadd.f32 %v2256, %v2276
  %v2293 = vadd.f32 %v2257, %v2276
  %v2294 = vadd.f32 %v2258, %v2276
  %v2295 = vadd.f32 %v2259, %v2276
  %v2296 = vadd.f32 %v2260, %v2276
  %v2297 = vadd.f32 %v2261, %v2276
  %v2298 = vadd.f32 %v2262, %v2276
  %v2299 = vadd.f32 %v2263, %v2276
  %v2300 = vadd.f32 %v2264, %v2276
  %v2301 = vadd.f32 %v2265, %v2276
  %v2302 = vadd.f32 %v2266, %v2276
  %v2303 = vadd.f32 %v2267, %v2276
  %v2304 = vadd.f32 %v2268, %v2276
  %v2305 = vadd.f32 %v2269, %v2276
  %v2306 = vadd.f32 %v2270, %v2276
  %v2307 = vadd.f32 %v2271, %v2276
  %v2308 = vadd.f32 %v2272, %v2276
  %2309 = vmax.xlane.f32.xlu0 %v2277
  %v2310 = vpop.xlane.xlu0 %2309
  %2311 = vmax.xlane.f32.xlu0 %v2278
  %v2312 = vpop.xlane.xlu0 %2311
  %2313 = vmax.xlane.f32.xlu0 %v2279
  %v2314 = vpop.xlane.xlu0 %2313
  %2315 = vmax.xlane.f32.xlu0 %v2280
  %v2316 = vpop.xlane.xlu0 %2315
  %2317 = vmax.xlane.f32.xlu0 %v2281
  %v2318 = vpop.xlane.xlu0 %2317
  %2319 = vmax.xlane.f32.xlu0 %v2282
  %v2320 = vpop.xlane.xlu0 %2319
  %2321 = vmax.xlane.f32.xlu0 %v2283
  %v2322 = vpop.xlane.xlu0 %2321
  %2323 = vmax.xlane.f32.xlu0 %v2284
  %v2324 = vpop.xlane.xlu0 %2323
  %2325 = vmax.xlane.f32.xlu0 %v2285
  %v2326 = vpop.xlane.xlu0 %2325
  %2327 = vmax.xlane.f32.xlu0 %v2286
  %v2328 = vpop.xlane.xlu0 %2327
  %2329 = vmax.xlane.f32.xlu0 %v2287
  %v2330 = vpop.xlane.xlu0 %2329
  %2331 = vmax.xlane.f32.xlu0 %v2288
  %v2332 = vpop.xlane.xlu0 %2331
  %2333 = vmax.xlane.f32.xlu0 %v2289
  %v2334 = vpop.xlane.xlu0 %2333
  %2335 = vmax.xlane.f32.xlu0 %v2290
  %v2336 = vpop.xlane.xlu0 %2335
  %2337 = vmax.xlane.f32.xlu0 %v2291
  %v2338 = vpop.xlane.xlu0 %2337
  %2339 = vmax.xlane.f32.xlu0 %v2292
  %v2340 = vpop.xlane.xlu0 %2339
  %2341 = vmax.xlane.f32.xlu0 %v2293
  %v2342 = vpop.xlane.xlu0 %2341
  %2343 = vmax.xlane.f32.xlu0 %v2294
  %v2344 = vpop.xlane.xlu0 %2343
  %2345 = vmax.xlane.f32.xlu0 %v2295
  %v2346 = vpop.xlane.xlu0 %2345
  %2347 = vmax.xlane.f32.xlu0 %v2296
  %v2348 = vpop.xlane.xlu0 %2347
  %2349 = vmax.xlane.f32.xlu0 %v2297
  %v2350 = vpop.xlane.xlu0 %2349
  %2351 = vmax.xlane.f32.xlu0 %v2298
  %v2352 = vpop.xlane.xlu0 %2351
  %2353 = vmax.xlane.f32.xlu0 %v2299
  %v2354 = vpop.xlane.xlu0 %2353
  %2355 = vmax.xlane.f32.xlu0 %v2300
  %v2356 = vpop.xlane.xlu0 %2355
  %2357 = vmax.xlane.f32.xlu0 %v2301
  %v2358 = vpop.xlane.xlu0 %2357
  %2359 = vmax.xlane.f32.xlu0 %v2302
  %v2360 = vpop.xlane.xlu0 %2359
  %2361 = vmax.xlane.f32.xlu0 %v2303
  %v2362 = vpop.xlane.xlu0 %2361
  %2363 = vmax.xlane.f32.xlu0 %v2304
  %v2364 = vpop.xlane.xlu0 %2363
  %2365 = vmax.xlane.f32.xlu0 %v2305
  %v2366 = vpop.xlane.xlu0 %2365
  %2367 = vmax.xlane.f32.xlu0 %v2306
  %v2368 = vpop.xlane.xlu0 %2367
  %2369 = vmax.xlane.f32.xlu0 %v2307
  %v2370 = vpop.xlane.xlu0 %2369
  %2371 = vmax.xlane.f32.xlu0 %v2308
  %v2372 = vpop.xlane.xlu0 %2371
  %v2373 = vsub.f32 %v2277, %v2310
  %v2374 = vsub.f32 %v2278, %v2312
  %v2375 = vsub.f32 %v2279, %v2314
  %v2376 = vsub.f32 %v2280, %v2316
  %v2377 = vsub.f32 %v2281, %v2318
  %v2378 = vsub.f32 %v2282, %v2320
  %v2379 = vsub.f32 %v2283, %v2322
  %v2380 = vsub.f32 %v2284, %v2324
  %v2381 = vsub.f32 %v2285, %v2326
  %v2382 = vsub.f32 %v2286, %v2328
  %v2383 = vsub.f32 %v2287, %v2330
  %v2384 = vsub.f32 %v2288, %v2332
  %v2385 = vsub.f32 %v2289, %v2334
  %v2386 = vsub.f32 %v2290, %v2336
  %v2387 = vsub.f32 %v2291, %v2338
  %v2388 = vsub.f32 %v2292, %v2340
  %v2389 = vsub.f32 %v2293, %v2342
  %v2390 = vsub.f32 %v2294, %v2344
  %v2391 = vsub.f32 %v2295, %v2346
  %v2392 = vsub.f32 %v2296, %v2348
  %v2393 = vsub.f32 %v2297, %v2350
  %v2394 = vsub.f32 %v2298, %v2352
  %v2395 = vsub.f32 %v2299, %v2354
  %v2396 = vsub.f32 %v2300, %v2356
  %v2397 = vsub.f32 %v2301, %v2358
  %v2398 = vsub.f32 %v2302, %v2360
  %v2399 = vsub.f32 %v2303, %v2362
  %v2400 = vsub.f32 %v2304, %v2364
  %v2401 = vsub.f32 %v2305, %v2366
  %v2402 = vsub.f32 %v2306, %v2368
  %v2403 = vsub.f32 %v2307, %v2370
  %v2404 = vsub.f32 %v2308, %v2372
  %v2405 = vmul.f32 %v2373, 1.442695
  %v2406 = vpow.pop %v2405
  %v2407 = vmul.f32 %v2374, 1.442695
  %v2408 = vpow.pop %v2407
  %v2409 = vmul.f32 %v2375, 1.442695
  %v2410 = vpow.pop %v2409
  %v2411 = vmul.f32 %v2376, 1.442695
  %v2412 = vpow.pop %v2411
  %v2413 = vmul.f32 %v2377, 1.442695
  %v2414 = vpow.pop %v2413
  %v2415 = vmul.f32 %v2378, 1.442695
  %v2416 = vpow.pop %v2415
  %v2417 = vmul.f32 %v2379, 1.442695
  %v2418 = vpow.pop %v2417
  %v2419 = vmul.f32 %v2380, 1.442695
  %v2420 = vpow.pop %v2419
  %v2421 = vmul.f32 %v2381, 1.442695
  %v2422 = vpow.pop %v2421
  %v2423 = vmul.f32 %v2382, 1.442695
  %v2424 = vpow.pop %v2423
  %v2425 = vmul.f32 %v2383, 1.442695
  %v2426 = vpow.pop %v2425
  %v2427 = vmul.f32 %v2384, 1.442695
  %v2428 = vpow.pop %v2427
  %v2429 = vmul.f32 %v2385, 1.442695
  %v2430 = vpow.pop %v2429
  %v2431 = vmul.f32 %v2386, 1.442695
  %v2432 = vpow.pop %v2431
  %v2433 = vmul.f32 %v2387, 1.442695
  %v2434 = vpow.pop %v2433
  %v2435 = vmul.f32 %v2388, 1.442695
  %v2436 = vpow.pop %v2435
  %v2437 = vmul.f32 %v2389, 1.442695
  %v2438 = vpow.pop %v2437
  %v2439 = vmul.f32 %v2390, 1.442695
  %v2440 = vpow.pop %v2439
  %v2441 = vmul.f32 %v2391, 1.442695
  %v2442 = vpow.pop %v2441
  %v2443 = vmul.f32 %v2392, 1.442695
  %v2444 = vpow.pop %v2443
  %v2445 = vmul.f32 %v2393, 1.442695
  %v2446 = vpow.pop %v2445
  %v2447 = vmul.f32 %v2394, 1.442695
  %v2448 = vpow.pop %v2447
  %v2449 = vmul.f32 %v2395, 1.442695
  %v2450 = vpow.pop %v2449
  %v2451 = vmul.f32 %v2396, 1.442695
  %v2452 = vpow.pop %v2451
  %v2453 = vmul.f32 %v2397, 1.442695
  %v2454 = vpow.pop %v2453
  %v2455 = vmul.f32 %v2398, 1.442695
  %v2456 = vpow.pop %v2455
  %v2457 = vmul.f32 %v2399, 1.442695
  %v2458 = vpow.pop %v2457
  %v2459 = vmul.f32 %v2400, 1.442695
  %v2460 = vpow.pop %v2459
  %v2461 = vmul.f32 %v2401, 1.442695
  %v2462 = vpow.pop %v2461
  %v2463 = vmul.f32 %v2402, 1.442695
  %v2464 = vpow.pop %v2463
  %v2465 = vmul.f32 %v2403, 1.442695
  %v2466 = vpow.pop %v2465
  %v2467 = vmul.f32 %v2404, 1.442695
  %v2468 = vpow.pop %v2467
  %2469 = vmatprep.subr.mxu0 0.0
  %2470 = vmatpush1.msra.mxu0 %v436
  %2471 = vmatprep.subr.mxu0 0.0
  %2472 = vmatpush1.msra.mxu0 %v437
  %2473 = vmatprep.subr.mxu0 0.0
  %2474 = vmatpush1.msra.mxu0 %v438
  %2475 = vmatprep.subr.mxu0 0.0
  %2476 = vmatpush1.msra.mxu0 %v439
  %2477 = vmatprep.subr.mxu0 0.0
  %2478 = vmatpush1.msra.mxu0 %v440
  %2479 = vmatprep.subr.mxu0 0.0
  %2480 = vmatpush1.msra.mxu0 %v441
  %2481 = vmatprep.subr.mxu0 0.0
  %2482 = vmatpush1.msra.mxu0 %v442
  %2483 = vmatprep.subr.mxu0 0.0
  %2484 = vmatpush1.msra.mxu0 %v443
  %2485 = vmatprep.subr.mxu0 0.0
  %2486 = vmatpush1.msra.mxu0 %v444
  %2487 = vmatprep.subr.mxu0 0.0
  %2488 = vmatpush1.msra.mxu0 %v445
  %2489 = vmatprep.subr.mxu0 0.0
  %2490 = vmatpush1.msra.mxu0 %v446
  %2491 = vmatprep.subr.mxu0 0.0
  %2492 = vmatpush1.msra.mxu0 %v447
  %2493 = vmatprep.subr.mxu0 0.0
  %2494 = vmatpush1.msra.mxu0 %v448
  %2495 = vmatprep.subr.mxu0 0.0
  %2496 = vmatpush1.msra.mxu0 %v449
  %2497 = vmatprep.subr.mxu0 0.0
  %2498 = vmatpush1.msra.mxu0 %v450
  %2499 = vmatprep.subr.mxu0 0.0
  %2500 = vmatpush1.msra.mxu0 %v451
  %2501 = vmatprep.subr.mxu0 0.0
  %2502 = vmatpush1.msra.mxu0 0.0
  %2503 = vmatprep.subr.mxu0 0.0
  %2504 = vmatpush1.msra.mxu0 0.0
  %2505 = vmatprep.subr.mxu0 0.0
  %2506 = vmatpush1.msra.mxu0 0.0
  %2507 = vmatprep.subr.mxu0 0.0
  %2508 = vmatpush1.msra.mxu0 0.0
  %2509 = vmatprep.subr.mxu0 0.0
  %2510 = vmatpush1.msra.mxu0 0.0
  %2511 = vmatprep.subr.mxu0 0.0
  %2512 = vmatpush1.msra.mxu0 0.0
  %2513 = vmatprep.subr.mxu0 0.0
  %2514 = vmatpush1.msra.mxu0 0.0
  %2515 = vmatprep.subr.mxu0 0.0
  %2516 = vmatpush1.msra.mxu0 0.0
  %2517 = vmatprep.subr.mxu0 0.0
  %2518 = vmatpush1.msra.mxu0 0.0
  %2519 = vmatprep.subr.mxu0 0.0
  %2520 = vmatpush1.msra.mxu0 0.0
  %2521 = vmatprep.subr.mxu0 0.0
  %2522 = vmatpush1.msra.mxu0 0.0
  %2523 = vmatprep.subr.mxu0 0.0
  %2524 = vmatpush1.msra.mxu0 0.0
  %2525 = vmatprep.subr.mxu0 0.0
  %2526 = vmatpush1.msra.mxu0 0.0
  %2527 = vmatprep.subr.mxu0 0.0
  %2528 = vmatpush1.msra.mxu0 0.0
  %2529 = vmatprep.subr.mxu0 0.0
  %2530 = vmatpush1.msra.mxu0 0.0
  %2531 = vmatprep.subr.mxu0 0.0
  %2532 = vmatpush1.msra.mxu0 0.0
  %2533 = vmatprep.mubr.f32.mxu0 0.0
  %2534 = vmatmul.mubr.f32.gmra.mrb[0].mxu0 %v2406
  %v2535 = vpop.f32.mrb[0].mxu0
  %v2536 = vadd.f32 0.0, %v2535
  %v2537 = vpop.f32.mrb[0].mxu0
  %2538 = vmatprep.mubr.f32.mxu0 0.0
  %2539 = vmatmul.mubr.f32.gmra.mrb[0].mxu0 %v2408
  %v2540 = vpop.f32.mrb[0].mxu0
  %v2541 = vadd.f32 0.0, %v2540
  %v2542 = vpop.f32.mrb[0].mxu0
  %2543 = vmatprep.mubr.f32.mxu0 0.0
  %2544 = vmatmul.mubr.f32.gmra.mrb[0].mxu0 %v2410
  %v2545 = vpop.f32.mrb[0].mxu0
  %v2546 = vadd.f32 0.0, %v2545
  %v2547 = vpop.f32.mrb[0].mxu0
  %2548 = vmatprep.mubr.f32.mxu0 0.0
  %2549 = vmatmul.mubr.f32.gmra.mrb[0].mxu0 %v2412
  %v2550 = vpop.f32.mrb[0].mxu0
  %v2551 = vadd.f32 0.0, %v2550
  %v2552 = vpop.f32.mrb[0].mxu0
  %2553 = vmatprep.mubr.f32.mxu0 0.0
  %2554 = vmatmul.mubr.f32.gmra.mrb[0].mxu0 %v2414
  %v2555 = vpop.f32.mrb[0].mxu0
  %v2556 = vadd.f32 0.0, %v2555
  %v2557 = vpop.f32.mrb[0].mxu0
  %2558 = vmatprep.mubr.f32.mxu0 0.0
  %2559 = vmatmul.mubr.f32.gmra.mrb[0].mxu0 %v2416
  %v2560 = vpop.f32.mrb[0].mxu0
  %v2561 = vadd.f32 0.0, %v2560
  %v2562 = vpop.f32.mrb[0].mxu0
  %2563 = vmatprep.mubr.f32.mxu0 0.0
  %2564 = vmatmul.mubr.f32.gmra.mrb[0].mxu0 %v2418
  %v2565 = vpop.f32.mrb[0].mxu0
  %v2566 = vadd.f32 0.0, %v2565
  %v2567 = vpop.f32.mrb[0].mxu0
  %2568 = vmatprep.mubr.f32.mxu0 0.0
  %2569 = vmatmul.mubr.f32.gmra.mrb[0].mxu0 %v2420
  %v2570 = vpop.f32.mrb[0].mxu0
  %v2571 = vadd.f32 0.0, %v2570
  %v2572 = vpop.f32.mrb[0].mxu0
  %2573 = vmatprep.mubr.f32.mxu0 0.0
  %2574 = vmatmul.mubr.f32.gmra.mrb[0].mxu0 %v2422
  %v2575 = vpop.f32.mrb[0].mxu0
  %v2576 = vadd.f32 0.0, %v2575
  %v2577 = vpop.f32.mrb[0].mxu0
  %2578 = vmatprep.mubr.f32.mxu0 0.0
  %2579 = vmatmul.mubr.f32.gmra.mrb[0].mxu0 %v2424
  %v2580 = vpop.f32.mrb[0].mxu0
  %v2581 = vadd.f32 0.0, %v2580
  %v2582 = vpop.f32.mrb[0].mxu0
  %2583 = vmatprep.mubr.f32.mxu0 0.0
  %2584 = vmatmul.mubr.f32.gmra.mrb[0].mxu0 %v2426
  %v2585 = vpop.f32.mrb[0].mxu0
  %v2586 = vadd.f32 0.0, %v2585
  %v2587 = vpop.f32.mrb[0].mxu0
  %2588 = vmatprep.mubr.f32.mxu0 0.0
  %2589 = vmatmul.mubr.f32.gmra.mrb[0].mxu0 %v2428
  %v2590 = vpop.f32.mrb[0].mxu0
  %v2591 = vadd.f32 0.0, %v2590
  %v2592 = vpop.f32.mrb[0].mxu0
  %2593 = vmatprep.mubr.f32.mxu0 0.0
  %2594 = vmatmul.mubr.f32.gmra.mrb[0].mxu0 %v2430
  %v2595 = vpop.f32.mrb[0].mxu0
  %v2596 = vadd.f32 0.0, %v2595
  %v2597 = vpop.f32.mrb[0].mxu0
  %2598 = vmatprep.mubr.f32.mxu0 0.0
  %2599 = vmatmul.mubr.f32.gmra.mrb[0].mxu0 %v2432
  %v2600 = vpop.f32.mrb[0].mxu0
  %v2601 = vadd.f32 0.0, %v2600
  %v2602 = vpop.f32.mrb[0].mxu0
  %2603 = vmatprep.mubr.f32.mxu0 0.0
  %2604 = vmatmul.mubr.f32.gmra.mrb[0].mxu0 %v2434
  %v2605 = vpop.f32.mrb[0].mxu0
  %v2606 = vadd.f32 0.0, %v2605
  %v2607 = vpop.f32.mrb[0].mxu0
  %2608 = vmatprep.mubr.f32.mxu0 0.0
  %2609 = vmatmul.mubr.f32.gmra.mrb[0].mxu0 %v2436
  %v2610 = vpop.f32.mrb[0].mxu0
  %v2611 = vadd.f32 0.0, %v2610
  %v2612 = vpop.f32.mrb[0].mxu0
  %2613 = vmatprep.mubr.f32.mxu0 0.0
  %2614 = vmatmul.mubr.f32.gmra.mrb[0].mxu0 %v2438
  %v2615 = vpop.f32.mrb[0].mxu0
  %v2616 = vadd.f32 0.0, %v2615
  %v2617 = vpop.f32.mrb[0].mxu0
  %2618 = vmatprep.mubr.f32.mxu0 0.0
  %2619 = vmatmul.mubr.f32.gmra.mrb[0].mxu0 %v2440
  %v2620 = vpop.f32.mrb[0].mxu0
  %v2621 = vadd.f32 0.0, %v2620
  %v2622 = vpop.f32.mrb[0].mxu0
  %2623 = vmatprep.mubr.f32.mxu0 0.0
  %2624 = vmatmul.mubr.f32.gmra.mrb[0].mxu0 %v2442
  %v2625 = vpop.f32.mrb[0].mxu0
  %v2626 = vadd.f32 0.0, %v2625
  %v2627 = vpop.f32.mrb[0].mxu0
  %2628 = vmatprep.mubr.f32.mxu0 0.0
  %2629 = vmatmul.mubr.f32.gmra.mrb[0].mxu0 %v2444
  %v2630 = vpop.f32.mrb[0].mxu0
  %v2631 = vadd.f32 0.0, %v2630
  %v2632 = vpop.f32.mrb[0].mxu0
  %2633 = vmatprep.mubr.f32.mxu0 0.0
  %2634 = vmatmul.mubr.f32.gmra.mrb[0].mxu0 %v2446
  %v2635 = vpop.f32.mrb[0].mxu0
  %v2636 = vadd.f32 0.0, %v2635
  %v2637 = vpop.f32.mrb[0].mxu0
  %2638 = vmatprep.mubr.f32.mxu0 0.0
  %2639 = vmatmul.mubr.f32.gmra.mrb[0].mxu0 %v2448
  %v2640 = vpop.f32.mrb[0].mxu0
  %v2641 = vadd.f32 0.0, %v2640
  %v2642 = vpop.f32.mrb[0].mxu0
  %2643 = vmatprep.mubr.f32.mxu0 0.0
  %2644 = vmatmul.mubr.f32.gmra.mrb[0].mxu0 %v2450
  %v2645 = vpop.f32.mrb[0].mxu0
  %v2646 = vadd.f32 0.0, %v2645
  %v2647 = vpop.f32.mrb[0].mxu0
  %2648 = vmatprep.mubr.f32.mxu0 0.0
  %2649 = vmatmul.mubr.f32.gmra.mrb[0].mxu0 %v2452
  %v2650 = vpop.f32.mrb[0].mxu0
  %v2651 = vadd.f32 0.0, %v2650
  %v2652 = vpop.f32.mrb[0].mxu0
  %2653 = vmatprep.mubr.f32.mxu0 0.0
  %2654 = vmatmul.mubr.f32.gmra.mrb[0].mxu0 %v2454
  %v2655 = vpop.f32.mrb[0].mxu0
  %v2656 = vadd.f32 0.0, %v2655
  %v2657 = vpop.f32.mrb[0].mxu0
  %2658 = vmatprep.mubr.f32.mxu0 0.0
  %2659 = vmatmul.mubr.f32.gmra.mrb[0].mxu0 %v2456
  %v2660 = vpop.f32.mrb[0].mxu0
  %v2661 = vadd.f32 0.0, %v2660
  %v2662 = vpop.f32.mrb[0].mxu0
  %2663 = vmatprep.mubr.f32.mxu0 0.0
  %2664 = vmatmul.mubr.f32.gmra.mrb[0].mxu0 %v2458
  %v2665 = vpop.f32.mrb[0].mxu0
  %v2666 = vadd.f32 0.0, %v2665
  %v2667 = vpop.f32.mrb[0].mxu0
  %2668 = vmatprep.mubr.f32.mxu0 0.0
  %2669 = vmatmul.mubr.f32.gmra.mrb[0].mxu0 %v2460
  %v2670 = vpop.f32.mrb[0].mxu0
  %v2671 = vadd.f32 0.0, %v2670
  %v2672 = vpop.f32.mrb[0].mxu0
  %2673 = vmatprep.mubr.f32.mxu0 0.0
  %2674 = vmatmul.mubr.f32.gmra.mrb[0].mxu0 %v2462
  %v2675 = vpop.f32.mrb[0].mxu0
  %v2676 = vadd.f32 0.0, %v2675
  %v2677 = vpop.f32.mrb[0].mxu0
  %2678 = vmatprep.mubr.f32.mxu0 0.0
  %2679 = vmatmul.mubr.f32.gmra.mrb[0].mxu0 %v2464
  %v2680 = vpop.f32.mrb[0].mxu0
  %v2681 = vadd.f32 0.0, %v2680
  %v2682 = vpop.f32.mrb[0].mxu0
  %2683 = vmatprep.mubr.f32.mxu0 0.0
  %2684 = vmatmul.mubr.f32.gmra.mrb[0].mxu0 %v2466
  %v2685 = vpop.f32.mrb[0].mxu0
  %v2686 = vadd.f32 0.0, %v2685
  %v2687 = vpop.f32.mrb[0].mxu0
  %2688 = vmatprep.mubr.f32.mxu0 0.0
  %2689 = vmatmul.mubr.f32.gmra.mrb[0].mxu0 %v2468
  %v2690 = vpop.f32.mrb[0].mxu0
  %v2691 = vadd.f32 0.0, %v2690
  %v2692 = vpop.f32.mrb[0].mxu0
  %2693 = vdwg.mxu0
  %v2694 = vrcp.pop %v2536
  %v2695 = vrcp.pop %v2541
  %v2696 = vrcp.pop %v2546
  %v2697 = vrcp.pop %v2551
  %v2698 = vrcp.pop %v2556
  %v2699 = vrcp.pop %v2561
  %v2700 = vrcp.pop %v2566
  %v2701 = vrcp.pop %v2571
  %v2702 = vrcp.pop %v2576
  %v2703 = vrcp.pop %v2581
  %v2704 = vrcp.pop %v2586
  %v2705 = vrcp.pop %v2591
  %v2706 = vrcp.pop %v2596
  %v2707 = vrcp.pop %v2601
  %v2708 = vrcp.pop %v2606
  %v2709 = vrcp.pop %v2611
  %v2710 = vrcp.pop %v2616
  %v2711 = vrcp.pop %v2621
  %v2712 = vrcp.pop %v2626
  %v2713 = vrcp.pop %v2631
  %v2714 = vrcp.pop %v2636
  %v2715 = vrcp.pop %v2641
  %v2716 = vrcp.pop %v2646
  %v2717 = vrcp.pop %v2651
  %v2718 = vrcp.pop %v2656
  %v2719 = vrcp.pop %v2661
  %v2720 = vrcp.pop %v2666
  %v2721 = vrcp.pop %v2671
  %v2722 = vrcp.pop %v2676
  %v2723 = vrcp.pop %v2681
  %v2724 = vrcp.pop %v2686
  %v2725 = vrcp.pop %v2691
  %v2726 = vmul.f32 %v2406, %v2694
  %v2727 = vmul.f32 %v2408, %v2695
  %v2728 = vmul.f32 %v2410, %v2696
  %v2729 = vmul.f32 %v2412, %v2697
  %v2730 = vmul.f32 %v2414, %v2698
  %v2731 = vmul.f32 %v2416, %v2699
  %v2732 = vmul.f32 %v2418, %v2700
  %v2733 = vmul.f32 %v2420, %v2701
  %v2734 = vmul.f32 %v2422, %v2702
  %v2735 = vmul.f32 %v2424, %v2703
  %v2736 = vmul.f32 %v2426, %v2704
  %v2737 = vmul.f32 %v2428, %v2705
  %v2738 = vmul.f32 %v2430, %v2706
  %v2739 = vmul.f32 %v2432, %v2707
  %v2740 = vmul.f32 %v2434, %v2708
  %v2741 = vmul.f32 %v2436, %v2709
  %v2742 = vmul.f32 %v2438, %v2710
  %v2743 = vmul.f32 %v2440, %v2711
  %v2744 = vmul.f32 %v2442, %v2712
  %v2745 = vmul.f32 %v2444, %v2713
  %v2746 = vmul.f32 %v2446, %v2714
  %v2747 = vmul.f32 %v2448, %v2715
  %v2748 = vmul.f32 %v2450, %v2716
  %v2749 = vmul.f32 %v2452, %v2717
  %v2750 = vmul.f32 %v2454, %v2718
  %v2751 = vmul.f32 %v2456, %v2719
  %v2752 = vmul.f32 %v2458, %v2720
  %v2753 = vmul.f32 %v2460, %v2721
  %v2754 = vmul.f32 %v2462, %v2722
  %v2755 = vmul.f32 %v2464, %v2723
  %v2756 = vmul.f32 %v2466, %v2724
  %v2757 = vmul.f32 %v2468, %v2725
  %v2758 = vpack.c.bf16 %v2727, %v2726
  %v2759 = vpack.c.bf16 %v2729, %v2728
  %v2760 = vpack.c.bf16 %v2731, %v2730
  %v2761 = vpack.c.bf16 %v2733, %v2732
  %v2762 = vpack.c.bf16 %v2735, %v2734
  %v2763 = vpack.c.bf16 %v2737, %v2736
  %v2764 = vpack.c.bf16 %v2739, %v2738
  %v2765 = vpack.c.bf16 %v2741, %v2740
  %v2766 = vpack.c.bf16 %v2743, %v2742
  %v2767 = vpack.c.bf16 %v2745, %v2744
  %v2768 = vpack.c.bf16 %v2747, %v2746
  %v2769 = vpack.c.bf16 %v2749, %v2748
  %v2770 = vpack.c.bf16 %v2751, %v2750
  %v2771 = vpack.c.bf16 %v2753, %v2752
  %v2772 = vpack.c.bf16 %v2755, %v2754
  %v2773 = vpack.c.bf16 %v2757, %v2756
  %2782 = vrot.lane.b32.xlu0 %v1353, 64
  %v2783 = vpop.permute.xlu0 %2782
  %2784 = vrot.lane.b32.xlu0 %v1354, 64
  %v2785 = vpop.permute.xlu0 %2784
  %2786 = vrot.lane.b32.xlu0 %v1355, 64
  %v2787 = vpop.permute.xlu0 %2786
  %2788 = vrot.lane.b32.xlu0 %v1356, 64
  %v2789 = vpop.permute.xlu0 %2788
  %2790 = vrot.lane.b32.xlu0 %v1357, 64
  %v2791 = vpop.permute.xlu0 %2790
  %2792 = vrot.lane.b32.xlu0 %v1358, 64
  %v2793 = vpop.permute.xlu0 %2792
  %2794 = vrot.lane.b32.xlu0 %v1359, 64
  %v2795 = vpop.permute.xlu0 %2794
  %2796 = vrot.lane.b32.xlu0 %v1360, 64
  %v2797 = vpop.permute.xlu0 %2796
  %2806 = vmatprep.subr.bf16.mxu0 0
  %2807 = vmatpush1.bf16.msra.mxu0 %v2783
  %2808 = vmatprep.subr.bf16.mxu0 0
  %2809 = vmatpush1.bf16.msra.mxu0 %v2785
  %2810 = vmatprep.subr.bf16.mxu0 0
  %2811 = vmatpush1.bf16.msra.mxu0 %v2787
  %2812 = vmatprep.subr.bf16.mxu0 0
  %2813 = vmatpush1.bf16.msra.mxu0 %v2789
  %2814 = vmatprep.subr.bf16.mxu0 0
  %2815 = vmatpush1.bf16.msra.mxu0 %v2791
  %2816 = vmatprep.subr.bf16.mxu0 0
  %2817 = vmatpush1.bf16.msra.mxu0 %v2793
  %2818 = vmatprep.subr.bf16.mxu0 0
  %2819 = vmatpush1.bf16.msra.mxu0 %v2795
  %2820 = vmatprep.subr.bf16.mxu0 0
  %2821 = vmatpush1.bf16.msra.mxu0 %v2797
  %2822 = vmatprep.subr.bf16.mxu0 0
  %2823 = vmatpush1.bf16.msra.mxu0 0
  %2824 = vmatprep.subr.bf16.mxu0 0
  %2825 = vmatpush1.bf16.msra.mxu0 0
  %2826 = vmatprep.subr.bf16.mxu0 0
  %2827 = vmatpush1.bf16.msra.mxu0 0
  %2828 = vmatprep.subr.bf16.mxu0 0
  %2829 = vmatpush1.bf16.msra.mxu0 0
  %2830 = vmatprep.subr.bf16.mxu0 0
  %2831 = vmatpush1.bf16.msra.mxu0 0
  %2832 = vmatprep.subr.bf16.mxu0 0
  %2833 = vmatpush1.bf16.msra.mxu0 0
  %2834 = vmatprep.subr.bf16.mxu0 0
  %2835 = vmatpush1.bf16.msra.mxu0 0
  %2836 = vmatprep.subr.bf16.mxu0 0
  %2837 = vmatpush1.bf16.msra.mxu0 0
  %2838 = vmatprep.mubr.bf16.mxu0 0
  %2839 = vmatmul.mubr.bf16.gmra.mrb[0].mxu0 %v2758
  %v2840 = vpop.f32.mrb[0].mxu0
  %v2841 = vadd.f32 0.0, %v2840
  %v2842 = vpop.f32.mrb[0].mxu0
  %v2843 = vpop.f32.mrb[0].mxu0
  %v2844 = vadd.f32 0.0, %v2843
  %v2845 = vpop.f32.mrb[0].mxu0
  %2846 = vmatprep.mubr.bf16.mxu0 0
  %2847 = vmatmul.mubr.bf16.gmra.mrb[0].mxu0 %v2759
  %v2848 = vpop.f32.mrb[0].mxu0
  %v2849 = vadd.f32 0.0, %v2848
  %v2850 = vpop.f32.mrb[0].mxu0
  %v2851 = vpop.f32.mrb[0].mxu0
  %v2852 = vadd.f32 0.0, %v2851
  %v2853 = vpop.f32.mrb[0].mxu0
  %2854 = vdwg.mxu0
  %2863 = vrot.lane.b32.xlu0 %v1361, 64
  %v2864 = vpop.permute.xlu0 %2863
  %2865 = vrot.lane.b32.xlu0 %v1362, 64
  %v2866 = vpop.permute.xlu0 %2865
  %2867 = vrot.lane.b32.xlu0 %v1363, 64
  %v2868 = vpop.permute.xlu0 %2867
  %2869 = vrot.lane.b32.xlu0 %v1364, 64
  %v2870 = vpop.permute.xlu0 %2869
  %2871 = vrot.lane.b32.xlu0 %v1365, 64
  %v2872 = vpop.permute.xlu0 %2871
  %2873 = vrot.lane.b32.xlu0 %v1366, 64
  %v2874 = vpop.permute.xlu0 %2873
  %2875 = vrot.lane.b32.xlu0 %v1367, 64
  %v2876 = vpop.permute.xlu0 %2875
  %2877 = vrot.lane.b32.xlu0 %v1368, 64
  %v2878 = vpop.permute.xlu0 %2877
  %2887 = vmatprep.subr.bf16.mxu0 0
  %2888 = vmatpush1.bf16.msra.mxu0 %v2864
  %2889 = vmatprep.subr.bf16.mxu0 0
  %2890 = vmatpush1.bf16.msra.mxu0 %v2866
  %2891 = vmatprep.subr.bf16.mxu0 0
  %2892 = vmatpush1.bf16.msra.mxu0 %v2868
  %2893 = vmatprep.subr.bf16.mxu0 0
  %2894 = vmatpush1.bf16.msra.mxu0 %v2870
  %2895 = vmatprep.subr.bf16.mxu0 0
  %2896 = vmatpush1.bf16.msra.mxu0 %v2872
  %2897 = vmatprep.subr.bf16.mxu0 0
  %2898 = vmatpush1.bf16.msra.mxu0 %v2874
  %2899 = vmatprep.subr.bf16.mxu0 0
  %2900 = vmatpush1.bf16.msra.mxu0 %v2876
  %2901 = vmatprep.subr.bf16.mxu0 0
  %2902 = vmatpush1.bf16.msra.mxu0 %v2878
  %2903 = vmatprep.subr.bf16.mxu0 0
  %2904 = vmatpush1.bf16.msra.mxu0 0
  %2905 = vmatprep.subr.bf16.mxu0 0
  %2906 = vmatpush1.bf16.msra.mxu0 0
  %2907 = vmatprep.subr.bf16.mxu0 0
  %2908 = vmatpush1.bf16.msra.mxu0 0
  %2909 = vmatprep.subr.bf16.mxu0 0
  %2910 = vmatpush1.bf16.msra.mxu0 0
  %2911 = vmatprep.subr.bf16.mxu0 0
  %2912 = vmatpush1.bf16.msra.mxu0 0
  %2913 = vmatprep.subr.bf16.mxu0 0
  %2914 = vmatpush1.bf16.msra.mxu0 0
  %2915 = vmatprep.subr.bf16.mxu0 0
  %2916 = vmatpush1.bf16.msra.mxu0 0
  %2917 = vmatprep.subr.bf16.mxu0 0
  %2918 = vmatpush1.bf16.msra.mxu0 0
  %2919 = vmatprep.mubr.bf16.mxu0 0
  %2920 = vmatmul.mubr.bf16.gmra.mrb[0].mxu0 %v2760
  %v2921 = vpop.f32.mrb[0].mxu0
  %v2922 = vadd.f32 0.0, %v2921
  %v2923 = vpop.f32.mrb[0].mxu0
  %v2924 = vpop.f32.mrb[0].mxu0
  %v2925 = vadd.f32 0.0, %v2924
  %v2926 = vpop.f32.mrb[0].mxu0
  %2927 = vmatprep.mubr.bf16.mxu0 0
  %2928 = vmatmul.mubr.bf16.gmra.mrb[0].mxu0 %v2761
  %v2929 = vpop.f32.mrb[0].mxu0
  %v2930 = vadd.f32 0.0, %v2929
  %v2931 = vpop.f32.mrb[0].mxu0
  %v2932 = vpop.f32.mrb[0].mxu0
  %v2933 = vadd.f32 0.0, %v2932
  %v2934 = vpop.f32.mrb[0].mxu0
  %2935 = vdwg.mxu0
  %2944 = vrot.lane.b32.xlu0 %v1369, 64
  %v2945 = vpop.permute.xlu0 %2944
  %2946 = vrot.lane.b32.xlu0 %v1370, 64
  %v2947 = vpop.permute.xlu0 %2946
  %2948 = vrot.lane.b32.xlu0 %v1371, 64
  %v2949 = vpop.permute.xlu0 %2948
  %2950 = vrot.lane.b32.xlu0 %v1372, 64
  %v2951 = vpop.permute.xlu0 %2950
  %2952 = vrot.lane.b32.xlu0 %v1373, 64
  %v2953 = vpop.permute.xlu0 %2952
  %2954 = vrot.lane.b32.xlu0 %v1374, 64
  %v2955 = vpop.permute.xlu0 %2954
  %2956 = vrot.lane.b32.xlu0 %v1375, 64
  %v2957 = vpop.permute.xlu0 %2956
  %2958 = vrot.lane.b32.xlu0 %v1376, 64
  %v2959 = vpop.permute.xlu0 %2958
  %2968 = vmatprep.subr.bf16.mxu0 0
  %2969 = vmatpush1.bf16.msra.mxu0 %v2945
  %2970 = vmatprep.subr.bf16.mxu0 0
  %2971 = vmatpush1.bf16.msra.mxu0 %v2947
  %2972 = vmatprep.subr.bf16.mxu0 0
  %2973 = vmatpush1.bf16.msra.mxu0 %v2949
  %2974 = vmatprep.subr.bf16.mxu0 0
  %2975 = vmatpush1.bf16.msra.mxu0 %v2951
  %2976 = vmatprep.subr.bf16.mxu0 0
  %2977 = vmatpush1.bf16.msra.mxu0 %v2953
  %2978 = vmatprep.subr.bf16.mxu0 0
  %2979 = vmatpush1.bf16.msra.mxu0 %v2955
  %2980 = vmatprep.subr.bf16.mxu0 0
  %2981 = vmatpush1.bf16.msra.mxu0 %v2957
  %2982 = vmatprep.subr.bf16.mxu0 0
  %2983 = vmatpush1.bf16.msra.mxu0 %v2959
  %2984 = vmatprep.subr.bf16.mxu0 0
  %2985 = vmatpush1.bf16.msra.mxu0 0
  %2986 = vmatprep.subr.bf16.mxu0 0
  %2987 = vmatpush1.bf16.msra.mxu0 0
  %2988 = vmatprep.subr.bf16.mxu0 0
  %2989 = vmatpush1.bf16.msra.mxu0 0
  %2990 = vmatprep.subr.bf16.mxu0 0
  %2991 = vmatpush1.bf16.msra.mxu0 0
  %2992 = vmatprep.subr.bf16.mxu0 0
  %2993 = vmatpush1.bf16.msra.mxu0 0
  %2994 = vmatprep.subr.bf16.mxu0 0
  %2995 = vmatpush1.bf16.msra.mxu0 0
  %2996 = vmatprep.subr.bf16.mxu0 0
  %2997 = vmatpush1.bf16.msra.mxu0 0
  %2998 = vmatprep.subr.bf16.mxu0 0
  %2999 = vmatpush1.bf16.msra.mxu0 0
  %3000 = vmatprep.mubr.bf16.mxu0 0
  %3001 = vmatmul.mubr.bf16.gmra.mrb[0].mxu0 %v2762
  %v3002 = vpop.f32.mrb[0].mxu0
  %v3003 = vadd.f32 0.0, %v3002
  %v3004 = vpop.f32.mrb[0].mxu0
  %v3005 = vpop.f32.mrb[0].mxu0
  %v3006 = vadd.f32 0.0, %v3005
  %v3007 = vpop.f32.mrb[0].mxu0
  %3008 = vmatprep.mubr.bf16.mxu0 0
  %3009 = vmatmul.mubr.bf16.gmra.mrb[0].mxu0 %v2763
  %v3010 = vpop.f32.mrb[0].mxu0
  %v3011 = vadd.f32 0.0, %v3010
  %v3012 = vpop.f32.mrb[0].mxu0
  %v3013 = vpop.f32.mrb[0].mxu0
  %v3014 = vadd.f32 0.0, %v3013
  %v3015 = vpop.f32.mrb[0].mxu0
  %3016 = vdwg.mxu0
  %3025 = vrot.lane.b32.xlu0 %v1377, 64
  %v3026 = vpop.permute.xlu0 %3025
  %3027 = vrot.lane.b32.xlu0 %v1378, 64
  %v3028 = vpop.permute.xlu0 %3027
  %3029 = vrot.lane.b32.xlu0 %v1379, 64
  %v3030 = vpop.permute.xlu0 %3029
  %3031 = vrot.lane.b32.xlu0 %v1380, 64
  %v3032 = vpop.permute.xlu0 %3031
  %3033 = vrot.lane.b32.xlu0 %v1381, 64
  %v3034 = vpop.permute.xlu0 %3033
  %3035 = vrot.lane.b32.xlu0 %v1382, 64
  %v3036 = vpop.permute.xlu0 %3035
  %3037 = vrot.lane.b32.xlu0 %v1383, 64
  %v3038 = vpop.permute.xlu0 %3037
  %3039 = vrot.lane.b32.xlu0 %v1384, 64
  %v3040 = vpop.permute.xlu0 %3039
  %3049 = vmatprep.subr.bf16.mxu0 0
  %3050 = vmatpush1.bf16.msra.mxu0 %v3026
  %3051 = vmatprep.subr.bf16.mxu0 0
  %3052 = vmatpush1.bf16.msra.mxu0 %v3028
  %3053 = vmatprep.subr.bf16.mxu0 0
  %3054 = vmatpush1.bf16.msra.mxu0 %v3030
  %3055 = vmatprep.subr.bf16.mxu0 0
  %3056 = vmatpush1.bf16.msra.mxu0 %v3032
  %3057 = vmatprep.subr.bf16.mxu0 0
  %3058 = vmatpush1.bf16.msra.mxu0 %v3034
  %3059 = vmatprep.subr.bf16.mxu0 0
  %3060 = vmatpush1.bf16.msra.mxu0 %v3036
  %3061 = vmatprep.subr.bf16.mxu0 0
  %3062 = vmatpush1.bf16.msra.mxu0 %v3038
  %3063 = vmatprep.subr.bf16.mxu0 0
  %3064 = vmatpush1.bf16.msra.mxu0 %v3040
  %3065 = vmatprep.subr.bf16.mxu0 0
  %3066 = vmatpush1.bf16.msra.mxu0 0
  %3067 = vmatprep.subr.bf16.mxu0 0
  %3068 = vmatpush1.bf16.msra.mxu0 0
  %3069 = vmatprep.subr.bf16.mxu0 0
  %3070 = vmatpush1.bf16.msra.mxu0 0
  %3071 = vmatprep.subr.bf16.mxu0 0
  %3072 = vmatpush1.bf16.msra.mxu0 0
  %3073 = vmatprep.subr.bf16.mxu0 0
  %3074 = vmatpush1.bf16.msra.mxu0 0
  %3075 = vmatprep.subr.bf16.mxu0 0
  %3076 = vmatpush1.bf16.msra.mxu0 0
  %3077 = vmatprep.subr.bf16.mxu0 0
  %3078 = vmatpush1.bf16.msra.mxu0 0
  %3079 = vmatprep.subr.bf16.mxu0 0
  %3080 = vmatpush1.bf16.msra.mxu0 0
  %3081 = vmatprep.mubr.bf16.mxu0 0
  %3082 = vmatmul.mubr.bf16.gmra.mrb[0].mxu0 %v2764
  %v3083 = vpop.f32.mrb[0].mxu0
  %v3084 = vadd.f32 0.0, %v3083
  %v3085 = vpop.f32.mrb[0].mxu0
  %v3086 = vpop.f32.mrb[0].mxu0
  %v3087 = vadd.f32 0.0, %v3086
  %v3088 = vpop.f32.mrb[0].mxu0
  %3089 = vmatprep.mubr.bf16.mxu0 0
  %3090 = vmatmul.mubr.bf16.gmra.mrb[0].mxu0 %v2765
  %v3091 = vpop.f32.mrb[0].mxu0
  %v3092 = vadd.f32 0.0, %v3091
  %v3093 = vpop.f32.mrb[0].mxu0
  %v3094 = vpop.f32.mrb[0].mxu0
  %v3095 = vadd.f32 0.0, %v3094
  %v3096 = vpop.f32.mrb[0].mxu0
  %3097 = vdwg.mxu0
  %3106 = vrot.lane.b32.xlu0 %v1385, 64
  %v3107 = vpop.permute.xlu0 %3106
  %3108 = vrot.lane.b32.xlu0 %v1386, 64
  %v3109 = vpop.permute.xlu0 %3108
  %3110 = vrot.lane.b32.xlu0 %v1387, 64
  %v3111 = vpop.permute.xlu0 %3110
  %3112 = vrot.lane.b32.xlu0 %v1388, 64
  %v3113 = vpop.permute.xlu0 %3112
  %3114 = vrot.lane.b32.xlu0 %v1389, 64
  %v3115 = vpop.permute.xlu0 %3114
  %3116 = vrot.lane.b32.xlu0 %v1390, 64
  %v3117 = vpop.permute.xlu0 %3116
  %3118 = vrot.lane.b32.xlu0 %v1391, 64
  %v3119 = vpop.permute.xlu0 %3118
  %3120 = vrot.lane.b32.xlu0 %v1392, 64
  %v3121 = vpop.permute.xlu0 %3120
  %3130 = vmatprep.subr.bf16.mxu0 0
  %3131 = vmatpush1.bf16.msra.mxu0 %v3107
  %3132 = vmatprep.subr.bf16.mxu0 0
  %3133 = vmatpush1.bf16.msra.mxu0 %v3109
  %3134 = vmatprep.subr.bf16.mxu0 0
  %3135 = vmatpush1.bf16.msra.mxu0 %v3111
  %3136 = vmatprep.subr.bf16.mxu0 0
  %3137 = vmatpush1.bf16.msra.mxu0 %v3113
  %3138 = vmatprep.subr.bf16.mxu0 0
  %3139 = vmatpush1.bf16.msra.mxu0 %v3115
  %3140 = vmatprep.subr.bf16.mxu0 0
  %3141 = vmatpush1.bf16.msra.mxu0 %v3117
  %3142 = vmatprep.subr.bf16.mxu0 0
  %3143 = vmatpush1.bf16.msra.mxu0 %v3119
  %3144 = vmatprep.subr.bf16.mxu0 0
  %3145 = vmatpush1.bf16.msra.mxu0 %v3121
  %3146 = vmatprep.subr.bf16.mxu0 0
  %3147 = vmatpush1.bf16.msra.mxu0 0
  %3148 = vmatprep.subr.bf16.mxu0 0
  %3149 = vmatpush1.bf16.msra.mxu0 0
  %3150 = vmatprep.subr.bf16.mxu0 0
  %3151 = vmatpush1.bf16.msra.mxu0 0
  %3152 = vmatprep.subr.bf16.mxu0 0
  %3153 = vmatpush1.bf16.msra.mxu0 0
  %3154 = vmatprep.subr.bf16.mxu0 0
  %3155 = vmatpush1.bf16.msra.mxu0 0
  %3156 = vmatprep.subr.bf16.mxu0 0
  %3157 = vmatpush1.bf16.msra.mxu0 0
  %3158 = vmatprep.subr.bf16.mxu0 0
  %3159 = vmatpush1.bf16.msra.mxu0 0
  %3160 = vmatprep.subr.bf16.mxu0 0
  %3161 = vmatpush1.bf16.msra.mxu0 0
  %3162 = vmatprep.mubr.bf16.mxu0 0
  %3163 = vmatmul.mubr.bf16.gmra.mrb[0].mxu0 %v2766
  %v3164 = vpop.f32.mrb[0].mxu0
  %v3165 = vadd.f32 0.0, %v3164
  %v3166 = vpop.f32.mrb[0].mxu0
  %v3167 = vpop.f32.mrb[0].mxu0
  %v3168 = vadd.f32 0.0, %v3167
  %v3169 = vpop.f32.mrb[0].mxu0
  %3170 = vmatprep.mubr.bf16.mxu0 0
  %3171 = vmatmul.mubr.bf16.gmra.mrb[0].mxu0 %v2767
  %v3172 = vpop.f32.mrb[0].mxu0
  %v3173 = vadd.f32 0.0, %v3172
  %v3174 = vpop.f32.mrb[0].mxu0
  %v3175 = vpop.f32.mrb[0].mxu0
  %v3176 = vadd.f32 0.0, %v3175
  %v3177 = vpop.f32.mrb[0].mxu0
  %3178 = vdwg.mxu0
  %3187 = vrot.lane.b32.xlu0 %v1393, 64
  %v3188 = vpop.permute.xlu0 %3187
  %3189 = vrot.lane.b32.xlu0 %v1394, 64
  %v3190 = vpop.permute.xlu0 %3189
  %3191 = vrot.lane.b32.xlu0 %v1395, 64
  %v3192 = vpop.permute.xlu0 %3191
  %3193 = vrot.lane.b32.xlu0 %v1396, 64
  %v3194 = vpop.permute.xlu0 %3193
  %3195 = vrot.lane.b32.xlu0 %v1397, 64
  %v3196 = vpop.permute.xlu0 %3195
  %3197 = vrot.lane.b32.xlu0 %v1398, 64
  %v3198 = vpop.permute.xlu0 %3197
  %3199 = vrot.lane.b32.xlu0 %v1399, 64
  %v3200 = vpop.permute.xlu0 %3199
  %3201 = vrot.lane.b32.xlu0 %v1400, 64
  %v3202 = vpop.permute.xlu0 %3201
  %3211 = vmatprep.subr.bf16.mxu0 0
  %3212 = vmatpush1.bf16.msra.mxu0 %v3188
  %3213 = vmatprep.subr.bf16.mxu0 0
  %3214 = vmatpush1.bf16.msra.mxu0 %v3190
  %3215 = vmatprep.subr.bf16.mxu0 0
  %3216 = vmatpush1.bf16.msra.mxu0 %v3192
  %3217 = vmatprep.subr.bf16.mxu0 0
  %3218 = vmatpush1.bf16.msra.mxu0 %v3194
  %3219 = vmatprep.subr.bf16.mxu0 0
  %3220 = vmatpush1.bf16.msra.mxu0 %v3196
  %3221 = vmatprep.subr.bf16.mxu0 0
  %3222 = vmatpush1.bf16.msra.mxu0 %v3198
  %3223 = vmatprep.subr.bf16.mxu0 0
  %3224 = vmatpush1.bf16.msra.mxu0 %v3200
  %3225 = vmatprep.subr.bf16.mxu0 0
  %3226 = vmatpush1.bf16.msra.mxu0 %v3202
  %3227 = vmatprep.subr.bf16.mxu0 0
  %3228 = vmatpush1.bf16.msra.mxu0 0
  %3229 = vmatprep.subr.bf16.mxu0 0
  %3230 = vmatpush1.bf16.msra.mxu0 0
  %3231 = vmatprep.subr.bf16.mxu0 0
  %3232 = vmatpush1.bf16.msra.mxu0 0
  %3233 = vmatprep.subr.bf16.mxu0 0
  %3234 = vmatpush1.bf16.msra.mxu0 0
  %3235 = vmatprep.subr.bf16.mxu0 0
  %3236 = vmatpush1.bf16.msra.mxu0 0
  %3237 = vmatprep.subr.bf16.mxu0 0
  %3238 = vmatpush1.bf16.msra.mxu0 0
  %3239 = vmatprep.subr.bf16.mxu0 0
  %3240 = vmatpush1.bf16.msra.mxu0 0
  %3241 = vmatprep.subr.bf16.mxu0 0
  %3242 = vmatpush1.bf16.msra.mxu0 0
  %3243 = vmatprep.mubr.bf16.mxu0 0
  %3244 = vmatmul.mubr.bf16.gmra.mrb[0].mxu0 %v2768
  %v3245 = vpop.f32.mrb[0].mxu0
  %v3246 = vadd.f32 0.0, %v3245
  %v3247 = vpop.f32.mrb[0].mxu0
  %v3248 = vpop.f32.mrb[0].mxu0
  %v3249 = vadd.f32 0.0, %v3248
  %v3250 = vpop.f32.mrb[0].mxu0
  %3251 = vmatprep.mubr.bf16.mxu0 0
  %3252 = vmatmul.mubr.bf16.gmra.mrb[0].mxu0 %v2769
  %v3253 = vpop.f32.mrb[0].mxu0
  %v3254 = vadd.f32 0.0, %v3253
  %v3255 = vpop.f32.mrb[0].mxu0
  %v3256 = vpop.f32.mrb[0].mxu0
  %v3257 = vadd.f32 0.0, %v3256
  %v3258 = vpop.f32.mrb[0].mxu0
  %3259 = vdwg.mxu0
  %3268 = vrot.lane.b32.xlu0 %v1401, 64
  %v3269 = vpop.permute.xlu0 %3268
  %3270 = vrot.lane.b32.xlu0 %v1402, 64
  %v3271 = vpop.permute.xlu0 %3270
  %3272 = vrot.lane.b32.xlu0 %v1403, 64
  %v3273 = vpop.permute.xlu0 %3272
  %3274 = vrot.lane.b32.xlu0 %v1404, 64
  %v3275 = vpop.permute.xlu0 %3274
  %3276 = vrot.lane.b32.xlu0 %v1405, 64
  %v3277 = vpop.permute.xlu0 %3276
  %3278 = vrot.lane.b32.xlu0 %v1406, 64
  %v3279 = vpop.permute.xlu0 %3278
  %3280 = vrot.lane.b32.xlu0 %v1407, 64
  %v3281 = vpop.permute.xlu0 %3280
  %3282 = vrot.lane.b32.xlu0 %v1408, 64
  %v3283 = vpop.permute.xlu0 %3282
  %3292 = vmatprep.subr.bf16.mxu0 0
  %3293 = vmatpush1.bf16.msra.mxu0 %v3269
  %3294 = vmatprep.subr.bf16.mxu0 0
  %3295 = vmatpush1.bf16.msra.mxu0 %v3271
  %3296 = vmatprep.subr.bf16.mxu0 0
  %3297 = vmatpush1.bf16.msra.mxu0 %v3273
  %3298 = vmatprep.subr.bf16.mxu0 0
  %3299 = vmatpush1.bf16.msra.mxu0 %v3275
  %3300 = vmatprep.subr.bf16.mxu0 0
  %3301 = vmatpush1.bf16.msra.mxu0 %v3277
  %3302 = vmatprep.subr.bf16.mxu0 0
  %3303 = vmatpush1.bf16.msra.mxu0 %v3279
  %3304 = vmatprep.subr.bf16.mxu0 0
  %3305 = vmatpush1.bf16.msra.mxu0 %v3281
  %3306 = vmatprep.subr.bf16.mxu0 0
  %3307 = vmatpush1.bf16.msra.mxu0 %v3283
  %3308 = vmatprep.subr.bf16.mxu0 0
  %3309 = vmatpush1.bf16.msra.mxu0 0
  %3310 = vmatprep.subr.bf16.mxu0 0
  %3311 = vmatpush1.bf16.msra.mxu0 0
  %3312 = vmatprep.subr.bf16.mxu0 0
  %3313 = vmatpush1.bf16.msra.mxu0 0
  %3314 = vmatprep.subr.bf16.mxu0 0
  %3315 = vmatpush1.bf16.msra.mxu0 0
  %3316 = vmatprep.subr.bf16.mxu0 0
  %3317 = vmatpush1.bf16.msra.mxu0 0
  %3318 = vmatprep.subr.bf16.mxu0 0
  %3319 = vmatpush1.bf16.msra.mxu0 0
  %3320 = vmatprep.subr.bf16.mxu0 0
  %3321 = vmatpush1.bf16.msra.mxu0 0
  %3322 = vmatprep.subr.bf16.mxu0 0
  %3323 = vmatpush1.bf16.msra.mxu0 0
  %3324 = vmatprep.mubr.bf16.mxu0 0
  %3325 = vmatmul.mubr.bf16.gmra.mrb[0].mxu0 %v2770
  %v3326 = vpop.f32.mrb[0].mxu0
  %v3327 = vadd.f32 0.0, %v3326
  %v3328 = vpop.f32.mrb[0].mxu0
  %v3329 = vpop.f32.mrb[0].mxu0
  %v3330 = vadd.f32 0.0, %v3329
  %v3331 = vpop.f32.mrb[0].mxu0
  %3332 = vmatprep.mubr.bf16.mxu0 0
  %3333 = vmatmul.mubr.bf16.gmra.mrb[0].mxu0 %v2771
  %v3334 = vpop.f32.mrb[0].mxu0
  %v3335 = vadd.f32 0.0, %v3334
  %v3336 = vpop.f32.mrb[0].mxu0
  %v3337 = vpop.f32.mrb[0].mxu0
  %v3338 = vadd.f32 0.0, %v3337
  %v3339 = vpop.f32.mrb[0].mxu0
  %3340 = vdwg.mxu0
  %3349 = vrot.lane.b32.xlu0 %v1409, 64
  %v3350 = vpop.permute.xlu0 %3349
  %3351 = vrot.lane.b32.xlu0 %v1410, 64
  %v3352 = vpop.permute.xlu0 %3351
  %3353 = vrot.lane.b32.xlu0 %v1411, 64
  %v3354 = vpop.permute.xlu0 %3353
  %3355 = vrot.lane.b32.xlu0 %v1412, 64
  %v3356 = vpop.permute.xlu0 %3355
  %3357 = vrot.lane.b32.xlu0 %v1413, 64
  %v3358 = vpop.permute.xlu0 %3357
  %3359 = vrot.lane.b32.xlu0 %v1414, 64
  %v3360 = vpop.permute.xlu0 %3359
  %3361 = vrot.lane.b32.xlu0 %v1415, 64
  %v3362 = vpop.permute.xlu0 %3361
  %3363 = vrot.lane.b32.xlu0 %v1416, 64
  %v3364 = vpop.permute.xlu0 %3363
  %3373 = vmatprep.subr.bf16.mxu0 0
  %3374 = vmatpush1.bf16.msra.mxu0 %v3350
  %3375 = vmatprep.subr.bf16.mxu0 0
  %3376 = vmatpush1.bf16.msra.mxu0 %v3352
  %3377 = vmatprep.subr.bf16.mxu0 0
  %3378 = vmatpush1.bf16.msra.mxu0 %v3354
  %3379 = vmatprep.subr.bf16.mxu0 0
  %3380 = vmatpush1.bf16.msra.mxu0 %v3356
  %3381 = vmatprep.subr.bf16.mxu0 0
  %3382 = vmatpush1.bf16.msra.mxu0 %v3358
  %3383 = vmatprep.subr.bf16.mxu0 0
  %3384 = vmatpush1.bf16.msra.mxu0 %v3360
  %3385 = vmatprep.subr.bf16.mxu0 0
  %3386 = vmatpush1.bf16.msra.mxu0 %v3362
  %3387 = vmatprep.subr.bf16.mxu0 0
  %3388 = vmatpush1.bf16.msra.mxu0 %v3364
  %3389 = vmatprep.subr.bf16.mxu0 0
  %3390 = vmatpush1.bf16.msra.mxu0 0
  %3391 = vmatprep.subr.bf16.mxu0 0
  %3392 = vmatpush1.bf16.msra.mxu0 0
  %3393 = vmatprep.subr.bf16.mxu0 0
  %3394 = vmatpush1.bf16.msra.mxu0 0
  %3395 = vmatprep.subr.bf16.mxu0 0
  %3396 = vmatpush1.bf16.msra.mxu0 0
  %3397 = vmatprep.subr.bf16.mxu0 0
  %3398 = vmatpush1.bf16.msra.mxu0 0
  %3399 = vmatprep.subr.bf16.mxu0 0
  %3400 = vmatpush1.bf16.msra.mxu0 0
  %3401 = vmatprep.subr.bf16.mxu0 0
  %3402 = vmatpush1.bf16.msra.mxu0 0
  %3403 = vmatprep.subr.bf16.mxu0 0
  %3404 = vmatpush1.bf16.msra.mxu0 0
  %3405 = vmatprep.mubr.bf16.mxu0 0
  %3406 = vmatmul.mubr.bf16.gmra.mrb[0].mxu0 %v2772
  %v3407 = vpop.f32.mrb[0].mxu0
  %v3408 = vadd.f32 0.0, %v3407
  %v3409 = vpop.f32.mrb[0].mxu0
  %v3410 = vpop.f32.mrb[0].mxu0
  %v3411 = vadd.f32 0.0, %v3410
  %v3412 = vpop.f32.mrb[0].mxu0
  %3413 = vmatprep.mubr.bf16.mxu0 0
  %3414 = vmatmul.mubr.bf16.gmra.mrb[0].mxu0 %v2773
  %v3415 = vpop.f32.mrb[0].mxu0
  %v3416 = vadd.f32 0.0, %v3415
  %v3417 = vpop.f32.mrb[0].mxu0
  %v3418 = vpop.f32.mrb[0].mxu0
  %v3419 = vadd.f32 0.0, %v3418
  %v3420 = vpop.f32.mrb[0].mxu0
  %3421 = vdwg.mxu0
  %v3422 = vpack.c.bf16 %v2844, %v2841
  %v3423 = vpack.c.bf16 %v2852, %v2849
  %v3424 = vpack.c.bf16 %v2925, %v2922
  %v3425 = vpack.c.bf16 %v2933, %v2930
  %v3426 = vpack.c.bf16 %v3006, %v3003
  %v3427 = vpack.c.bf16 %v3014, %v3011
  %v3428 = vpack.c.bf16 %v3087, %v3084
  %v3429 = vpack.c.bf16 %v3095, %v3092
  %v3430 = vpack.c.bf16 %v3168, %v3165
  %v3431 = vpack.c.bf16 %v3176, %v3173
  %v3432 = vpack.c.bf16 %v3249, %v3246
  %v3433 = vpack.c.bf16 %v3257, %v3254
  %v3434 = vpack.c.bf16 %v3330, %v3327
  %v3435 = vpack.c.bf16 %v3338, %v3335
  %v3436 = vpack.c.bf16 %v3411, %v3408
  %v3437 = vpack.c.bf16 %v3419, %v3416
  %v3438 = vld [vmem:[%s4] sm:$0xf]
  %v3439 = vld [vmem:[%s4 + $0x4] sm:$0xf]
  %v3440 = vld [vmem:[%s4 + $0x8] sm:$0xf]
  %v3441 = vld [vmem:[%s4 + $0xc] sm:$0xf]
  %v3446 = vunpack.c.l.b16 %v3438
  %v3447 = vunpack.c.l.b16 %v3439
  %v3448 = vunpack.c.l.b16 %v3440
  %v3449 = vunpack.c.l.b16 %v3441
  %v3450 = vpack.c.b16 %v3447, %v3446
  %v3451 = vpack.c.b16 %v3449, %v3448
  %v3455 = vsel %vm454, %v3422, 0
  %v3458 = vsel %vm454, %v3423, 0
  %v3461 = vsel %vm454, %v3424, 0
  %v3464 = vsel %vm454, %v3425, 0
  %v3467 = vsel %vm454, %v3426, 0
  %v3470 = vsel %vm454, %v3427, 0
  %v3473 = vsel %vm454, %v3428, 0
  %v3476 = vsel %vm454, %v3429, 0
  %v3479 = vsel %vm454, %v3430, 0
  %v3482 = vsel %vm454, %v3431, 0
  %v3485 = vsel %vm454, %v3432, 0
  %v3488 = vsel %vm454, %v3433, 0
  %v3491 = vsel %vm454, %v3434, 0
  %v3494 = vsel %vm454, %v3435, 0
  %v3497 = vsel %vm454, %v3436, 0
  %v3500 = vsel %vm454, %v3437, 0
  %3502 = vmatprep.subr.bf16.mxu0 0
  %3503 = vmatpush1.bf16.msra.mxu0 %v3450
  %3504 = vmatprep.subr.bf16.mxu0 0
  %3505 = vmatpush1.bf16.msra.mxu0 %v3451
  %3506 = vmatprep.subr.bf16.mxu0 0
  %3507 = vmatpush1.bf16.msra.mxu0 0
  %3508 = vmatprep.subr.bf16.mxu0 0
  %3509 = vmatpush1.bf16.msra.mxu0 0
  %3510 = vmatprep.subr.bf16.mxu0 0
  %3511 = vmatpush1.bf16.msra.mxu0 0
  %3512 = vmatprep.subr.bf16.mxu0 0
  %3513 = vmatpush1.bf16.msra.mxu0 0
  %3514 = vmatprep.subr.bf16.mxu0 0
  %3515 = vmatpush1.bf16.msra.mxu0 0
  %3516 = vmatprep.subr.bf16.mxu0 0
  %3517 = vmatpush1.bf16.msra.mxu0 0
  %3518 = vmatprep.subr.bf16.mxu0 0
  %3519 = vmatpush1.bf16.msra.mxu0 0
  %3520 = vmatprep.subr.bf16.mxu0 0
  %3521 = vmatpush1.bf16.msra.mxu0 0
  %3522 = vmatprep.subr.bf16.mxu0 0
  %3523 = vmatpush1.bf16.msra.mxu0 0
  %3524 = vmatprep.subr.bf16.mxu0 0
  %3525 = vmatpush1.bf16.msra.mxu0 0
  %3526 = vmatprep.subr.bf16.mxu0 0
  %3527 = vmatpush1.bf16.msra.mxu0 0
  %3528 = vmatprep.subr.bf16.mxu0 0
  %3529 = vmatpush1.bf16.msra.mxu0 0
  %3530 = vmatprep.subr.bf16.mxu0 0
  %3531 = vmatpush1.bf16.msra.mxu0 0
  %3532 = vmatprep.subr.bf16.mxu0 0
  %3533 = vmatpush1.bf16.msra.mxu0 0
  %3534 = vmatprep.mubr.bf16.mxu0 0
  %3535 = vmatmul.mubr.bf16.gmra.mrb[0].mxu0 %v3455
  %v3536 = vpop.f32.mrb[0].mxu0
  %v3537 = vadd.f32 0.0, %v3536
  %v3538 = vpop.f32.mrb[0].mxu0
  %v3539 = vpop.f32.mrb[0].mxu0
  %v3540 = vadd.f32 0.0, %v3539
  %v3541 = vpop.f32.mrb[0].mxu0
  %3542 = vmatprep.mubr.bf16.mxu0 0
  %3543 = vmatmul.mubr.bf16.gmra.mrb[0].mxu0 %v3458
  %v3544 = vpop.f32.mrb[0].mxu0
  %v3545 = vadd.f32 0.0, %v3544
  %v3546 = vpop.f32.mrb[0].mxu0
  %v3547 = vpop.f32.mrb[0].mxu0
  %v3548 = vadd.f32 0.0, %v3547
  %v3549 = vpop.f32.mrb[0].mxu0
  %3550 = vmatprep.mubr.bf16.mxu0 0
  %3551 = vmatmul.mubr.bf16.gmra.mrb[0].mxu0 %v3461
  %v3552 = vpop.f32.mrb[0].mxu0
  %v3553 = vadd.f32 0.0, %v3552
  %v3554 = vpop.f32.mrb[0].mxu0
  %v3555 = vpop.f32.mrb[0].mxu0
  %v3556 = vadd.f32 0.0, %v3555
  %v3557 = vpop.f32.mrb[0].mxu0
  %3558 = vmatprep.mubr.bf16.mxu0 0
  %3559 = vmatmul.mubr.bf16.gmra.mrb[0].mxu0 %v3464
  %v3560 = vpop.f32.mrb[0].mxu0
  %v3561 = vadd.f32 0.0, %v3560
  %v3562 = vpop.f32.mrb[0].mxu0
  %v3563 = vpop.f32.mrb[0].mxu0
  %v3564 = vadd.f32 0.0, %v3563
  %v3565 = vpop.f32.mrb[0].mxu0
  %3566 = vmatprep.mubr.bf16.mxu0 0
  %3567 = vmatmul.mubr.bf16.gmra.mrb[0].mxu0 %v3467
  %v3568 = vpop.f32.mrb[0].mxu0
  %v3569 = vadd.f32 0.0, %v3568
  %v3570 = vpop.f32.mrb[0].mxu0
  %v3571 = vpop.f32.mrb[0].mxu0
  %v3572 = vadd.f32 0.0, %v3571
  %v3573 = vpop.f32.mrb[0].mxu0
  %3574 = vmatprep.mubr.bf16.mxu0 0
  %3575 = vmatmul.mubr.bf16.gmra.mrb[0].mxu0 %v3470
  %v3576 = vpop.f32.mrb[0].mxu0
  %v3577 = vadd.f32 0.0, %v3576
  %v3578 = vpop.f32.mrb[0].mxu0
  %v3579 = vpop.f32.mrb[0].mxu0
  %v3580 = vadd.f32 0.0, %v3579
  %v3581 = vpop.f32.mrb[0].mxu0
  %3582 = vmatprep.mubr.bf16.mxu0 0
  %3583 = vmatmul.mubr.bf16.gmra.mrb[0].mxu0 %v3473
  %v3584 = vpop.f32.mrb[0].mxu0
  %v3585 = vadd.f32 0.0, %v3584
  %v3586 = vpop.f32.mrb[0].mxu0
  %v3587 = vpop.f32.mrb[0].mxu0
  %v3588 = vadd.f32 0.0, %v3587
  %v3589 = vpop.f32.mrb[0].mxu0
  %3590 = vmatprep.mubr.bf16.mxu0 0
  %3591 = vmatmul.mubr.bf16.gmra.mrb[0].mxu0 %v3476
  %v3592 = vpop.f32.mrb[0].mxu0
  %v3593 = vadd.f32 0.0, %v3592
  %v3594 = vpop.f32.mrb[0].mxu0
  %v3595 = vpop.f32.mrb[0].mxu0
  %v3596 = vadd.f32 0.0, %v3595
  %v3597 = vpop.f32.mrb[0].mxu0
  %3598 = vmatprep.mubr.bf16.mxu0 0
  %3599 = vmatmul.mubr.bf16.gmra.mrb[0].mxu0 %v3479
  %v3600 = vpop.f32.mrb[0].mxu0
  %v3601 = vadd.f32 0.0, %v3600
  %v3602 = vpop.f32.mrb[0].mxu0
  %v3603 = vpop.f32.mrb[0].mxu0
  %v3604 = vadd.f32 0.0, %v3603
  %v3605 = vpop.f32.mrb[0].mxu0
  %3606 = vmatprep.mubr.bf16.mxu0 0
  %3607 = vmatmul.mubr.bf16.gmra.mrb[0].mxu0 %v3482
  %v3608 = vpop.f32.mrb[0].mxu0
  %v3609 = vadd.f32 0.0, %v3608
  %v3610 = vpop.f32.mrb[0].mxu0
  %v3611 = vpop.f32.mrb[0].mxu0
  %v3612 = vadd.f32 0.0, %v3611
  %v3613 = vpop.f32.mrb[0].mxu0
  %3614 = vmatprep.mubr.bf16.mxu0 0
  %3615 = vmatmul.mubr.bf16.gmra.mrb[0].mxu0 %v3485
  %v3616 = vpop.f32.mrb[0].mxu0
  %v3617 = vadd.f32 0.0, %v3616
  %v3618 = vpop.f32.mrb[0].mxu0
  %v3619 = vpop.f32.mrb[0].mxu0
  %v3620 = vadd.f32 0.0, %v3619
  %v3621 = vpop.f32.mrb[0].mxu0
  %3622 = vmatprep.mubr.bf16.mxu0 0
  %3623 = vmatmul.mubr.bf16.gmra.mrb[0].mxu0 %v3488
  %v3624 = vpop.f32.mrb[0].mxu0
  %v3625 = vadd.f32 0.0, %v3624
  %v3626 = vpop.f32.mrb[0].mxu0
  %v3627 = vpop.f32.mrb[0].mxu0
  %v3628 = vadd.f32 0.0, %v3627
  %v3629 = vpop.f32.mrb[0].mxu0
  %3630 = vmatprep.mubr.bf16.mxu0 0
  %3631 = vmatmul.mubr.bf16.gmra.mrb[0].mxu0 %v3491
  %v3632 = vpop.f32.mrb[0].mxu0
  %v3633 = vadd.f32 0.0, %v3632
  %v3634 = vpop.f32.mrb[0].mxu0
  %v3635 = vpop.f32.mrb[0].mxu0
  %v3636 = vadd.f32 0.0, %v3635
  %v3637 = vpop.f32.mrb[0].mxu0
  %3638 = vmatprep.mubr.bf16.mxu0 0
  %3639 = vmatmul.mubr.bf16.gmra.mrb[0].mxu0 %v3494
  %v3640 = vpop.f32.mrb[0].mxu0
  %v3641 = vadd.f32 0.0, %v3640
  %v3642 = vpop.f32.mrb[0].mxu0
  %v3643 = vpop.f32.mrb[0].mxu0
  %v3644 = vadd.f32 0.0, %v3643
  %v3645 = vpop.f32.mrb[0].mxu0
  %3646 = vmatprep.mubr.bf16.mxu0 0
  %3647 = vmatmul.mubr.bf16.gmra.mrb[0].mxu0 %v3497
  %v3648 = vpop.f32.mrb[0].mxu0
  %v3649 = vadd.f32 0.0, %v3648
  %v3650 = vpop.f32.mrb[0].mxu0
  %v3651 = vpop.f32.mrb[0].mxu0
  %v3652 = vadd.f32 0.0, %v3651
  %v3653 = vpop.f32.mrb[0].mxu0
  %3654 = vmatprep.mubr.bf16.mxu0 0
  %3655 = vmatmul.mubr.bf16.gmra.mrb[0].mxu0 %v3500
  %v3656 = vpop.f32.mrb[0].mxu0
  %v3657 = vadd.f32 0.0, %v3656
  %v3658 = vpop.f32.mrb[0].mxu0
  %v3659 = vpop.f32.mrb[0].mxu0
  %v3660 = vadd.f32 0.0, %v3659
  %v3661 = vpop.f32.mrb[0].mxu0
  %3662 = vdwg.mxu0
  %v3663 = vadd.f32 %v294, %v3537
  %v3664 = vadd.f32 %v297, %v3540
  %v3665 = vadd.f32 %v302, %v3545
  %v3666 = vadd.f32 %v305, %v3548
  %v3667 = vadd.f32 %v310, %v3553
  %v3668 = vadd.f32 %v313, %v3556
  %v3669 = vadd.f32 %v318, %v3561
  %v3670 = vadd.f32 %v321, %v3564
  %v3671 = vadd.f32 %v326, %v3569
  %v3672 = vadd.f32 %v329, %v3572
  %v3673 = vadd.f32 %v334, %v3577
  %v3674 = vadd.f32 %v337, %v3580
  %v3675 = vadd.f32 %v342, %v3585
  %v3676 = vadd.f32 %v345, %v3588
  %v3677 = vadd.f32 %v350, %v3593
  %v3678 = vadd.f32 %v353, %v3596
  %v3679 = vadd.f32 %v358, %v3601
  %v3680 = vadd.f32 %v361, %v3604
  %v3681 = vadd.f32 %v366, %v3609
  %v3682 = vadd.f32 %v369, %v3612
  %v3683 = vadd.f32 %v374, %v3617
  %v3684 = vadd.f32 %v377, %v3620
  %v3685 = vadd.f32 %v382, %v3625
  %v3686 = vadd.f32 %v385, %v3628
  %v3687 = vadd.f32 %v390, %v3633
  %v3688 = vadd.f32 %v393, %v3636
  %v3689 = vadd.f32 %v398, %v3641
  %v3690 = vadd.f32 %v401, %v3644
  %v3691 = vadd.f32 %v406, %v3649
  %v3692 = vadd.f32 %v409, %v3652
  %v3693 = vadd.f32 %v414, %v3657
  %v3694 = vadd.f32 %v417, %v3660
  %v3695 = vlaneseq
  %v3696 = vshrl.u32 %v3695, 7
  %v3697 = vsub.s32 4, %v3696
  %v3698 = vrot.slane %v453, %v3697
  %v3699 = vadd.f32 %v3663, %v3698
  %v3700 = vadd.f32 %v3664, %v3698
  %v3701 = vadd.f32 %v3665, %v3698
  %v3702 = vadd.f32 %v3666, %v3698
  %v3703 = vadd.f32 %v3667, %v3698
  %v3704 = vadd.f32 %v3668, %v3698
  %v3705 = vadd.f32 %v3669, %v3698
  %v3706 = vadd.f32 %v3670, %v3698
  %v3707 = vadd.f32 %v3671, %v3698
  %v3708 = vadd.f32 %v3672, %v3698
  %v3709 = vadd.f32 %v3673, %v3698
  %v3710 = vadd.f32 %v3674, %v3698
  %v3711 = vadd.f32 %v3675, %v3698
  %v3712 = vadd.f32 %v3676, %v3698
  %v3713 = vadd.f32 %v3677, %v3698
  %v3714 = vadd.f32 %v3678, %v3698
  %v3715 = vadd.f32 %v3679, %v3698
  %v3716 = vadd.f32 %v3680, %v3698
  %v3717 = vadd.f32 %v3681, %v3698
  %v3718 = vadd.f32 %v3682, %v3698
  %v3719 = vadd.f32 %v3683, %v3698
  %v3720 = vadd.f32 %v3684, %v3698
  %v3721 = vadd.f32 %v3685, %v3698
  %v3722 = vadd.f32 %v3686, %v3698
  %v3723 = vadd.f32 %v3687, %v3698
  %v3724 = vadd.f32 %v3688, %v3698
  %v3725 = vadd.f32 %v3689, %v3698
  %v3726 = vadd.f32 %v3690, %v3698
  %v3727 = vadd.f32 %v3691, %v3698
  %v3728 = vadd.f32 %v3692, %v3698
  %v3729 = vadd.f32 %v3693, %v3698
  %v3730 = vadd.f32 %v3694, %v3698
  %v3731 = vsel %vm454, %v3699, 0.0
  %3732 = vadd.xlane.f32.xlu0 %v3731
  %v3733 = vpop.xlane.xlu0 %3732
  %v3734 = vsel %vm454, %v3700, 0.0
  %3735 = vadd.xlane.f32.xlu0 %v3734
  %v3736 = vpop.xlane.xlu0 %3735
  %v3737 = vsel %vm454, %v3701, 0.0
  %3738 = vadd.xlane.f32.xlu0 %v3737
  %v3739 = vpop.xlane.xlu0 %3738
  %v3740 = vsel %vm454, %v3702, 0.0
  %3741 = vadd.xlane.f32.xlu0 %v3740
  %v3742 = vpop.xlane.xlu0 %3741
  %v3743 = vsel %vm454, %v3703, 0.0
  %3744 = vadd.xlane.f32.xlu0 %v3743
  %v3745 = vpop.xlane.xlu0 %3744
  %v3746 = vsel %vm454, %v3704, 0.0
  %3747 = vadd.xlane.f32.xlu0 %v3746
  %v3748 = vpop.xlane.xlu0 %3747
  %v3749 = vsel %vm454, %v3705, 0.0
  %3750 = vadd.xlane.f32.xlu0 %v3749
  %v3751 = vpop.xlane.xlu0 %3750
  %v3752 = vsel %vm454, %v3706, 0.0
  %3753 = vadd.xlane.f32.xlu0 %v3752
  %v3754 = vpop.xlane.xlu0 %3753
  %v3755 = vsel %vm454, %v3707, 0.0
  %3756 = vadd.xlane.f32.xlu0 %v3755
  %v3757 = vpop.xlane.xlu0 %3756
  %v3758 = vsel %vm454, %v3708, 0.0
  %3759 = vadd.xlane.f32.xlu0 %v3758
  %v3760 = vpop.xlane.xlu0 %3759
  %v3761 = vsel %vm454, %v3709, 0.0
  %3762 = vadd.xlane.f32.xlu0 %v3761
  %v3763 = vpop.xlane.xlu0 %3762
  %v3764 = vsel %vm454, %v3710, 0.0
  %3765 = vadd.xlane.f32.xlu0 %v3764
  %v3766 = vpop.xlane.xlu0 %3765
  %v3767 = vsel %vm454, %v3711, 0.0
  %3768 = vadd.xlane.f32.xlu0 %v3767
  %v3769 = vpop.xlane.xlu0 %3768
  %v3770 = vsel %vm454, %v3712, 0.0
  %3771 = vadd.xlane.f32.xlu0 %v3770
  %v3772 = vpop.xlane.xlu0 %3771
  %v3773 = vsel %vm454, %v3713, 0.0
  %3774 = vadd.xlane.f32.xlu0 %v3773
  %v3775 = vpop.xlane.xlu0 %3774
  %v3776 = vsel %vm454, %v3714, 0.0
  %3777 = vadd.xlane.f32.xlu0 %v3776
  %v3778 = vpop.xlane.xlu0 %3777
  %v3779 = vsel %vm454, %v3715, 0.0
  %3780 = vadd.xlane.f32.xlu0 %v3779
  %v3781 = vpop.xlane.xlu0 %3780
  %v3782 = vsel %vm454, %v3716, 0.0
  %3783 = vadd.xlane.f32.xlu0 %v3782
  %v3784 = vpop.xlane.xlu0 %3783
  %v3785 = vsel %vm454, %v3717, 0.0
  %3786 = vadd.xlane.f32.xlu0 %v3785
  %v3787 = vpop.xlane.xlu0 %3786
  %v3788 = vsel %vm454, %v3718, 0.0
  %3789 = vadd.xlane.f32.xlu0 %v3788
  %v3790 = vpop.xlane.xlu0 %3789
  %v3791 = vsel %vm454, %v3719, 0.0
  %3792 = vadd.xlane.f32.xlu0 %v3791
  %v3793 = vpop.xlane.xlu0 %3792
  %v3794 = vsel %vm454, %v3720, 0.0
  %3795 = vadd.xlane.f32.xlu0 %v3794
  %v3796 = vpop.xlane.xlu0 %3795
  %v3797 = vsel %vm454, %v3721, 0.0
  %3798 = vadd.xlane.f32.xlu0 %v3797
  %v3799 = vpop.xlane.xlu0 %3798
  %v3800 = vsel %vm454, %v3722, 0.0
  %3801 = vadd.xlane.f32.xlu0 %v3800
  %v3802 = vpop.xlane.xlu0 %3801
  %v3803 = vsel %vm454, %v3723, 0.0
  %3804 = vadd.xlane.f32.xlu0 %v3803
  %v3805 = vpop.xlane.xlu0 %3804
  %v3806 = vsel %vm454, %v3724, 0.0
  %3807 = vadd.xlane.f32.xlu0 %v3806
  %v3808 = vpop.xlane.xlu0 %3807
  %v3809 = vsel %vm454, %v3725, 0.0
  %3810 = vadd.xlane.f32.xlu0 %v3809
  %v3811 = vpop.xlane.xlu0 %3810
  %v3812 = vsel %vm454, %v3726, 0.0
  %3813 = vadd.xlane.f32.xlu0 %v3812
  %v3814 = vpop.xlane.xlu0 %3813
  %v3815 = vsel %vm454, %v3727, 0.0
  %3816 = vadd.xlane.f32.xlu0 %v3815
  %v3817 = vpop.xlane.xlu0 %3816
  %v3818 = vsel %vm454, %v3728, 0.0
  %3819 = vadd.xlane.f32.xlu0 %v3818
  %v3820 = vpop.xlane.xlu0 %3819
  %v3821 = vsel %vm454, %v3729, 0.0
  %3822 = vadd.xlane.f32.xlu0 %v3821
  %v3823 = vpop.xlane.xlu0 %3822
  %v3824 = vsel %vm454, %v3730, 0.0
  %3825 = vadd.xlane.f32.xlu0 %v3824
  %v3826 = vpop.xlane.xlu0 %3825
  %v3827 = vmul.f32 %v3733, %v551
  %v3828 = vmul.f32 %v3736, %v551
  %v3829 = vmul.f32 %v3739, %v551
  %v3830 = vmul.f32 %v3742, %v551
  %v3831 = vmul.f32 %v3745, %v551
  %v3832 = vmul.f32 %v3748, %v551
  %v3833 = vmul.f32 %v3751, %v551
  %v3834 = vmul.f32 %v3754, %v551
  %v3835 = vmul.f32 %v3757, %v551
  %v3836 = vmul.f32 %v3760, %v551
  %v3837 = vmul.f32 %v3763, %v551
  %v3838 = vmul.f32 %v3766, %v551
  %v3839 = vmul.f32 %v3769, %v551
  %v3840 = vmul.f32 %v3772, %v551
  %v3841 = vmul.f32 %v3775, %v551
  %v3842 = vmul.f32 %v3778, %v551
  %v3843 = vmul.f32 %v3781, %v551
  %v3844 = vmul.f32 %v3784, %v551
  %v3845 = vmul.f32 %v3787, %v551
  %v3846 = vmul.f32 %v3790, %v551
  %v3847 = vmul.f32 %v3793, %v551
  %v3848 = vmul.f32 %v3796, %v551
  %v3849 = vmul.f32 %v3799, %v551
  %v3850 = vmul.f32 %v3802, %v551
  %v3851 = vmul.f32 %v3805, %v551
  %v3852 = vmul.f32 %v3808, %v551
  %v3853 = vmul.f32 %v3811, %v551
  %v3854 = vmul.f32 %v3814, %v551
  %v3855 = vmul.f32 %v3817, %v551
  %v3856 = vmul.f32 %v3820, %v551
  %v3857 = vmul.f32 %v3823, %v551
  %v3858 = vmul.f32 %v3826, %v551
  %v3859 = vsub.f32 %v3699, %v3827
  %v3860 = vsub.f32 %v3700, %v3828
  %v3861 = vsub.f32 %v3701, %v3829
  %v3862 = vsub.f32 %v3702, %v3830
  %v3863 = vsub.f32 %v3703, %v3831
  %v3864 = vsub.f32 %v3704, %v3832
  %v3865 = vsub.f32 %v3705, %v3833
  %v3866 = vsub.f32 %v3706, %v3834
  %v3867 = vsub.f32 %v3707, %v3835
  %v3868 = vsub.f32 %v3708, %v3836
  %v3869 = vsub.f32 %v3709, %v3837
  %v3870 = vsub.f32 %v3710, %v3838
  %v3871 = vsub.f32 %v3711, %v3839
  %v3872 = vsub.f32 %v3712, %v3840
  %v3873 = vsub.f32 %v3713, %v3841
  %v3874 = vsub.f32 %v3714, %v3842
  %v3875 = vsub.f32 %v3715, %v3843
  %v3876 = vsub.f32 %v3716, %v3844
  %v3877 = vsub.f32 %v3717, %v3845
  %v3878 = vsub.f32 %v3718, %v3846
  %v3879 = vsub.f32 %v3719, %v3847
  %v3880 = vsub.f32 %v3720, %v3848
  %v3881 = vsub.f32 %v3721, %v3849
  %v3882 = vsub.f32 %v3722, %v3850
  %v3883 = vsub.f32 %v3723, %v3851
  %v3884 = vsub.f32 %v3724, %v3852
  %v3885 = vsub.f32 %v3725, %v3853
  %v3886 = vsub.f32 %v3726, %v3854
  %v3887 = vsub.f32 %v3727, %v3855
  %v3888 = vsub.f32 %v3728, %v3856
  %v3889 = vsub.f32 %v3729, %v3857
  %v3890 = vsub.f32 %v3730, %v3858
  %v3891 = vmul.f32 %v3859, %v3859
  %v3892 = vmul.f32 %v3860, %v3860
  %v3893 = vmul.f32 %v3861, %v3861
  %v3894 = vmul.f32 %v3862, %v3862
  %v3895 = vmul.f32 %v3863, %v3863
  %v3896 = vmul.f32 %v3864, %v3864
  %v3897 = vmul.f32 %v3865, %v3865
  %v3898 = vmul.f32 %v3866, %v3866
  %v3899 = vmul.f32 %v3867, %v3867
  %v3900 = vmul.f32 %v3868, %v3868
  %v3901 = vmul.f32 %v3869, %v3869
  %v3902 = vmul.f32 %v3870, %v3870
  %v3903 = vmul.f32 %v3871, %v3871
  %v3904 = vmul.f32 %v3872, %v3872
  %v3905 = vmul.f32 %v3873, %v3873
  %v3906 = vmul.f32 %v3874, %v3874
  %v3907 = vmul.f32 %v3875, %v3875
  %v3908 = vmul.f32 %v3876, %v3876
  %v3909 = vmul.f32 %v3877, %v3877
  %v3910 = vmul.f32 %v3878, %v3878
  %v3911 = vmul.f32 %v3879, %v3879
  %v3912 = vmul.f32 %v3880, %v3880
  %v3913 = vmul.f32 %v3881, %v3881
  %v3914 = vmul.f32 %v3882, %v3882
  %v3915 = vmul.f32 %v3883, %v3883
  %v3916 = vmul.f32 %v3884, %v3884
  %v3917 = vmul.f32 %v3885, %v3885
  %v3918 = vmul.f32 %v3886, %v3886
  %v3919 = vmul.f32 %v3887, %v3887
  %v3920 = vmul.f32 %v3888, %v3888
  %v3921 = vmul.f32 %v3889, %v3889
  %v3922 = vmul.f32 %v3890, %v3890
  %v3923 = vsel %vm454, %v3891, 0.0
  %3924 = vadd.xlane.f32.xlu0 %v3923
  %v3925 = vpop.xlane.xlu0 %3924
  %v3926 = vsel %vm454, %v3892, 0.0
  %3927 = vadd.xlane.f32.xlu0 %v3926
  %v3928 = vpop.xlane.xlu0 %3927
  %v3929 = vsel %vm454, %v3893, 0.0
  %3930 = vadd.xlane.f32.xlu0 %v3929
  %v3931 = vpop.xlane.xlu0 %3930
  %v3932 = vsel %vm454, %v3894, 0.0
  %3933 = vadd.xlane.f32.xlu0 %v3932
  %v3934 = vpop.xlane.xlu0 %3933
  %v3935 = vsel %vm454, %v3895, 0.0
  %3936 = vadd.xlane.f32.xlu0 %v3935
  %v3937 = vpop.xlane.xlu0 %3936
  %v3938 = vsel %vm454, %v3896, 0.0
  %3939 = vadd.xlane.f32.xlu0 %v3938
  %v3940 = vpop.xlane.xlu0 %3939
  %v3941 = vsel %vm454, %v3897, 0.0
  %3942 = vadd.xlane.f32.xlu0 %v3941
  %v3943 = vpop.xlane.xlu0 %3942
  %v3944 = vsel %vm454, %v3898, 0.0
  %3945 = vadd.xlane.f32.xlu0 %v3944
  %v3946 = vpop.xlane.xlu0 %3945
  %v3947 = vsel %vm454, %v3899, 0.0
  %3948 = vadd.xlane.f32.xlu0 %v3947
  %v3949 = vpop.xlane.xlu0 %3948
  %v3950 = vsel %vm454, %v3900, 0.0
  %3951 = vadd.xlane.f32.xlu0 %v3950
  %v3952 = vpop.xlane.xlu0 %3951
  %v3953 = vsel %vm454, %v3901, 0.0
  %3954 = vadd.xlane.f32.xlu0 %v3953
  %v3955 = vpop.xlane.xlu0 %3954
  %v3956 = vsel %vm454, %v3902, 0.0
  %3957 = vadd.xlane.f32.xlu0 %v3956
  %v3958 = vpop.xlane.xlu0 %3957
  %v3959 = vsel %vm454, %v3903, 0.0
  %3960 = vadd.xlane.f32.xlu0 %v3959
  %v3961 = vpop.xlane.xlu0 %3960
  %v3962 = vsel %vm454, %v3904, 0.0
  %3963 = vadd.xlane.f32.xlu0 %v3962
  %v3964 = vpop.xlane.xlu0 %3963
  %v3965 = vsel %vm454, %v3905, 0.0
  %3966 = vadd.xlane.f32.xlu0 %v3965
  %v3967 = vpop.xlane.xlu0 %3966
  %v3968 = vsel %vm454, %v3906, 0.0
  %3969 = vadd.xlane.f32.xlu0 %v3968
  %v3970 = vpop.xlane.xlu0 %3969
  %v3971 = vsel %vm454, %v3907, 0.0
  %3972 = vadd.xlane.f32.xlu0 %v3971
  %v3973 = vpop.xlane.xlu0 %3972
  %v3974 = vsel %vm454, %v3908, 0.0
  %3975 = vadd.xlane.f32.xlu0 %v3974
  %v3976 = vpop.xlane.xlu0 %3975
  %v3977 = vsel %vm454, %v3909, 0.0
  %3978 = vadd.xlane.f32.xlu0 %v3977
  %v3979 = vpop.xlane.xlu0 %3978
  %v3980 = vsel %vm454, %v3910, 0.0
  %3981 = vadd.xlane.f32.xlu0 %v3980
  %v3982 = vpop.xlane.xlu0 %3981
  %v3983 = vsel %vm454, %v3911, 0.0
  %3984 = vadd.xlane.f32.xlu0 %v3983
  %v3985 = vpop.xlane.xlu0 %3984
  %v3986 = vsel %vm454, %v3912, 0.0
  %3987 = vadd.xlane.f32.xlu0 %v3986
  %v3988 = vpop.xlane.xlu0 %3987
  %v3989 = vsel %vm454, %v3913, 0.0
  %3990 = vadd.xlane.f32.xlu0 %v3989
  %v3991 = vpop.xlane.xlu0 %3990
  %v3992 = vsel %vm454, %v3914, 0.0
  %3993 = vadd.xlane.f32.xlu0 %v3992
  %v3994 = vpop.xlane.xlu0 %3993
  %v3995 = vsel %vm454, %v3915, 0.0
  %3996 = vadd.xlane.f32.xlu0 %v3995
  %v3997 = vpop.xlane.xlu0 %3996
  %v3998 = vsel %vm454, %v3916, 0.0
  %3999 = vadd.xlane.f32.xlu0 %v3998
  %v4000 = vpop.xlane.xlu0 %3999
  %v4001 = vsel %vm454, %v3917, 0.0
  %4002 = vadd.xlane.f32.xlu0 %v4001
  %v4003 = vpop.xlane.xlu0 %4002
  %v4004 = vsel %vm454, %v3918, 0.0
  %4005 = vadd.xlane.f32.xlu0 %v4004
  %v4006 = vpop.xlane.xlu0 %4005
  %v4007 = vsel %vm454, %v3919, 0.0
  %4008 = vadd.xlane.f32.xlu0 %v4007
  %v4009 = vpop.xlane.xlu0 %4008
  %v4010 = vsel %vm454, %v3920, 0.0
  %4011 = vadd.xlane.f32.xlu0 %v4010
  %v4012 = vpop.xlane.xlu0 %4011
  %v4013 = vsel %vm454, %v3921, 0.0
  %4014 = vadd.xlane.f32.xlu0 %v4013
  %v4015 = vpop.xlane.xlu0 %4014
  %v4016 = vsel %vm454, %v3922, 0.0
  %4017 = vadd.xlane.f32.xlu0 %v4016
  %v4018 = vpop.xlane.xlu0 %4017
  %v4019 = vmul.f32 %v3925, %v551
  %v4020 = vmul.f32 %v3928, %v551
  %v4021 = vmul.f32 %v3931, %v551
  %v4022 = vmul.f32 %v3934, %v551
  %v4023 = vmul.f32 %v3937, %v551
  %v4024 = vmul.f32 %v3940, %v551
  %v4025 = vmul.f32 %v3943, %v551
  %v4026 = vmul.f32 %v3946, %v551
  %v4027 = vmul.f32 %v3949, %v551
  %v4028 = vmul.f32 %v3952, %v551
  %v4029 = vmul.f32 %v3955, %v551
  %v4030 = vmul.f32 %v3958, %v551
  %v4031 = vmul.f32 %v3961, %v551
  %v4032 = vmul.f32 %v3964, %v551
  %v4033 = vmul.f32 %v3967, %v551
  %v4034 = vmul.f32 %v3970, %v551
  %v4035 = vmul.f32 %v3973, %v551
  %v4036 = vmul.f32 %v3976, %v551
  %v4037 = vmul.f32 %v3979, %v551
  %v4038 = vmul.f32 %v3982, %v551
  %v4039 = vmul.f32 %v3985, %v551
  %v4040 = vmul.f32 %v3988, %v551
  %v4041 = vmul.f32 %v3991, %v551
  %v4042 = vmul.f32 %v3994, %v551
  %v4043 = vmul.f32 %v3997, %v551
  %v4044 = vmul.f32 %v4000, %v551
  %v4045 = vmul.f32 %v4003, %v551
  %v4046 = vmul.f32 %v4006, %v551
  %v4047 = vmul.f32 %v4009, %v551
  %v4048 = vmul.f32 %v4012, %v551
  %v4049 = vmul.f32 %v4015, %v551
  %v4050 = vmul.f32 %v4018, %v551
  %v4051 = vadd.f32 %v4019, 1e-05
  %v4052 = vadd.f32 %v4020, 1e-05
  %v4053 = vadd.f32 %v4021, 1e-05
  %v4054 = vadd.f32 %v4022, 1e-05
  %v4055 = vadd.f32 %v4023, 1e-05
  %v4056 = vadd.f32 %v4024, 1e-05
  %v4057 = vadd.f32 %v4025, 1e-05
  %v4058 = vadd.f32 %v4026, 1e-05
  %v4059 = vadd.f32 %v4027, 1e-05
  %v4060 = vadd.f32 %v4028, 1e-05
  %v4061 = vadd.f32 %v4029, 1e-05
  %v4062 = vadd.f32 %v4030, 1e-05
  %v4063 = vadd.f32 %v4031, 1e-05
  %v4064 = vadd.f32 %v4032, 1e-05
  %v4065 = vadd.f32 %v4033, 1e-05
  %v4066 = vadd.f32 %v4034, 1e-05
  %v4067 = vadd.f32 %v4035, 1e-05
  %v4068 = vadd.f32 %v4036, 1e-05
  %v4069 = vadd.f32 %v4037, 1e-05
  %v4070 = vadd.f32 %v4038, 1e-05
  %v4071 = vadd.f32 %v4039, 1e-05
  %v4072 = vadd.f32 %v4040, 1e-05
  %v4073 = vadd.f32 %v4041, 1e-05
  %v4074 = vadd.f32 %v4042, 1e-05
  %v4075 = vadd.f32 %v4043, 1e-05
  %v4076 = vadd.f32 %v4044, 1e-05
  %v4077 = vadd.f32 %v4045, 1e-05
  %v4078 = vadd.f32 %v4046, 1e-05
  %v4079 = vadd.f32 %v4047, 1e-05
  %v4080 = vadd.f32 %v4048, 1e-05
  %v4081 = vadd.f32 %v4049, 1e-05
  %v4082 = vadd.f32 %v4050, 1e-05
  %v4083 = vrsqrt.pop %v4051
  %v4084 = vrsqrt.pop %v4052
  %v4085 = vrsqrt.pop %v4053
  %v4086 = vrsqrt.pop %v4054
  %v4087 = vrsqrt.pop %v4055
  %v4088 = vrsqrt.pop %v4056
  %v4089 = vrsqrt.pop %v4057
  %v4090 = vrsqrt.pop %v4058
  %v4091 = vrsqrt.pop %v4059
  %v4092 = vrsqrt.pop %v4060
  %v4093 = vrsqrt.pop %v4061
  %v4094 = vrsqrt.pop %v4062
  %v4095 = vrsqrt.pop %v4063
  %v4096 = vrsqrt.pop %v4064
  %v4097 = vrsqrt.pop %v4065
  %v4098 = vrsqrt.pop %v4066
  %v4099 = vrsqrt.pop %v4067
  %v4100 = vrsqrt.pop %v4068
  %v4101 = vrsqrt.pop %v4069
  %v4102 = vrsqrt.pop %v4070
  %v4103 = vrsqrt.pop %v4071
  %v4104 = vrsqrt.pop %v4072
  %v4105 = vrsqrt.pop %v4073
  %v4106 = vrsqrt.pop %v4074
  %v4107 = vrsqrt.pop %v4075
  %v4108 = vrsqrt.pop %v4076
  %v4109 = vrsqrt.pop %v4077
  %v4110 = vrsqrt.pop %v4078
  %v4111 = vrsqrt.pop %v4079
  %v4112 = vrsqrt.pop %v4080
  %v4113 = vrsqrt.pop %v4081
  %v4114 = vrsqrt.pop %v4082
  %v4115 = vmul.f32 %v3859, %v4083
  %v4116 = vmul.f32 %v3860, %v4084
  %v4117 = vmul.f32 %v3861, %v4085
  %v4118 = vmul.f32 %v3862, %v4086
  %v4119 = vmul.f32 %v3863, %v4087
  %v4120 = vmul.f32 %v3864, %v4088
  %v4121 = vmul.f32 %v3865, %v4089
  %v4122 = vmul.f32 %v3866, %v4090
  %v4123 = vmul.f32 %v3867, %v4091
  %v4124 = vmul.f32 %v3868, %v4092
  %v4125 = vmul.f32 %v3869, %v4093
  %v4126 = vmul.f32 %v3870, %v4094
  %v4127 = vmul.f32 %v3871, %v4095
  %v4128 = vmul.f32 %v3872, %v4096
  %v4129 = vmul.f32 %v3873, %v4097
  %v4130 = vmul.f32 %v3874, %v4098
  %v4131 = vmul.f32 %v3875, %v4099
  %v4132 = vmul.f32 %v3876, %v4100
  %v4133 = vmul.f32 %v3877, %v4101
  %v4134 = vmul.f32 %v3878, %v4102
  %v4135 = vmul.f32 %v3879, %v4103
  %v4136 = vmul.f32 %v3880, %v4104
  %v4137 = vmul.f32 %v3881, %v4105
  %v4138 = vmul.f32 %v3882, %v4106
  %v4139 = vmul.f32 %v3883, %v4107
  %v4140 = vmul.f32 %v3884, %v4108
  %v4141 = vmul.f32 %v3885, %v4109
  %v4142 = vmul.f32 %v3886, %v4110
  %v4143 = vmul.f32 %v3887, %v4111
  %v4144 = vmul.f32 %v3888, %v4112
  %v4145 = vmul.f32 %v3889, %v4113
  %v4146 = vmul.f32 %v3890, %v4114
  %v4147 = vlaneseq
  %v4148 = vshrl.u32 %v4147, 7
  %v4149 = vsub.s32 2, %v4148
  %v4150 = vrot.slane %v453, %v4149
  %v4151 = vmul.f32 %v4115, %v4150
  %v4152 = vmul.f32 %v4116, %v4150
  %v4153 = vmul.f32 %v4117, %v4150
  %v4154 = vmul.f32 %v4118, %v4150
  %v4155 = vmul.f32 %v4119, %v4150
  %v4156 = vmul.f32 %v4120, %v4150
  %v4157 = vmul.f32 %v4121, %v4150
  %v4158 = vmul.f32 %v4122, %v4150
  %v4159 = vmul.f32 %v4123, %v4150
  %v4160 = vmul.f32 %v4124, %v4150
  %v4161 = vmul.f32 %v4125, %v4150
  %v4162 = vmul.f32 %v4126, %v4150
  %v4163 = vmul.f32 %v4127, %v4150
  %v4164 = vmul.f32 %v4128, %v4150
  %v4165 = vmul.f32 %v4129, %v4150
  %v4166 = vmul.f32 %v4130, %v4150
  %v4167 = vmul.f32 %v4131, %v4150
  %v4168 = vmul.f32 %v4132, %v4150
  %v4169 = vmul.f32 %v4133, %v4150
  %v4170 = vmul.f32 %v4134, %v4150
  %v4171 = vmul.f32 %v4135, %v4150
  %v4172 = vmul.f32 %v4136, %v4150
  %v4173 = vmul.f32 %v4137, %v4150
  %v4174 = vmul.f32 %v4138, %v4150
  %v4175 = vmul.f32 %v4139, %v4150
  %v4176 = vmul.f32 %v4140, %v4150
  %v4177 = vmul.f32 %v4141, %v4150
  %v4178 = vmul.f32 %v4142, %v4150
  %v4179 = vmul.f32 %v4143, %v4150
  %v4180 = vmul.f32 %v4144, %v4150
  %v4181 = vmul.f32 %v4145, %v4150
  %v4182 = vmul.f32 %v4146, %v4150
  %v4183 = vlaneseq
  %v4184 = vshrl.u32 %v4183, 7
  %v4185 = vsub.s32 3, %v4184
  %v4186 = vrot.slane %v453, %v4185
  %v4187 = vadd.f32 %v4151, %v4186
  %v4188 = vadd.f32 %v4152, %v4186
  %v4189 = vadd.f32 %v4153, %v4186
  %v4190 = vadd.f32 %v4154, %v4186
  %v4191 = vadd.f32 %v4155, %v4186
  %v4192 = vadd.f32 %v4156, %v4186
  %v4193 = vadd.f32 %v4157, %v4186
  %v4194 = vadd.f32 %v4158, %v4186
  %v4195 = vadd.f32 %v4159, %v4186
  %v4196 = vadd.f32 %v4160, %v4186
  %v4197 = vadd.f32 %v4161, %v4186
  %v4198 = vadd.f32 %v4162, %v4186
  %v4199 = vadd.f32 %v4163, %v4186
  %v4200 = vadd.f32 %v4164, %v4186
  %v4201 = vadd.f32 %v4165, %v4186
  %v4202 = vadd.f32 %v4166, %v4186
  %v4203 = vadd.f32 %v4167, %v4186
  %v4204 = vadd.f32 %v4168, %v4186
  %v4205 = vadd.f32 %v4169, %v4186
  %v4206 = vadd.f32 %v4170, %v4186
  %v4207 = vadd.f32 %v4171, %v4186
  %v4208 = vadd.f32 %v4172, %v4186
  %v4209 = vadd.f32 %v4173, %v4186
  %v4210 = vadd.f32 %v4174, %v4186
  %v4211 = vadd.f32 %v4175, %v4186
  %v4212 = vadd.f32 %v4176, %v4186
  %v4213 = vadd.f32 %v4177, %v4186
  %v4214 = vadd.f32 %v4178, %v4186
  %v4215 = vadd.f32 %v4179, %v4186
  %v4216 = vadd.f32 %v4180, %v4186
  %v4217 = vadd.f32 %v4181, %v4186
  %v4218 = vadd.f32 %v4182, %v4186
  %v4219 = vpack.c.bf16 %v4188, %v4187
  %v4220 = vpack.c.bf16 %v4190, %v4189
  %v4221 = vpack.c.bf16 %v4192, %v4191
  %v4222 = vpack.c.bf16 %v4194, %v4193
  %v4223 = vpack.c.bf16 %v4196, %v4195
  %v4224 = vpack.c.bf16 %v4198, %v4197
  %v4225 = vpack.c.bf16 %v4200, %v4199
  %v4226 = vpack.c.bf16 %v4202, %v4201
  %v4227 = vpack.c.bf16 %v4204, %v4203
  %v4228 = vpack.c.bf16 %v4206, %v4205
  %v4229 = vpack.c.bf16 %v4208, %v4207
  %v4230 = vpack.c.bf16 %v4210, %v4209
  %v4231 = vpack.c.bf16 %v4212, %v4211
  %v4232 = vpack.c.bf16 %v4214, %v4213
  %v4233 = vpack.c.bf16 %v4216, %v4215
  %v4234 = vpack.c.bf16 %v4218, %v4217
  %v4235 = vld [vmem:[%s5] sm:$0xf]
  %v4236 = vld [vmem:[%s5 + $0x4] sm:$0xf]
  %v4237 = vld [vmem:[%s5 + $0x8] sm:$0xf]
  %v4238 = vld [vmem:[%s5 + $0xc] sm:$0xf]
  %v4239 = vlaneseq
  %v4240 = vshrl.u32 %v4239, 7
  %v4241 = vsub.s32 6, %v4240
  %v4242 = vrot.slane %v453, %v4241
  %v4247 = vunpack.c.l.b16 %v4235
  %v4248 = vunpack.c.l.b16 %v4236
  %v4249 = vunpack.c.l.b16 %v4237
  %v4250 = vunpack.c.l.b16 %v4238
  %v4251 = vpack.c.b16 %v4248, %v4247
  %v4252 = vpack.c.b16 %v4250, %v4249
  %v4256 = vsel %vm454, %v4219, 0
  %v4259 = vsel %vm454, %v4220, 0
  %v4262 = vsel %vm454, %v4221, 0
  %v4265 = vsel %vm454, %v4222, 0
  %v4268 = vsel %vm454, %v4223, 0
  %v4271 = vsel %vm454, %v4224, 0
  %v4274 = vsel %vm454, %v4225, 0
  %v4277 = vsel %vm454, %v4226, 0
  %v4280 = vsel %vm454, %v4227, 0
  %v4283 = vsel %vm454, %v4228, 0
  %v4286 = vsel %vm454, %v4229, 0
  %v4289 = vsel %vm454, %v4230, 0
  %v4292 = vsel %vm454, %v4231, 0
  %v4295 = vsel %vm454, %v4232, 0
  %v4298 = vsel %vm454, %v4233, 0
  %v4301 = vsel %vm454, %v4234, 0
  %4303 = vmatprep.subr.bf16.mxu0 0
  %4304 = vmatpush1.bf16.msra.mxu0 %v4251
  %4305 = vmatprep.subr.bf16.mxu0 0
  %4306 = vmatpush1.bf16.msra.mxu0 %v4252
  %4307 = vmatprep.subr.bf16.mxu0 0
  %4308 = vmatpush1.bf16.msra.mxu0 0
  %4309 = vmatprep.subr.bf16.mxu0 0
  %4310 = vmatpush1.bf16.msra.mxu0 0
  %4311 = vmatprep.subr.bf16.mxu0 0
  %4312 = vmatpush1.bf16.msra.mxu0 0
  %4313 = vmatprep.subr.bf16.mxu0 0
  %4314 = vmatpush1.bf16.msra.mxu0 0
  %4315 = vmatprep.subr.bf16.mxu0 0
  %4316 = vmatpush1.bf16.msra.mxu0 0
  %4317 = vmatprep.subr.bf16.mxu0 0
  %4318 = vmatpush1.bf16.msra.mxu0 0
  %4319 = vmatprep.subr.bf16.mxu0 0
  %4320 = vmatpush1.bf16.msra.mxu0 0
  %4321 = vmatprep.subr.bf16.mxu0 0
  %4322 = vmatpush1.bf16.msra.mxu0 0
  %4323 = vmatprep.subr.bf16.mxu0 0
  %4324 = vmatpush1.bf16.msra.mxu0 0
  %4325 = vmatprep.subr.bf16.mxu0 0
  %4326 = vmatpush1.bf16.msra.mxu0 0
  %4327 = vmatprep.subr.bf16.mxu0 0
  %4328 = vmatpush1.bf16.msra.mxu0 0
  %4329 = vmatprep.subr.bf16.mxu0 0
  %4330 = vmatpush1.bf16.msra.mxu0 0
  %4331 = vmatprep.subr.bf16.mxu0 0
  %4332 = vmatpush1.bf16.msra.mxu0 0
  %4333 = vmatprep.subr.bf16.mxu0 0
  %4334 = vmatpush1.bf16.msra.mxu0 0
  %4335 = vmatprep.mubr.bf16.mxu0 0
  %4336 = vmatmul.mubr.bf16.gmra.mrb[0].mxu0 %v4256
  %v4337 = vpop.f32.mrb[0].mxu0
  %v4338 = vadd.f32 %v4242, %v4337
  %v4339 = vpop.f32.mrb[0].mxu0
  %v4340 = vpop.f32.mrb[0].mxu0
  %v4341 = vadd.f32 %v4242, %v4340
  %v4342 = vpop.f32.mrb[0].mxu0
  %4343 = vmatprep.mubr.bf16.mxu0 0
  %4344 = vmatmul.mubr.bf16.gmra.mrb[0].mxu0 %v4259
  %v4345 = vpop.f32.mrb[0].mxu0
  %v4346 = vadd.f32 %v4242, %v4345
  %v4347 = vpop.f32.mrb[0].mxu0
  %v4348 = vpop.f32.mrb[0].mxu0
  %v4349 = vadd.f32 %v4242, %v4348
  %v4350 = vpop.f32.mrb[0].mxu0
  %4351 = vmatprep.mubr.bf16.mxu0 0
  %4352 = vmatmul.mubr.bf16.gmra.mrb[0].mxu0 %v4262
  %v4353 = vpop.f32.mrb[0].mxu0
  %v4354 = vadd.f32 %v4242, %v4353
  %v4355 = vpop.f32.mrb[0].mxu0
  %v4356 = vpop.f32.mrb[0].mxu0
  %v4357 = vadd.f32 %v4242, %v4356
  %v4358 = vpop.f32.mrb[0].mxu0
  %4359 = vmatprep.mubr.bf16.mxu0 0
  %4360 = vmatmul.mubr.bf16.gmra.mrb[0].mxu0 %v4265
  %v4361 = vpop.f32.mrb[0].mxu0
  %v4362 = vadd.f32 %v4242, %v4361
  %v4363 = vpop.f32.mrb[0].mxu0
  %v4364 = vpop.f32.mrb[0].mxu0
  %v4365 = vadd.f32 %v4242, %v4364
  %v4366 = vpop.f32.mrb[0].mxu0
  %4367 = vmatprep.mubr.bf16.mxu0 0
  %4368 = vmatmul.mubr.bf16.gmra.mrb[0].mxu0 %v4268
  %v4369 = vpop.f32.mrb[0].mxu0
  %v4370 = vadd.f32 %v4242, %v4369
  %v4371 = vpop.f32.mrb[0].mxu0
  %v4372 = vpop.f32.mrb[0].mxu0
  %v4373 = vadd.f32 %v4242, %v4372
  %v4374 = vpop.f32.mrb[0].mxu0
  %4375 = vmatprep.mubr.bf16.mxu0 0
  %4376 = vmatmul.mubr.bf16.gmra.mrb[0].mxu0 %v4271
  %v4377 = vpop.f32.mrb[0].mxu0
  %v4378 = vadd.f32 %v4242, %v4377
  %v4379 = vpop.f32.mrb[0].mxu0
  %v4380 = vpop.f32.mrb[0].mxu0
  %v4381 = vadd.f32 %v4242, %v4380
  %v4382 = vpop.f32.mrb[0].mxu0
  %4383 = vmatprep.mubr.bf16.mxu0 0
  %4384 = vmatmul.mubr.bf16.gmra.mrb[0].mxu0 %v4274
  %v4385 = vpop.f32.mrb[0].mxu0
  %v4386 = vadd.f32 %v4242, %v4385
  %v4387 = vpop.f32.mrb[0].mxu0
  %v4388 = vpop.f32.mrb[0].mxu0
  %v4389 = vadd.f32 %v4242, %v4388
  %v4390 = vpop.f32.mrb[0].mxu0
  %4391 = vmatprep.mubr.bf16.mxu0 0
  %4392 = vmatmul.mubr.bf16.gmra.mrb[0].mxu0 %v4277
  %v4393 = vpop.f32.mrb[0].mxu0
  %v4394 = vadd.f32 %v4242, %v4393
  %v4395 = vpop.f32.mrb[0].mxu0
  %v4396 = vpop.f32.mrb[0].mxu0
  %v4397 = vadd.f32 %v4242, %v4396
  %v4398 = vpop.f32.mrb[0].mxu0
  %4399 = vmatprep.mubr.bf16.mxu0 0
  %4400 = vmatmul.mubr.bf16.gmra.mrb[0].mxu0 %v4280
  %v4401 = vpop.f32.mrb[0].mxu0
  %v4402 = vadd.f32 %v4242, %v4401
  %v4403 = vpop.f32.mrb[0].mxu0
  %v4404 = vpop.f32.mrb[0].mxu0
  %v4405 = vadd.f32 %v4242, %v4404
  %v4406 = vpop.f32.mrb[0].mxu0
  %4407 = vmatprep.mubr.bf16.mxu0 0
  %4408 = vmatmul.mubr.bf16.gmra.mrb[0].mxu0 %v4283
  %v4409 = vpop.f32.mrb[0].mxu0
  %v4410 = vadd.f32 %v4242, %v4409
  %v4411 = vpop.f32.mrb[0].mxu0
  %v4412 = vpop.f32.mrb[0].mxu0
  %v4413 = vadd.f32 %v4242, %v4412
  %v4414 = vpop.f32.mrb[0].mxu0
  %4415 = vmatprep.mubr.bf16.mxu0 0
  %4416 = vmatmul.mubr.bf16.gmra.mrb[0].mxu0 %v4286
  %v4417 = vpop.f32.mrb[0].mxu0
  %v4418 = vadd.f32 %v4242, %v4417
  %v4419 = vpop.f32.mrb[0].mxu0
  %v4420 = vpop.f32.mrb[0].mxu0
  %v4421 = vadd.f32 %v4242, %v4420
  %v4422 = vpop.f32.mrb[0].mxu0
  %4423 = vmatprep.mubr.bf16.mxu0 0
  %4424 = vmatmul.mubr.bf16.gmra.mrb[0].mxu0 %v4289
  %v4425 = vpop.f32.mrb[0].mxu0
  %v4426 = vadd.f32 %v4242, %v4425
  %v4427 = vpop.f32.mrb[0].mxu0
  %v4428 = vpop.f32.mrb[0].mxu0
  %v4429 = vadd.f32 %v4242, %v4428
  %v4430 = vpop.f32.mrb[0].mxu0
  %4431 = vmatprep.mubr.bf16.mxu0 0
  %4432 = vmatmul.mubr.bf16.gmra.mrb[0].mxu0 %v4292
  %v4433 = vpop.f32.mrb[0].mxu0
  %v4434 = vadd.f32 %v4242, %v4433
  %v4435 = vpop.f32.mrb[0].mxu0
  %v4436 = vpop.f32.mrb[0].mxu0
  %v4437 = vadd.f32 %v4242, %v4436
  %v4438 = vpop.f32.mrb[0].mxu0
  %4439 = vmatprep.mubr.bf16.mxu0 0
  %4440 = vmatmul.mubr.bf16.gmra.mrb[0].mxu0 %v4295
  %v4441 = vpop.f32.mrb[0].mxu0
  %v4442 = vadd.f32 %v4242, %v4441
  %v4443 = vpop.f32.mrb[0].mxu0
  %v4444 = vpop.f32.mrb[0].mxu0
  %v4445 = vadd.f32 %v4242, %v4444
  %v4446 = vpop.f32.mrb[0].mxu0
  %4447 = vmatprep.mubr.bf16.mxu0 0
  %4448 = vmatmul.mubr.bf16.gmra.mrb[0].mxu0 %v4298
  %v4449 = vpop.f32.mrb[0].mxu0
  %v4450 = vadd.f32 %v4242, %v4449
  %v4451 = vpop.f32.mrb[0].mxu0
  %v4452 = vpop.f32.mrb[0].mxu0
  %v4453 = vadd.f32 %v4242, %v4452
  %v4454 = vpop.f32.mrb[0].mxu0
  %4455 = vmatprep.mubr.bf16.mxu0 0
  %4456 = vmatmul.mubr.bf16.gmra.mrb[0].mxu0 %v4301
  %v4457 = vpop.f32.mrb[0].mxu0
  %v4458 = vadd.f32 %v4242, %v4457
  %v4459 = vpop.f32.mrb[0].mxu0
  %v4460 = vpop.f32.mrb[0].mxu0
  %v4461 = vadd.f32 %v4242, %v4460
  %v4462 = vpop.f32.mrb[0].mxu0
  %4463 = vdwg.mxu0
  %v4464 = vmul.f32 %v4338, 0.5
  %v4465 = vmul.f32 %v4341, 0.5
  %v4466 = vmul.f32 %v4346, 0.5
  %v4467 = vmul.f32 %v4349, 0.5
  %v4468 = vmul.f32 %v4354, 0.5
  %v4469 = vmul.f32 %v4357, 0.5
  %v4470 = vmul.f32 %v4362, 0.5
  %v4471 = vmul.f32 %v4365, 0.5
  %v4472 = vmul.f32 %v4370, 0.5
  %v4473 = vmul.f32 %v4373, 0.5
  %v4474 = vmul.f32 %v4378, 0.5
  %v4475 = vmul.f32 %v4381, 0.5
  %v4476 = vmul.f32 %v4386, 0.5
  %v4477 = vmul.f32 %v4389, 0.5
  %v4478 = vmul.f32 %v4394, 0.5
  %v4479 = vmul.f32 %v4397, 0.5
  %v4480 = vmul.f32 %v4402, 0.5
  %v4481 = vmul.f32 %v4405, 0.5
  %v4482 = vmul.f32 %v4410, 0.5
  %v4483 = vmul.f32 %v4413, 0.5
  %v4484 = vmul.f32 %v4418, 0.5
  %v4485 = vmul.f32 %v4421, 0.5
  %v4486 = vmul.f32 %v4426, 0.5
  %v4487 = vmul.f32 %v4429, 0.5
  %v4488 = vmul.f32 %v4434, 0.5
  %v4489 = vmul.f32 %v4437, 0.5
  %v4490 = vmul.f32 %v4442, 0.5
  %v4491 = vmul.f32 %v4445, 0.5
  %v4492 = vmul.f32 %v4450, 0.5
  %v4493 = vmul.f32 %v4453, 0.5
  %v4494 = vmul.f32 %v4458, 0.5
  %v4495 = vmul.f32 %v4461, 0.5
  %v4496 = vmul.f32 %v4338, 0.70710677
  %v4497 = vmul.f32 %v4341, 0.70710677
  %v4498 = vmul.f32 %v4346, 0.70710677
  %v4499 = vmul.f32 %v4349, 0.70710677
  %v4500 = vmul.f32 %v4354, 0.70710677
  %v4501 = vmul.f32 %v4357, 0.70710677
  %v4502 = vmul.f32 %v4362, 0.70710677
  %v4503 = vmul.f32 %v4365, 0.70710677
  %v4504 = vmul.f32 %v4370, 0.70710677
  %v4505 = vmul.f32 %v4373, 0.70710677
  %v4506 = vmul.f32 %v4378, 0.70710677
  %v4507 = vmul.f32 %v4381, 0.70710677
  %v4508 = vmul.f32 %v4386, 0.70710677
  %v4509 = vmul.f32 %v4389, 0.70710677
  %v4510 = vmul.f32 %v4394, 0.70710677
  %v4511 = vmul.f32 %v4397, 0.70710677
  %v4512 = vmul.f32 %v4402, 0.70710677
  %v4513 = vmul.f32 %v4405, 0.70710677
  %v4514 = vmul.f32 %v4410, 0.70710677
  %v4515 = vmul.f32 %v4413, 0.70710677
  %v4516 = vmul.f32 %v4418, 0.70710677
  %v4517 = vmul.f32 %v4421, 0.70710677
  %v4518 = vmul.f32 %v4426, 0.70710677
  %v4519 = vmul.f32 %v4429, 0.70710677
  %v4520 = vmul.f32 %v4434, 0.70710677
  %v4521 = vmul.f32 %v4437, 0.70710677
  %v4522 = vmul.f32 %v4442, 0.70710677
  %v4523 = vmul.f32 %v4445, 0.70710677
  %v4524 = vmul.f32 %v4450, 0.70710677
  %v4525 = vmul.f32 %v4453, 0.70710677
  %v4526 = vmul.f32 %v4458, 0.70710677
  %v4527 = vmul.f32 %v4461, 0.70710677
  %v4528 = verf.f32.pop %v4496
  %v4529 = verf.f32.pop %v4497
  %v4530 = verf.f32.pop %v4498
  %v4531 = verf.f32.pop %v4499
  %v4532 = verf.f32.pop %v4500
  %v4533 = verf.f32.pop %v4501
  %v4534 = verf.f32.pop %v4502
  %v4535 = verf.f32.pop %v4503
  %v4536 = verf.f32.pop %v4504
  %v4537 = verf.f32.pop %v4505
  %v4538 = verf.f32.pop %v4506
  %v4539 = verf.f32.pop %v4507
  %v4540 = verf.f32.pop %v4508
  %v4541 = verf.f32.pop %v4509
  %v4542 = verf.f32.pop %v4510
  %v4543 = verf.f32.pop %v4511
  %v4544 = verf.f32.pop %v4512
  %v4545 = verf.f32.pop %v4513
  %v4546 = verf.f32.pop %v4514
  %v4547 = verf.f32.pop %v4515
  %v4548 = verf.f32.pop %v4516
  %v4549 = verf.f32.pop %v4517
  %v4550 = verf.f32.pop %v4518
  %v4551 = verf.f32.pop %v4519
  %v4552 = verf.f32.pop %v4520
  %v4553 = verf.f32.pop %v4521
  %v4554 = verf.f32.pop %v4522
  %v4555 = verf.f32.pop %v4523
  %v4556 = verf.f32.pop %v4524
  %v4557 = verf.f32.pop %v4525
  %v4558 = verf.f32.pop %v4526
  %v4559 = verf.f32.pop %v4527
  %v4560 = vadd.f32 %v4528, 1.0
  %v4561 = vadd.f32 %v4529, 1.0
  %v4562 = vadd.f32 %v4530, 1.0
  %v4563 = vadd.f32 %v4531, 1.0
  %v4564 = vadd.f32 %v4532, 1.0
  %v4565 = vadd.f32 %v4533, 1.0
  %v4566 = vadd.f32 %v4534, 1.0
  %v4567 = vadd.f32 %v4535, 1.0
  %v4568 = vadd.f32 %v4536, 1.0
  %v4569 = vadd.f32 %v4537, 1.0
  %v4570 = vadd.f32 %v4538, 1.0
  %v4571 = vadd.f32 %v4539, 1.0
  %v4572 = vadd.f32 %v4540, 1.0
  %v4573 = vadd.f32 %v4541, 1.0
  %v4574 = vadd.f32 %v4542, 1.0
  %v4575 = vadd.f32 %v4543, 1.0
  %v4576 = vadd.f32 %v4544, 1.0
  %v4577 = vadd.f32 %v4545, 1.0
  %v4578 = vadd.f32 %v4546, 1.0
  %v4579 = vadd.f32 %v4547, 1.0
  %v4580 = vadd.f32 %v4548, 1.0
  %v4581 = vadd.f32 %v4549, 1.0
  %v4582 = vadd.f32 %v4550, 1.0
  %v4583 = vadd.f32 %v4551, 1.0
  %v4584 = vadd.f32 %v4552, 1.0
  %v4585 = vadd.f32 %v4553, 1.0
  %v4586 = vadd.f32 %v4554, 1.0
  %v4587 = vadd.f32 %v4555, 1.0
  %v4588 = vadd.f32 %v4556, 1.0
  %v4589 = vadd.f32 %v4557, 1.0
  %v4590 = vadd.f32 %v4558, 1.0
  %v4591 = vadd.f32 %v4559, 1.0
  %v4592 = vmul.f32 %v4464, %v4560
  %v4593 = vmul.f32 %v4465, %v4561
  %v4594 = vmul.f32 %v4466, %v4562
  %v4595 = vmul.f32 %v4467, %v4563
  %v4596 = vmul.f32 %v4468, %v4564
  %v4597 = vmul.f32 %v4469, %v4565
  %v4598 = vmul.f32 %v4470, %v4566
  %v4599 = vmul.f32 %v4471, %v4567
  %v4600 = vmul.f32 %v4472, %v4568
  %v4601 = vmul.f32 %v4473, %v4569
  %v4602 = vmul.f32 %v4474, %v4570
  %v4603 = vmul.f32 %v4475, %v4571
  %v4604 = vmul.f32 %v4476, %v4572
  %v4605 = vmul.f32 %v4477, %v4573
  %v4606 = vmul.f32 %v4478, %v4574
  %v4607 = vmul.f32 %v4479, %v4575
  %v4608 = vmul.f32 %v4480, %v4576
  %v4609 = vmul.f32 %v4481, %v4577
  %v4610 = vmul.f32 %v4482, %v4578
  %v4611 = vmul.f32 %v4483, %v4579
  %v4612 = vmul.f32 %v4484, %v4580
  %v4613 = vmul.f32 %v4485, %v4581
  %v4614 = vmul.f32 %v4486, %v4582
  %v4615 = vmul.f32 %v4487, %v4583
  %v4616 = vmul.f32 %v4488, %v4584
  %v4617 = vmul.f32 %v4489, %v4585
  %v4618 = vmul.f32 %v4490, %v4586
  %v4619 = vmul.f32 %v4491, %v4587
  %v4620 = vmul.f32 %v4492, %v4588
  %v4621 = vmul.f32 %v4493, %v4589
  %v4622 = vmul.f32 %v4494, %v4590
  %v4623 = vmul.f32 %v4495, %v4591
  %v4624 = vpack.c.bf16 %v4593, %v4592
  %v4625 = vpack.c.bf16 %v4595, %v4594
  %v4626 = vpack.c.bf16 %v4597, %v4596
  %v4627 = vpack.c.bf16 %v4599, %v4598
  %v4628 = vpack.c.bf16 %v4601, %v4600
  %v4629 = vpack.c.bf16 %v4603, %v4602
  %v4630 = vpack.c.bf16 %v4605, %v4604
  %v4631 = vpack.c.bf16 %v4607, %v4606
  %v4632 = vpack.c.bf16 %v4609, %v4608
  %v4633 = vpack.c.bf16 %v4611, %v4610
  %v4634 = vpack.c.bf16 %v4613, %v4612
  %v4635 = vpack.c.bf16 %v4615, %v4614
  %v4636 = vpack.c.bf16 %v4617, %v4616
  %v4637 = vpack.c.bf16 %v4619, %v4618
  %v4638 = vpack.c.bf16 %v4621, %v4620
  %v4639 = vpack.c.bf16 %v4623, %v4622
  %v4640 = vld [vmem:[%s6] sm:$0xf]
  %v4641 = vld [vmem:[%s6 + $0x4] sm:$0xf]
  %v4642 = vld [vmem:[%s6 + $0x8] sm:$0xf]
  %v4643 = vld [vmem:[%s6 + $0xc] sm:$0xf]
  %v4644 = vld [vmem:[%s6 + $0x10] sm:$0xf]
  %v4645 = vld [vmem:[%s6 + $0x14] sm:$0xf]
  %v4646 = vld [vmem:[%s6 + $0x18] sm:$0xf]
  %v4647 = vld [vmem:[%s6 + $0x1c] sm:$0xf]
  %v4648 = vld [vmem:[%s6 + $0x20] sm:$0xf]
  %v4649 = vld [vmem:[%s6 + $0x24] sm:$0xf]
  %v4650 = vld [vmem:[%s6 + $0x28] sm:$0xf]
  %v4651 = vld [vmem:[%s6 + $0x2c] sm:$0xf]
  %v4652 = vld [vmem:[%s6 + $0x30] sm:$0xf]
  %v4653 = vld [vmem:[%s6 + $0x34] sm:$0xf]
  %v4654 = vld [vmem:[%s6 + $0x38] sm:$0xf]
  %v4655 = vld [vmem:[%s6 + $0x3c] sm:$0xf]
  %v4656 = vlaneseq
  %v4657 = vshrl.u32 %v4656, 7
  %v4658 = vsub.s32 5, %v4657
  %v4659 = vrot.slane %v453, %v4658
  %v4676 = vunpack.c.l.b16 %v4640
  %v4677 = vunpack.c.l.b16 %v4641
  %v4678 = vunpack.c.l.b16 %v4642
  %v4679 = vunpack.c.l.b16 %v4643
  %v4680 = vunpack.c.l.b16 %v4644
  %v4681 = vunpack.c.l.b16 %v4645
  %v4682 = vunpack.c.l.b16 %v4646
  %v4683 = vunpack.c.l.b16 %v4647
  %v4684 = vunpack.c.l.b16 %v4648
  %v4685 = vunpack.c.l.b16 %v4649
  %v4686 = vunpack.c.l.b16 %v4650
  %v4687 = vunpack.c.l.b16 %v4651
  %v4688 = vunpack.c.l.b16 %v4652
  %v4689 = vunpack.c.l.b16 %v4653
  %v4690 = vunpack.c.l.b16 %v4654
  %v4691 = vunpack.c.l.b16 %v4655
  %v4692 = vpack.c.b16 %v4677, %v4676
  %v4693 = vpack.c.b16 %v4679, %v4678
  %v4694 = vpack.c.b16 %v4681, %v4680
  %v4695 = vpack.c.b16 %v4683, %v4682
  %v4696 = vpack.c.b16 %v4685, %v4684
  %v4697 = vpack.c.b16 %v4687, %v4686
  %v4698 = vpack.c.b16 %v4689, %v4688
  %v4699 = vpack.c.b16 %v4691, %v4690
  %4708 = vmatprep.subr.bf16.mxu0 0
  %4709 = vmatpush1.bf16.msra.mxu0 %v4692
  %4710 = vmatprep.subr.bf16.mxu0 0
  %4711 = vmatpush1.bf16.msra.mxu0 %v4693
  %4712 = vmatprep.subr.bf16.mxu0 0
  %4713 = vmatpush1.bf16.msra.mxu0 %v4694
  %4714 = vmatprep.subr.bf16.mxu0 0
  %4715 = vmatpush1.bf16.msra.mxu0 %v4695
  %4716 = vmatprep.subr.bf16.mxu0 0
  %4717 = vmatpush1.bf16.msra.mxu0 %v4696
  %4718 = vmatprep.subr.bf16.mxu0 0
  %4719 = vmatpush1.bf16.msra.mxu0 %v4697
  %4720 = vmatprep.subr.bf16.mxu0 0
  %4721 = vmatpush1.bf16.msra.mxu0 %v4698
  %4722 = vmatprep.subr.bf16.mxu0 0
  %4723 = vmatpush1.bf16.msra.mxu0 %v4699
  %4724 = vmatprep.subr.bf16.mxu0 0
  %4725 = vmatpush1.bf16.msra.mxu0 0
  %4726 = vmatprep.subr.bf16.mxu0 0
  %4727 = vmatpush1.bf16.msra.mxu0 0
  %4728 = vmatprep.subr.bf16.mxu0 0
  %4729 = vmatpush1.bf16.msra.mxu0 0
  %4730 = vmatprep.subr.bf16.mxu0 0
  %4731 = vmatpush1.bf16.msra.mxu0 0
  %4732 = vmatprep.subr.bf16.mxu0 0
  %4733 = vmatpush1.bf16.msra.mxu0 0
  %4734 = vmatprep.subr.bf16.mxu0 0
  %4735 = vmatpush1.bf16.msra.mxu0 0
  %4736 = vmatprep.subr.bf16.mxu0 0
  %4737 = vmatpush1.bf16.msra.mxu0 0
  %4738 = vmatprep.subr.bf16.mxu0 0
  %4739 = vmatpush1.bf16.msra.mxu0 0
  %4740 = vmatprep.mubr.bf16.mxu0 0
  %4741 = vmatmul.mubr.bf16.gmra.mrb[0].mxu0 %v4624
  %v4742 = vpop.f32.mrb[0].mxu0
  %v4743 = vadd.f32 %v4659, %v4742
  %v4744 = vpop.f32.mrb[0].mxu0
  %v4745 = vpop.f32.mrb[0].mxu0
  %v4746 = vadd.f32 %v4659, %v4745
  %v4747 = vpop.f32.mrb[0].mxu0
  %4748 = vmatprep.mubr.bf16.mxu0 0
  %4749 = vmatmul.mubr.bf16.gmra.mrb[0].mxu0 %v4625
  %v4750 = vpop.f32.mrb[0].mxu0
  %v4751 = vadd.f32 %v4659, %v4750
  %v4752 = vpop.f32.mrb[0].mxu0
  %v4753 = vpop.f32.mrb[0].mxu0
  %v4754 = vadd.f32 %v4659, %v4753
  %v4755 = vpop.f32.mrb[0].mxu0
  %4756 = vmatprep.mubr.bf16.mxu0 0
  %4757 = vmatmul.mubr.bf16.gmra.mrb[0].mxu0 %v4626
  %v4758 = vpop.f32.mrb[0].mxu0
  %v4759 = vadd.f32 %v4659, %v4758
  %v4760 = vpop.f32.mrb[0].mxu0
  %v4761 = vpop.f32.mrb[0].mxu0
  %v4762 = vadd.f32 %v4659, %v4761
  %v4763 = vpop.f32.mrb[0].mxu0
  %4764 = vmatprep.mubr.bf16.mxu0 0
  %4765 = vmatmul.mubr.bf16.gmra.mrb[0].mxu0 %v4627
  %v4766 = vpop.f32.mrb[0].mxu0
  %v4767 = vadd.f32 %v4659, %v4766
  %v4768 = vpop.f32.mrb[0].mxu0
  %v4769 = vpop.f32.mrb[0].mxu0
  %v4770 = vadd.f32 %v4659, %v4769
  %v4771 = vpop.f32.mrb[0].mxu0
  %4772 = vmatprep.mubr.bf16.mxu0 0
  %4773 = vmatmul.mubr.bf16.gmra.mrb[0].mxu0 %v4628
  %v4774 = vpop.f32.mrb[0].mxu0
  %v4775 = vadd.f32 %v4659, %v4774
  %v4776 = vpop.f32.mrb[0].mxu0
  %v4777 = vpop.f32.mrb[0].mxu0
  %v4778 = vadd.f32 %v4659, %v4777
  %v4779 = vpop.f32.mrb[0].mxu0
  %4780 = vmatprep.mubr.bf16.mxu0 0
  %4781 = vmatmul.mubr.bf16.gmra.mrb[0].mxu0 %v4629
  %v4782 = vpop.f32.mrb[0].mxu0
  %v4783 = vadd.f32 %v4659, %v4782
  %v4784 = vpop.f32.mrb[0].mxu0
  %v4785 = vpop.f32.mrb[0].mxu0
  %v4786 = vadd.f32 %v4659, %v4785
  %v4787 = vpop.f32.mrb[0].mxu0
  %4788 = vmatprep.mubr.bf16.mxu0 0
  %4789 = vmatmul.mubr.bf16.gmra.mrb[0].mxu0 %v4630
  %v4790 = vpop.f32.mrb[0].mxu0
  %v4791 = vadd.f32 %v4659, %v4790
  %v4792 = vpop.f32.mrb[0].mxu0
  %v4793 = vpop.f32.mrb[0].mxu0
  %v4794 = vadd.f32 %v4659, %v4793
  %v4795 = vpop.f32.mrb[0].mxu0
  %4796 = vmatprep.mubr.bf16.mxu0 0
  %4797 = vmatmul.mubr.bf16.gmra.mrb[0].mxu0 %v4631
  %v4798 = vpop.f32.mrb[0].mxu0
  %v4799 = vadd.f32 %v4659, %v4798
  %v4800 = vpop.f32.mrb[0].mxu0
  %v4801 = vpop.f32.mrb[0].mxu0
  %v4802 = vadd.f32 %v4659, %v4801
  %v4803 = vpop.f32.mrb[0].mxu0
  %4804 = vmatprep.mubr.bf16.mxu0 0
  %4805 = vmatmul.mubr.bf16.gmra.mrb[0].mxu0 %v4632
  %v4806 = vpop.f32.mrb[0].mxu0
  %v4807 = vadd.f32 %v4659, %v4806
  %v4808 = vpop.f32.mrb[0].mxu0
  %v4809 = vpop.f32.mrb[0].mxu0
  %v4810 = vadd.f32 %v4659, %v4809
  %v4811 = vpop.f32.mrb[0].mxu0
  %4812 = vmatprep.mubr.bf16.mxu0 0
  %4813 = vmatmul.mubr.bf16.gmra.mrb[0].mxu0 %v4633
  %v4814 = vpop.f32.mrb[0].mxu0
  %v4815 = vadd.f32 %v4659, %v4814
  %v4816 = vpop.f32.mrb[0].mxu0
  %v4817 = vpop.f32.mrb[0].mxu0
  %v4818 = vadd.f32 %v4659, %v4817
  %v4819 = vpop.f32.mrb[0].mxu0
  %4820 = vmatprep.mubr.bf16.mxu0 0
  %4821 = vmatmul.mubr.bf16.gmra.mrb[0].mxu0 %v4634
  %v4822 = vpop.f32.mrb[0].mxu0
  %v4823 = vadd.f32 %v4659, %v4822
  %v4824 = vpop.f32.mrb[0].mxu0
  %v4825 = vpop.f32.mrb[0].mxu0
  %v4826 = vadd.f32 %v4659, %v4825
  %v4827 = vpop.f32.mrb[0].mxu0
  %4828 = vmatprep.mubr.bf16.mxu0 0
  %4829 = vmatmul.mubr.bf16.gmra.mrb[0].mxu0 %v4635
  %v4830 = vpop.f32.mrb[0].mxu0
  %v4831 = vadd.f32 %v4659, %v4830
  %v4832 = vpop.f32.mrb[0].mxu0
  %v4833 = vpop.f32.mrb[0].mxu0
  %v4834 = vadd.f32 %v4659, %v4833
  %v4835 = vpop.f32.mrb[0].mxu0
  %4836 = vmatprep.mubr.bf16.mxu0 0
  %4837 = vmatmul.mubr.bf16.gmra.mrb[0].mxu0 %v4636
  %v4838 = vpop.f32.mrb[0].mxu0
  %v4839 = vadd.f32 %v4659, %v4838
  %v4840 = vpop.f32.mrb[0].mxu0
  %v4841 = vpop.f32.mrb[0].mxu0
  %v4842 = vadd.f32 %v4659, %v4841
  %v4843 = vpop.f32.mrb[0].mxu0
  %4844 = vmatprep.mubr.bf16.mxu0 0
  %4845 = vmatmul.mubr.bf16.gmra.mrb[0].mxu0 %v4637
  %v4846 = vpop.f32.mrb[0].mxu0
  %v4847 = vadd.f32 %v4659, %v4846
  %v4848 = vpop.f32.mrb[0].mxu0
  %v4849 = vpop.f32.mrb[0].mxu0
  %v4850 = vadd.f32 %v4659, %v4849
  %v4851 = vpop.f32.mrb[0].mxu0
  %4852 = vmatprep.mubr.bf16.mxu0 0
  %4853 = vmatmul.mubr.bf16.gmra.mrb[0].mxu0 %v4638
  %v4854 = vpop.f32.mrb[0].mxu0
  %v4855 = vadd.f32 %v4659, %v4854
  %v4856 = vpop.f32.mrb[0].mxu0
  %v4857 = vpop.f32.mrb[0].mxu0
  %v4858 = vadd.f32 %v4659, %v4857
  %v4859 = vpop.f32.mrb[0].mxu0
  %4860 = vmatprep.mubr.bf16.mxu0 0
  %4861 = vmatmul.mubr.bf16.gmra.mrb[0].mxu0 %v4639
  %v4862 = vpop.f32.mrb[0].mxu0
  %v4863 = vadd.f32 %v4659, %v4862
  %v4864 = vpop.f32.mrb[0].mxu0
  %v4865 = vpop.f32.mrb[0].mxu0
  %v4866 = vadd.f32 %v4659, %v4865
  %v4867 = vpop.f32.mrb[0].mxu0
  %4868 = vdwg.mxu0
  %v4869 = vadd.f32 %v3699, %v4743
  %v4870 = vadd.f32 %v3700, %v4746
  %v4871 = vadd.f32 %v3701, %v4751
  %v4872 = vadd.f32 %v3702, %v4754
  %v4873 = vadd.f32 %v3703, %v4759
  %v4874 = vadd.f32 %v3704, %v4762
  %v4875 = vadd.f32 %v3705, %v4767
  %v4876 = vadd.f32 %v3706, %v4770
  %v4877 = vadd.f32 %v3707, %v4775
  %v4878 = vadd.f32 %v3708, %v4778
  %v4879 = vadd.f32 %v3709, %v4783
  %v4880 = vadd.f32 %v3710, %v4786
  %v4881 = vadd.f32 %v3711, %v4791
  %v4882 = vadd.f32 %v3712, %v4794
  %v4883 = vadd.f32 %v3713, %v4799
  %v4884 = vadd.f32 %v3714, %v4802
  %v4885 = vadd.f32 %v3715, %v4807
  %v4886 = vadd.f32 %v3716, %v4810
  %v4887 = vadd.f32 %v3717, %v4815
  %v4888 = vadd.f32 %v3718, %v4818
  %v4889 = vadd.f32 %v3719, %v4823
  %v4890 = vadd.f32 %v3720, %v4826
  %v4891 = vadd.f32 %v3721, %v4831
  %v4892 = vadd.f32 %v3722, %v4834
  %v4893 = vadd.f32 %v3723, %v4839
  %v4894 = vadd.f32 %v3724, %v4842
  %v4895 = vadd.f32 %v3725, %v4847
  %v4896 = vadd.f32 %v3726, %v4850
  %v4897 = vadd.f32 %v3727, %v4855
  %v4898 = vadd.f32 %v3728, %v4858
  %v4899 = vadd.f32 %v3729, %v4863
  %v4900 = vadd.f32 %v3730, %v4866
  %s4901 = scalar_lea.vmem %s7, 8
  %v4902 = vld [vmem:[%s4901] sm:$0xff]
  %v4903 = vsel %vm454, %v4869, 0.0
  %4904 = vadd.xlane.f32.xlu0 %v4903
  %v4905 = vpop.xlane.xlu0 %4904
  %v4906 = vsel %vm454, %v4870, 0.0
  %4907 = vadd.xlane.f32.xlu0 %v4906
  %v4908 = vpop.xlane.xlu0 %4907
  %v4909 = vsel %vm454, %v4871, 0.0
  %4910 = vadd.xlane.f32.xlu0 %v4909
  %v4911 = vpop.xlane.xlu0 %4910
  %v4912 = vsel %vm454, %v4872, 0.0
  %4913 = vadd.xlane.f32.xlu0 %v4912
  %v4914 = vpop.xlane.xlu0 %4913
  %v4915 = vsel %vm454, %v4873, 0.0
  %4916 = vadd.xlane.f32.xlu0 %v4915
  %v4917 = vpop.xlane.xlu0 %4916
  %v4918 = vsel %vm454, %v4874, 0.0
  %4919 = vadd.xlane.f32.xlu0 %v4918
  %v4920 = vpop.xlane.xlu0 %4919
  %v4921 = vsel %vm454, %v4875, 0.0
  %4922 = vadd.xlane.f32.xlu0 %v4921
  %v4923 = vpop.xlane.xlu0 %4922
  %v4924 = vsel %vm454, %v4876, 0.0
  %4925 = vadd.xlane.f32.xlu0 %v4924
  %v4926 = vpop.xlane.xlu0 %4925
  %v4927 = vsel %vm454, %v4877, 0.0
  %4928 = vadd.xlane.f32.xlu0 %v4927
  %v4929 = vpop.xlane.xlu0 %4928
  %v4930 = vsel %vm454, %v4878, 0.0
  %4931 = vadd.xlane.f32.xlu0 %v4930
  %v4932 = vpop.xlane.xlu0 %4931
  %v4933 = vsel %vm454, %v4879, 0.0
  %4934 = vadd.xlane.f32.xlu0 %v4933
  %v4935 = vpop.xlane.xlu0 %4934
  %v4936 = vsel %vm454, %v4880, 0.0
  %4937 = vadd.xlane.f32.xlu0 %v4936
  %v4938 = vpop.xlane.xlu0 %4937
  %v4939 = vsel %vm454, %v4881, 0.0
  %4940 = vadd.xlane.f32.xlu0 %v4939
  %v4941 = vpop.xlane.xlu0 %4940
  %v4942 = vsel %vm454, %v4882, 0.0
  %4943 = vadd.xlane.f32.xlu0 %v4942
  %v4944 = vpop.xlane.xlu0 %4943
  %v4945 = vsel %vm454, %v4883, 0.0
  %4946 = vadd.xlane.f32.xlu0 %v4945
  %v4947 = vpop.xlane.xlu0 %4946
  %v4948 = vsel %vm454, %v4884, 0.0
  %4949 = vadd.xlane.f32.xlu0 %v4948
  %v4950 = vpop.xlane.xlu0 %4949
  %v4951 = vsel %vm454, %v4885, 0.0
  %4952 = vadd.xlane.f32.xlu0 %v4951
  %v4953 = vpop.xlane.xlu0 %4952
  %v4954 = vsel %vm454, %v4886, 0.0
  %4955 = vadd.xlane.f32.xlu0 %v4954
  %v4956 = vpop.xlane.xlu0 %4955
  %v4957 = vsel %vm454, %v4887, 0.0
  %4958 = vadd.xlane.f32.xlu0 %v4957
  %v4959 = vpop.xlane.xlu0 %4958
  %v4960 = vsel %vm454, %v4888, 0.0
  %4961 = vadd.xlane.f32.xlu0 %v4960
  %v4962 = vpop.xlane.xlu0 %4961
  %v4963 = vsel %vm454, %v4889, 0.0
  %4964 = vadd.xlane.f32.xlu0 %v4963
  %v4965 = vpop.xlane.xlu0 %4964
  %v4966 = vsel %vm454, %v4890, 0.0
  %4967 = vadd.xlane.f32.xlu0 %v4966
  %v4968 = vpop.xlane.xlu0 %4967
  %v4969 = vsel %vm454, %v4891, 0.0
  %4970 = vadd.xlane.f32.xlu0 %v4969
  %v4971 = vpop.xlane.xlu0 %4970
  %v4972 = vsel %vm454, %v4892, 0.0
  %4973 = vadd.xlane.f32.xlu0 %v4972
  %v4974 = vpop.xlane.xlu0 %4973
  %v4975 = vsel %vm454, %v4893, 0.0
  %4976 = vadd.xlane.f32.xlu0 %v4975
  %v4977 = vpop.xlane.xlu0 %4976
  %v4978 = vsel %vm454, %v4894, 0.0
  %4979 = vadd.xlane.f32.xlu0 %v4978
  %v4980 = vpop.xlane.xlu0 %4979
  %v4981 = vsel %vm454, %v4895, 0.0
  %4982 = vadd.xlane.f32.xlu0 %v4981
  %v4983 = vpop.xlane.xlu0 %4982
  %v4984 = vsel %vm454, %v4896, 0.0
  %4985 = vadd.xlane.f32.xlu0 %v4984
  %v4986 = vpop.xlane.xlu0 %4985
  %v4987 = vsel %vm454, %v4897, 0.0
  %4988 = vadd.xlane.f32.xlu0 %v4987
  %v4989 = vpop.xlane.xlu0 %4988
  %v4990 = vsel %vm454, %v4898, 0.0
  %4991 = vadd.xlane.f32.xlu0 %v4990
  %v4992 = vpop.xlane.xlu0 %4991
  %v4993 = vsel %vm454, %v4899, 0.0
  %4994 = vadd.xlane.f32.xlu0 %v4993
  %v4995 = vpop.xlane.xlu0 %4994
  %v4996 = vsel %vm454, %v4900, 0.0
  %4997 = vadd.xlane.f32.xlu0 %v4996
  %v4998 = vpop.xlane.xlu0 %4997
  %v4999 = vmul.f32 %v4905, %v551
  %v5000 = vmul.f32 %v4908, %v551
  %v5001 = vmul.f32 %v4911, %v551
  %v5002 = vmul.f32 %v4914, %v551
  %v5003 = vmul.f32 %v4917, %v551
  %v5004 = vmul.f32 %v4920, %v551
  %v5005 = vmul.f32 %v4923, %v551
  %v5006 = vmul.f32 %v4926, %v551
  %v5007 = vmul.f32 %v4929, %v551
  %v5008 = vmul.f32 %v4932, %v551
  %v5009 = vmul.f32 %v4935, %v551
  %v5010 = vmul.f32 %v4938, %v551
  %v5011 = vmul.f32 %v4941, %v551
  %v5012 = vmul.f32 %v4944, %v551
  %v5013 = vmul.f32 %v4947, %v551
  %v5014 = vmul.f32 %v4950, %v551
  %v5015 = vmul.f32 %v4953, %v551
  %v5016 = vmul.f32 %v4956, %v551
  %v5017 = vmul.f32 %v4959, %v551
  %v5018 = vmul.f32 %v4962, %v551
  %v5019 = vmul.f32 %v4965, %v551
  %v5020 = vmul.f32 %v4968, %v551
  %v5021 = vmul.f32 %v4971, %v551
  %v5022 = vmul.f32 %v4974, %v551
  %v5023 = vmul.f32 %v4977, %v551
  %v5024 = vmul.f32 %v4980, %v551
  %v5025 = vmul.f32 %v4983, %v551
  %v5026 = vmul.f32 %v4986, %v551
  %v5027 = vmul.f32 %v4989, %v551
  %v5028 = vmul.f32 %v4992, %v551
  %v5029 = vmul.f32 %v4995, %v551
  %v5030 = vmul.f32 %v4998, %v551
  %v5031 = vsub.f32 %v4869, %v4999
  %v5032 = vsub.f32 %v4870, %v5000
  %v5033 = vsub.f32 %v4871, %v5001
  %v5034 = vsub.f32 %v4872, %v5002
  %v5035 = vsub.f32 %v4873, %v5003
  %v5036 = vsub.f32 %v4874, %v5004
  %v5037 = vsub.f32 %v4875, %v5005
  %v5038 = vsub.f32 %v4876, %v5006
  %v5039 = vsub.f32 %v4877, %v5007
  %v5040 = vsub.f32 %v4878, %v5008
  %v5041 = vsub.f32 %v4879, %v5009
  %v5042 = vsub.f32 %v4880, %v5010
  %v5043 = vsub.f32 %v4881, %v5011
  %v5044 = vsub.f32 %v4882, %v5012
  %v5045 = vsub.f32 %v4883, %v5013
  %v5046 = vsub.f32 %v4884, %v5014
  %v5047 = vsub.f32 %v4885, %v5015
  %v5048 = vsub.f32 %v4886, %v5016
  %v5049 = vsub.f32 %v4887, %v5017
  %v5050 = vsub.f32 %v4888, %v5018
  %v5051 = vsub.f32 %v4889, %v5019
  %v5052 = vsub.f32 %v4890, %v5020
  %v5053 = vsub.f32 %v4891, %v5021
  %v5054 = vsub.f32 %v4892, %v5022
  %v5055 = vsub.f32 %v4893, %v5023
  %v5056 = vsub.f32 %v4894, %v5024
  %v5057 = vsub.f32 %v4895, %v5025
  %v5058 = vsub.f32 %v4896, %v5026
  %v5059 = vsub.f32 %v4897, %v5027
  %v5060 = vsub.f32 %v4898, %v5028
  %v5061 = vsub.f32 %v4899, %v5029
  %v5062 = vsub.f32 %v4900, %v5030
  %v5063 = vmul.f32 %v5031, %v5031
  %v5064 = vmul.f32 %v5032, %v5032
  %v5065 = vmul.f32 %v5033, %v5033
  %v5066 = vmul.f32 %v5034, %v5034
  %v5067 = vmul.f32 %v5035, %v5035
  %v5068 = vmul.f32 %v5036, %v5036
  %v5069 = vmul.f32 %v5037, %v5037
  %v5070 = vmul.f32 %v5038, %v5038
  %v5071 = vmul.f32 %v5039, %v5039
  %v5072 = vmul.f32 %v5040, %v5040
  %v5073 = vmul.f32 %v5041, %v5041
  %v5074 = vmul.f32 %v5042, %v5042
  %v5075 = vmul.f32 %v5043, %v5043
  %v5076 = vmul.f32 %v5044, %v5044
  %v5077 = vmul.f32 %v5045, %v5045
  %v5078 = vmul.f32 %v5046, %v5046
  %v5079 = vmul.f32 %v5047, %v5047
  %v5080 = vmul.f32 %v5048, %v5048
  %v5081 = vmul.f32 %v5049, %v5049
  %v5082 = vmul.f32 %v5050, %v5050
  %v5083 = vmul.f32 %v5051, %v5051
  %v5084 = vmul.f32 %v5052, %v5052
  %v5085 = vmul.f32 %v5053, %v5053
  %v5086 = vmul.f32 %v5054, %v5054
  %v5087 = vmul.f32 %v5055, %v5055
  %v5088 = vmul.f32 %v5056, %v5056
  %v5089 = vmul.f32 %v5057, %v5057
  %v5090 = vmul.f32 %v5058, %v5058
  %v5091 = vmul.f32 %v5059, %v5059
  %v5092 = vmul.f32 %v5060, %v5060
  %v5093 = vmul.f32 %v5061, %v5061
  %v5094 = vmul.f32 %v5062, %v5062
  %v5095 = vsel %vm454, %v5063, 0.0
  %5096 = vadd.xlane.f32.xlu0 %v5095
  %v5097 = vpop.xlane.xlu0 %5096
  %v5098 = vsel %vm454, %v5064, 0.0
  %5099 = vadd.xlane.f32.xlu0 %v5098
  %v5100 = vpop.xlane.xlu0 %5099
  %v5101 = vsel %vm454, %v5065, 0.0
  %5102 = vadd.xlane.f32.xlu0 %v5101
  %v5103 = vpop.xlane.xlu0 %5102
  %v5104 = vsel %vm454, %v5066, 0.0
  %5105 = vadd.xlane.f32.xlu0 %v5104
  %v5106 = vpop.xlane.xlu0 %5105
  %v5107 = vsel %vm454, %v5067, 0.0
  %5108 = vadd.xlane.f32.xlu0 %v5107
  %v5109 = vpop.xlane.xlu0 %5108
  %v5110 = vsel %vm454, %v5068, 0.0
  %5111 = vadd.xlane.f32.xlu0 %v5110
  %v5112 = vpop.xlane.xlu0 %5111
  %v5113 = vsel %vm454, %v5069, 0.0
  %5114 = vadd.xlane.f32.xlu0 %v5113
  %v5115 = vpop.xlane.xlu0 %5114
  %v5116 = vsel %vm454, %v5070, 0.0
  %5117 = vadd.xlane.f32.xlu0 %v5116
  %v5118 = vpop.xlane.xlu0 %5117
  %v5119 = vsel %vm454, %v5071, 0.0
  %5120 = vadd.xlane.f32.xlu0 %v5119
  %v5121 = vpop.xlane.xlu0 %5120
  %v5122 = vsel %vm454, %v5072, 0.0
  %5123 = vadd.xlane.f32.xlu0 %v5122
  %v5124 = vpop.xlane.xlu0 %5123
  %v5125 = vsel %vm454, %v5073, 0.0
  %5126 = vadd.xlane.f32.xlu0 %v5125
  %v5127 = vpop.xlane.xlu0 %5126
  %v5128 = vsel %vm454, %v5074, 0.0
  %5129 = vadd.xlane.f32.xlu0 %v5128
  %v5130 = vpop.xlane.xlu0 %5129
  %v5131 = vsel %vm454, %v5075, 0.0
  %5132 = vadd.xlane.f32.xlu0 %v5131
  %v5133 = vpop.xlane.xlu0 %5132
  %v5134 = vsel %vm454, %v5076, 0.0
  %5135 = vadd.xlane.f32.xlu0 %v5134
  %v5136 = vpop.xlane.xlu0 %5135
  %v5137 = vsel %vm454, %v5077, 0.0
  %5138 = vadd.xlane.f32.xlu0 %v5137
  %v5139 = vpop.xlane.xlu0 %5138
  %v5140 = vsel %vm454, %v5078, 0.0
  %5141 = vadd.xlane.f32.xlu0 %v5140
  %v5142 = vpop.xlane.xlu0 %5141
  %v5143 = vsel %vm454, %v5079, 0.0
  %5144 = vadd.xlane.f32.xlu0 %v5143
  %v5145 = vpop.xlane.xlu0 %5144
  %v5146 = vsel %vm454, %v5080, 0.0
  %5147 = vadd.xlane.f32.xlu0 %v5146
  %v5148 = vpop.xlane.xlu0 %5147
  %v5149 = vsel %vm454, %v5081, 0.0
  %5150 = vadd.xlane.f32.xlu0 %v5149
  %v5151 = vpop.xlane.xlu0 %5150
  %v5152 = vsel %vm454, %v5082, 0.0
  %5153 = vadd.xlane.f32.xlu0 %v5152
  %v5154 = vpop.xlane.xlu0 %5153
  %v5155 = vsel %vm454, %v5083, 0.0
  %5156 = vadd.xlane.f32.xlu0 %v5155
  %v5157 = vpop.xlane.xlu0 %5156
  %v5158 = vsel %vm454, %v5084, 0.0
  %5159 = vadd.xlane.f32.xlu0 %v5158
  %v5160 = vpop.xlane.xlu0 %5159
  %v5161 = vsel %vm454, %v5085, 0.0
  %5162 = vadd.xlane.f32.xlu0 %v5161
  %v5163 = vpop.xlane.xlu0 %5162
  %v5164 = vsel %vm454, %v5086, 0.0
  %5165 = vadd.xlane.f32.xlu0 %v5164
  %v5166 = vpop.xlane.xlu0 %5165
  %v5167 = vsel %vm454, %v5087, 0.0
  %5168 = vadd.xlane.f32.xlu0 %v5167
  %v5169 = vpop.xlane.xlu0 %5168
  %v5170 = vsel %vm454, %v5088, 0.0
  %5171 = vadd.xlane.f32.xlu0 %v5170
  %v5172 = vpop.xlane.xlu0 %5171
  %v5173 = vsel %vm454, %v5089, 0.0
  %5174 = vadd.xlane.f32.xlu0 %v5173
  %v5175 = vpop.xlane.xlu0 %5174
  %v5176 = vsel %vm454, %v5090, 0.0
  %5177 = vadd.xlane.f32.xlu0 %v5176
  %v5178 = vpop.xlane.xlu0 %5177
  %v5179 = vsel %vm454, %v5091, 0.0
  %5180 = vadd.xlane.f32.xlu0 %v5179
  %v5181 = vpop.xlane.xlu0 %5180
  %v5182 = vsel %vm454, %v5092, 0.0
  %5183 = vadd.xlane.f32.xlu0 %v5182
  %v5184 = vpop.xlane.xlu0 %5183
  %v5185 = vsel %vm454, %v5093, 0.0
  %5186 = vadd.xlane.f32.xlu0 %v5185
  %v5187 = vpop.xlane.xlu0 %5186
  %v5188 = vsel %vm454, %v5094, 0.0
  %5189 = vadd.xlane.f32.xlu0 %v5188
  %v5190 = vpop.xlane.xlu0 %5189
  %v5191 = vmul.f32 %v5097, %v551
  %v5192 = vmul.f32 %v5100, %v551
  %v5193 = vmul.f32 %v5103, %v551
  %v5194 = vmul.f32 %v5106, %v551
  %v5195 = vmul.f32 %v5109, %v551
  %v5196 = vmul.f32 %v5112, %v551
  %v5197 = vmul.f32 %v5115, %v551
  %v5198 = vmul.f32 %v5118, %v551
  %v5199 = vmul.f32 %v5121, %v551
  %v5200 = vmul.f32 %v5124, %v551
  %v5201 = vmul.f32 %v5127, %v551
  %v5202 = vmul.f32 %v5130, %v551
  %v5203 = vmul.f32 %v5133, %v551
  %v5204 = vmul.f32 %v5136, %v551
  %v5205 = vmul.f32 %v5139, %v551
  %v5206 = vmul.f32 %v5142, %v551
  %v5207 = vmul.f32 %v5145, %v551
  %v5208 = vmul.f32 %v5148, %v551
  %v5209 = vmul.f32 %v5151, %v551
  %v5210 = vmul.f32 %v5154, %v551
  %v5211 = vmul.f32 %v5157, %v551
  %v5212 = vmul.f32 %v5160, %v551
  %v5213 = vmul.f32 %v5163, %v551
  %v5214 = vmul.f32 %v5166, %v551
  %v5215 = vmul.f32 %v5169, %v551
  %v5216 = vmul.f32 %v5172, %v551
  %v5217 = vmul.f32 %v5175, %v551
  %v5218 = vmul.f32 %v5178, %v551
  %v5219 = vmul.f32 %v5181, %v551
  %v5220 = vmul.f32 %v5184, %v551
  %v5221 = vmul.f32 %v5187, %v551
  %v5222 = vmul.f32 %v5190, %v551
  %v5223 = vadd.f32 %v5191, 1e-05
  %v5224 = vadd.f32 %v5192, 1e-05
  %v5225 = vadd.f32 %v5193, 1e-05
  %v5226 = vadd.f32 %v5194, 1e-05
  %v5227 = vadd.f32 %v5195, 1e-05
  %v5228 = vadd.f32 %v5196, 1e-05
  %v5229 = vadd.f32 %v5197, 1e-05
  %v5230 = vadd.f32 %v5198, 1e-05
  %v5231 = vadd.f32 %v5199, 1e-05
  %v5232 = vadd.f32 %v5200, 1e-05
  %v5233 = vadd.f32 %v5201, 1e-05
  %v5234 = vadd.f32 %v5202, 1e-05
  %v5235 = vadd.f32 %v5203, 1e-05
  %v5236 = vadd.f32 %v5204, 1e-05
  %v5237 = vadd.f32 %v5205, 1e-05
  %v5238 = vadd.f32 %v5206, 1e-05
  %v5239 = vadd.f32 %v5207, 1e-05
  %v5240 = vadd.f32 %v5208, 1e-05
  %v5241 = vadd.f32 %v5209, 1e-05
  %v5242 = vadd.f32 %v5210, 1e-05
  %v5243 = vadd.f32 %v5211, 1e-05
  %v5244 = vadd.f32 %v5212, 1e-05
  %v5245 = vadd.f32 %v5213, 1e-05
  %v5246 = vadd.f32 %v5214, 1e-05
  %v5247 = vadd.f32 %v5215, 1e-05
  %v5248 = vadd.f32 %v5216, 1e-05
  %v5249 = vadd.f32 %v5217, 1e-05
  %v5250 = vadd.f32 %v5218, 1e-05
  %v5251 = vadd.f32 %v5219, 1e-05
  %v5252 = vadd.f32 %v5220, 1e-05
  %v5253 = vadd.f32 %v5221, 1e-05
  %v5254 = vadd.f32 %v5222, 1e-05
  %v5255 = vrsqrt.pop %v5223
  %v5256 = vrsqrt.pop %v5224
  %v5257 = vrsqrt.pop %v5225
  %v5258 = vrsqrt.pop %v5226
  %v5259 = vrsqrt.pop %v5227
  %v5260 = vrsqrt.pop %v5228
  %v5261 = vrsqrt.pop %v5229
  %v5262 = vrsqrt.pop %v5230
  %v5263 = vrsqrt.pop %v5231
  %v5264 = vrsqrt.pop %v5232
  %v5265 = vrsqrt.pop %v5233
  %v5266 = vrsqrt.pop %v5234
  %v5267 = vrsqrt.pop %v5235
  %v5268 = vrsqrt.pop %v5236
  %v5269 = vrsqrt.pop %v5237
  %v5270 = vrsqrt.pop %v5238
  %v5271 = vrsqrt.pop %v5239
  %v5272 = vrsqrt.pop %v5240
  %v5273 = vrsqrt.pop %v5241
  %v5274 = vrsqrt.pop %v5242
  %v5275 = vrsqrt.pop %v5243
  %v5276 = vrsqrt.pop %v5244
  %v5277 = vrsqrt.pop %v5245
  %v5278 = vrsqrt.pop %v5246
  %v5279 = vrsqrt.pop %v5247
  %v5280 = vrsqrt.pop %v5248
  %v5281 = vrsqrt.pop %v5249
  %v5282 = vrsqrt.pop %v5250
  %v5283 = vrsqrt.pop %v5251
  %v5284 = vrsqrt.pop %v5252
  %v5285 = vrsqrt.pop %v5253
  %v5286 = vrsqrt.pop %v5254
  %v5287 = vmul.f32 %v5031, %v5255
  %v5288 = vmul.f32 %v5032, %v5256
  %v5289 = vmul.f32 %v5033, %v5257
  %v5290 = vmul.f32 %v5034, %v5258
  %v5291 = vmul.f32 %v5035, %v5259
  %v5292 = vmul.f32 %v5036, %v5260
  %v5293 = vmul.f32 %v5037, %v5261
  %v5294 = vmul.f32 %v5038, %v5262
  %v5295 = vmul.f32 %v5039, %v5263
  %v5296 = vmul.f32 %v5040, %v5264
  %v5297 = vmul.f32 %v5041, %v5265
  %v5298 = vmul.f32 %v5042, %v5266
  %v5299 = vmul.f32 %v5043, %v5267
  %v5300 = vmul.f32 %v5044, %v5268
  %v5301 = vmul.f32 %v5045, %v5269
  %v5302 = vmul.f32 %v5046, %v5270
  %v5303 = vmul.f32 %v5047, %v5271
  %v5304 = vmul.f32 %v5048, %v5272
  %v5305 = vmul.f32 %v5049, %v5273
  %v5306 = vmul.f32 %v5050, %v5274
  %v5307 = vmul.f32 %v5051, %v5275
  %v5308 = vmul.f32 %v5052, %v5276
  %v5309 = vmul.f32 %v5053, %v5277
  %v5310 = vmul.f32 %v5054, %v5278
  %v5311 = vmul.f32 %v5055, %v5279
  %v5312 = vmul.f32 %v5056, %v5280
  %v5313 = vmul.f32 %v5057, %v5281
  %v5314 = vmul.f32 %v5058, %v5282
  %v5315 = vmul.f32 %v5059, %v5283
  %v5316 = vmul.f32 %v5060, %v5284
  %v5317 = vmul.f32 %v5061, %v5285
  %v5318 = vmul.f32 %v5062, %v5286
  %v5319 = vlaneseq
  %v5320 = vshrl.u32 %v5319, 7
  %v5321 = vsub.s32 0, %v5320
  %v5322 = vrot.slane %v4902, %v5321
  %v5323 = vmul.f32 %v5287, %v5322
  %v5324 = vmul.f32 %v5288, %v5322
  %v5325 = vmul.f32 %v5289, %v5322
  %v5326 = vmul.f32 %v5290, %v5322
  %v5327 = vmul.f32 %v5291, %v5322
  %v5328 = vmul.f32 %v5292, %v5322
  %v5329 = vmul.f32 %v5293, %v5322
  %v5330 = vmul.f32 %v5294, %v5322
  %v5331 = vmul.f32 %v5295, %v5322
  %v5332 = vmul.f32 %v5296, %v5322
  %v5333 = vmul.f32 %v5297, %v5322
  %v5334 = vmul.f32 %v5298, %v5322
  %v5335 = vmul.f32 %v5299, %v5322
  %v5336 = vmul.f32 %v5300, %v5322
  %v5337 = vmul.f32 %v5301, %v5322
  %v5338 = vmul.f32 %v5302, %v5322
  %v5339 = vmul.f32 %v5303, %v5322
  %v5340 = vmul.f32 %v5304, %v5322
  %v5341 = vmul.f32 %v5305, %v5322
  %v5342 = vmul.f32 %v5306, %v5322
  %v5343 = vmul.f32 %v5307, %v5322
  %v5344 = vmul.f32 %v5308, %v5322
  %v5345 = vmul.f32 %v5309, %v5322
  %v5346 = vmul.f32 %v5310, %v5322
  %v5347 = vmul.f32 %v5311, %v5322
  %v5348 = vmul.f32 %v5312, %v5322
  %v5349 = vmul.f32 %v5313, %v5322
  %v5350 = vmul.f32 %v5314, %v5322
  %v5351 = vmul.f32 %v5315, %v5322
  %v5352 = vmul.f32 %v5316, %v5322
  %v5353 = vmul.f32 %v5317, %v5322
  %v5354 = vmul.f32 %v5318, %v5322
  %v5355 = vlaneseq
  %v5356 = vshrl.u32 %v5355, 7
  %v5357 = vsub.s32 1, %v5356
  %v5358 = vrot.slane %v4902, %v5357
  %v5359 = vadd.f32 %v5323, %v5358
  %v5360 = vadd.f32 %v5324, %v5358
  %v5361 = vadd.f32 %v5325, %v5358
  %v5362 = vadd.f32 %v5326, %v5358
  %v5363 = vadd.f32 %v5327, %v5358
  %v5364 = vadd.f32 %v5328, %v5358
  %v5365 = vadd.f32 %v5329, %v5358
  %v5366 = vadd.f32 %v5330, %v5358
  %v5367 = vadd.f32 %v5331, %v5358
  %v5368 = vadd.f32 %v5332, %v5358
  %v5369 = vadd.f32 %v5333, %v5358
  %v5370 = vadd.f32 %v5334, %v5358
  %v5371 = vadd.f32 %v5335, %v5358
  %v5372 = vadd.f32 %v5336, %v5358
  %v5373 = vadd.f32 %v5337, %v5358
  %v5374 = vadd.f32 %v5338, %v5358
  %v5375 = vadd.f32 %v5339, %v5358
  %v5376 = vadd.f32 %v5340, %v5358
  %v5377 = vadd.f32 %v5341, %v5358
  %v5378 = vadd.f32 %v5342, %v5358
  %v5379 = vadd.f32 %v5343, %v5358
  %v5380 = vadd.f32 %v5344, %v5358
  %v5381 = vadd.f32 %v5345, %v5358
  %v5382 = vadd.f32 %v5346, %v5358
  %v5383 = vadd.f32 %v5347, %v5358
  %v5384 = vadd.f32 %v5348, %v5358
  %v5385 = vadd.f32 %v5349, %v5358
  %v5386 = vadd.f32 %v5350, %v5358
  %v5387 = vadd.f32 %v5351, %v5358
  %v5388 = vadd.f32 %v5352, %v5358
  %v5389 = vadd.f32 %v5353, %v5358
  %v5390 = vadd.f32 %v5354, %v5358
  %v5391 = vpack.c.bf16 %v5360, %v5359
  %v5392 = vpack.c.bf16 %v5362, %v5361
  %v5393 = vpack.c.bf16 %v5364, %v5363
  %v5394 = vpack.c.bf16 %v5366, %v5365
  %v5395 = vpack.c.bf16 %v5368, %v5367
  %v5396 = vpack.c.bf16 %v5370, %v5369
  %v5397 = vpack.c.bf16 %v5372, %v5371
  %v5398 = vpack.c.bf16 %v5374, %v5373
  %v5399 = vpack.c.bf16 %v5376, %v5375
  %v5400 = vpack.c.bf16 %v5378, %v5377
  %v5401 = vpack.c.bf16 %v5380, %v5379
  %v5402 = vpack.c.bf16 %v5382, %v5381
  %v5403 = vpack.c.bf16 %v5384, %v5383
  %v5404 = vpack.c.bf16 %v5386, %v5385
  %v5405 = vpack.c.bf16 %v5388, %v5387
  %v5406 = vpack.c.bf16 %v5390, %v5389
  %s5407 = scalar_lea.vmem %s3, 16
  %v5408 = vld [vmem:[%s5407] sm:$0xf]
  %v5409 = vld [vmem:[%s5407 + $0x4] sm:$0xf]
  %v5410 = vld [vmem:[%s5407 + $0x8] sm:$0xf]
  %v5411 = vld [vmem:[%s5407 + $0xc] sm:$0xf]
  %v5416 = vunpack.c.l.b16 %v5408
  %v5417 = vunpack.c.l.b16 %v5409
  %v5418 = vunpack.c.l.b16 %v5410
  %v5419 = vunpack.c.l.b16 %v5411
  %v5420 = vpack.c.b16 %v5417, %v5416
  %v5421 = vpack.c.b16 %v5419, %v5418
  %v5425 = vsel %vm454, %v5391, 0
  %v5428 = vsel %vm454, %v5392, 0
  %v5431 = vsel %vm454, %v5393, 0
  %v5434 = vsel %vm454, %v5394, 0
  %v5437 = vsel %vm454, %v5395, 0
  %v5440 = vsel %vm454, %v5396, 0
  %v5443 = vsel %vm454, %v5397, 0
  %v5446 = vsel %vm454, %v5398, 0
  %v5449 = vsel %vm454, %v5399, 0
  %v5452 = vsel %vm454, %v5400, 0
  %v5455 = vsel %vm454, %v5401, 0
  %v5458 = vsel %vm454, %v5402, 0
  %v5461 = vsel %vm454, %v5403, 0
  %v5464 = vsel %vm454, %v5404, 0
  %v5467 = vsel %vm454, %v5405, 0
  %v5470 = vsel %vm454, %v5406, 0
  %5472 = vmatprep.subr.bf16.mxu0 0
  %5473 = vmatpush1.bf16.msra.mxu0 %v5420
  %5474 = vmatprep.subr.bf16.mxu0 0
  %5475 = vmatpush1.bf16.msra.mxu0 %v5421
  %5476 = vmatprep.subr.bf16.mxu0 0
  %5477 = vmatpush1.bf16.msra.mxu0 0
  %5478 = vmatprep.subr.bf16.mxu0 0
  %5479 = vmatpush1.bf16.msra.mxu0 0
  %5480 = vmatprep.subr.bf16.mxu0 0
  %5481 = vmatpush1.bf16.msra.mxu0 0
  %5482 = vmatprep.subr.bf16.mxu0 0
  %5483 = vmatpush1.bf16.msra.mxu0 0
  %5484 = vmatprep.subr.bf16.mxu0 0
  %5485 = vmatpush1.bf16.msra.mxu0 0
  %5486 = vmatprep.subr.bf16.mxu0 0
  %5487 = vmatpush1.bf16.msra.mxu0 0
  %5488 = vmatprep.subr.bf16.mxu0 0
  %5489 = vmatpush1.bf16.msra.mxu0 0
  %5490 = vmatprep.subr.bf16.mxu0 0
  %5491 = vmatpush1.bf16.msra.mxu0 0
  %5492 = vmatprep.subr.bf16.mxu0 0
  %5493 = vmatpush1.bf16.msra.mxu0 0
  %5494 = vmatprep.subr.bf16.mxu0 0
  %5495 = vmatpush1.bf16.msra.mxu0 0
  %5496 = vmatprep.subr.bf16.mxu0 0
  %5497 = vmatpush1.bf16.msra.mxu0 0
  %5498 = vmatprep.subr.bf16.mxu0 0
  %5499 = vmatpush1.bf16.msra.mxu0 0
  %5500 = vmatprep.subr.bf16.mxu0 0
  %5501 = vmatpush1.bf16.msra.mxu0 0
  %5502 = vmatprep.subr.bf16.mxu0 0
  %5503 = vmatpush1.bf16.msra.mxu0 0
  %5504 = vmatprep.mubr.bf16.mxu0 0
  %5505 = vmatmul.mubr.bf16.gmra.mrb[0].mxu0 %v5425
  %v5506 = vpop.f32.mrb[0].mxu0
  %v5507 = vadd.f32 0.0, %v5506
  %v5508 = vpop.f32.mrb[0].mxu0
  %v5509 = vpop.f32.mrb[0].mxu0
  %v5510 = vadd.f32 0.0, %v5509
  %v5511 = vpop.f32.mrb[0].mxu0
  %5512 = vmatprep.mubr.bf16.mxu0 0
  %5513 = vmatmul.mubr.bf16.gmra.mrb[0].mxu0 %v5428
  %v5514 = vpop.f32.mrb[0].mxu0
  %v5515 = vadd.f32 0.0, %v5514
  %v5516 = vpop.f32.mrb[0].mxu0
  %v5517 = vpop.f32.mrb[0].mxu0
  %v5518 = vadd.f32 0.0, %v5517
  %v5519 = vpop.f32.mrb[0].mxu0
  %5520 = vmatprep.mubr.bf16.mxu0 0
  %5521 = vmatmul.mubr.bf16.gmra.mrb[0].mxu0 %v5431
  %v5522 = vpop.f32.mrb[0].mxu0
  %v5523 = vadd.f32 0.0, %v5522
  %v5524 = vpop.f32.mrb[0].mxu0
  %v5525 = vpop.f32.mrb[0].mxu0
  %v5526 = vadd.f32 0.0, %v5525
  %v5527 = vpop.f32.mrb[0].mxu0
  %5528 = vmatprep.mubr.bf16.mxu0 0
  %5529 = vmatmul.mubr.bf16.gmra.mrb[0].mxu0 %v5434
  %v5530 = vpop.f32.mrb[0].mxu0
  %v5531 = vadd.f32 0.0, %v5530
  %v5532 = vpop.f32.mrb[0].mxu0
  %v5533 = vpop.f32.mrb[0].mxu0
  %v5534 = vadd.f32 0.0, %v5533
  %v5535 = vpop.f32.mrb[0].mxu0
  %5536 = vmatprep.mubr.bf16.mxu0 0
  %5537 = vmatmul.mubr.bf16.gmra.mrb[0].mxu0 %v5437
  %v5538 = vpop.f32.mrb[0].mxu0
  %v5539 = vadd.f32 0.0, %v5538
  %v5540 = vpop.f32.mrb[0].mxu0
  %v5541 = vpop.f32.mrb[0].mxu0
  %v5542 = vadd.f32 0.0, %v5541
  %v5543 = vpop.f32.mrb[0].mxu0
  %5544 = vmatprep.mubr.bf16.mxu0 0
  %5545 = vmatmul.mubr.bf16.gmra.mrb[0].mxu0 %v5440
  %v5546 = vpop.f32.mrb[0].mxu0
  %v5547 = vadd.f32 0.0, %v5546
  %v5548 = vpop.f32.mrb[0].mxu0
  %v5549 = vpop.f32.mrb[0].mxu0
  %v5550 = vadd.f32 0.0, %v5549
  %v5551 = vpop.f32.mrb[0].mxu0
  %5552 = vmatprep.mubr.bf16.mxu0 0
  %5553 = vmatmul.mubr.bf16.gmra.mrb[0].mxu0 %v5443
  %v5554 = vpop.f32.mrb[0].mxu0
  %v5555 = vadd.f32 0.0, %v5554
  %v5556 = vpop.f32.mrb[0].mxu0
  %v5557 = vpop.f32.mrb[0].mxu0
  %v5558 = vadd.f32 0.0, %v5557
  %v5559 = vpop.f32.mrb[0].mxu0
  %5560 = vmatprep.mubr.bf16.mxu0 0
  %5561 = vmatmul.mubr.bf16.gmra.mrb[0].mxu0 %v5446
  %v5562 = vpop.f32.mrb[0].mxu0
  %v5563 = vadd.f32 0.0, %v5562
  %v5564 = vpop.f32.mrb[0].mxu0
  %v5565 = vpop.f32.mrb[0].mxu0
  %v5566 = vadd.f32 0.0, %v5565
  %v5567 = vpop.f32.mrb[0].mxu0
  %5568 = vmatprep.mubr.bf16.mxu0 0
  %5569 = vmatmul.mubr.bf16.gmra.mrb[0].mxu0 %v5449
  %v5570 = vpop.f32.mrb[0].mxu0
  %v5571 = vadd.f32 0.0, %v5570
  %v5572 = vpop.f32.mrb[0].mxu0
  %v5573 = vpop.f32.mrb[0].mxu0
  %v5574 = vadd.f32 0.0, %v5573
  %v5575 = vpop.f32.mrb[0].mxu0
  %5576 = vmatprep.mubr.bf16.mxu0 0
  %5577 = vmatmul.mubr.bf16.gmra.mrb[0].mxu0 %v5452
  %v5578 = vpop.f32.mrb[0].mxu0
  %v5579 = vadd.f32 0.0, %v5578
  %v5580 = vpop.f32.mrb[0].mxu0
  %v5581 = vpop.f32.mrb[0].mxu0
  %v5582 = vadd.f32 0.0, %v5581
  %v5583 = vpop.f32.mrb[0].mxu0
  %5584 = vmatprep.mubr.bf16.mxu0 0
  %5585 = vmatmul.mubr.bf16.gmra.mrb[0].mxu0 %v5455
  %v5586 = vpop.f32.mrb[0].mxu0
  %v5587 = vadd.f32 0.0, %v5586
  %v5588 = vpop.f32.mrb[0].mxu0
  %v5589 = vpop.f32.mrb[0].mxu0
  %v5590 = vadd.f32 0.0, %v5589
  %v5591 = vpop.f32.mrb[0].mxu0
  %5592 = vmatprep.mubr.bf16.mxu0 0
  %5593 = vmatmul.mubr.bf16.gmra.mrb[0].mxu0 %v5458
  %v5594 = vpop.f32.mrb[0].mxu0
  %v5595 = vadd.f32 0.0, %v5594
  %v5596 = vpop.f32.mrb[0].mxu0
  %v5597 = vpop.f32.mrb[0].mxu0
  %v5598 = vadd.f32 0.0, %v5597
  %v5599 = vpop.f32.mrb[0].mxu0
  %5600 = vmatprep.mubr.bf16.mxu0 0
  %5601 = vmatmul.mubr.bf16.gmra.mrb[0].mxu0 %v5461
  %v5602 = vpop.f32.mrb[0].mxu0
  %v5603 = vadd.f32 0.0, %v5602
  %v5604 = vpop.f32.mrb[0].mxu0
  %v5605 = vpop.f32.mrb[0].mxu0
  %v5606 = vadd.f32 0.0, %v5605
  %v5607 = vpop.f32.mrb[0].mxu0
  %5608 = vmatprep.mubr.bf16.mxu0 0
  %5609 = vmatmul.mubr.bf16.gmra.mrb[0].mxu0 %v5464
  %v5610 = vpop.f32.mrb[0].mxu0
  %v5611 = vadd.f32 0.0, %v5610
  %v5612 = vpop.f32.mrb[0].mxu0
  %v5613 = vpop.f32.mrb[0].mxu0
  %v5614 = vadd.f32 0.0, %v5613
  %v5615 = vpop.f32.mrb[0].mxu0
  %5616 = vmatprep.mubr.bf16.mxu0 0
  %5617 = vmatmul.mubr.bf16.gmra.mrb[0].mxu0 %v5467
  %v5618 = vpop.f32.mrb[0].mxu0
  %v5619 = vadd.f32 0.0, %v5618
  %v5620 = vpop.f32.mrb[0].mxu0
  %v5621 = vpop.f32.mrb[0].mxu0
  %v5622 = vadd.f32 0.0, %v5621
  %v5623 = vpop.f32.mrb[0].mxu0
  %5624 = vmatprep.mubr.bf16.mxu0 0
  %5625 = vmatmul.mubr.bf16.gmra.mrb[0].mxu0 %v5470
  %v5626 = vpop.f32.mrb[0].mxu0
  %v5627 = vadd.f32 0.0, %v5626
  %v5628 = vpop.f32.mrb[0].mxu0
  %v5629 = vpop.f32.mrb[0].mxu0
  %v5630 = vadd.f32 0.0, %v5629
  %v5631 = vpop.f32.mrb[0].mxu0
  %5632 = vdwg.mxu0
  %v5633 = vpack.c.bf16 %v5510, %v5507
  %v5634 = vpack.c.bf16 %v5518, %v5515
  %v5635 = vpack.c.bf16 %v5526, %v5523
  %v5636 = vpack.c.bf16 %v5534, %v5531
  %v5637 = vpack.c.bf16 %v5542, %v5539
  %v5638 = vpack.c.bf16 %v5550, %v5547
  %v5639 = vpack.c.bf16 %v5558, %v5555
  %v5640 = vpack.c.bf16 %v5566, %v5563
  %v5641 = vpack.c.bf16 %v5574, %v5571
  %v5642 = vpack.c.bf16 %v5582, %v5579
  %v5643 = vpack.c.bf16 %v5590, %v5587
  %v5644 = vpack.c.bf16 %v5598, %v5595
  %v5645 = vpack.c.bf16 %v5606, %v5603
  %v5646 = vpack.c.bf16 %v5614, %v5611
  %v5647 = vpack.c.bf16 %v5622, %v5619
  %v5648 = vpack.c.bf16 %v5630, %v5627
  %v5649 = vmul.bf16 %v5633, %v1242
  %v5650 = vmul.bf16 %v5634, %v1244
  %v5651 = vmul.bf16 %v5633, %v1246
  %v5652 = vmul.bf16 %v5634, %v1248
  %v5653 = vmul.bf16 %v5633, %v1250
  %v5654 = vmul.bf16 %v5634, %v1252
  %v5655 = vmul.bf16 %v5633, %v1254
  %v5656 = vmul.bf16 %v5634, %v1256
  %v5657 = vmul.bf16 %v5635, %v1242
  %v5658 = vmul.bf16 %v5636, %v1244
  %v5659 = vmul.bf16 %v5635, %v1246
  %v5660 = vmul.bf16 %v5636, %v1248
  %v5661 = vmul.bf16 %v5635, %v1250
  %v5662 = vmul.bf16 %v5636, %v1252
  %v5663 = vmul.bf16 %v5635, %v1254
  %v5664 = vmul.bf16 %v5636, %v1256
  %v5665 = vmul.bf16 %v5637, %v1242
  %v5666 = vmul.bf16 %v5638, %v1244
  %v5667 = vmul.bf16 %v5637, %v1246
  %v5668 = vmul.bf16 %v5638, %v1248
  %v5669 = vmul.bf16 %v5637, %v1250
  %v5670 = vmul.bf16 %v5638, %v1252
  %v5671 = vmul.bf16 %v5637, %v1254
  %v5672 = vmul.bf16 %v5638, %v1256
  %v5673 = vmul.bf16 %v5639, %v1242
  %v5674 = vmul.bf16 %v5640, %v1244
  %v5675 = vmul.bf16 %v5639, %v1246
  %v5676 = vmul.bf16 %v5640, %v1248
  %v5677 = vmul.bf16 %v5639, %v1250
  %v5678 = vmul.bf16 %v5640, %v1252
  %v5679 = vmul.bf16 %v5639, %v1254
  %v5680 = vmul.bf16 %v5640, %v1256
  %v5681 = vmul.bf16 %v5641, %v1242
  %v5682 = vmul.bf16 %v5642, %v1244
  %v5683 = vmul.bf16 %v5641, %v1246
  %v5684 = vmul.bf16 %v5642, %v1248
  %v5685 = vmul.bf16 %v5641, %v1250
  %v5686 = vmul.bf16 %v5642, %v1252
  %v5687 = vmul.bf16 %v5641, %v1254
  %v5688 = vmul.bf16 %v5642, %v1256
  %v5689 = vmul.bf16 %v5643, %v1242
  %v5690 = vmul.bf16 %v5644, %v1244
  %v5691 = vmul.bf16 %v5643, %v1246
  %v5692 = vmul.bf16 %v5644, %v1248
  %v5693 = vmul.bf16 %v5643, %v1250
  %v5694 = vmul.bf16 %v5644, %v1252
  %v5695 = vmul.bf16 %v5643, %v1254
  %v5696 = vmul.bf16 %v5644, %v1256
  %v5697 = vmul.bf16 %v5645, %v1242
  %v5698 = vmul.bf16 %v5646, %v1244
  %v5699 = vmul.bf16 %v5645, %v1246
  %v5700 = vmul.bf16 %v5646, %v1248
  %v5701 = vmul.bf16 %v5645, %v1250
  %v5702 = vmul.bf16 %v5646, %v1252
  %v5703 = vmul.bf16 %v5645, %v1254
  %v5704 = vmul.bf16 %v5646, %v1256
  %v5705 = vmul.bf16 %v5647, %v1242
  %v5706 = vmul.bf16 %v5648, %v1244
  %v5707 = vmul.bf16 %v5647, %v1246
  %v5708 = vmul.bf16 %v5648, %v1248
  %v5709 = vmul.bf16 %v5647, %v1250
  %v5710 = vmul.bf16 %v5648, %v1252
  %v5711 = vmul.bf16 %v5647, %v1254
  %v5712 = vmul.bf16 %v5648, %v1256
  %v5713 = vmul.bf16 %v5633, %v1330
  %v5714 = vmul.bf16 %v5634, %v1332
  %v5715 = vmul.bf16 %v5633, %v1334
  %v5716 = vmul.bf16 %v5634, %v1336
  %v5717 = vmul.bf16 %v5633, %v1338
  %v5718 = vmul.bf16 %v5634, %v1340
  %v5719 = vmul.bf16 %v5633, %v1342
  %v5720 = vmul.bf16 %v5634, %v1344
  %v5721 = vmul.bf16 %v5635, %v1330
  %v5722 = vmul.bf16 %v5636, %v1332
  %v5723 = vmul.bf16 %v5635, %v1334
  %v5724 = vmul.bf16 %v5636, %v1336
  %v5725 = vmul.bf16 %v5635, %v1338
  %v5726 = vmul.bf16 %v5636, %v1340
  %v5727 = vmul.bf16 %v5635, %v1342
  %v5728 = vmul.bf16 %v5636, %v1344
  %v5729 = vmul.bf16 %v5637, %v1330
  %v5730 = vmul.bf16 %v5638, %v1332
  %v5731 = vmul.bf16 %v5637, %v1334
  %v5732 = vmul.bf16 %v5638, %v1336
  %v5733 = vmul.bf16 %v5637, %v1338
  %v5734 = vmul.bf16 %v5638, %v1340
  %v5735 = vmul.bf16 %v5637, %v1342
  %v5736 = vmul.bf16 %v5638, %v1344
  %v5737 = vmul.bf16 %v5639, %v1330
  %v5738 = vmul.bf16 %v5640, %v1332
  %v5739 = vmul.bf16 %v5639, %v1334
  %v5740 = vmul.bf16 %v5640, %v1336
  %v5741 = vmul.bf16 %v5639, %v1338
  %v5742 = vmul.bf16 %v5640, %v1340
  %v5743 = vmul.bf16 %v5639, %v1342
  %v5744 = vmul.bf16 %v5640, %v1344
  %v5745 = vmul.bf16 %v5641, %v1330
  %v5746 = vmul.bf16 %v5642, %v1332
  %v5747 = vmul.bf16 %v5641, %v1334
  %v5748 = vmul.bf16 %v5642, %v1336
  %v5749 = vmul.bf16 %v5641, %v1338
  %v5750 = vmul.bf16 %v5642, %v1340
  %v5751 = vmul.bf16 %v5641, %v1342
  %v5752 = vmul.bf16 %v5642, %v1344
  %v5753 = vmul.bf16 %v5643, %v1330
  %v5754 = vmul.bf16 %v5644, %v1332
  %v5755 = vmul.bf16 %v5643, %v1334
  %v5756 = vmul.bf16 %v5644, %v1336
  %v5757 = vmul.bf16 %v5643, %v1338
  %v5758 = vmul.bf16 %v5644, %v1340
  %v5759 = vmul.bf16 %v5643, %v1342
  %v5760 = vmul.bf16 %v5644, %v1344
  %v5761 = vmul.bf16 %v5645, %v1330
  %v5762 = vmul.bf16 %v5646, %v1332
  %v5763 = vmul.bf16 %v5645, %v1334
  %v5764 = vmul.bf16 %v5646, %v1336
  %v5765 = vmul.bf16 %v5645, %v1338
  %v5766 = vmul.bf16 %v5646, %v1340
  %v5767 = vmul.bf16 %v5645, %v1342
  %v5768 = vmul.bf16 %v5646, %v1344
  %v5769 = vmul.bf16 %v5647, %v1330
  %v5770 = vmul.bf16 %v5648, %v1332
  %v5771 = vmul.bf16 %v5647, %v1334
  %v5772 = vmul.bf16 %v5648, %v1336
  %v5773 = vmul.bf16 %v5647, %v1338
  %v5774 = vmul.bf16 %v5648, %v1340
  %v5775 = vmul.bf16 %v5647, %v1342
  %v5776 = vmul.bf16 %v5648, %v1344
  %5785 = vrot.lane.b32.xlu0 %v5649, 96
  %v5786 = vpop.permute.xlu0 %5785
  %5787 = vrot.lane.b32.xlu0 %v5650, 96
  %v5788 = vpop.permute.xlu0 %5787
  %5789 = vrot.lane.b32.xlu0 %v5651, 96
  %v5790 = vpop.permute.xlu0 %5789
  %5791 = vrot.lane.b32.xlu0 %v5652, 96
  %v5792 = vpop.permute.xlu0 %5791
  %5793 = vrot.lane.b32.xlu0 %v5653, 96
  %v5794 = vpop.permute.xlu0 %5793
  %5795 = vrot.lane.b32.xlu0 %v5654, 96
  %v5796 = vpop.permute.xlu0 %5795
  %5797 = vrot.lane.b32.xlu0 %v5655, 96
  %v5798 = vpop.permute.xlu0 %5797
  %5799 = vrot.lane.b32.xlu0 %v5656, 96
  %v5800 = vpop.permute.xlu0 %5799
  %v5802 = vsel %vm454, %v5633, 0
  %v5805 = vsel %vm454, %v5634, 0
  %v5808 = vsel %vm454, %v5786, 0
  %v5811 = vsel %vm454, %v5788, 0
  %v5814 = vsel %vm454, %v5790, 0
  %v5817 = vsel %vm454, %v5792, 0
  %v5820 = vsel %vm454, %v5794, 0
  %v5823 = vsel %vm454, %v5796, 0
  %v5826 = vsel %vm454, %v5798, 0
  %v5829 = vsel %vm454, %v5800, 0
  %5831 = vmatprep.subr.bf16.mxu0 0
  %5832 = vmatpush1.bf16.xpose.msra.mxu0 %v5808
  %5833 = vmatprep.subr.bf16.mxu0 0
  %5834 = vmatpush1.bf16.xpose.msra.mxu0 %v5811
  %5835 = vmatprep.subr.bf16.mxu0 0
  %5836 = vmatpush1.bf16.xpose.msra.mxu0 %v5814
  %5837 = vmatprep.subr.bf16.mxu0 0
  %5838 = vmatpush1.bf16.xpose.msra.mxu0 %v5817
  %5839 = vmatprep.subr.bf16.mxu0 0
  %5840 = vmatpush1.bf16.xpose.msra.mxu0 %v5820
  %5841 = vmatprep.subr.bf16.mxu0 0
  %5842 = vmatpush1.bf16.xpose.msra.mxu0 %v5823
  %5843 = vmatprep.subr.bf16.mxu0 0
  %5844 = vmatpush1.bf16.xpose.msra.mxu0 %v5826
  %5845 = vmatprep.subr.bf16.mxu0 0
  %5846 = vmatpush1.bf16.xpose.msra.mxu0 %v5829
  %5847 = vmatprep.subr.bf16.mxu0 0
  %5848 = vmatpush1.bf16.xpose.msra.mxu0 0
  %5849 = vmatprep.subr.bf16.mxu0 0
  %5850 = vmatpush1.bf16.xpose.msra.mxu0 0
  %5851 = vmatprep.subr.bf16.mxu0 0
  %5852 = vmatpush1.bf16.xpose.msra.mxu0 0
  %5853 = vmatprep.subr.bf16.mxu0 0
  %5854 = vmatpush1.bf16.xpose.msra.mxu0 0
  %5855 = vmatprep.subr.bf16.mxu0 0
  %5856 = vmatpush1.bf16.xpose.msra.mxu0 0
  %5857 = vmatprep.subr.bf16.mxu0 0
  %5858 = vmatpush1.bf16.xpose.msra.mxu0 0
  %5859 = vmatprep.subr.bf16.mxu0 0
  %5860 = vmatpush1.bf16.xpose.msra.mxu0 0
  %5861 = vmatprep.subr.bf16.mxu0 0
  %5862 = vmatpush1.bf16.xpose.msra.mxu0 0
  %5863 = vmatprep.mubr.bf16.mxu0 0
  %5864 = vmatmul.mubr.bf16.gmra.mrb[0].mxu0 %v5802
  %v5865 = vpop.f32.mrb[0].mxu0
  %v5866 = vadd.f32 0.0, %v5865
  %v5867 = vpop.f32.mrb[0].mxu0
  %v5868 = vpop.f32.mrb[0].mxu0
  %v5869 = vadd.f32 0.0, %v5868
  %v5870 = vpop.f32.mrb[0].mxu0
  %5871 = vmatprep.mubr.bf16.mxu0 0
  %5872 = vmatmul.mubr.bf16.gmra.mrb[0].mxu0 %v5805
  %v5873 = vpop.f32.mrb[0].mxu0
  %v5874 = vadd.f32 0.0, %v5873
  %v5875 = vpop.f32.mrb[0].mxu0
  %v5876 = vpop.f32.mrb[0].mxu0
  %v5877 = vadd.f32 0.0, %v5876
  %v5878 = vpop.f32.mrb[0].mxu0
  %5879 = vdwg.mxu0
  %5888 = vrot.lane.b32.xlu0 %v5657, 96
  %v5889 = vpop.permute.xlu0 %5888
  %5890 = vrot.lane.b32.xlu0 %v5658, 96
  %v5891 = vpop.permute.xlu0 %5890
  %5892 = vrot.lane.b32.xlu0 %v5659, 96
  %v5893 = vpop.permute.xlu0 %5892
  %5894 = vrot.lane.b32.xlu0 %v5660, 96
  %v5895 = vpop.permute.xlu0 %5894
  %5896 = vrot.lane.b32.xlu0 %v5661, 96
  %v5897 = vpop.permute.xlu0 %5896
  %5898 = vrot.lane.b32.xlu0 %v5662, 96
  %v5899 = vpop.permute.xlu0 %5898
  %5900 = vrot.lane.b32.xlu0 %v5663, 96
  %v5901 = vpop.permute.xlu0 %5900
  %5902 = vrot.lane.b32.xlu0 %v5664, 96
  %v5903 = vpop.permute.xlu0 %5902
  %v5905 = vsel %vm454, %v5635, 0
  %v5908 = vsel %vm454, %v5636, 0
  %v5911 = vsel %vm454, %v5889, 0
  %v5914 = vsel %vm454, %v5891, 0
  %v5917 = vsel %vm454, %v5893, 0
  %v5920 = vsel %vm454, %v5895, 0
  %v5923 = vsel %vm454, %v5897, 0
  %v5926 = vsel %vm454, %v5899, 0
  %v5929 = vsel %vm454, %v5901, 0
  %v5932 = vsel %vm454, %v5903, 0
  %5934 = vmatprep.subr.bf16.mxu0 0
  %5935 = vmatpush1.bf16.xpose.msra.mxu0 %v5911
  %5936 = vmatprep.subr.bf16.mxu0 0
  %5937 = vmatpush1.bf16.xpose.msra.mxu0 %v5914
  %5938 = vmatprep.subr.bf16.mxu0 0
  %5939 = vmatpush1.bf16.xpose.msra.mxu0 %v5917
  %5940 = vmatprep.subr.bf16.mxu0 0
  %5941 = vmatpush1.bf16.xpose.msra.mxu0 %v5920
  %5942 = vmatprep.subr.bf16.mxu0 0
  %5943 = vmatpush1.bf16.xpose.msra.mxu0 %v5923
  %5944 = vmatprep.subr.bf16.mxu0 0
  %5945 = vmatpush1.bf16.xpose.msra.mxu0 %v5926
  %5946 = vmatprep.subr.bf16.mxu0 0
  %5947 = vmatpush1.bf16.xpose.msra.mxu0 %v5929
  %5948 = vmatprep.subr.bf16.mxu0 0
  %5949 = vmatpush1.bf16.xpose.msra.mxu0 %v5932
  %5950 = vmatprep.subr.bf16.mxu0 0
  %5951 = vmatpush1.bf16.xpose.msra.mxu0 0
  %5952 = vmatprep.subr.bf16.mxu0 0
  %5953 = vmatpush1.bf16.xpose.msra.mxu0 0
  %5954 = vmatprep.subr.bf16.mxu0 0
  %5955 = vmatpush1.bf16.xpose.msra.mxu0 0
  %5956 = vmatprep.subr.bf16.mxu0 0
  %5957 = vmatpush1.bf16.xpose.msra.mxu0 0
  %5958 = vmatprep.subr.bf16.mxu0 0
  %5959 = vmatpush1.bf16.xpose.msra.mxu0 0
  %5960 = vmatprep.subr.bf16.mxu0 0
  %5961 = vmatpush1.bf16.xpose.msra.mxu0 0
  %5962 = vmatprep.subr.bf16.mxu0 0
  %5963 = vmatpush1.bf16.xpose.msra.mxu0 0
  %5964 = vmatprep.subr.bf16.mxu0 0
  %5965 = vmatpush1.bf16.xpose.msra.mxu0 0
  %5966 = vmatprep.mubr.bf16.mxu0 0
  %5967 = vmatmul.mubr.bf16.gmra.mrb[0].mxu0 %v5905
  %v5968 = vpop.f32.mrb[0].mxu0
  %v5969 = vadd.f32 0.0, %v5968
  %v5970 = vpop.f32.mrb[0].mxu0
  %v5971 = vpop.f32.mrb[0].mxu0
  %v5972 = vadd.f32 0.0, %v5971
  %v5973 = vpop.f32.mrb[0].mxu0
  %5974 = vmatprep.mubr.bf16.mxu0 0
  %5975 = vmatmul.mubr.bf16.gmra.mrb[0].mxu0 %v5908
  %v5976 = vpop.f32.mrb[0].mxu0
  %v5977 = vadd.f32 0.0, %v5976
  %v5978 = vpop.f32.mrb[0].mxu0
  %v5979 = vpop.f32.mrb[0].mxu0
  %v5980 = vadd.f32 0.0, %v5979
  %v5981 = vpop.f32.mrb[0].mxu0
  %5982 = vdwg.mxu0
  %5991 = vrot.lane.b32.xlu0 %v5665, 96
  %v5992 = vpop.permute.xlu0 %5991
  %5993 = vrot.lane.b32.xlu0 %v5666, 96
  %v5994 = vpop.permute.xlu0 %5993
  %5995 = vrot.lane.b32.xlu0 %v5667, 96
  %v5996 = vpop.permute.xlu0 %5995
  %5997 = vrot.lane.b32.xlu0 %v5668, 96
  %v5998 = vpop.permute.xlu0 %5997
  %5999 = vrot.lane.b32.xlu0 %v5669, 96
  %v6000 = vpop.permute.xlu0 %5999
  %6001 = vrot.lane.b32.xlu0 %v5670, 96
  %v6002 = vpop.permute.xlu0 %6001
  %6003 = vrot.lane.b32.xlu0 %v5671, 96
  %v6004 = vpop.permute.xlu0 %6003
  %6005 = vrot.lane.b32.xlu0 %v5672, 96
  %v6006 = vpop.permute.xlu0 %6005
  %v6008 = vsel %vm454, %v5637, 0
  %v6011 = vsel %vm454, %v5638, 0
  %v6014 = vsel %vm454, %v5992, 0
  %v6017 = vsel %vm454, %v5994, 0
  %v6020 = vsel %vm454, %v5996, 0
  %v6023 = vsel %vm454, %v5998, 0
  %v6026 = vsel %vm454, %v6000, 0
  %v6029 = vsel %vm454, %v6002, 0
  %v6032 = vsel %vm454, %v6004, 0
  %v6035 = vsel %vm454, %v6006, 0
  %6037 = vmatprep.subr.bf16.mxu0 0
  %6038 = vmatpush1.bf16.xpose.msra.mxu0 %v6014
  %6039 = vmatprep.subr.bf16.mxu0 0
  %6040 = vmatpush1.bf16.xpose.msra.mxu0 %v6017
  %6041 = vmatprep.subr.bf16.mxu0 0
  %6042 = vmatpush1.bf16.xpose.msra.mxu0 %v6020
  %6043 = vmatprep.subr.bf16.mxu0 0
  %6044 = vmatpush1.bf16.xpose.msra.mxu0 %v6023
  %6045 = vmatprep.subr.bf16.mxu0 0
  %6046 = vmatpush1.bf16.xpose.msra.mxu0 %v6026
  %6047 = vmatprep.subr.bf16.mxu0 0
  %6048 = vmatpush1.bf16.xpose.msra.mxu0 %v6029
  %6049 = vmatprep.subr.bf16.mxu0 0
  %6050 = vmatpush1.bf16.xpose.msra.mxu0 %v6032
  %6051 = vmatprep.subr.bf16.mxu0 0
  %6052 = vmatpush1.bf16.xpose.msra.mxu0 %v6035
  %6053 = vmatprep.subr.bf16.mxu0 0
  %6054 = vmatpush1.bf16.xpose.msra.mxu0 0
  %6055 = vmatprep.subr.bf16.mxu0 0
  %6056 = vmatpush1.bf16.xpose.msra.mxu0 0
  %6057 = vmatprep.subr.bf16.mxu0 0
  %6058 = vmatpush1.bf16.xpose.msra.mxu0 0
  %6059 = vmatprep.subr.bf16.mxu0 0
  %6060 = vmatpush1.bf16.xpose.msra.mxu0 0
  %6061 = vmatprep.subr.bf16.mxu0 0
  %6062 = vmatpush1.bf16.xpose.msra.mxu0 0
  %6063 = vmatprep.subr.bf16.mxu0 0
  %6064 = vmatpush1.bf16.xpose.msra.mxu0 0
  %6065 = vmatprep.subr.bf16.mxu0 0
  %6066 = vmatpush1.bf16.xpose.msra.mxu0 0
  %6067 = vmatprep.subr.bf16.mxu0 0
  %6068 = vmatpush1.bf16.xpose.msra.mxu0 0
  %6069 = vmatprep.mubr.bf16.mxu0 0
  %6070 = vmatmul.mubr.bf16.gmra.mrb[0].mxu0 %v6008
  %v6071 = vpop.f32.mrb[0].mxu0
  %v6072 = vadd.f32 0.0, %v6071
  %v6073 = vpop.f32.mrb[0].mxu0
  %v6074 = vpop.f32.mrb[0].mxu0
  %v6075 = vadd.f32 0.0, %v6074
  %v6076 = vpop.f32.mrb[0].mxu0
  %6077 = vmatprep.mubr.bf16.mxu0 0
  %6078 = vmatmul.mubr.bf16.gmra.mrb[0].mxu0 %v6011
  %v6079 = vpop.f32.mrb[0].mxu0
  %v6080 = vadd.f32 0.0, %v6079
  %v6081 = vpop.f32.mrb[0].mxu0
  %v6082 = vpop.f32.mrb[0].mxu0
  %v6083 = vadd.f32 0.0, %v6082
  %v6084 = vpop.f32.mrb[0].mxu0
  %6085 = vdwg.mxu0
  %6094 = vrot.lane.b32.xlu0 %v5673, 96
  %v6095 = vpop.permute.xlu0 %6094
  %6096 = vrot.lane.b32.xlu0 %v5674, 96
  %v6097 = vpop.permute.xlu0 %6096
  %6098 = vrot.lane.b32.xlu0 %v5675, 96
  %v6099 = vpop.permute.xlu0 %6098
  %6100 = vrot.lane.b32.xlu0 %v5676, 96
  %v6101 = vpop.permute.xlu0 %6100
  %6102 = vrot.lane.b32.xlu0 %v5677, 96
  %v6103 = vpop.permute.xlu0 %6102
  %6104 = vrot.lane.b32.xlu0 %v5678, 96
  %v6105 = vpop.permute.xlu0 %6104
  %6106 = vrot.lane.b32.xlu0 %v5679, 96
  %v6107 = vpop.permute.xlu0 %6106
  %6108 = vrot.lane.b32.xlu0 %v5680, 96
  %v6109 = vpop.permute.xlu0 %6108
  %v6111 = vsel %vm454, %v5639, 0
  %v6114 = vsel %vm454, %v5640, 0
  %v6117 = vsel %vm454, %v6095, 0
  %v6120 = vsel %vm454, %v6097, 0
  %v6123 = vsel %vm454, %v6099, 0
  %v6126 = vsel %vm454, %v6101, 0
  %v6129 = vsel %vm454, %v6103, 0
  %v6132 = vsel %vm454, %v6105, 0
  %v6135 = vsel %vm454, %v6107, 0
  %v6138 = vsel %vm454, %v6109, 0
  %6140 = vmatprep.subr.bf16.mxu0 0
  %6141 = vmatpush1.bf16.xpose.msra.mxu0 %v6117
  %6142 = vmatprep.subr.bf16.mxu0 0
  %6143 = vmatpush1.bf16.xpose.msra.mxu0 %v6120
  %6144 = vmatprep.subr.bf16.mxu0 0
  %6145 = vmatpush1.bf16.xpose.msra.mxu0 %v6123
  %6146 = vmatprep.subr.bf16.mxu0 0
  %6147 = vmatpush1.bf16.xpose.msra.mxu0 %v6126
  %6148 = vmatprep.subr.bf16.mxu0 0
  %6149 = vmatpush1.bf16.xpose.msra.mxu0 %v6129
  %6150 = vmatprep.subr.bf16.mxu0 0
  %6151 = vmatpush1.bf16.xpose.msra.mxu0 %v6132
  %6152 = vmatprep.subr.bf16.mxu0 0
  %6153 = vmatpush1.bf16.xpose.msra.mxu0 %v6135
  %6154 = vmatprep.subr.bf16.mxu0 0
  %6155 = vmatpush1.bf16.xpose.msra.mxu0 %v6138
  %6156 = vmatprep.subr.bf16.mxu0 0
  %6157 = vmatpush1.bf16.xpose.msra.mxu0 0
  %6158 = vmatprep.subr.bf16.mxu0 0
  %6159 = vmatpush1.bf16.xpose.msra.mxu0 0
  %6160 = vmatprep.subr.bf16.mxu0 0
  %6161 = vmatpush1.bf16.xpose.msra.mxu0 0
  %6162 = vmatprep.subr.bf16.mxu0 0
  %6163 = vmatpush1.bf16.xpose.msra.mxu0 0
  %6164 = vmatprep.subr.bf16.mxu0 0
  %6165 = vmatpush1.bf16.xpose.msra.mxu0 0
  %6166 = vmatprep.subr.bf16.mxu0 0
  %6167 = vmatpush1.bf16.xpose.msra.mxu0 0
  %6168 = vmatprep.subr.bf16.mxu0 0
  %6169 = vmatpush1.bf16.xpose.msra.mxu0 0
  %6170 = vmatprep.subr.bf16.mxu0 0
  %6171 = vmatpush1.bf16.xpose.msra.mxu0 0
  %6172 = vmatprep.mubr.bf16.mxu0 0
  %6173 = vmatmul.mubr.bf16.gmra.mrb[0].mxu0 %v6111
  %v6174 = vpop.f32.mrb[0].mxu0
  %v6175 = vadd.f32 0.0, %v6174
  %v6176 = vpop.f32.mrb[0].mxu0
  %v6177 = vpop.f32.mrb[0].mxu0
  %v6178 = vadd.f32 0.0, %v6177
  %v6179 = vpop.f32.mrb[0].mxu0
  %6180 = vmatprep.mubr.bf16.mxu0 0
  %6181 = vmatmul.mubr.bf16.gmra.mrb[0].mxu0 %v6114
  %v6182 = vpop.f32.mrb[0].mxu0
  %v6183 = vadd.f32 0.0, %v6182
  %v6184 = vpop.f32.mrb[0].mxu0
  %v6185 = vpop.f32.mrb[0].mxu0
  %v6186 = vadd.f32 0.0, %v6185
  %v6187 = vpop.f32.mrb[0].mxu0
  %6188 = vdwg.mxu0
  %6197 = vrot.lane.b32.xlu0 %v5681, 96
  %v6198 = vpop.permute.xlu0 %6197
  %6199 = vrot.lane.b32.xlu0 %v5682, 96
  %v6200 = vpop.permute.xlu0 %6199
  %6201 = vrot.lane.b32.xlu0 %v5683, 96
  %v6202 = vpop.permute.xlu0 %6201
  %6203 = vrot.lane.b32.xlu0 %v5684, 96
  %v6204 = vpop.permute.xlu0 %6203
  %6205 = vrot.lane.b32.xlu0 %v5685, 96
  %v6206 = vpop.permute.xlu0 %6205
  %6207 = vrot.lane.b32.xlu0 %v5686, 96
  %v6208 = vpop.permute.xlu0 %6207
  %6209 = vrot.lane.b32.xlu0 %v5687, 96
  %v6210 = vpop.permute.xlu0 %6209
  %6211 = vrot.lane.b32.xlu0 %v5688, 96
  %v6212 = vpop.permute.xlu0 %6211
  %v6214 = vsel %vm454, %v5641, 0
  %v6217 = vsel %vm454, %v5642, 0
  %v6220 = vsel %vm454, %v6198, 0
  %v6223 = vsel %vm454, %v6200, 0
  %v6226 = vsel %vm454, %v6202, 0
  %v6229 = vsel %vm454, %v6204, 0
  %v6232 = vsel %vm454, %v6206, 0
  %v6235 = vsel %vm454, %v6208, 0
  %v6238 = vsel %vm454, %v6210, 0
  %v6241 = vsel %vm454, %v6212, 0
  %6243 = vmatprep.subr.bf16.mxu0 0
  %6244 = vmatpush1.bf16.xpose.msra.mxu0 %v6220
  %6245 = vmatprep.subr.bf16.mxu0 0
  %6246 = vmatpush1.bf16.xpose.msra.mxu0 %v6223
  %6247 = vmatprep.subr.bf16.mxu0 0
  %6248 = vmatpush1.bf16.xpose.msra.mxu0 %v6226
  %6249 = vmatprep.subr.bf16.mxu0 0
  %6250 = vmatpush1.bf16.xpose.msra.mxu0 %v6229
  %6251 = vmatprep.subr.bf16.mxu0 0
  %6252 = vmatpush1.bf16.xpose.msra.mxu0 %v6232
  %6253 = vmatprep.subr.bf16.mxu0 0
  %6254 = vmatpush1.bf16.xpose.msra.mxu0 %v6235
  %6255 = vmatprep.subr.bf16.mxu0 0
  %6256 = vmatpush1.bf16.xpose.msra.mxu0 %v6238
  %6257 = vmatprep.subr.bf16.mxu0 0
  %6258 = vmatpush1.bf16.xpose.msra.mxu0 %v6241
  %6259 = vmatprep.subr.bf16.mxu0 0
  %6260 = vmatpush1.bf16.xpose.msra.mxu0 0
  %6261 = vmatprep.subr.bf16.mxu0 0
  %6262 = vmatpush1.bf16.xpose.msra.mxu0 0
  %6263 = vmatprep.subr.bf16.mxu0 0
  %6264 = vmatpush1.bf16.xpose.msra.mxu0 0
  %6265 = vmatprep.subr.bf16.mxu0 0
  %6266 = vmatpush1.bf16.xpose.msra.mxu0 0
  %6267 = vmatprep.subr.bf16.mxu0 0
  %6268 = vmatpush1.bf16.xpose.msra.mxu0 0
  %6269 = vmatprep.subr.bf16.mxu0 0
  %6270 = vmatpush1.bf16.xpose.msra.mxu0 0
  %6271 = vmatprep.subr.bf16.mxu0 0
  %6272 = vmatpush1.bf16.xpose.msra.mxu0 0
  %6273 = vmatprep.subr.bf16.mxu0 0
  %6274 = vmatpush1.bf16.xpose.msra.mxu0 0
  %6275 = vmatprep.mubr.bf16.mxu0 0
  %6276 = vmatmul.mubr.bf16.gmra.mrb[0].mxu0 %v6214
  %v6277 = vpop.f32.mrb[0].mxu0
  %v6278 = vadd.f32 0.0, %v6277
  %v6279 = vpop.f32.mrb[0].mxu0
  %v6280 = vpop.f32.mrb[0].mxu0
  %v6281 = vadd.f32 0.0, %v6280
  %v6282 = vpop.f32.mrb[0].mxu0
  %6283 = vmatprep.mubr.bf16.mxu0 0
  %6284 = vmatmul.mubr.bf16.gmra.mrb[0].mxu0 %v6217
  %v6285 = vpop.f32.mrb[0].mxu0
  %v6286 = vadd.f32 0.0, %v6285
  %v6287 = vpop.f32.mrb[0].mxu0
  %v6288 = vpop.f32.mrb[0].mxu0
  %v6289 = vadd.f32 0.0, %v6288
  %v6290 = vpop.f32.mrb[0].mxu0
  %6291 = vdwg.mxu0
  %6300 = vrot.lane.b32.xlu0 %v5689, 96
  %v6301 = vpop.permute.xlu0 %6300
  %6302 = vrot.lane.b32.xlu0 %v5690, 96
  %v6303 = vpop.permute.xlu0 %6302
  %6304 = vrot.lane.b32.xlu0 %v5691, 96
  %v6305 = vpop.permute.xlu0 %6304
  %6306 = vrot.lane.b32.xlu0 %v5692, 96
  %v6307 = vpop.permute.xlu0 %6306
  %6308 = vrot.lane.b32.xlu0 %v5693, 96
  %v6309 = vpop.permute.xlu0 %6308
  %6310 = vrot.lane.b32.xlu0 %v5694, 96
  %v6311 = vpop.permute.xlu0 %6310
  %6312 = vrot.lane.b32.xlu0 %v5695, 96
  %v6313 = vpop.permute.xlu0 %6312
  %6314 = vrot.lane.b32.xlu0 %v5696, 96
  %v6315 = vpop.permute.xlu0 %6314
  %v6317 = vsel %vm454, %v5643, 0
  %v6320 = vsel %vm454, %v5644, 0
  %v6323 = vsel %vm454, %v6301, 0
  %v6326 = vsel %vm454, %v6303, 0
  %v6329 = vsel %vm454, %v6305, 0
  %v6332 = vsel %vm454, %v6307, 0
  %v6335 = vsel %vm454, %v6309, 0
  %v6338 = vsel %vm454, %v6311, 0
  %v6341 = vsel %vm454, %v6313, 0
  %v6344 = vsel %vm454, %v6315, 0
  %6346 = vmatprep.subr.bf16.mxu0 0
  %6347 = vmatpush1.bf16.xpose.msra.mxu0 %v6323
  %6348 = vmatprep.subr.bf16.mxu0 0
  %6349 = vmatpush1.bf16.xpose.msra.mxu0 %v6326
  %6350 = vmatprep.subr.bf16.mxu0 0
  %6351 = vmatpush1.bf16.xpose.msra.mxu0 %v6329
  %6352 = vmatprep.subr.bf16.mxu0 0
  %6353 = vmatpush1.bf16.xpose.msra.mxu0 %v6332
  %6354 = vmatprep.subr.bf16.mxu0 0
  %6355 = vmatpush1.bf16.xpose.msra.mxu0 %v6335
  %6356 = vmatprep.subr.bf16.mxu0 0
  %6357 = vmatpush1.bf16.xpose.msra.mxu0 %v6338
  %6358 = vmatprep.subr.bf16.mxu0 0
  %6359 = vmatpush1.bf16.xpose.msra.mxu0 %v6341
  %6360 = vmatprep.subr.bf16.mxu0 0
  %6361 = vmatpush1.bf16.xpose.msra.mxu0 %v6344
  %6362 = vmatprep.subr.bf16.mxu0 0
  %6363 = vmatpush1.bf16.xpose.msra.mxu0 0
  %6364 = vmatprep.subr.bf16.mxu0 0
  %6365 = vmatpush1.bf16.xpose.msra.mxu0 0
  %6366 = vmatprep.subr.bf16.mxu0 0
  %6367 = vmatpush1.bf16.xpose.msra.mxu0 0
  %6368 = vmatprep.subr.bf16.mxu0 0
  %6369 = vmatpush1.bf16.xpose.msra.mxu0 0
  %6370 = vmatprep.subr.bf16.mxu0 0
  %6371 = vmatpush1.bf16.xpose.msra.mxu0 0
  %6372 = vmatprep.subr.bf16.mxu0 0
  %6373 = vmatpush1.bf16.xpose.msra.mxu0 0
  %6374 = vmatprep.subr.bf16.mxu0 0
  %6375 = vmatpush1.bf16.xpose.msra.mxu0 0
  %6376 = vmatprep.subr.bf16.mxu0 0
  %6377 = vmatpush1.bf16.xpose.msra.mxu0 0
  %6378 = vmatprep.mubr.bf16.mxu0 0
  %6379 = vmatmul.mubr.bf16.gmra.mrb[0].mxu0 %v6317
  %v6380 = vpop.f32.mrb[0].mxu0
  %v6381 = vadd.f32 0.0, %v6380
  %v6382 = vpop.f32.mrb[0].mxu0
  %v6383 = vpop.f32.mrb[0].mxu0
  %v6384 = vadd.f32 0.0, %v6383
  %v6385 = vpop.f32.mrb[0].mxu0
  %6386 = vmatprep.mubr.bf16.mxu0 0
  %6387 = vmatmul.mubr.bf16.gmra.mrb[0].mxu0 %v6320
  %v6388 = vpop.f32.mrb[0].mxu0
  %v6389 = vadd.f32 0.0, %v6388
  %v6390 = vpop.f32.mrb[0].mxu0
  %v6391 = vpop.f32.mrb[0].mxu0
  %v6392 = vadd.f32 0.0, %v6391
  %v6393 = vpop.f32.mrb[0].mxu0
  %6394 = vdwg.mxu0
  %6403 = vrot.lane.b32.xlu0 %v5697, 96
  %v6404 = vpop.permute.xlu0 %6403
  %6405 = vrot.lane.b32.xlu0 %v5698, 96
  %v6406 = vpop.permute.xlu0 %6405
  %6407 = vrot.lane.b32.xlu0 %v5699, 96
  %v6408 = vpop.permute.xlu0 %6407
  %6409 = vrot.lane.b32.xlu0 %v5700, 96
  %v6410 = vpop.permute.xlu0 %6409
  %6411 = vrot.lane.b32.xlu0 %v5701, 96
  %v6412 = vpop.permute.xlu0 %6411
  %6413 = vrot.lane.b32.xlu0 %v5702, 96
  %v6414 = vpop.permute.xlu0 %6413
  %6415 = vrot.lane.b32.xlu0 %v5703, 96
  %v6416 = vpop.permute.xlu0 %6415
  %6417 = vrot.lane.b32.xlu0 %v5704, 96
  %v6418 = vpop.permute.xlu0 %6417
  %v6420 = vsel %vm454, %v5645, 0
  %v6423 = vsel %vm454, %v5646, 0
  %v6426 = vsel %vm454, %v6404, 0
  %v6429 = vsel %vm454, %v6406, 0
  %v6432 = vsel %vm454, %v6408, 0
  %v6435 = vsel %vm454, %v6410, 0
  %v6438 = vsel %vm454, %v6412, 0
  %v6441 = vsel %vm454, %v6414, 0
  %v6444 = vsel %vm454, %v6416, 0
  %v6447 = vsel %vm454, %v6418, 0
  %6449 = vmatprep.subr.bf16.mxu0 0
  %6450 = vmatpush1.bf16.xpose.msra.mxu0 %v6426
  %6451 = vmatprep.subr.bf16.mxu0 0
  %6452 = vmatpush1.bf16.xpose.msra.mxu0 %v6429
  %6453 = vmatprep.subr.bf16.mxu0 0
  %6454 = vmatpush1.bf16.xpose.msra.mxu0 %v6432
  %6455 = vmatprep.subr.bf16.mxu0 0
  %6456 = vmatpush1.bf16.xpose.msra.mxu0 %v6435
  %6457 = vmatprep.subr.bf16.mxu0 0
  %6458 = vmatpush1.bf16.xpose.msra.mxu0 %v6438
  %6459 = vmatprep.subr.bf16.mxu0 0
  %6460 = vmatpush1.bf16.xpose.msra.mxu0 %v6441
  %6461 = vmatprep.subr.bf16.mxu0 0
  %6462 = vmatpush1.bf16.xpose.msra.mxu0 %v6444
  %6463 = vmatprep.subr.bf16.mxu0 0
  %6464 = vmatpush1.bf16.xpose.msra.mxu0 %v6447
  %6465 = vmatprep.subr.bf16.mxu0 0
  %6466 = vmatpush1.bf16.xpose.msra.mxu0 0
  %6467 = vmatprep.subr.bf16.mxu0 0
  %6468 = vmatpush1.bf16.xpose.msra.mxu0 0
  %6469 = vmatprep.subr.bf16.mxu0 0
  %6470 = vmatpush1.bf16.xpose.msra.mxu0 0
  %6471 = vmatprep.subr.bf16.mxu0 0
  %6472 = vmatpush1.bf16.xpose.msra.mxu0 0
  %6473 = vmatprep.subr.bf16.mxu0 0
  %6474 = vmatpush1.bf16.xpose.msra.mxu0 0
  %6475 = vmatprep.subr.bf16.mxu0 0
  %6476 = vmatpush1.bf16.xpose.msra.mxu0 0
  %6477 = vmatprep.subr.bf16.mxu0 0
  %6478 = vmatpush1.bf16.xpose.msra.mxu0 0
  %6479 = vmatprep.subr.bf16.mxu0 0
  %6480 = vmatpush1.bf16.xpose.msra.mxu0 0
  %6481 = vmatprep.mubr.bf16.mxu0 0
  %6482 = vmatmul.mubr.bf16.gmra.mrb[0].mxu0 %v6420
  %v6483 = vpop.f32.mrb[0].mxu0
  %v6484 = vadd.f32 0.0, %v6483
  %v6485 = vpop.f32.mrb[0].mxu0
  %v6486 = vpop.f32.mrb[0].mxu0
  %v6487 = vadd.f32 0.0, %v6486
  %v6488 = vpop.f32.mrb[0].mxu0
  %6489 = vmatprep.mubr.bf16.mxu0 0
  %6490 = vmatmul.mubr.bf16.gmra.mrb[0].mxu0 %v6423
  %v6491 = vpop.f32.mrb[0].mxu0
  %v6492 = vadd.f32 0.0, %v6491
  %v6493 = vpop.f32.mrb[0].mxu0
  %v6494 = vpop.f32.mrb[0].mxu0
  %v6495 = vadd.f32 0.0, %v6494
  %v6496 = vpop.f32.mrb[0].mxu0
  %6497 = vdwg.mxu0
  %6506 = vrot.lane.b32.xlu0 %v5705, 96
  %v6507 = vpop.permute.xlu0 %6506
  %6508 = vrot.lane.b32.xlu0 %v5706, 96
  %v6509 = vpop.permute.xlu0 %6508
  %6510 = vrot.lane.b32.xlu0 %v5707, 96
  %v6511 = vpop.permute.xlu0 %6510
  %6512 = vrot.lane.b32.xlu0 %v5708, 96
  %v6513 = vpop.permute.xlu0 %6512
  %6514 = vrot.lane.b32.xlu0 %v5709, 96
  %v6515 = vpop.permute.xlu0 %6514
  %6516 = vrot.lane.b32.xlu0 %v5710, 96
  %v6517 = vpop.permute.xlu0 %6516
  %6518 = vrot.lane.b32.xlu0 %v5711, 96
  %v6519 = vpop.permute.xlu0 %6518
  %6520 = vrot.lane.b32.xlu0 %v5712, 96
  %v6521 = vpop.permute.xlu0 %6520
  %v6523 = vsel %vm454, %v5647, 0
  %v6526 = vsel %vm454, %v5648, 0
  %v6529 = vsel %vm454, %v6507, 0
  %v6532 = vsel %vm454, %v6509, 0
  %v6535 = vsel %vm454, %v6511, 0
  %v6538 = vsel %vm454, %v6513, 0
  %v6541 = vsel %vm454, %v6515, 0
  %v6544 = vsel %vm454, %v6517, 0
  %v6547 = vsel %vm454, %v6519, 0
  %v6550 = vsel %vm454, %v6521, 0
  %6552 = vmatprep.subr.bf16.mxu0 0
  %6553 = vmatpush1.bf16.xpose.msra.mxu0 %v6529
  %6554 = vmatprep.subr.bf16.mxu0 0
  %6555 = vmatpush1.bf16.xpose.msra.mxu0 %v6532
  %6556 = vmatprep.subr.bf16.mxu0 0
  %6557 = vmatpush1.bf16.xpose.msra.mxu0 %v6535
  %6558 = vmatprep.subr.bf16.mxu0 0
  %6559 = vmatpush1.bf16.xpose.msra.mxu0 %v6538
  %6560 = vmatprep.subr.bf16.mxu0 0
  %6561 = vmatpush1.bf16.xpose.msra.mxu0 %v6541
  %6562 = vmatprep.subr.bf16.mxu0 0
  %6563 = vmatpush1.bf16.xpose.msra.mxu0 %v6544
  %6564 = vmatprep.subr.bf16.mxu0 0
  %6565 = vmatpush1.bf16.xpose.msra.mxu0 %v6547
  %6566 = vmatprep.subr.bf16.mxu0 0
  %6567 = vmatpush1.bf16.xpose.msra.mxu0 %v6550
  %6568 = vmatprep.subr.bf16.mxu0 0
  %6569 = vmatpush1.bf16.xpose.msra.mxu0 0
  %6570 = vmatprep.subr.bf16.mxu0 0
  %6571 = vmatpush1.bf16.xpose.msra.mxu0 0
  %6572 = vmatprep.subr.bf16.mxu0 0
  %6573 = vmatpush1.bf16.xpose.msra.mxu0 0
  %6574 = vmatprep.subr.bf16.mxu0 0
  %6575 = vmatpush1.bf16.xpose.msra.mxu0 0
  %6576 = vmatprep.subr.bf16.mxu0 0
  %6577 = vmatpush1.bf16.xpose.msra.mxu0 0
  %6578 = vmatprep.subr.bf16.mxu0 0
  %6579 = vmatpush1.bf16.xpose.msra.mxu0 0
  %6580 = vmatprep.subr.bf16.mxu0 0
  %6581 = vmatpush1.bf16.xpose.msra.mxu0 0
  %6582 = vmatprep.subr.bf16.mxu0 0
  %6583 = vmatpush1.bf16.xpose.msra.mxu0 0
  %6584 = vmatprep.mubr.bf16.mxu0 0
  %6585 = vmatmul.mubr.bf16.gmra.mrb[0].mxu0 %v6523
  %v6586 = vpop.f32.mrb[0].mxu0
  %v6587 = vadd.f32 0.0, %v6586
  %v6588 = vpop.f32.mrb[0].mxu0
  %v6589 = vpop.f32.mrb[0].mxu0
  %v6590 = vadd.f32 0.0, %v6589
  %v6591 = vpop.f32.mrb[0].mxu0
  %6592 = vmatprep.mubr.bf16.mxu0 0
  %6593 = vmatmul.mubr.bf16.gmra.mrb[0].mxu0 %v6526
  %v6594 = vpop.f32.mrb[0].mxu0
  %v6595 = vadd.f32 0.0, %v6594
  %v6596 = vpop.f32.mrb[0].mxu0
  %v6597 = vpop.f32.mrb[0].mxu0
  %v6598 = vadd.f32 0.0, %v6597
  %v6599 = vpop.f32.mrb[0].mxu0
  %6600 = vdwg.mxu0
  %v6601 = vmul.f32 %v5866, 0.35355338
  %v6602 = vmul.f32 %v5869, 0.35355338
  %v6603 = vmul.f32 %v5874, 0.35355338
  %v6604 = vmul.f32 %v5877, 0.35355338
  %v6605 = vmul.f32 %v5969, 0.35355338
  %v6606 = vmul.f32 %v5972, 0.35355338
  %v6607 = vmul.f32 %v5977, 0.35355338
  %v6608 = vmul.f32 %v5980, 0.35355338
  %v6609 = vmul.f32 %v6072, 0.35355338
  %v6610 = vmul.f32 %v6075, 0.35355338
  %v6611 = vmul.f32 %v6080, 0.35355338
  %v6612 = vmul.f32 %v6083, 0.35355338
  %v6613 = vmul.f32 %v6175, 0.35355338
  %v6614 = vmul.f32 %v6178, 0.35355338
  %v6615 = vmul.f32 %v6183, 0.35355338
  %v6616 = vmul.f32 %v6186, 0.35355338
  %v6617 = vmul.f32 %v6278, 0.35355338
  %v6618 = vmul.f32 %v6281, 0.35355338
  %v6619 = vmul.f32 %v6286, 0.35355338
  %v6620 = vmul.f32 %v6289, 0.35355338
  %v6621 = vmul.f32 %v6381, 0.35355338
  %v6622 = vmul.f32 %v6384, 0.35355338
  %v6623 = vmul.f32 %v6389, 0.35355338
  %v6624 = vmul.f32 %v6392, 0.35355338
  %v6625 = vmul.f32 %v6484, 0.35355338
  %v6626 = vmul.f32 %v6487, 0.35355338
  %v6627 = vmul.f32 %v6492, 0.35355338
  %v6628 = vmul.f32 %v6495, 0.35355338
  %v6629 = vmul.f32 %v6587, 0.35355338
  %v6630 = vmul.f32 %v6590, 0.35355338
  %v6631 = vmul.f32 %v6595, 0.35355338
  %v6632 = vmul.f32 %v6598, 0.35355338
  %v6633 = vadd.f32 %v6601, %v2276
  %v6634 = vadd.f32 %v6602, %v2276
  %v6635 = vadd.f32 %v6603, %v2276
  %v6636 = vadd.f32 %v6604, %v2276
  %v6637 = vadd.f32 %v6605, %v2276
  %v6638 = vadd.f32 %v6606, %v2276
  %v6639 = vadd.f32 %v6607, %v2276
  %v6640 = vadd.f32 %v6608, %v2276
  %v6641 = vadd.f32 %v6609, %v2276
  %v6642 = vadd.f32 %v6610, %v2276
  %v6643 = vadd.f32 %v6611, %v2276
  %v6644 = vadd.f32 %v6612, %v2276
  %v6645 = vadd.f32 %v6613, %v2276
  %v6646 = vadd.f32 %v6614, %v2276
  %v6647 = vadd.f32 %v6615, %v2276
  %v6648 = vadd.f32 %v6616, %v2276
  %v6649 = vadd.f32 %v6617, %v2276
  %v6650 = vadd.f32 %v6618, %v2276
  %v6651 = vadd.f32 %v6619, %v2276
  %v6652 = vadd.f32 %v6620, %v2276
  %v6653 = vadd.f32 %v6621, %v2276
  %v6654 = vadd.f32 %v6622, %v2276
  %v6655 = vadd.f32 %v6623, %v2276
  %v6656 = vadd.f32 %v6624, %v2276
  %v6657 = vadd.f32 %v6625, %v2276
  %v6658 = vadd.f32 %v6626, %v2276
  %v6659 = vadd.f32 %v6627, %v2276
  %v6660 = vadd.f32 %v6628, %v2276
  %v6661 = vadd.f32 %v6629, %v2276
  %v6662 = vadd.f32 %v6630, %v2276
  %v6663 = vadd.f32 %v6631, %v2276
  %v6664 = vadd.f32 %v6632, %v2276
  %6665 = vmax.xlane.f32.xlu0 %v6633
  %v6666 = vpop.xlane.xlu0 %6665
  %6667 = vmax.xlane.f32.xlu0 %v6634
  %v6668 = vpop.xlane.xlu0 %6667
  %6669 = vmax.xlane.f32.xlu0 %v6635
  %v6670 = vpop.xlane.xlu0 %6669
  %6671 = vmax.xlane.f32.xlu0 %v6636
  %v6672 = vpop.xlane.xlu0 %6671
  %6673 = vmax.xlane.f32.xlu0 %v6637
  %v6674 = vpop.xlane.xlu0 %6673
  %6675 = vmax.xlane.f32.xlu0 %v6638
  %v6676 = vpop.xlane.xlu0 %6675
  %6677 = vmax.xlane.f32.xlu0 %v6639
  %v6678 = vpop.xlane.xlu0 %6677
  %6679 = vmax.xlane.f32.xlu0 %v6640
  %v6680 = vpop.xlane.xlu0 %6679
  %6681 = vmax.xlane.f32.xlu0 %v6641
  %v6682 = vpop.xlane.xlu0 %6681
  %6683 = vmax.xlane.f32.xlu0 %v6642
  %v6684 = vpop.xlane.xlu0 %6683
  %6685 = vmax.xlane.f32.xlu0 %v6643
  %v6686 = vpop.xlane.xlu0 %6685
  %6687 = vmax.xlane.f32.xlu0 %v6644
  %v6688 = vpop.xlane.xlu0 %6687
  %6689 = vmax.xlane.f32.xlu0 %v6645
  %v6690 = vpop.xlane.xlu0 %6689
  %6691 = vmax.xlane.f32.xlu0 %v6646
  %v6692 = vpop.xlane.xlu0 %6691
  %6693 = vmax.xlane.f32.xlu0 %v6647
  %v6694 = vpop.xlane.xlu0 %6693
  %6695 = vmax.xlane.f32.xlu0 %v6648
  %v6696 = vpop.xlane.xlu0 %6695
  %6697 = vmax.xlane.f32.xlu0 %v6649
  %v6698 = vpop.xlane.xlu0 %6697
  %6699 = vmax.xlane.f32.xlu0 %v6650
  %v6700 = vpop.xlane.xlu0 %6699
  %6701 = vmax.xlane.f32.xlu0 %v6651
  %v6702 = vpop.xlane.xlu0 %6701
  %6703 = vmax.xlane.f32.xlu0 %v6652
  %v6704 = vpop.xlane.xlu0 %6703
  %6705 = vmax.xlane.f32.xlu0 %v6653
  %v6706 = vpop.xlane.xlu0 %6705
  %6707 = vmax.xlane.f32.xlu0 %v6654
  %v6708 = vpop.xlane.xlu0 %6707
  %6709 = vmax.xlane.f32.xlu0 %v6655
  %v6710 = vpop.xlane.xlu0 %6709
  %6711 = vmax.xlane.f32.xlu0 %v6656
  %v6712 = vpop.xlane.xlu0 %6711
  %6713 = vmax.xlane.f32.xlu0 %v6657
  %v6714 = vpop.xlane.xlu0 %6713
  %6715 = vmax.xlane.f32.xlu0 %v6658
  %v6716 = vpop.xlane.xlu0 %6715
  %6717 = vmax.xlane.f32.xlu0 %v6659
  %v6718 = vpop.xlane.xlu0 %6717
  %6719 = vmax.xlane.f32.xlu0 %v6660
  %v6720 = vpop.xlane.xlu0 %6719
  %6721 = vmax.xlane.f32.xlu0 %v6661
  %v6722 = vpop.xlane.xlu0 %6721
  %6723 = vmax.xlane.f32.xlu0 %v6662
  %v6724 = vpop.xlane.xlu0 %6723
  %6725 = vmax.xlane.f32.xlu0 %v6663
  %v6726 = vpop.xlane.xlu0 %6725
  %6727 = vmax.xlane.f32.xlu0 %v6664
  %v6728 = vpop.xlane.xlu0 %6727
  %v6729 = vsub.f32 %v6633, %v6666
  %v6730 = vsub.f32 %v6634, %v6668
  %v6731 = vsub.f32 %v6635, %v6670
  %v6732 = vsub.f32 %v6636, %v6672
  %v6733 = vsub.f32 %v6637, %v6674
  %v6734 = vsub.f32 %v6638, %v6676
  %v6735 = vsub.f32 %v6639, %v6678
  %v6736 = vsub.f32 %v6640, %v6680
  %v6737 = vsub.f32 %v6641, %v6682
  %v6738 = vsub.f32 %v6642, %v6684
  %v6739 = vsub.f32 %v6643, %v6686
  %v6740 = vsub.f32 %v6644, %v6688
  %v6741 = vsub.f32 %v6645, %v6690
  %v6742 = vsub.f32 %v6646, %v6692
  %v6743 = vsub.f32 %v6647, %v6694
  %v6744 = vsub.f32 %v6648, %v6696
  %v6745 = vsub.f32 %v6649, %v6698
  %v6746 = vsub.f32 %v6650, %v6700
  %v6747 = vsub.f32 %v6651, %v6702
  %v6748 = vsub.f32 %v6652, %v6704
  %v6749 = vsub.f32 %v6653, %v6706
  %v6750 = vsub.f32 %v6654, %v6708
  %v6751 = vsub.f32 %v6655, %v6710
  %v6752 = vsub.f32 %v6656, %v6712
  %v6753 = vsub.f32 %v6657, %v6714
  %v6754 = vsub.f32 %v6658, %v6716
  %v6755 = vsub.f32 %v6659, %v6718
  %v6756 = vsub.f32 %v6660, %v6720
  %v6757 = vsub.f32 %v6661, %v6722
  %v6758 = vsub.f32 %v6662, %v6724
  %v6759 = vsub.f32 %v6663, %v6726
  %v6760 = vsub.f32 %v6664, %v6728
  %v6761 = vmul.f32 %v6729, 1.442695
  %v6762 = vpow.pop %v6761
  %v6763 = vmul.f32 %v6730, 1.442695
  %v6764 = vpow.pop %v6763
  %v6765 = vmul.f32 %v6731, 1.442695
  %v6766 = vpow.pop %v6765
  %v6767 = vmul.f32 %v6732, 1.442695
  %v6768 = vpow.pop %v6767
  %v6769 = vmul.f32 %v6733, 1.442695
  %v6770 = vpow.pop %v6769
  %v6771 = vmul.f32 %v6734, 1.442695
  %v6772 = vpow.pop %v6771
  %v6773 = vmul.f32 %v6735, 1.442695
  %v6774 = vpow.pop %v6773
  %v6775 = vmul.f32 %v6736, 1.442695
  %v6776 = vpow.pop %v6775
  %v6777 = vmul.f32 %v6737, 1.442695
  %v6778 = vpow.pop %v6777
  %v6779 = vmul.f32 %v6738, 1.442695
  %v6780 = vpow.pop %v6779
  %v6781 = vmul.f32 %v6739, 1.442695
  %v6782 = vpow.pop %v6781
  %v6783 = vmul.f32 %v6740, 1.442695
  %v6784 = vpow.pop %v6783
  %v6785 = vmul.f32 %v6741, 1.442695
  %v6786 = vpow.pop %v6785
  %v6787 = vmul.f32 %v6742, 1.442695
  %v6788 = vpow.pop %v6787
  %v6789 = vmul.f32 %v6743, 1.442695
  %v6790 = vpow.pop %v6789
  %v6791 = vmul.f32 %v6744, 1.442695
  %v6792 = vpow.pop %v6791
  %v6793 = vmul.f32 %v6745, 1.442695
  %v6794 = vpow.pop %v6793
  %v6795 = vmul.f32 %v6746, 1.442695
  %v6796 = vpow.pop %v6795
  %v6797 = vmul.f32 %v6747, 1.442695
  %v6798 = vpow.pop %v6797
  %v6799 = vmul.f32 %v6748, 1.442695
  %v6800 = vpow.pop %v6799
  %v6801 = vmul.f32 %v6749, 1.442695
  %v6802 = vpow.pop %v6801
  %v6803 = vmul.f32 %v6750, 1.442695
  %v6804 = vpow.pop %v6803
  %v6805 = vmul.f32 %v6751, 1.442695
  %v6806 = vpow.pop %v6805
  %v6807 = vmul.f32 %v6752, 1.442695
  %v6808 = vpow.pop %v6807
  %v6809 = vmul.f32 %v6753, 1.442695
  %v6810 = vpow.pop %v6809
  %v6811 = vmul.f32 %v6754, 1.442695
  %v6812 = vpow.pop %v6811
  %v6813 = vmul.f32 %v6755, 1.442695
  %v6814 = vpow.pop %v6813
  %v6815 = vmul.f32 %v6756, 1.442695
  %v6816 = vpow.pop %v6815
  %v6817 = vmul.f32 %v6757, 1.442695
  %v6818 = vpow.pop %v6817
  %v6819 = vmul.f32 %v6758, 1.442695
  %v6820 = vpow.pop %v6819
  %v6821 = vmul.f32 %v6759, 1.442695
  %v6822 = vpow.pop %v6821
  %v6823 = vmul.f32 %v6760, 1.442695
  %v6824 = vpow.pop %v6823
  %6825 = vmatprep.subr.mxu0 0.0
  %6826 = vmatpush1.msra.mxu0 %v436
  %6827 = vmatprep.subr.mxu0 0.0
  %6828 = vmatpush1.msra.mxu0 %v437
  %6829 = vmatprep.subr.mxu0 0.0
  %6830 = vmatpush1.msra.mxu0 %v438
  %6831 = vmatprep.subr.mxu0 0.0
  %6832 = vmatpush1.msra.mxu0 %v439
  %6833 = vmatprep.subr.mxu0 0.0
  %6834 = vmatpush1.msra.mxu0 %v440
  %6835 = vmatprep.subr.mxu0 0.0
  %6836 = vmatpush1.msra.mxu0 %v441
  %6837 = vmatprep.subr.mxu0 0.0
  %6838 = vmatpush1.msra.mxu0 %v442
  %6839 = vmatprep.subr.mxu0 0.0
  %6840 = vmatpush1.msra.mxu0 %v443
  %6841 = vmatprep.subr.mxu0 0.0
  %6842 = vmatpush1.msra.mxu0 %v444
  %6843 = vmatprep.subr.mxu0 0.0
  %6844 = vmatpush1.msra.mxu0 %v445
  %6845 = vmatprep.subr.mxu0 0.0
  %6846 = vmatpush1.msra.mxu0 %v446
  %6847 = vmatprep.subr.mxu0 0.0
  %6848 = vmatpush1.msra.mxu0 %v447
  %6849 = vmatprep.subr.mxu0 0.0
  %6850 = vmatpush1.msra.mxu0 %v448
  %6851 = vmatprep.subr.mxu0 0.0
  %6852 = vmatpush1.msra.mxu0 %v449
  %6853 = vmatprep.subr.mxu0 0.0
  %6854 = vmatpush1.msra.mxu0 %v450
  %6855 = vmatprep.subr.mxu0 0.0
  %6856 = vmatpush1.msra.mxu0 %v451
  %6857 = vmatprep.subr.mxu0 0.0
  %6858 = vmatpush1.msra.mxu0 0.0
  %6859 = vmatprep.subr.mxu0 0.0
  %6860 = vmatpush1.msra.mxu0 0.0
  %6861 = vmatprep.subr.mxu0 0.0
  %6862 = vmatpush1.msra.mxu0 0.0
  %6863 = vmatprep.subr.mxu0 0.0
  %6864 = vmatpush1.msra.mxu0 0.0
  %6865 = vmatprep.subr.mxu0 0.0
  %6866 = vmatpush1.msra.mxu0 0.0
  %6867 = vmatprep.subr.mxu0 0.0
  %6868 = vmatpush1.msra.mxu0 0.0
  %6869 = vmatprep.subr.mxu0 0.0
  %6870 = vmatpush1.msra.mxu0 0.0
  %6871 = vmatprep.subr.mxu0 0.0
  %6872 = vmatpush1.msra.mxu0 0.0
  %6873 = vmatprep.subr.mxu0 0.0
  %6874 = vmatpush1.msra.mxu0 0.0
  %6875 = vmatprep.subr.mxu0 0.0
  %6876 = vmatpush1.msra.mxu0 0.0
  %6877 = vmatprep.subr.mxu0 0.0
  %6878 = vmatpush1.msra.mxu0 0.0
  %6879 = vmatprep.subr.mxu0 0.0
  %6880 = vmatpush1.msra.mxu0 0.0
  %6881 = vmatprep.subr.mxu0 0.0
  %6882 = vmatpush1.msra.mxu0 0.0
  %6883 = vmatprep.subr.mxu0 0.0
  %6884 = vmatpush1.msra.mxu0 0.0
  %6885 = vmatprep.subr.mxu0 0.0
  %6886 = vmatpush1.msra.mxu0 0.0
  %6887 = vmatprep.subr.mxu0 0.0
  %6888 = vmatpush1.msra.mxu0 0.0
  %6889 = vmatprep.mubr.f32.mxu0 0.0
  %6890 = vmatmul.mubr.f32.gmra.mrb[0].mxu0 %v6762
  %v6891 = vpop.f32.mrb[0].mxu0
  %v6892 = vadd.f32 0.0, %v6891
  %v6893 = vpop.f32.mrb[0].mxu0
  %6894 = vmatprep.mubr.f32.mxu0 0.0
  %6895 = vmatmul.mubr.f32.gmra.mrb[0].mxu0 %v6764
  %v6896 = vpop.f32.mrb[0].mxu0
  %v6897 = vadd.f32 0.0, %v6896
  %v6898 = vpop.f32.mrb[0].mxu0
  %6899 = vmatprep.mubr.f32.mxu0 0.0
  %6900 = vmatmul.mubr.f32.gmra.mrb[0].mxu0 %v6766
  %v6901 = vpop.f32.mrb[0].mxu0
  %v6902 = vadd.f32 0.0, %v6901
  %v6903 = vpop.f32.mrb[0].mxu0
  %6904 = vmatprep.mubr.f32.mxu0 0.0
  %6905 = vmatmul.mubr.f32.gmra.mrb[0].mxu0 %v6768
  %v6906 = vpop.f32.mrb[0].mxu0
  %v6907 = vadd.f32 0.0, %v6906
  %v6908 = vpop.f32.mrb[0].mxu0
  %6909 = vmatprep.mubr.f32.mxu0 0.0
  %6910 = vmatmul.mubr.f32.gmra.mrb[0].mxu0 %v6770
  %v6911 = vpop.f32.mrb[0].mxu0
  %v6912 = vadd.f32 0.0, %v6911
  %v6913 = vpop.f32.mrb[0].mxu0
  %6914 = vmatprep.mubr.f32.mxu0 0.0
  %6915 = vmatmul.mubr.f32.gmra.mrb[0].mxu0 %v6772
  %v6916 = vpop.f32.mrb[0].mxu0
  %v6917 = vadd.f32 0.0, %v6916
  %v6918 = vpop.f32.mrb[0].mxu0
  %6919 = vmatprep.mubr.f32.mxu0 0.0
  %6920 = vmatmul.mubr.f32.gmra.mrb[0].mxu0 %v6774
  %v6921 = vpop.f32.mrb[0].mxu0
  %v6922 = vadd.f32 0.0, %v6921
  %v6923 = vpop.f32.mrb[0].mxu0
  %6924 = vmatprep.mubr.f32.mxu0 0.0
  %6925 = vmatmul.mubr.f32.gmra.mrb[0].mxu0 %v6776
  %v6926 = vpop.f32.mrb[0].mxu0
  %v6927 = vadd.f32 0.0, %v6926
  %v6928 = vpop.f32.mrb[0].mxu0
  %6929 = vmatprep.mubr.f32.mxu0 0.0
  %6930 = vmatmul.mubr.f32.gmra.mrb[0].mxu0 %v6778
  %v6931 = vpop.f32.mrb[0].mxu0
  %v6932 = vadd.f32 0.0, %v6931
  %v6933 = vpop.f32.mrb[0].mxu0
  %6934 = vmatprep.mubr.f32.mxu0 0.0
  %6935 = vmatmul.mubr.f32.gmra.mrb[0].mxu0 %v6780
  %v6936 = vpop.f32.mrb[0].mxu0
  %v6937 = vadd.f32 0.0, %v6936
  %v6938 = vpop.f32.mrb[0].mxu0
  %6939 = vmatprep.mubr.f32.mxu0 0.0
  %6940 = vmatmul.mubr.f32.gmra.mrb[0].mxu0 %v6782
  %v6941 = vpop.f32.mrb[0].mxu0
  %v6942 = vadd.f32 0.0, %v6941
  %v6943 = vpop.f32.mrb[0].mxu0
  %6944 = vmatprep.mubr.f32.mxu0 0.0
  %6945 = vmatmul.mubr.f32.gmra.mrb[0].mxu0 %v6784
  %v6946 = vpop.f32.mrb[0].mxu0
  %v6947 = vadd.f32 0.0, %v6946
  %v6948 = vpop.f32.mrb[0].mxu0
  %6949 = vmatprep.mubr.f32.mxu0 0.0
  %6950 = vmatmul.mubr.f32.gmra.mrb[0].mxu0 %v6786
  %v6951 = vpop.f32.mrb[0].mxu0
  %v6952 = vadd.f32 0.0, %v6951
  %v6953 = vpop.f32.mrb[0].mxu0
  %6954 = vmatprep.mubr.f32.mxu0 0.0
  %6955 = vmatmul.mubr.f32.gmra.mrb[0].mxu0 %v6788
  %v6956 = vpop.f32.mrb[0].mxu0
  %v6957 = vadd.f32 0.0, %v6956
  %v6958 = vpop.f32.mrb[0].mxu0
  %6959 = vmatprep.mubr.f32.mxu0 0.0
  %6960 = vmatmul.mubr.f32.gmra.mrb[0].mxu0 %v6790
  %v6961 = vpop.f32.mrb[0].mxu0
  %v6962 = vadd.f32 0.0, %v6961
  %v6963 = vpop.f32.mrb[0].mxu0
  %6964 = vmatprep.mubr.f32.mxu0 0.0
  %6965 = vmatmul.mubr.f32.gmra.mrb[0].mxu0 %v6792
  %v6966 = vpop.f32.mrb[0].mxu0
  %v6967 = vadd.f32 0.0, %v6966
  %v6968 = vpop.f32.mrb[0].mxu0
  %6969 = vmatprep.mubr.f32.mxu0 0.0
  %6970 = vmatmul.mubr.f32.gmra.mrb[0].mxu0 %v6794
  %v6971 = vpop.f32.mrb[0].mxu0
  %v6972 = vadd.f32 0.0, %v6971
  %v6973 = vpop.f32.mrb[0].mxu0
  %6974 = vmatprep.mubr.f32.mxu0 0.0
  %6975 = vmatmul.mubr.f32.gmra.mrb[0].mxu0 %v6796
  %v6976 = vpop.f32.mrb[0].mxu0
  %v6977 = vadd.f32 0.0, %v6976
  %v6978 = vpop.f32.mrb[0].mxu0
  %6979 = vmatprep.mubr.f32.mxu0 0.0
  %6980 = vmatmul.mubr.f32.gmra.mrb[0].mxu0 %v6798
  %v6981 = vpop.f32.mrb[0].mxu0
  %v6982 = vadd.f32 0.0, %v6981
  %v6983 = vpop.f32.mrb[0].mxu0
  %6984 = vmatprep.mubr.f32.mxu0 0.0
  %6985 = vmatmul.mubr.f32.gmra.mrb[0].mxu0 %v6800
  %v6986 = vpop.f32.mrb[0].mxu0
  %v6987 = vadd.f32 0.0, %v6986
  %v6988 = vpop.f32.mrb[0].mxu0
  %6989 = vmatprep.mubr.f32.mxu0 0.0
  %6990 = vmatmul.mubr.f32.gmra.mrb[0].mxu0 %v6802
  %v6991 = vpop.f32.mrb[0].mxu0
  %v6992 = vadd.f32 0.0, %v6991
  %v6993 = vpop.f32.mrb[0].mxu0
  %6994 = vmatprep.mubr.f32.mxu0 0.0
  %6995 = vmatmul.mubr.f32.gmra.mrb[0].mxu0 %v6804
  %v6996 = vpop.f32.mrb[0].mxu0
  %v6997 = vadd.f32 0.0, %v6996
  %v6998 = vpop.f32.mrb[0].mxu0
  %6999 = vmatprep.mubr.f32.mxu0 0.0
  %7000 = vmatmul.mubr.f32.gmra.mrb[0].mxu0 %v6806
  %v7001 = vpop.f32.mrb[0].mxu0
  %v7002 = vadd.f32 0.0, %v7001
  %v7003 = vpop.f32.mrb[0].mxu0
  %7004 = vmatprep.mubr.f32.mxu0 0.0
  %7005 = vmatmul.mubr.f32.gmra.mrb[0].mxu0 %v6808
  %v7006 = vpop.f32.mrb[0].mxu0
  %v7007 = vadd.f32 0.0, %v7006
  %v7008 = vpop.f32.mrb[0].mxu0
  %7009 = vmatprep.mubr.f32.mxu0 0.0
  %7010 = vmatmul.mubr.f32.gmra.mrb[0].mxu0 %v6810
  %v7011 = vpop.f32.mrb[0].mxu0
  %v7012 = vadd.f32 0.0, %v7011
  %v7013 = vpop.f32.mrb[0].mxu0
  %7014 = vmatprep.mubr.f32.mxu0 0.0
  %7015 = vmatmul.mubr.f32.gmra.mrb[0].mxu0 %v6812
  %v7016 = vpop.f32.mrb[0].mxu0
  %v7017 = vadd.f32 0.0, %v7016
  %v7018 = vpop.f32.mrb[0].mxu0
  %7019 = vmatprep.mubr.f32.mxu0 0.0
  %7020 = vmatmul.mubr.f32.gmra.mrb[0].mxu0 %v6814
  %v7021 = vpop.f32.mrb[0].mxu0
  %v7022 = vadd.f32 0.0, %v7021
  %v7023 = vpop.f32.mrb[0].mxu0
  %7024 = vmatprep.mubr.f32.mxu0 0.0
  %7025 = vmatmul.mubr.f32.gmra.mrb[0].mxu0 %v6816
  %v7026 = vpop.f32.mrb[0].mxu0
  %v7027 = vadd.f32 0.0, %v7026
  %v7028 = vpop.f32.mrb[0].mxu0
  %7029 = vmatprep.mubr.f32.mxu0 0.0
  %7030 = vmatmul.mubr.f32.gmra.mrb[0].mxu0 %v6818
  %v7031 = vpop.f32.mrb[0].mxu0
  %v7032 = vadd.f32 0.0, %v7031
  %v7033 = vpop.f32.mrb[0].mxu0
  %7034 = vmatprep.mubr.f32.mxu0 0.0
  %7035 = vmatmul.mubr.f32.gmra.mrb[0].mxu0 %v6820
  %v7036 = vpop.f32.mrb[0].mxu0
  %v7037 = vadd.f32 0.0, %v7036
  %v7038 = vpop.f32.mrb[0].mxu0
  %7039 = vmatprep.mubr.f32.mxu0 0.0
  %7040 = vmatmul.mubr.f32.gmra.mrb[0].mxu0 %v6822
  %v7041 = vpop.f32.mrb[0].mxu0
  %v7042 = vadd.f32 0.0, %v7041
  %v7043 = vpop.f32.mrb[0].mxu0
  %7044 = vmatprep.mubr.f32.mxu0 0.0
  %7045 = vmatmul.mubr.f32.gmra.mrb[0].mxu0 %v6824
  %v7046 = vpop.f32.mrb[0].mxu0
  %v7047 = vadd.f32 0.0, %v7046
  %v7048 = vpop.f32.mrb[0].mxu0
  %7049 = vdwg.mxu0
  %v7050 = vrcp.pop %v6892
  %v7051 = vrcp.pop %v6897
  %v7052 = vrcp.pop %v6902
  %v7053 = vrcp.pop %v6907
  %v7054 = vrcp.pop %v6912
  %v7055 = vrcp.pop %v6917
  %v7056 = vrcp.pop %v6922
  %v7057 = vrcp.pop %v6927
  %v7058 = vrcp.pop %v6932
  %v7059 = vrcp.pop %v6937
  %v7060 = vrcp.pop %v6942
  %v7061 = vrcp.pop %v6947
  %v7062 = vrcp.pop %v6952
  %v7063 = vrcp.pop %v6957
  %v7064 = vrcp.pop %v6962
  %v7065 = vrcp.pop %v6967
  %v7066 = vrcp.pop %v6972
  %v7067 = vrcp.pop %v6977
  %v7068 = vrcp.pop %v6982
  %v7069 = vrcp.pop %v6987
  %v7070 = vrcp.pop %v6992
  %v7071 = vrcp.pop %v6997
  %v7072 = vrcp.pop %v7002
  %v7073 = vrcp.pop %v7007
  %v7074 = vrcp.pop %v7012
  %v7075 = vrcp.pop %v7017
  %v7076 = vrcp.pop %v7022
  %v7077 = vrcp.pop %v7027
  %v7078 = vrcp.pop %v7032
  %v7079 = vrcp.pop %v7037
  %v7080 = vrcp.pop %v7042
  %v7081 = vrcp.pop %v7047
  %v7082 = vmul.f32 %v6762, %v7050
  %v7083 = vmul.f32 %v6764, %v7051
  %v7084 = vmul.f32 %v6766, %v7052
  %v7085 = vmul.f32 %v6768, %v7053
  %v7086 = vmul.f32 %v6770, %v7054
  %v7087 = vmul.f32 %v6772, %v7055
  %v7088 = vmul.f32 %v6774, %v7056
  %v7089 = vmul.f32 %v6776, %v7057
  %v7090 = vmul.f32 %v6778, %v7058
  %v7091 = vmul.f32 %v6780, %v7059
  %v7092 = vmul.f32 %v6782, %v7060
  %v7093 = vmul.f32 %v6784, %v7061
  %v7094 = vmul.f32 %v6786, %v7062
  %v7095 = vmul.f32 %v6788, %v7063
  %v7096 = vmul.f32 %v6790, %v7064
  %v7097 = vmul.f32 %v6792, %v7065
  %v7098 = vmul.f32 %v6794, %v7066
  %v7099 = vmul.f32 %v6796, %v7067
  %v7100 = vmul.f32 %v6798, %v7068
  %v7101 = vmul.f32 %v6800, %v7069
  %v7102 = vmul.f32 %v6802, %v7070
  %v7103 = vmul.f32 %v6804, %v7071
  %v7104 = vmul.f32 %v6806, %v7072
  %v7105 = vmul.f32 %v6808, %v7073
  %v7106 = vmul.f32 %v6810, %v7074
  %v7107 = vmul.f32 %v6812, %v7075
  %v7108 = vmul.f32 %v6814, %v7076
  %v7109 = vmul.f32 %v6816, %v7077
  %v7110 = vmul.f32 %v6818, %v7078
  %v7111 = vmul.f32 %v6820, %v7079
  %v7112 = vmul.f32 %v6822, %v7080
  %v7113 = vmul.f32 %v6824, %v7081
  %v7114 = vpack.c.bf16 %v7083, %v7082
  %v7115 = vpack.c.bf16 %v7085, %v7084
  %v7116 = vpack.c.bf16 %v7087, %v7086
  %v7117 = vpack.c.bf16 %v7089, %v7088
  %v7118 = vpack.c.bf16 %v7091, %v7090
  %v7119 = vpack.c.bf16 %v7093, %v7092
  %v7120 = vpack.c.bf16 %v7095, %v7094
  %v7121 = vpack.c.bf16 %v7097, %v7096
  %v7122 = vpack.c.bf16 %v7099, %v7098
  %v7123 = vpack.c.bf16 %v7101, %v7100
  %v7124 = vpack.c.bf16 %v7103, %v7102
  %v7125 = vpack.c.bf16 %v7105, %v7104
  %v7126 = vpack.c.bf16 %v7107, %v7106
  %v7127 = vpack.c.bf16 %v7109, %v7108
  %v7128 = vpack.c.bf16 %v7111, %v7110
  %v7129 = vpack.c.bf16 %v7113, %v7112
  %7138 = vrot.lane.b32.xlu0 %v5713, 64
  %v7139 = vpop.permute.xlu0 %7138
  %7140 = vrot.lane.b32.xlu0 %v5714, 64
  %v7141 = vpop.permute.xlu0 %7140
  %7142 = vrot.lane.b32.xlu0 %v5715, 64
  %v7143 = vpop.permute.xlu0 %7142
  %7144 = vrot.lane.b32.xlu0 %v5716, 64
  %v7145 = vpop.permute.xlu0 %7144
  %7146 = vrot.lane.b32.xlu0 %v5717, 64
  %v7147 = vpop.permute.xlu0 %7146
  %7148 = vrot.lane.b32.xlu0 %v5718, 64
  %v7149 = vpop.permute.xlu0 %7148
  %7150 = vrot.lane.b32.xlu0 %v5719, 64
  %v7151 = vpop.permute.xlu0 %7150
  %7152 = vrot.lane.b32.xlu0 %v5720, 64
  %v7153 = vpop.permute.xlu0 %7152
  %7162 = vmatprep.subr.bf16.mxu0 0
  %7163 = vmatpush1.bf16.msra.mxu0 %v7139
  %7164 = vmatprep.subr.bf16.mxu0 0
  %7165 = vmatpush1.bf16.msra.mxu0 %v7141
  %7166 = vmatprep.subr.bf16.mxu0 0
  %7167 = vmatpush1.bf16.msra.mxu0 %v7143
  %7168 = vmatprep.subr.bf16.mxu0 0
  %7169 = vmatpush1.bf16.msra.mxu0 %v7145
  %7170 = vmatprep.subr.bf16.mxu0 0
  %7171 = vmatpush1.bf16.msra.mxu0 %v7147
  %7172 = vmatprep.subr.bf16.mxu0 0
  %7173 = vmatpush1.bf16.msra.mxu0 %v7149
  %7174 = vmatprep.subr.bf16.mxu0 0
  %7175 = vmatpush1.bf16.msra.mxu0 %v7151
  %7176 = vmatprep.subr.bf16.mxu0 0
  %7177 = vmatpush1.bf16.msra.mxu0 %v7153
  %7178 = vmatprep.subr.bf16.mxu0 0
  %7179 = vmatpush1.bf16.msra.mxu0 0
  %7180 = vmatprep.subr.bf16.mxu0 0
  %7181 = vmatpush1.bf16.msra.mxu0 0
  %7182 = vmatprep.subr.bf16.mxu0 0
  %7183 = vmatpush1.bf16.msra.mxu0 0
  %7184 = vmatprep.subr.bf16.mxu0 0
  %7185 = vmatpush1.bf16.msra.mxu0 0
  %7186 = vmatprep.subr.bf16.mxu0 0
  %7187 = vmatpush1.bf16.msra.mxu0 0
  %7188 = vmatprep.subr.bf16.mxu0 0
  %7189 = vmatpush1.bf16.msra.mxu0 0
  %7190 = vmatprep.subr.bf16.mxu0 0
  %7191 = vmatpush1.bf16.msra.mxu0 0
  %7192 = vmatprep.subr.bf16.mxu0 0
  %7193 = vmatpush1.bf16.msra.mxu0 0
  %7194 = vmatprep.mubr.bf16.mxu0 0
  %7195 = vmatmul.mubr.bf16.gmra.mrb[0].mxu0 %v7114
  %v7196 = vpop.f32.mrb[0].mxu0
  %v7197 = vadd.f32 0.0, %v7196
  %v7198 = vpop.f32.mrb[0].mxu0
  %v7199 = vpop.f32.mrb[0].mxu0
  %v7200 = vadd.f32 0.0, %v7199
  %v7201 = vpop.f32.mrb[0].mxu0
  %7202 = vmatprep.mubr.bf16.mxu0 0
  %7203 = vmatmul.mubr.bf16.gmra.mrb[0].mxu0 %v7115
  %v7204 = vpop.f32.mrb[0].mxu0
  %v7205 = vadd.f32 0.0, %v7204
  %v7206 = vpop.f32.mrb[0].mxu0
  %v7207 = vpop.f32.mrb[0].mxu0
  %v7208 = vadd.f32 0.0, %v7207
  %v7209 = vpop.f32.mrb[0].mxu0
  %7210 = vdwg.mxu0
  %7219 = vrot.lane.b32.xlu0 %v5721, 64
  %v7220 = vpop.permute.xlu0 %7219
  %7221 = vrot.lane.b32.xlu0 %v5722, 64
  %v7222 = vpop.permute.xlu0 %7221
  %7223 = vrot.lane.b32.xlu0 %v5723, 64
  %v7224 = vpop.permute.xlu0 %7223
  %7225 = vrot.lane.b32.xlu0 %v5724, 64
  %v7226 = vpop.permute.xlu0 %7225
  %7227 = vrot.lane.b32.xlu0 %v5725, 64
  %v7228 = vpop.permute.xlu0 %7227
  %7229 = vrot.lane.b32.xlu0 %v5726, 64
  %v7230 = vpop.permute.xlu0 %7229
  %7231 = vrot.lane.b32.xlu0 %v5727, 64
  %v7232 = vpop.permute.xlu0 %7231
  %7233 = vrot.lane.b32.xlu0 %v5728, 64
  %v7234 = vpop.permute.xlu0 %7233
  %7243 = vmatprep.subr.bf16.mxu0 0
  %7244 = vmatpush1.bf16.msra.mxu0 %v7220
  %7245 = vmatprep.subr.bf16.mxu0 0
  %7246 = vmatpush1.bf16.msra.mxu0 %v7222
  %7247 = vmatprep.subr.bf16.mxu0 0
  %7248 = vmatpush1.bf16.msra.mxu0 %v7224
  %7249 = vmatprep.subr.bf16.mxu0 0
  %7250 = vmatpush1.bf16.msra.mxu0 %v7226
  %7251 = vmatprep.subr.bf16.mxu0 0
  %7252 = vmatpush1.bf16.msra.mxu0 %v7228
  %7253 = vmatprep.subr.bf16.mxu0 0
  %7254 = vmatpush1.bf16.msra.mxu0 %v7230
  %7255 = vmatprep.subr.bf16.mxu0 0
  %7256 = vmatpush1.bf16.msra.mxu0 %v7232
  %7257 = vmatprep.subr.bf16.mxu0 0
  %7258 = vmatpush1.bf16.msra.mxu0 %v7234
  %7259 = vmatprep.subr.bf16.mxu0 0
  %7260 = vmatpush1.bf16.msra.mxu0 0
  %7261 = vmatprep.subr.bf16.mxu0 0
  %7262 = vmatpush1.bf16.msra.mxu0 0
  %7263 = vmatprep.subr.bf16.mxu0 0
  %7264 = vmatpush1.bf16.msra.mxu0 0
  %7265 = vmatprep.subr.bf16.mxu0 0
  %7266 = vmatpush1.bf16.msra.mxu0 0
  %7267 = vmatprep.subr.bf16.mxu0 0
  %7268 = vmatpush1.bf16.msra.mxu0 0
  %7269 = vmatprep.subr.bf16.mxu0 0
  %7270 = vmatpush1.bf16.msra.mxu0 0
  %7271 = vmatprep.subr.bf16.mxu0 0
  %7272 = vmatpush1.bf16.msra.mxu0 0
  %7273 = vmatprep.subr.bf16.mxu0 0
  %7274 = vmatpush1.bf16.msra.mxu0 0
  %7275 = vmatprep.mubr.bf16.mxu0 0
  %7276 = vmatmul.mubr.bf16.gmra.mrb[0].mxu0 %v7116
  %v7277 = vpop.f32.mrb[0].mxu0
  %v7278 = vadd.f32 0.0, %v7277
  %v7279 = vpop.f32.mrb[0].mxu0
  %v7280 = vpop.f32.mrb[0].mxu0
  %v7281 = vadd.f32 0.0, %v7280
  %v7282 = vpop.f32.mrb[0].mxu0
  %7283 = vmatprep.mubr.bf16.mxu0 0
  %7284 = vmatmul.mubr.bf16.gmra.mrb[0].mxu0 %v7117
  %v7285 = vpop.f32.mrb[0].mxu0
  %v7286 = vadd.f32 0.0, %v7285
  %v7287 = vpop.f32.mrb[0].mxu0
  %v7288 = vpop.f32.mrb[0].mxu0
  %v7289 = vadd.f32 0.0, %v7288
  %v7290 = vpop.f32.mrb[0].mxu0
  %7291 = vdwg.mxu0
  %7300 = vrot.lane.b32.xlu0 %v5729, 64
  %v7301 = vpop.permute.xlu0 %7300
  %7302 = vrot.lane.b32.xlu0 %v5730, 64
  %v7303 = vpop.permute.xlu0 %7302
  %7304 = vrot.lane.b32.xlu0 %v5731, 64
  %v7305 = vpop.permute.xlu0 %7304
  %7306 = vrot.lane.b32.xlu0 %v5732, 64
  %v7307 = vpop.permute.xlu0 %7306
  %7308 = vrot.lane.b32.xlu0 %v5733, 64
  %v7309 = vpop.permute.xlu0 %7308
  %7310 = vrot.lane.b32.xlu0 %v5734, 64
  %v7311 = vpop.permute.xlu0 %7310
  %7312 = vrot.lane.b32.xlu0 %v5735, 64
  %v7313 = vpop.permute.xlu0 %7312
  %7314 = vrot.lane.b32.xlu0 %v5736, 64
  %v7315 = vpop.permute.xlu0 %7314
  %7324 = vmatprep.subr.bf16.mxu0 0
  %7325 = vmatpush1.bf16.msra.mxu0 %v7301
  %7326 = vmatprep.subr.bf16.mxu0 0
  %7327 = vmatpush1.bf16.msra.mxu0 %v7303
  %7328 = vmatprep.subr.bf16.mxu0 0
  %7329 = vmatpush1.bf16.msra.mxu0 %v7305
  %7330 = vmatprep.subr.bf16.mxu0 0
  %7331 = vmatpush1.bf16.msra.mxu0 %v7307
  %7332 = vmatprep.subr.bf16.mxu0 0
  %7333 = vmatpush1.bf16.msra.mxu0 %v7309
  %7334 = vmatprep.subr.bf16.mxu0 0
  %7335 = vmatpush1.bf16.msra.mxu0 %v7311
  %7336 = vmatprep.subr.bf16.mxu0 0
  %7337 = vmatpush1.bf16.msra.mxu0 %v7313
  %7338 = vmatprep.subr.bf16.mxu0 0
  %7339 = vmatpush1.bf16.msra.mxu0 %v7315
  %7340 = vmatprep.subr.bf16.mxu0 0
  %7341 = vmatpush1.bf16.msra.mxu0 0
  %7342 = vmatprep.subr.bf16.mxu0 0
  %7343 = vmatpush1.bf16.msra.mxu0 0
  %7344 = vmatprep.subr.bf16.mxu0 0
  %7345 = vmatpush1.bf16.msra.mxu0 0
  %7346 = vmatprep.subr.bf16.mxu0 0
  %7347 = vmatpush1.bf16.msra.mxu0 0
  %7348 = vmatprep.subr.bf16.mxu0 0
  %7349 = vmatpush1.bf16.msra.mxu0 0
  %7350 = vmatprep.subr.bf16.mxu0 0
  %7351 = vmatpush1.bf16.msra.mxu0 0
  %7352 = vmatprep.subr.bf16.mxu0 0
  %7353 = vmatpush1.bf16.msra.mxu0 0
  %7354 = vmatprep.subr.bf16.mxu0 0
  %7355 = vmatpush1.bf16.msra.mxu0 0
  %7356 = vmatprep.mubr.bf16.mxu0 0
  %7357 = vmatmul.mubr.bf16.gmra.mrb[0].mxu0 %v7118
  %v7358 = vpop.f32.mrb[0].mxu0
  %v7359 = vadd.f32 0.0, %v7358
  %v7360 = vpop.f32.mrb[0].mxu0
  %v7361 = vpop.f32.mrb[0].mxu0
  %v7362 = vadd.f32 0.0, %v7361
  %v7363 = vpop.f32.mrb[0].mxu0
  %7364 = vmatprep.mubr.bf16.mxu0 0
  %7365 = vmatmul.mubr.bf16.gmra.mrb[0].mxu0 %v7119
  %v7366 = vpop.f32.mrb[0].mxu0
  %v7367 = vadd.f32 0.0, %v7366
  %v7368 = vpop.f32.mrb[0].mxu0
  %v7369 = vpop.f32.mrb[0].mxu0
  %v7370 = vadd.f32 0.0, %v7369
  %v7371 = vpop.f32.mrb[0].mxu0
  %7372 = vdwg.mxu0
  %7381 = vrot.lane.b32.xlu0 %v5737, 64
  %v7382 = vpop.permute.xlu0 %7381
  %7383 = vrot.lane.b32.xlu0 %v5738, 64
  %v7384 = vpop.permute.xlu0 %7383
  %7385 = vrot.lane.b32.xlu0 %v5739, 64
  %v7386 = vpop.permute.xlu0 %7385
  %7387 = vrot.lane.b32.xlu0 %v5740, 64
  %v7388 = vpop.permute.xlu0 %7387
  %7389 = vrot.lane.b32.xlu0 %v5741, 64
  %v7390 = vpop.permute.xlu0 %7389
  %7391 = vrot.lane.b32.xlu0 %v5742, 64
  %v7392 = vpop.permute.xlu0 %7391
  %7393 = vrot.lane.b32.xlu0 %v5743, 64
  %v7394 = vpop.permute.xlu0 %7393
  %7395 = vrot.lane.b32.xlu0 %v5744, 64
  %v7396 = vpop.permute.xlu0 %7395
  %7405 = vmatprep.subr.bf16.mxu0 0
  %7406 = vmatpush1.bf16.msra.mxu0 %v7382
  %7407 = vmatprep.subr.bf16.mxu0 0
  %7408 = vmatpush1.bf16.msra.mxu0 %v7384
  %7409 = vmatprep.subr.bf16.mxu0 0
  %7410 = vmatpush1.bf16.msra.mxu0 %v7386
  %7411 = vmatprep.subr.bf16.mxu0 0
  %7412 = vmatpush1.bf16.msra.mxu0 %v7388
  %7413 = vmatprep.subr.bf16.mxu0 0
  %7414 = vmatpush1.bf16.msra.mxu0 %v7390
  %7415 = vmatprep.subr.bf16.mxu0 0
  %7416 = vmatpush1.bf16.msra.mxu0 %v7392
  %7417 = vmatprep.subr.bf16.mxu0 0
  %7418 = vmatpush1.bf16.msra.mxu0 %v7394
  %7419 = vmatprep.subr.bf16.mxu0 0
  %7420 = vmatpush1.bf16.msra.mxu0 %v7396
  %7421 = vmatprep.subr.bf16.mxu0 0
  %7422 = vmatpush1.bf16.msra.mxu0 0
  %7423 = vmatprep.subr.bf16.mxu0 0
  %7424 = vmatpush1.bf16.msra.mxu0 0
  %7425 = vmatprep.subr.bf16.mxu0 0
  %7426 = vmatpush1.bf16.msra.mxu0 0
  %7427 = vmatprep.subr.bf16.mxu0 0
  %7428 = vmatpush1.bf16.msra.mxu0 0
  %7429 = vmatprep.subr.bf16.mxu0 0
  %7430 = vmatpush1.bf16.msra.mxu0 0
  %7431 = vmatprep.subr.bf16.mxu0 0
  %7432 = vmatpush1.bf16.msra.mxu0 0
  %7433 = vmatprep.subr.bf16.mxu0 0
  %7434 = vmatpush1.bf16.msra.mxu0 0
  %7435 = vmatprep.subr.bf16.mxu0 0
  %7436 = vmatpush1.bf16.msra.mxu0 0
  %7437 = vmatprep.mubr.bf16.mxu0 0
  %7438 = vmatmul.mubr.bf16.gmra.mrb[0].mxu0 %v7120
  %v7439 = vpop.f32.mrb[0].mxu0
  %v7440 = vadd.f32 0.0, %v7439
  %v7441 = vpop.f32.mrb[0].mxu0
  %v7442 = vpop.f32.mrb[0].mxu0
  %v7443 = vadd.f32 0.0, %v7442
  %v7444 = vpop.f32.mrb[0].mxu0
  %7445 = vmatprep.mubr.bf16.mxu0 0
  %7446 = vmatmul.mubr.bf16.gmra.mrb[0].mxu0 %v7121
  %v7447 = vpop.f32.mrb[0].mxu0
  %v7448 = vadd.f32 0.0, %v7447
  %v7449 = vpop.f32.mrb[0].mxu0
  %v7450 = vpop.f32.mrb[0].mxu0
  %v7451 = vadd.f32 0.0, %v7450
  %v7452 = vpop.f32.mrb[0].mxu0
  %7453 = vdwg.mxu0
  %7462 = vrot.lane.b32.xlu0 %v5745, 64
  %v7463 = vpop.permute.xlu0 %7462
  %7464 = vrot.lane.b32.xlu0 %v5746, 64
  %v7465 = vpop.permute.xlu0 %7464
  %7466 = vrot.lane.b32.xlu0 %v5747, 64
  %v7467 = vpop.permute.xlu0 %7466
  %7468 = vrot.lane.b32.xlu0 %v5748, 64
  %v7469 = vpop.permute.xlu0 %7468
  %7470 = vrot.lane.b32.xlu0 %v5749, 64
  %v7471 = vpop.permute.xlu0 %7470
  %7472 = vrot.lane.b32.xlu0 %v5750, 64
  %v7473 = vpop.permute.xlu0 %7472
  %7474 = vrot.lane.b32.xlu0 %v5751, 64
  %v7475 = vpop.permute.xlu0 %7474
  %7476 = vrot.lane.b32.xlu0 %v5752, 64
  %v7477 = vpop.permute.xlu0 %7476
  %7486 = vmatprep.subr.bf16.mxu0 0
  %7487 = vmatpush1.bf16.msra.mxu0 %v7463
  %7488 = vmatprep.subr.bf16.mxu0 0
  %7489 = vmatpush1.bf16.msra.mxu0 %v7465
  %7490 = vmatprep.subr.bf16.mxu0 0
  %7491 = vmatpush1.bf16.msra.mxu0 %v7467
  %7492 = vmatprep.subr.bf16.mxu0 0
  %7493 = vmatpush1.bf16.msra.mxu0 %v7469
  %7494 = vmatprep.subr.bf16.mxu0 0
  %7495 = vmatpush1.bf16.msra.mxu0 %v7471
  %7496 = vmatprep.subr.bf16.mxu0 0
  %7497 = vmatpush1.bf16.msra.mxu0 %v7473
  %7498 = vmatprep.subr.bf16.mxu0 0
  %7499 = vmatpush1.bf16.msra.mxu0 %v7475
  %7500 = vmatprep.subr.bf16.mxu0 0
  %7501 = vmatpush1.bf16.msra.mxu0 %v7477
  %7502 = vmatprep.subr.bf16.mxu0 0
  %7503 = vmatpush1.bf16.msra.mxu0 0
  %7504 = vmatprep.subr.bf16.mxu0 0
  %7505 = vmatpush1.bf16.msra.mxu0 0
  %7506 = vmatprep.subr.bf16.mxu0 0
  %7507 = vmatpush1.bf16.msra.mxu0 0
  %7508 = vmatprep.subr.bf16.mxu0 0
  %7509 = vmatpush1.bf16.msra.mxu0 0
  %7510 = vmatprep.subr.bf16.mxu0 0
  %7511 = vmatpush1.bf16.msra.mxu0 0
  %7512 = vmatprep.subr.bf16.mxu0 0
  %7513 = vmatpush1.bf16.msra.mxu0 0
  %7514 = vmatprep.subr.bf16.mxu0 0
  %7515 = vmatpush1.bf16.msra.mxu0 0
  %7516 = vmatprep.subr.bf16.mxu0 0
  %7517 = vmatpush1.bf16.msra.mxu0 0
  %7518 = vmatprep.mubr.bf16.mxu0 0
  %7519 = vmatmul.mubr.bf16.gmra.mrb[0].mxu0 %v7122
  %v7520 = vpop.f32.mrb[0].mxu0
  %v7521 = vadd.f32 0.0, %v7520
  %v7522 = vpop.f32.mrb[0].mxu0
  %v7523 = vpop.f32.mrb[0].mxu0
  %v7524 = vadd.f32 0.0, %v7523
  %v7525 = vpop.f32.mrb[0].mxu0
  %7526 = vmatprep.mubr.bf16.mxu0 0
  %7527 = vmatmul.mubr.bf16.gmra.mrb[0].mxu0 %v7123
  %v7528 = vpop.f32.mrb[0].mxu0
  %v7529 = vadd.f32 0.0, %v7528
  %v7530 = vpop.f32.mrb[0].mxu0
  %v7531 = vpop.f32.mrb[0].mxu0
  %v7532 = vadd.f32 0.0, %v7531
  %v7533 = vpop.f32.mrb[0].mxu0
  %7534 = vdwg.mxu0
  %7543 = vrot.lane.b32.xlu0 %v5753, 64
  %v7544 = vpop.permute.xlu0 %7543
  %7545 = vrot.lane.b32.xlu0 %v5754, 64
  %v7546 = vpop.permute.xlu0 %7545
  %7547 = vrot.lane.b32.xlu0 %v5755, 64
  %v7548 = vpop.permute.xlu0 %7547
  %7549 = vrot.lane.b32.xlu0 %v5756, 64
  %v7550 = vpop.permute.xlu0 %7549
  %7551 = vrot.lane.b32.xlu0 %v5757, 64
  %v7552 = vpop.permute.xlu0 %7551
  %7553 = vrot.lane.b32.xlu0 %v5758, 64
  %v7554 = vpop.permute.xlu0 %7553
  %7555 = vrot.lane.b32.xlu0 %v5759, 64
  %v7556 = vpop.permute.xlu0 %7555
  %7557 = vrot.lane.b32.xlu0 %v5760, 64
  %v7558 = vpop.permute.xlu0 %7557
  %7567 = vmatprep.subr.bf16.mxu0 0
  %7568 = vmatpush1.bf16.msra.mxu0 %v7544
  %7569 = vmatprep.subr.bf16.mxu0 0
  %7570 = vmatpush1.bf16.msra.mxu0 %v7546
  %7571 = vmatprep.subr.bf16.mxu0 0
  %7572 = vmatpush1.bf16.msra.mxu0 %v7548
  %7573 = vmatprep.subr.bf16.mxu0 0
  %7574 = vmatpush1.bf16.msra.mxu0 %v7550
  %7575 = vmatprep.subr.bf16.mxu0 0
  %7576 = vmatpush1.bf16.msra.mxu0 %v7552
  %7577 = vmatprep.subr.bf16.mxu0 0
  %7578 = vmatpush1.bf16.msra.mxu0 %v7554
  %7579 = vmatprep.subr.bf16.mxu0 0
  %7580 = vmatpush1.bf16.msra.mxu0 %v7556
  %7581 = vmatprep.subr.bf16.mxu0 0
  %7582 = vmatpush1.bf16.msra.mxu0 %v7558
  %7583 = vmatprep.subr.bf16.mxu0 0
  %7584 = vmatpush1.bf16.msra.mxu0 0
  %7585 = vmatprep.subr.bf16.mxu0 0
  %7586 = vmatpush1.bf16.msra.mxu0 0
  %7587 = vmatprep.subr.bf16.mxu0 0
  %7588 = vmatpush1.bf16.msra.mxu0 0
  %7589 = vmatprep.subr.bf16.mxu0 0
  %7590 = vmatpush1.bf16.msra.mxu0 0
  %7591 = vmatprep.subr.bf16.mxu0 0
  %7592 = vmatpush1.bf16.msra.mxu0 0
  %7593 = vmatprep.subr.bf16.mxu0 0
  %7594 = vmatpush1.bf16.msra.mxu0 0
  %7595 = vmatprep.subr.bf16.mxu0 0
  %7596 = vmatpush1.bf16.msra.mxu0 0
  %7597 = vmatprep.subr.bf16.mxu0 0
  %7598 = vmatpush1.bf16.msra.mxu0 0
  %7599 = vmatprep.mubr.bf16.mxu0 0
  %7600 = vmatmul.mubr.bf16.gmra.mrb[0].mxu0 %v7124
  %v7601 = vpop.f32.mrb[0].mxu0
  %v7602 = vadd.f32 0.0, %v7601
  %v7603 = vpop.f32.mrb[0].mxu0
  %v7604 = vpop.f32.mrb[0].mxu0
  %v7605 = vadd.f32 0.0, %v7604
  %v7606 = vpop.f32.mrb[0].mxu0
  %7607 = vmatprep.mubr.bf16.mxu0 0
  %7608 = vmatmul.mubr.bf16.gmra.mrb[0].mxu0 %v7125
  %v7609 = vpop.f32.mrb[0].mxu0
  %v7610 = vadd.f32 0.0, %v7609
  %v7611 = vpop.f32.mrb[0].mxu0
  %v7612 = vpop.f32.mrb[0].mxu0
  %v7613 = vadd.f32 0.0, %v7612
  %v7614 = vpop.f32.mrb[0].mxu0
  %7615 = vdwg.mxu0
  %7624 = vrot.lane.b32.xlu0 %v5761, 64
  %v7625 = vpop.permute.xlu0 %7624
  %7626 = vrot.lane.b32.xlu0 %v5762, 64
  %v7627 = vpop.permute.xlu0 %7626
  %7628 = vrot.lane.b32.xlu0 %v5763, 64
  %v7629 = vpop.permute.xlu0 %7628
  %7630 = vrot.lane.b32.xlu0 %v5764, 64
  %v7631 = vpop.permute.xlu0 %7630
  %7632 = vrot.lane.b32.xlu0 %v5765, 64
  %v7633 = vpop.permute.xlu0 %7632
  %7634 = vrot.lane.b32.xlu0 %v5766, 64
  %v7635 = vpop.permute.xlu0 %7634
  %7636 = vrot.lane.b32.xlu0 %v5767, 64
  %v7637 = vpop.permute.xlu0 %7636
  %7638 = vrot.lane.b32.xlu0 %v5768, 64
  %v7639 = vpop.permute.xlu0 %7638
  %7648 = vmatprep.subr.bf16.mxu0 0
  %7649 = vmatpush1.bf16.msra.mxu0 %v7625
  %7650 = vmatprep.subr.bf16.mxu0 0
  %7651 = vmatpush1.bf16.msra.mxu0 %v7627
  %7652 = vmatprep.subr.bf16.mxu0 0
  %7653 = vmatpush1.bf16.msra.mxu0 %v7629
  %7654 = vmatprep.subr.bf16.mxu0 0
  %7655 = vmatpush1.bf16.msra.mxu0 %v7631
  %7656 = vmatprep.subr.bf16.mxu0 0
  %7657 = vmatpush1.bf16.msra.mxu0 %v7633
  %7658 = vmatprep.subr.bf16.mxu0 0
  %7659 = vmatpush1.bf16.msra.mxu0 %v7635
  %7660 = vmatprep.subr.bf16.mxu0 0
  %7661 = vmatpush1.bf16.msra.mxu0 %v7637
  %7662 = vmatprep.subr.bf16.mxu0 0
  %7663 = vmatpush1.bf16.msra.mxu0 %v7639
  %7664 = vmatprep.subr.bf16.mxu0 0
  %7665 = vmatpush1.bf16.msra.mxu0 0
  %7666 = vmatprep.subr.bf16.mxu0 0
  %7667 = vmatpush1.bf16.msra.mxu0 0
  %7668 = vmatprep.subr.bf16.mxu0 0
  %7669 = vmatpush1.bf16.msra.mxu0 0
  %7670 = vmatprep.subr.bf16.mxu0 0
  %7671 = vmatpush1.bf16.msra.mxu0 0
  %7672 = vmatprep.subr.bf16.mxu0 0
  %7673 = vmatpush1.bf16.msra.mxu0 0
  %7674 = vmatprep.subr.bf16.mxu0 0
  %7675 = vmatpush1.bf16.msra.mxu0 0
  %7676 = vmatprep.subr.bf16.mxu0 0
  %7677 = vmatpush1.bf16.msra.mxu0 0
  %7678 = vmatprep.subr.bf16.mxu0 0
  %7679 = vmatpush1.bf16.msra.mxu0 0
  %7680 = vmatprep.mubr.bf16.mxu0 0
  %7681 = vmatmul.mubr.bf16.gmra.mrb[0].mxu0 %v7126
  %v7682 = vpop.f32.mrb[0].mxu0
  %v7683 = vadd.f32 0.0, %v7682
  %v7684 = vpop.f32.mrb[0].mxu0
  %v7685 = vpop.f32.mrb[0].mxu0
  %v7686 = vadd.f32 0.0, %v7685
  %v7687 = vpop.f32.mrb[0].mxu0
  %7688 = vmatprep.mubr.bf16.mxu0 0
  %7689 = vmatmul.mubr.bf16.gmra.mrb[0].mxu0 %v7127
  %v7690 = vpop.f32.mrb[0].mxu0
  %v7691 = vadd.f32 0.0, %v7690
  %v7692 = vpop.f32.mrb[0].mxu0
  %v7693 = vpop.f32.mrb[0].mxu0
  %v7694 = vadd.f32 0.0, %v7693
  %v7695 = vpop.f32.mrb[0].mxu0
  %7696 = vdwg.mxu0
  %7705 = vrot.lane.b32.xlu0 %v5769, 64
  %v7706 = vpop.permute.xlu0 %7705
  %7707 = vrot.lane.b32.xlu0 %v5770, 64
  %v7708 = vpop.permute.xlu0 %7707
  %7709 = vrot.lane.b32.xlu0 %v5771, 64
  %v7710 = vpop.permute.xlu0 %7709
  %7711 = vrot.lane.b32.xlu0 %v5772, 64
  %v7712 = vpop.permute.xlu0 %7711
  %7713 = vrot.lane.b32.xlu0 %v5773, 64
  %v7714 = vpop.permute.xlu0 %7713
  %7715 = vrot.lane.b32.xlu0 %v5774, 64
  %v7716 = vpop.permute.xlu0 %7715
  %7717 = vrot.lane.b32.xlu0 %v5775, 64
  %v7718 = vpop.permute.xlu0 %7717
  %7719 = vrot.lane.b32.xlu0 %v5776, 64
  %v7720 = vpop.permute.xlu0 %7719
  %7729 = vmatprep.subr.bf16.mxu0 0
  %7730 = vmatpush1.bf16.msra.mxu0 %v7706
  %7731 = vmatprep.subr.bf16.mxu0 0
  %7732 = vmatpush1.bf16.msra.mxu0 %v7708
  %7733 = vmatprep.subr.bf16.mxu0 0
  %7734 = vmatpush1.bf16.msra.mxu0 %v7710
  %7735 = vmatprep.subr.bf16.mxu0 0
  %7736 = vmatpush1.bf16.msra.mxu0 %v7712
  %7737 = vmatprep.subr.bf16.mxu0 0
  %7738 = vmatpush1.bf16.msra.mxu0 %v7714
  %7739 = vmatprep.subr.bf16.mxu0 0
  %7740 = vmatpush1.bf16.msra.mxu0 %v7716
  %7741 = vmatprep.subr.bf16.mxu0 0
  %7742 = vmatpush1.bf16.msra.mxu0 %v7718
  %7743 = vmatprep.subr.bf16.mxu0 0
  %7744 = vmatpush1.bf16.msra.mxu0 %v7720
  %7745 = vmatprep.subr.bf16.mxu0 0
  %7746 = vmatpush1.bf16.msra.mxu0 0
  %7747 = vmatprep.subr.bf16.mxu0 0
  %7748 = vmatpush1.bf16.msra.mxu0 0
  %7749 = vmatprep.subr.bf16.mxu0 0
  %7750 = vmatpush1.bf16.msra.mxu0 0
  %7751 = vmatprep.subr.bf16.mxu0 0
  %7752 = vmatpush1.bf16.msra.mxu0 0
  %7753 = vmatprep.subr.bf16.mxu0 0
  %7754 = vmatpush1.bf16.msra.mxu0 0
  %7755 = vmatprep.subr.bf16.mxu0 0
  %7756 = vmatpush1.bf16.msra.mxu0 0
  %7757 = vmatprep.subr.bf16.mxu0 0
  %7758 = vmatpush1.bf16.msra.mxu0 0
  %7759 = vmatprep.subr.bf16.mxu0 0
  %7760 = vmatpush1.bf16.msra.mxu0 0
  %7761 = vmatprep.mubr.bf16.mxu0 0
  %7762 = vmatmul.mubr.bf16.gmra.mrb[0].mxu0 %v7128
  %v7763 = vpop.f32.mrb[0].mxu0
  %v7764 = vadd.f32 0.0, %v7763
  %v7765 = vpop.f32.mrb[0].mxu0
  %v7766 = vpop.f32.mrb[0].mxu0
  %v7767 = vadd.f32 0.0, %v7766
  %v7768 = vpop.f32.mrb[0].mxu0
  %7769 = vmatprep.mubr.bf16.mxu0 0
  %7770 = vmatmul.mubr.bf16.gmra.mrb[0].mxu0 %v7129
  %v7771 = vpop.f32.mrb[0].mxu0
  %v7772 = vadd.f32 0.0, %v7771
  %v7773 = vpop.f32.mrb[0].mxu0
  %v7774 = vpop.f32.mrb[0].mxu0
  %v7775 = vadd.f32 0.0, %v7774
  %v7776 = vpop.f32.mrb[0].mxu0
  %7777 = vdwg.mxu0
  %v7778 = vpack.c.bf16 %v7200, %v7197
  %v7779 = vpack.c.bf16 %v7208, %v7205
  %v7780 = vpack.c.bf16 %v7281, %v7278
  %v7781 = vpack.c.bf16 %v7289, %v7286
  %v7782 = vpack.c.bf16 %v7362, %v7359
  %v7783 = vpack.c.bf16 %v7370, %v7367
  %v7784 = vpack.c.bf16 %v7443, %v7440
  %v7785 = vpack.c.bf16 %v7451, %v7448
  %v7786 = vpack.c.bf16 %v7524, %v7521
  %v7787 = vpack.c.bf16 %v7532, %v7529
  %v7788 = vpack.c.bf16 %v7605, %v7602
  %v7789 = vpack.c.bf16 %v7613, %v7610
  %v7790 = vpack.c.bf16 %v7686, %v7683
  %v7791 = vpack.c.bf16 %v7694, %v7691
  %v7792 = vpack.c.bf16 %v7767, %v7764
  %v7793 = vpack.c.bf16 %v7775, %v7772
  %s7794 = scalar_lea.vmem %s4, 16
  %v7795 = vld [vmem:[%s7794] sm:$0xf]
  %v7796 = vld [vmem:[%s7794 + $0x4] sm:$0xf]
  %v7797 = vld [vmem:[%s7794 + $0x8] sm:$0xf]
  %v7798 = vld [vmem:[%s7794 + $0xc] sm:$0xf]
  %v7803 = vunpack.c.l.b16 %v7795
  %v7804 = vunpack.c.l.b16 %v7796
  %v7805 = vunpack.c.l.b16 %v7797
  %v7806 = vunpack.c.l.b16 %v7798
  %v7807 = vpack.c.b16 %v7804, %v7803
  %v7808 = vpack.c.b16 %v7806, %v7805
  %v7812 = vsel %vm454, %v7778, 0
  %v7815 = vsel %vm454, %v7779, 0
  %v7818 = vsel %vm454, %v7780, 0
  %v7821 = vsel %vm454, %v7781, 0
  %v7824 = vsel %vm454, %v7782, 0
  %v7827 = vsel %vm454, %v7783, 0
  %v7830 = vsel %vm454, %v7784, 0
  %v7833 = vsel %vm454, %v7785, 0
  %v7836 = vsel %vm454, %v7786, 0
  %v7839 = vsel %vm454, %v7787, 0
  %v7842 = vsel %vm454, %v7788, 0
  %v7845 = vsel %vm454, %v7789, 0
  %v7848 = vsel %vm454, %v7790, 0
  %v7851 = vsel %vm454, %v7791, 0
  %v7854 = vsel %vm454, %v7792, 0
  %v7857 = vsel %vm454, %v7793, 0
  %7859 = vmatprep.subr.bf16.mxu0 0
  %7860 = vmatpush1.bf16.msra.mxu0 %v7807
  %7861 = vmatprep.subr.bf16.mxu0 0
  %7862 = vmatpush1.bf16.msra.mxu0 %v7808
  %7863 = vmatprep.subr.bf16.mxu0 0
  %7864 = vmatpush1.bf16.msra.mxu0 0
  %7865 = vmatprep.subr.bf16.mxu0 0
  %7866 = vmatpush1.bf16.msra.mxu0 0
  %7867 = vmatprep.subr.bf16.mxu0 0
  %7868 = vmatpush1.bf16.msra.mxu0 0
  %7869 = vmatprep.subr.bf16.mxu0 0
  %7870 = vmatpush1.bf16.msra.mxu0 0
  %7871 = vmatprep.subr.bf16.mxu0 0
  %7872 = vmatpush1.bf16.msra.mxu0 0
  %7873 = vmatprep.subr.bf16.mxu0 0
  %7874 = vmatpush1.bf16.msra.mxu0 0
  %7875 = vmatprep.subr.bf16.mxu0 0
  %7876 = vmatpush1.bf16.msra.mxu0 0
  %7877 = vmatprep.subr.bf16.mxu0 0
  %7878 = vmatpush1.bf16.msra.mxu0 0
  %7879 = vmatprep.subr.bf16.mxu0 0
  %7880 = vmatpush1.bf16.msra.mxu0 0
  %7881 = vmatprep.subr.bf16.mxu0 0
  %7882 = vmatpush1.bf16.msra.mxu0 0
  %7883 = vmatprep.subr.bf16.mxu0 0
  %7884 = vmatpush1.bf16.msra.mxu0 0
  %7885 = vmatprep.subr.bf16.mxu0 0
  %7886 = vmatpush1.bf16.msra.mxu0 0
  %7887 = vmatprep.subr.bf16.mxu0 0
  %7888 = vmatpush1.bf16.msra.mxu0 0
  %7889 = vmatprep.subr.bf16.mxu0 0
  %7890 = vmatpush1.bf16.msra.mxu0 0
  %7891 = vmatprep.mubr.bf16.mxu0 0
  %7892 = vmatmul.mubr.bf16.gmra.mrb[0].mxu0 %v7812
  %v7893 = vpop.f32.mrb[0].mxu0
  %v7894 = vadd.f32 0.0, %v7893
  %v7895 = vpop.f32.mrb[0].mxu0
  %v7896 = vpop.f32.mrb[0].mxu0
  %v7897 = vadd.f32 0.0, %v7896
  %v7898 = vpop.f32.mrb[0].mxu0
  %7899 = vmatprep.mubr.bf16.mxu0 0
  %7900 = vmatmul.mubr.bf16.gmra.mrb[0].mxu0 %v7815
  %v7901 = vpop.f32.mrb[0].mxu0
  %v7902 = vadd.f32 0.0, %v7901
  %v7903 = vpop.f32.mrb[0].mxu0
  %v7904 = vpop.f32.mrb[0].mxu0
  %v7905 = vadd.f32 0.0, %v7904
  %v7906 = vpop.f32.mrb[0].mxu0
  %7907 = vmatprep.mubr.bf16.mxu0 0
  %7908 = vmatmul.mubr.bf16.gmra.mrb[0].mxu0 %v7818
  %v7909 = vpop.f32.mrb[0].mxu0
  %v7910 = vadd.f32 0.0, %v7909
  %v7911 = vpop.f32.mrb[0].mxu0
  %v7912 = vpop.f32.mrb[0].mxu0
  %v7913 = vadd.f32 0.0, %v7912
  %v7914 = vpop.f32.mrb[0].mxu0
  %7915 = vmatprep.mubr.bf16.mxu0 0
  %7916 = vmatmul.mubr.bf16.gmra.mrb[0].mxu0 %v7821
  %v7917 = vpop.f32.mrb[0].mxu0
  %v7918 = vadd.f32 0.0, %v7917
  %v7919 = vpop.f32.mrb[0].mxu0
  %v7920 = vpop.f32.mrb[0].mxu0
  %v7921 = vadd.f32 0.0, %v7920
  %v7922 = vpop.f32.mrb[0].mxu0
  %7923 = vmatprep.mubr.bf16.mxu0 0
  %7924 = vmatmul.mubr.bf16.gmra.mrb[0].mxu0 %v7824
  %v7925 = vpop.f32.mrb[0].mxu0
  %v7926 = vadd.f32 0.0, %v7925
  %v7927 = vpop.f32.mrb[0].mxu0
  %v7928 = vpop.f32.mrb[0].mxu0
  %v7929 = vadd.f32 0.0, %v7928
  %v7930 = vpop.f32.mrb[0].mxu0
  %7931 = vmatprep.mubr.bf16.mxu0 0
  %7932 = vmatmul.mubr.bf16.gmra.mrb[0].mxu0 %v7827
  %v7933 = vpop.f32.mrb[0].mxu0
  %v7934 = vadd.f32 0.0, %v7933
  %v7935 = vpop.f32.mrb[0].mxu0
  %v7936 = vpop.f32.mrb[0].mxu0
  %v7937 = vadd.f32 0.0, %v7936
  %v7938 = vpop.f32.mrb[0].mxu0
  %7939 = vmatprep.mubr.bf16.mxu0 0
  %7940 = vmatmul.mubr.bf16.gmra.mrb[0].mxu0 %v7830
  %v7941 = vpop.f32.mrb[0].mxu0
  %v7942 = vadd.f32 0.0, %v7941
  %v7943 = vpop.f32.mrb[0].mxu0
  %v7944 = vpop.f32.mrb[0].mxu0
  %v7945 = vadd.f32 0.0, %v7944
  %v7946 = vpop.f32.mrb[0].mxu0
  %7947 = vmatprep.mubr.bf16.mxu0 0
  %7948 = vmatmul.mubr.bf16.gmra.mrb[0].mxu0 %v7833
  %v7949 = vpop.f32.mrb[0].mxu0
  %v7950 = vadd.f32 0.0, %v7949
  %v7951 = vpop.f32.mrb[0].mxu0
  %v7952 = vpop.f32.mrb[0].mxu0
  %v7953 = vadd.f32 0.0, %v7952
  %v7954 = vpop.f32.mrb[0].mxu0
  %7955 = vmatprep.mubr.bf16.mxu0 0
  %7956 = vmatmul.mubr.bf16.gmra.mrb[0].mxu0 %v7836
  %v7957 = vpop.f32.mrb[0].mxu0
  %v7958 = vadd.f32 0.0, %v7957
  %v7959 = vpop.f32.mrb[0].mxu0
  %v7960 = vpop.f32.mrb[0].mxu0
  %v7961 = vadd.f32 0.0, %v7960
  %v7962 = vpop.f32.mrb[0].mxu0
  %7963 = vmatprep.mubr.bf16.mxu0 0
  %7964 = vmatmul.mubr.bf16.gmra.mrb[0].mxu0 %v7839
  %v7965 = vpop.f32.mrb[0].mxu0
  %v7966 = vadd.f32 0.0, %v7965
  %v7967 = vpop.f32.mrb[0].mxu0
  %v7968 = vpop.f32.mrb[0].mxu0
  %v7969 = vadd.f32 0.0, %v7968
  %v7970 = vpop.f32.mrb[0].mxu0
  %7971 = vmatprep.mubr.bf16.mxu0 0
  %7972 = vmatmul.mubr.bf16.gmra.mrb[0].mxu0 %v7842
  %v7973 = vpop.f32.mrb[0].mxu0
  %v7974 = vadd.f32 0.0, %v7973
  %v7975 = vpop.f32.mrb[0].mxu0
  %v7976 = vpop.f32.mrb[0].mxu0
  %v7977 = vadd.f32 0.0, %v7976
  %v7978 = vpop.f32.mrb[0].mxu0
  %7979 = vmatprep.mubr.bf16.mxu0 0
  %7980 = vmatmul.mubr.bf16.gmra.mrb[0].mxu0 %v7845
  %v7981 = vpop.f32.mrb[0].mxu0
  %v7982 = vadd.f32 0.0, %v7981
  %v7983 = vpop.f32.mrb[0].mxu0
  %v7984 = vpop.f32.mrb[0].mxu0
  %v7985 = vadd.f32 0.0, %v7984
  %v7986 = vpop.f32.mrb[0].mxu0
  %7987 = vmatprep.mubr.bf16.mxu0 0
  %7988 = vmatmul.mubr.bf16.gmra.mrb[0].mxu0 %v7848
  %v7989 = vpop.f32.mrb[0].mxu0
  %v7990 = vadd.f32 0.0, %v7989
  %v7991 = vpop.f32.mrb[0].mxu0
  %v7992 = vpop.f32.mrb[0].mxu0
  %v7993 = vadd.f32 0.0, %v7992
  %v7994 = vpop.f32.mrb[0].mxu0
  %7995 = vmatprep.mubr.bf16.mxu0 0
  %7996 = vmatmul.mubr.bf16.gmra.mrb[0].mxu0 %v7851
  %v7997 = vpop.f32.mrb[0].mxu0
  %v7998 = vadd.f32 0.0, %v7997
  %v7999 = vpop.f32.mrb[0].mxu0
  %v8000 = vpop.f32.mrb[0].mxu0
  %v8001 = vadd.f32 0.0, %v8000
  %v8002 = vpop.f32.mrb[0].mxu0
  %8003 = vmatprep.mubr.bf16.mxu0 0
  %8004 = vmatmul.mubr.bf16.gmra.mrb[0].mxu0 %v7854
  %v8005 = vpop.f32.mrb[0].mxu0
  %v8006 = vadd.f32 0.0, %v8005
  %v8007 = vpop.f32.mrb[0].mxu0
  %v8008 = vpop.f32.mrb[0].mxu0
  %v8009 = vadd.f32 0.0, %v8008
  %v8010 = vpop.f32.mrb[0].mxu0
  %8011 = vmatprep.mubr.bf16.mxu0 0
  %8012 = vmatmul.mubr.bf16.gmra.mrb[0].mxu0 %v7857
  %v8013 = vpop.f32.mrb[0].mxu0
  %v8014 = vadd.f32 0.0, %v8013
  %v8015 = vpop.f32.mrb[0].mxu0
  %v8016 = vpop.f32.mrb[0].mxu0
  %v8017 = vadd.f32 0.0, %v8016
  %v8018 = vpop.f32.mrb[0].mxu0
  %8019 = vdwg.mxu0
  %v8020 = vadd.f32 %v4869, %v7894
  %v8021 = vadd.f32 %v4870, %v7897
  %v8022 = vadd.f32 %v4871, %v7902
  %v8023 = vadd.f32 %v4872, %v7905
  %v8024 = vadd.f32 %v4873, %v7910
  %v8025 = vadd.f32 %v4874, %v7913
  %v8026 = vadd.f32 %v4875, %v7918
  %v8027 = vadd.f32 %v4876, %v7921
  %v8028 = vadd.f32 %v4877, %v7926
  %v8029 = vadd.f32 %v4878, %v7929
  %v8030 = vadd.f32 %v4879, %v7934
  %v8031 = vadd.f32 %v4880, %v7937
  %v8032 = vadd.f32 %v4881, %v7942
  %v8033 = vadd.f32 %v4882, %v7945
  %v8034 = vadd.f32 %v4883, %v7950
  %v8035 = vadd.f32 %v4884, %v7953
  %v8036 = vadd.f32 %v4885, %v7958
  %v8037 = vadd.f32 %v4886, %v7961
  %v8038 = vadd.f32 %v4887, %v7966
  %v8039 = vadd.f32 %v4888, %v7969
  %v8040 = vadd.f32 %v4889, %v7974
  %v8041 = vadd.f32 %v4890, %v7977
  %v8042 = vadd.f32 %v4891, %v7982
  %v8043 = vadd.f32 %v4892, %v7985
  %v8044 = vadd.f32 %v4893, %v7990
  %v8045 = vadd.f32 %v4894, %v7993
  %v8046 = vadd.f32 %v4895, %v7998
  %v8047 = vadd.f32 %v4896, %v8001
  %v8048 = vadd.f32 %v4897, %v8006
  %v8049 = vadd.f32 %v4898, %v8009
  %v8050 = vadd.f32 %v4899, %v8014
  %v8051 = vadd.f32 %v4900, %v8017
  %v8052 = vlaneseq
  %v8053 = vshrl.u32 %v8052, 7
  %v8054 = vsub.s32 4, %v8053
  %v8055 = vrot.slane %v4902, %v8054
  %v8056 = vadd.f32 %v8020, %v8055
  %v8057 = vadd.f32 %v8021, %v8055
  %v8058 = vadd.f32 %v8022, %v8055
  %v8059 = vadd.f32 %v8023, %v8055
  %v8060 = vadd.f32 %v8024, %v8055
  %v8061 = vadd.f32 %v8025, %v8055
  %v8062 = vadd.f32 %v8026, %v8055
  %v8063 = vadd.f32 %v8027, %v8055
  %v8064 = vadd.f32 %v8028, %v8055
  %v8065 = vadd.f32 %v8029, %v8055
  %v8066 = vadd.f32 %v8030, %v8055
  %v8067 = vadd.f32 %v8031, %v8055
  %v8068 = vadd.f32 %v8032, %v8055
  %v8069 = vadd.f32 %v8033, %v8055
  %v8070 = vadd.f32 %v8034, %v8055
  %v8071 = vadd.f32 %v8035, %v8055
  %v8072 = vadd.f32 %v8036, %v8055
  %v8073 = vadd.f32 %v8037, %v8055
  %v8074 = vadd.f32 %v8038, %v8055
  %v8075 = vadd.f32 %v8039, %v8055
  %v8076 = vadd.f32 %v8040, %v8055
  %v8077 = vadd.f32 %v8041, %v8055
  %v8078 = vadd.f32 %v8042, %v8055
  %v8079 = vadd.f32 %v8043, %v8055
  %v8080 = vadd.f32 %v8044, %v8055
  %v8081 = vadd.f32 %v8045, %v8055
  %v8082 = vadd.f32 %v8046, %v8055
  %v8083 = vadd.f32 %v8047, %v8055
  %v8084 = vadd.f32 %v8048, %v8055
  %v8085 = vadd.f32 %v8049, %v8055
  %v8086 = vadd.f32 %v8050, %v8055
  %v8087 = vadd.f32 %v8051, %v8055
  %v8088 = vsel %vm454, %v8056, 0.0
  %8089 = vadd.xlane.f32.xlu0 %v8088
  %v8090 = vpop.xlane.xlu0 %8089
  %v8091 = vsel %vm454, %v8057, 0.0
  %8092 = vadd.xlane.f32.xlu0 %v8091
  %v8093 = vpop.xlane.xlu0 %8092
  %v8094 = vsel %vm454, %v8058, 0.0
  %8095 = vadd.xlane.f32.xlu0 %v8094
  %v8096 = vpop.xlane.xlu0 %8095
  %v8097 = vsel %vm454, %v8059, 0.0
  %8098 = vadd.xlane.f32.xlu0 %v8097
  %v8099 = vpop.xlane.xlu0 %8098
  %v8100 = vsel %vm454, %v8060, 0.0
  %8101 = vadd.xlane.f32.xlu0 %v8100
  %v8102 = vpop.xlane.xlu0 %8101
  %v8103 = vsel %vm454, %v8061, 0.0
  %8104 = vadd.xlane.f32.xlu0 %v8103
  %v8105 = vpop.xlane.xlu0 %8104
  %v8106 = vsel %vm454, %v8062, 0.0
  %8107 = vadd.xlane.f32.xlu0 %v8106
  %v8108 = vpop.xlane.xlu0 %8107
  %v8109 = vsel %vm454, %v8063, 0.0
  %8110 = vadd.xlane.f32.xlu0 %v8109
  %v8111 = vpop.xlane.xlu0 %8110
  %v8112 = vsel %vm454, %v8064, 0.0
  %8113 = vadd.xlane.f32.xlu0 %v8112
  %v8114 = vpop.xlane.xlu0 %8113
  %v8115 = vsel %vm454, %v8065, 0.0
  %8116 = vadd.xlane.f32.xlu0 %v8115
  %v8117 = vpop.xlane.xlu0 %8116
  %v8118 = vsel %vm454, %v8066, 0.0
  %8119 = vadd.xlane.f32.xlu0 %v8118
  %v8120 = vpop.xlane.xlu0 %8119
  %v8121 = vsel %vm454, %v8067, 0.0
  %8122 = vadd.xlane.f32.xlu0 %v8121
  %v8123 = vpop.xlane.xlu0 %8122
  %v8124 = vsel %vm454, %v8068, 0.0
  %8125 = vadd.xlane.f32.xlu0 %v8124
  %v8126 = vpop.xlane.xlu0 %8125
  %v8127 = vsel %vm454, %v8069, 0.0
  %8128 = vadd.xlane.f32.xlu0 %v8127
  %v8129 = vpop.xlane.xlu0 %8128
  %v8130 = vsel %vm454, %v8070, 0.0
  %8131 = vadd.xlane.f32.xlu0 %v8130
  %v8132 = vpop.xlane.xlu0 %8131
  %v8133 = vsel %vm454, %v8071, 0.0
  %8134 = vadd.xlane.f32.xlu0 %v8133
  %v8135 = vpop.xlane.xlu0 %8134
  %v8136 = vsel %vm454, %v8072, 0.0
  %8137 = vadd.xlane.f32.xlu0 %v8136
  %v8138 = vpop.xlane.xlu0 %8137
  %v8139 = vsel %vm454, %v8073, 0.0
  %8140 = vadd.xlane.f32.xlu0 %v8139
  %v8141 = vpop.xlane.xlu0 %8140
  %v8142 = vsel %vm454, %v8074, 0.0
  %8143 = vadd.xlane.f32.xlu0 %v8142
  %v8144 = vpop.xlane.xlu0 %8143
  %v8145 = vsel %vm454, %v8075, 0.0
  %8146 = vadd.xlane.f32.xlu0 %v8145
  %v8147 = vpop.xlane.xlu0 %8146
  %v8148 = vsel %vm454, %v8076, 0.0
  %8149 = vadd.xlane.f32.xlu0 %v8148
  %v8150 = vpop.xlane.xlu0 %8149
  %v8151 = vsel %vm454, %v8077, 0.0
  %8152 = vadd.xlane.f32.xlu0 %v8151
  %v8153 = vpop.xlane.xlu0 %8152
  %v8154 = vsel %vm454, %v8078, 0.0
  %8155 = vadd.xlane.f32.xlu0 %v8154
  %v8156 = vpop.xlane.xlu0 %8155
  %v8157 = vsel %vm454, %v8079, 0.0
  %8158 = vadd.xlane.f32.xlu0 %v8157
  %v8159 = vpop.xlane.xlu0 %8158
  %v8160 = vsel %vm454, %v8080, 0.0
  %8161 = vadd.xlane.f32.xlu0 %v8160
  %v8162 = vpop.xlane.xlu0 %8161
  %v8163 = vsel %vm454, %v8081, 0.0
  %8164 = vadd.xlane.f32.xlu0 %v8163
  %v8165 = vpop.xlane.xlu0 %8164
  %v8166 = vsel %vm454, %v8082, 0.0
  %8167 = vadd.xlane.f32.xlu0 %v8166
  %v8168 = vpop.xlane.xlu0 %8167
  %v8169 = vsel %vm454, %v8083, 0.0
  %8170 = vadd.xlane.f32.xlu0 %v8169
  %v8171 = vpop.xlane.xlu0 %8170
  %v8172 = vsel %vm454, %v8084, 0.0
  %8173 = vadd.xlane.f32.xlu0 %v8172
  %v8174 = vpop.xlane.xlu0 %8173
  %v8175 = vsel %vm454, %v8085, 0.0
  %8176 = vadd.xlane.f32.xlu0 %v8175
  %v8177 = vpop.xlane.xlu0 %8176
  %v8178 = vsel %vm454, %v8086, 0.0
  %8179 = vadd.xlane.f32.xlu0 %v8178
  %v8180 = vpop.xlane.xlu0 %8179
  %v8181 = vsel %vm454, %v8087, 0.0
  %8182 = vadd.xlane.f32.xlu0 %v8181
  %v8183 = vpop.xlane.xlu0 %8182
  %v8184 = vmul.f32 %v8090, %v551
  %v8185 = vmul.f32 %v8093, %v551
  %v8186 = vmul.f32 %v8096, %v551
  %v8187 = vmul.f32 %v8099, %v551
  %v8188 = vmul.f32 %v8102, %v551
  %v8189 = vmul.f32 %v8105, %v551
  %v8190 = vmul.f32 %v8108, %v551
  %v8191 = vmul.f32 %v8111, %v551
  %v8192 = vmul.f32 %v8114, %v551
  %v8193 = vmul.f32 %v8117, %v551
  %v8194 = vmul.f32 %v8120, %v551
  %v8195 = vmul.f32 %v8123, %v551
  %v8196 = vmul.f32 %v8126, %v551
  %v8197 = vmul.f32 %v8129, %v551
  %v8198 = vmul.f32 %v8132, %v551
  %v8199 = vmul.f32 %v8135, %v551
  %v8200 = vmul.f32 %v8138, %v551
  %v8201 = vmul.f32 %v8141, %v551
  %v8202 = vmul.f32 %v8144, %v551
  %v8203 = vmul.f32 %v8147, %v551
  %v8204 = vmul.f32 %v8150, %v551
  %v8205 = vmul.f32 %v8153, %v551
  %v8206 = vmul.f32 %v8156, %v551
  %v8207 = vmul.f32 %v8159, %v551
  %v8208 = vmul.f32 %v8162, %v551
  %v8209 = vmul.f32 %v8165, %v551
  %v8210 = vmul.f32 %v8168, %v551
  %v8211 = vmul.f32 %v8171, %v551
  %v8212 = vmul.f32 %v8174, %v551
  %v8213 = vmul.f32 %v8177, %v551
  %v8214 = vmul.f32 %v8180, %v551
  %v8215 = vmul.f32 %v8183, %v551
  %v8216 = vsub.f32 %v8056, %v8184
  %v8217 = vsub.f32 %v8057, %v8185
  %v8218 = vsub.f32 %v8058, %v8186
  %v8219 = vsub.f32 %v8059, %v8187
  %v8220 = vsub.f32 %v8060, %v8188
  %v8221 = vsub.f32 %v8061, %v8189
  %v8222 = vsub.f32 %v8062, %v8190
  %v8223 = vsub.f32 %v8063, %v8191
  %v8224 = vsub.f32 %v8064, %v8192
  %v8225 = vsub.f32 %v8065, %v8193
  %v8226 = vsub.f32 %v8066, %v8194
  %v8227 = vsub.f32 %v8067, %v8195
  %v8228 = vsub.f32 %v8068, %v8196
  %v8229 = vsub.f32 %v8069, %v8197
  %v8230 = vsub.f32 %v8070, %v8198
  %v8231 = vsub.f32 %v8071, %v8199
  %v8232 = vsub.f32 %v8072, %v8200
  %v8233 = vsub.f32 %v8073, %v8201
  %v8234 = vsub.f32 %v8074, %v8202
  %v8235 = vsub.f32 %v8075, %v8203
  %v8236 = vsub.f32 %v8076, %v8204
  %v8237 = vsub.f32 %v8077, %v8205
  %v8238 = vsub.f32 %v8078, %v8206
  %v8239 = vsub.f32 %v8079, %v8207
  %v8240 = vsub.f32 %v8080, %v8208
  %v8241 = vsub.f32 %v8081, %v8209
  %v8242 = vsub.f32 %v8082, %v8210
  %v8243 = vsub.f32 %v8083, %v8211
  %v8244 = vsub.f32 %v8084, %v8212
  %v8245 = vsub.f32 %v8085, %v8213
  %v8246 = vsub.f32 %v8086, %v8214
  %v8247 = vsub.f32 %v8087, %v8215
  %v8248 = vmul.f32 %v8216, %v8216
  %v8249 = vmul.f32 %v8217, %v8217
  %v8250 = vmul.f32 %v8218, %v8218
  %v8251 = vmul.f32 %v8219, %v8219
  %v8252 = vmul.f32 %v8220, %v8220
  %v8253 = vmul.f32 %v8221, %v8221
  %v8254 = vmul.f32 %v8222, %v8222
  %v8255 = vmul.f32 %v8223, %v8223
  %v8256 = vmul.f32 %v8224, %v8224
  %v8257 = vmul.f32 %v8225, %v8225
  %v8258 = vmul.f32 %v8226, %v8226
  %v8259 = vmul.f32 %v8227, %v8227
  %v8260 = vmul.f32 %v8228, %v8228
  %v8261 = vmul.f32 %v8229, %v8229
  %v8262 = vmul.f32 %v8230, %v8230
  %v8263 = vmul.f32 %v8231, %v8231
  %v8264 = vmul.f32 %v8232, %v8232
  %v8265 = vmul.f32 %v8233, %v8233
  %v8266 = vmul.f32 %v8234, %v8234
  %v8267 = vmul.f32 %v8235, %v8235
  %v8268 = vmul.f32 %v8236, %v8236
  %v8269 = vmul.f32 %v8237, %v8237
  %v8270 = vmul.f32 %v8238, %v8238
  %v8271 = vmul.f32 %v8239, %v8239
  %v8272 = vmul.f32 %v8240, %v8240
  %v8273 = vmul.f32 %v8241, %v8241
  %v8274 = vmul.f32 %v8242, %v8242
  %v8275 = vmul.f32 %v8243, %v8243
  %v8276 = vmul.f32 %v8244, %v8244
  %v8277 = vmul.f32 %v8245, %v8245
  %v8278 = vmul.f32 %v8246, %v8246
  %v8279 = vmul.f32 %v8247, %v8247
  %v8280 = vsel %vm454, %v8248, 0.0
  %8281 = vadd.xlane.f32.xlu0 %v8280
  %v8282 = vpop.xlane.xlu0 %8281
  %v8283 = vsel %vm454, %v8249, 0.0
  %8284 = vadd.xlane.f32.xlu0 %v8283
  %v8285 = vpop.xlane.xlu0 %8284
  %v8286 = vsel %vm454, %v8250, 0.0
  %8287 = vadd.xlane.f32.xlu0 %v8286
  %v8288 = vpop.xlane.xlu0 %8287
  %v8289 = vsel %vm454, %v8251, 0.0
  %8290 = vadd.xlane.f32.xlu0 %v8289
  %v8291 = vpop.xlane.xlu0 %8290
  %v8292 = vsel %vm454, %v8252, 0.0
  %8293 = vadd.xlane.f32.xlu0 %v8292
  %v8294 = vpop.xlane.xlu0 %8293
  %v8295 = vsel %vm454, %v8253, 0.0
  %8296 = vadd.xlane.f32.xlu0 %v8295
  %v8297 = vpop.xlane.xlu0 %8296
  %v8298 = vsel %vm454, %v8254, 0.0
  %8299 = vadd.xlane.f32.xlu0 %v8298
  %v8300 = vpop.xlane.xlu0 %8299
  %v8301 = vsel %vm454, %v8255, 0.0
  %8302 = vadd.xlane.f32.xlu0 %v8301
  %v8303 = vpop.xlane.xlu0 %8302
  %v8304 = vsel %vm454, %v8256, 0.0
  %8305 = vadd.xlane.f32.xlu0 %v8304
  %v8306 = vpop.xlane.xlu0 %8305
  %v8307 = vsel %vm454, %v8257, 0.0
  %8308 = vadd.xlane.f32.xlu0 %v8307
  %v8309 = vpop.xlane.xlu0 %8308
  %v8310 = vsel %vm454, %v8258, 0.0
  %8311 = vadd.xlane.f32.xlu0 %v8310
  %v8312 = vpop.xlane.xlu0 %8311
  %v8313 = vsel %vm454, %v8259, 0.0
  %8314 = vadd.xlane.f32.xlu0 %v8313
  %v8315 = vpop.xlane.xlu0 %8314
  %v8316 = vsel %vm454, %v8260, 0.0
  %8317 = vadd.xlane.f32.xlu0 %v8316
  %v8318 = vpop.xlane.xlu0 %8317
  %v8319 = vsel %vm454, %v8261, 0.0
  %8320 = vadd.xlane.f32.xlu0 %v8319
  %v8321 = vpop.xlane.xlu0 %8320
  %v8322 = vsel %vm454, %v8262, 0.0
  %8323 = vadd.xlane.f32.xlu0 %v8322
  %v8324 = vpop.xlane.xlu0 %8323
  %v8325 = vsel %vm454, %v8263, 0.0
  %8326 = vadd.xlane.f32.xlu0 %v8325
  %v8327 = vpop.xlane.xlu0 %8326
  %v8328 = vsel %vm454, %v8264, 0.0
  %8329 = vadd.xlane.f32.xlu0 %v8328
  %v8330 = vpop.xlane.xlu0 %8329
  %v8331 = vsel %vm454, %v8265, 0.0
  %8332 = vadd.xlane.f32.xlu0 %v8331
  %v8333 = vpop.xlane.xlu0 %8332
  %v8334 = vsel %vm454, %v8266, 0.0
  %8335 = vadd.xlane.f32.xlu0 %v8334
  %v8336 = vpop.xlane.xlu0 %8335
  %v8337 = vsel %vm454, %v8267, 0.0
  %8338 = vadd.xlane.f32.xlu0 %v8337
  %v8339 = vpop.xlane.xlu0 %8338
  %v8340 = vsel %vm454, %v8268, 0.0
  %8341 = vadd.xlane.f32.xlu0 %v8340
  %v8342 = vpop.xlane.xlu0 %8341
  %v8343 = vsel %vm454, %v8269, 0.0
  %8344 = vadd.xlane.f32.xlu0 %v8343
  %v8345 = vpop.xlane.xlu0 %8344
  %v8346 = vsel %vm454, %v8270, 0.0
  %8347 = vadd.xlane.f32.xlu0 %v8346
  %v8348 = vpop.xlane.xlu0 %8347
  %v8349 = vsel %vm454, %v8271, 0.0
  %8350 = vadd.xlane.f32.xlu0 %v8349
  %v8351 = vpop.xlane.xlu0 %8350
  %v8352 = vsel %vm454, %v8272, 0.0
  %8353 = vadd.xlane.f32.xlu0 %v8352
  %v8354 = vpop.xlane.xlu0 %8353
  %v8355 = vsel %vm454, %v8273, 0.0
  %8356 = vadd.xlane.f32.xlu0 %v8355
  %v8357 = vpop.xlane.xlu0 %8356
  %v8358 = vsel %vm454, %v8274, 0.0
  %8359 = vadd.xlane.f32.xlu0 %v8358
  %v8360 = vpop.xlane.xlu0 %8359
  %v8361 = vsel %vm454, %v8275, 0.0
  %8362 = vadd.xlane.f32.xlu0 %v8361
  %v8363 = vpop.xlane.xlu0 %8362
  %v8364 = vsel %vm454, %v8276, 0.0
  %8365 = vadd.xlane.f32.xlu0 %v8364
  %v8366 = vpop.xlane.xlu0 %8365
  %v8367 = vsel %vm454, %v8277, 0.0
  %8368 = vadd.xlane.f32.xlu0 %v8367
  %v8369 = vpop.xlane.xlu0 %8368
  %v8370 = vsel %vm454, %v8278, 0.0
  %8371 = vadd.xlane.f32.xlu0 %v8370
  %v8372 = vpop.xlane.xlu0 %8371
  %v8373 = vsel %vm454, %v8279, 0.0
  %8374 = vadd.xlane.f32.xlu0 %v8373
  %v8375 = vpop.xlane.xlu0 %8374
  %v8376 = vmul.f32 %v8282, %v551
  %v8377 = vmul.f32 %v8285, %v551
  %v8378 = vmul.f32 %v8288, %v551
  %v8379 = vmul.f32 %v8291, %v551
  %v8380 = vmul.f32 %v8294, %v551
  %v8381 = vmul.f32 %v8297, %v551
  %v8382 = vmul.f32 %v8300, %v551
  %v8383 = vmul.f32 %v8303, %v551
  %v8384 = vmul.f32 %v8306, %v551
  %v8385 = vmul.f32 %v8309, %v551
  %v8386 = vmul.f32 %v8312, %v551
  %v8387 = vmul.f32 %v8315, %v551
  %v8388 = vmul.f32 %v8318, %v551
  %v8389 = vmul.f32 %v8321, %v551
  %v8390 = vmul.f32 %v8324, %v551
  %v8391 = vmul.f32 %v8327, %v551
  %v8392 = vmul.f32 %v8330, %v551
  %v8393 = vmul.f32 %v8333, %v551
  %v8394 = vmul.f32 %v8336, %v551
  %v8395 = vmul.f32 %v8339, %v551
  %v8396 = vmul.f32 %v8342, %v551
  %v8397 = vmul.f32 %v8345, %v551
  %v8398 = vmul.f32 %v8348, %v551
  %v8399 = vmul.f32 %v8351, %v551
  %v8400 = vmul.f32 %v8354, %v551
  %v8401 = vmul.f32 %v8357, %v551
  %v8402 = vmul.f32 %v8360, %v551
  %v8403 = vmul.f32 %v8363, %v551
  %v8404 = vmul.f32 %v8366, %v551
  %v8405 = vmul.f32 %v8369, %v551
  %v8406 = vmul.f32 %v8372, %v551
  %v8407 = vmul.f32 %v8375, %v551
  %v8408 = vadd.f32 %v8376, 1e-05
  %v8409 = vadd.f32 %v8377, 1e-05
  %v8410 = vadd.f32 %v8378, 1e-05
  %v8411 = vadd.f32 %v8379, 1e-05
  %v8412 = vadd.f32 %v8380, 1e-05
  %v8413 = vadd.f32 %v8381, 1e-05
  %v8414 = vadd.f32 %v8382, 1e-05
  %v8415 = vadd.f32 %v8383, 1e-05
  %v8416 = vadd.f32 %v8384, 1e-05
  %v8417 = vadd.f32 %v8385, 1e-05
  %v8418 = vadd.f32 %v8386, 1e-05
  %v8419 = vadd.f32 %v8387, 1e-05
  %v8420 = vadd.f32 %v8388, 1e-05
  %v8421 = vadd.f32 %v8389, 1e-05
  %v8422 = vadd.f32 %v8390, 1e-05
  %v8423 = vadd.f32 %v8391, 1e-05
  %v8424 = vadd.f32 %v8392, 1e-05
  %v8425 = vadd.f32 %v8393, 1e-05
  %v8426 = vadd.f32 %v8394, 1e-05
  %v8427 = vadd.f32 %v8395, 1e-05
  %v8428 = vadd.f32 %v8396, 1e-05
  %v8429 = vadd.f32 %v8397, 1e-05
  %v8430 = vadd.f32 %v8398, 1e-05
  %v8431 = vadd.f32 %v8399, 1e-05
  %v8432 = vadd.f32 %v8400, 1e-05
  %v8433 = vadd.f32 %v8401, 1e-05
  %v8434 = vadd.f32 %v8402, 1e-05
  %v8435 = vadd.f32 %v8403, 1e-05
  %v8436 = vadd.f32 %v8404, 1e-05
  %v8437 = vadd.f32 %v8405, 1e-05
  %v8438 = vadd.f32 %v8406, 1e-05
  %v8439 = vadd.f32 %v8407, 1e-05
  %v8440 = vrsqrt.pop %v8408
  %v8441 = vrsqrt.pop %v8409
  %v8442 = vrsqrt.pop %v8410
  %v8443 = vrsqrt.pop %v8411
  %v8444 = vrsqrt.pop %v8412
  %v8445 = vrsqrt.pop %v8413
  %v8446 = vrsqrt.pop %v8414
  %v8447 = vrsqrt.pop %v8415
  %v8448 = vrsqrt.pop %v8416
  %v8449 = vrsqrt.pop %v8417
  %v8450 = vrsqrt.pop %v8418
  %v8451 = vrsqrt.pop %v8419
  %v8452 = vrsqrt.pop %v8420
  %v8453 = vrsqrt.pop %v8421
  %v8454 = vrsqrt.pop %v8422
  %v8455 = vrsqrt.pop %v8423
  %v8456 = vrsqrt.pop %v8424
  %v8457 = vrsqrt.pop %v8425
  %v8458 = vrsqrt.pop %v8426
  %v8459 = vrsqrt.pop %v8427
  %v8460 = vrsqrt.pop %v8428
  %v8461 = vrsqrt.pop %v8429
  %v8462 = vrsqrt.pop %v8430
  %v8463 = vrsqrt.pop %v8431
  %v8464 = vrsqrt.pop %v8432
  %v8465 = vrsqrt.pop %v8433
  %v8466 = vrsqrt.pop %v8434
  %v8467 = vrsqrt.pop %v8435
  %v8468 = vrsqrt.pop %v8436
  %v8469 = vrsqrt.pop %v8437
  %v8470 = vrsqrt.pop %v8438
  %v8471 = vrsqrt.pop %v8439
  %v8472 = vmul.f32 %v8216, %v8440
  %v8473 = vmul.f32 %v8217, %v8441
  %v8474 = vmul.f32 %v8218, %v8442
  %v8475 = vmul.f32 %v8219, %v8443
  %v8476 = vmul.f32 %v8220, %v8444
  %v8477 = vmul.f32 %v8221, %v8445
  %v8478 = vmul.f32 %v8222, %v8446
  %v8479 = vmul.f32 %v8223, %v8447
  %v8480 = vmul.f32 %v8224, %v8448
  %v8481 = vmul.f32 %v8225, %v8449
  %v8482 = vmul.f32 %v8226, %v8450
  %v8483 = vmul.f32 %v8227, %v8451
  %v8484 = vmul.f32 %v8228, %v8452
  %v8485 = vmul.f32 %v8229, %v8453
  %v8486 = vmul.f32 %v8230, %v8454
  %v8487 = vmul.f32 %v8231, %v8455
  %v8488 = vmul.f32 %v8232, %v8456
  %v8489 = vmul.f32 %v8233, %v8457
  %v8490 = vmul.f32 %v8234, %v8458
  %v8491 = vmul.f32 %v8235, %v8459
  %v8492 = vmul.f32 %v8236, %v8460
  %v8493 = vmul.f32 %v8237, %v8461
  %v8494 = vmul.f32 %v8238, %v8462
  %v8495 = vmul.f32 %v8239, %v8463
  %v8496 = vmul.f32 %v8240, %v8464
  %v8497 = vmul.f32 %v8241, %v8465
  %v8498 = vmul.f32 %v8242, %v8466
  %v8499 = vmul.f32 %v8243, %v8467
  %v8500 = vmul.f32 %v8244, %v8468
  %v8501 = vmul.f32 %v8245, %v8469
  %v8502 = vmul.f32 %v8246, %v8470
  %v8503 = vmul.f32 %v8247, %v8471
  %v8504 = vlaneseq
  %v8505 = vshrl.u32 %v8504, 7
  %v8506 = vsub.s32 2, %v8505
  %v8507 = vrot.slane %v4902, %v8506
  %v8508 = vmul.f32 %v8472, %v8507
  %v8509 = vmul.f32 %v8473, %v8507
  %v8510 = vmul.f32 %v8474, %v8507
  %v8511 = vmul.f32 %v8475, %v8507
  %v8512 = vmul.f32 %v8476, %v8507
  %v8513 = vmul.f32 %v8477, %v8507
  %v8514 = vmul.f32 %v8478, %v8507
  %v8515 = vmul.f32 %v8479, %v8507
  %v8516 = vmul.f32 %v8480, %v8507
  %v8517 = vmul.f32 %v8481, %v8507
  %v8518 = vmul.f32 %v8482, %v8507
  %v8519 = vmul.f32 %v8483, %v8507
  %v8520 = vmul.f32 %v8484, %v8507
  %v8521 = vmul.f32 %v8485, %v8507
  %v8522 = vmul.f32 %v8486, %v8507
  %v8523 = vmul.f32 %v8487, %v8507
  %v8524 = vmul.f32 %v8488, %v8507
  %v8525 = vmul.f32 %v8489, %v8507
  %v8526 = vmul.f32 %v8490, %v8507
  %v8527 = vmul.f32 %v8491, %v8507
  %v8528 = vmul.f32 %v8492, %v8507
  %v8529 = vmul.f32 %v8493, %v8507
  %v8530 = vmul.f32 %v8494, %v8507
  %v8531 = vmul.f32 %v8495, %v8507
  %v8532 = vmul.f32 %v8496, %v8507
  %v8533 = vmul.f32 %v8497, %v8507
  %v8534 = vmul.f32 %v8498, %v8507
  %v8535 = vmul.f32 %v8499, %v8507
  %v8536 = vmul.f32 %v8500, %v8507
  %v8537 = vmul.f32 %v8501, %v8507
  %v8538 = vmul.f32 %v8502, %v8507
  %v8539 = vmul.f32 %v8503, %v8507
  %v8540 = vlaneseq
  %v8541 = vshrl.u32 %v8540, 7
  %v8542 = vsub.s32 3, %v8541
  %v8543 = vrot.slane %v4902, %v8542
  %v8544 = vadd.f32 %v8508, %v8543
  %v8545 = vadd.f32 %v8509, %v8543
  %v8546 = vadd.f32 %v8510, %v8543
  %v8547 = vadd.f32 %v8511, %v8543
  %v8548 = vadd.f32 %v8512, %v8543
  %v8549 = vadd.f32 %v8513, %v8543
  %v8550 = vadd.f32 %v8514, %v8543
  %v8551 = vadd.f32 %v8515, %v8543
  %v8552 = vadd.f32 %v8516, %v8543
  %v8553 = vadd.f32 %v8517, %v8543
  %v8554 = vadd.f32 %v8518, %v8543
  %v8555 = vadd.f32 %v8519, %v8543
  %v8556 = vadd.f32 %v8520, %v8543
  %v8557 = vadd.f32 %v8521, %v8543
  %v8558 = vadd.f32 %v8522, %v8543
  %v8559 = vadd.f32 %v8523, %v8543
  %v8560 = vadd.f32 %v8524, %v8543
  %v8561 = vadd.f32 %v8525, %v8543
  %v8562 = vadd.f32 %v8526, %v8543
  %v8563 = vadd.f32 %v8527, %v8543
  %v8564 = vadd.f32 %v8528, %v8543
  %v8565 = vadd.f32 %v8529, %v8543
  %v8566 = vadd.f32 %v8530, %v8543
  %v8567 = vadd.f32 %v8531, %v8543
  %v8568 = vadd.f32 %v8532, %v8543
  %v8569 = vadd.f32 %v8533, %v8543
  %v8570 = vadd.f32 %v8534, %v8543
  %v8571 = vadd.f32 %v8535, %v8543
  %v8572 = vadd.f32 %v8536, %v8543
  %v8573 = vadd.f32 %v8537, %v8543
  %v8574 = vadd.f32 %v8538, %v8543
  %v8575 = vadd.f32 %v8539, %v8543
  %v8576 = vpack.c.bf16 %v8545, %v8544
  %v8577 = vpack.c.bf16 %v8547, %v8546
  %v8578 = vpack.c.bf16 %v8549, %v8548
  %v8579 = vpack.c.bf16 %v8551, %v8550
  %v8580 = vpack.c.bf16 %v8553, %v8552
  %v8581 = vpack.c.bf16 %v8555, %v8554
  %v8582 = vpack.c.bf16 %v8557, %v8556
  %v8583 = vpack.c.bf16 %v8559, %v8558
  %v8584 = vpack.c.bf16 %v8561, %v8560
  %v8585 = vpack.c.bf16 %v8563, %v8562
  %v8586 = vpack.c.bf16 %v8565, %v8564
  %v8587 = vpack.c.bf16 %v8567, %v8566
  %v8588 = vpack.c.bf16 %v8569, %v8568
  %v8589 = vpack.c.bf16 %v8571, %v8570
  %v8590 = vpack.c.bf16 %v8573, %v8572
  %v8591 = vpack.c.bf16 %v8575, %v8574
  %s8592 = scalar_lea.vmem %s5, 16
  %v8593 = vld [vmem:[%s8592] sm:$0xf]
  %v8594 = vld [vmem:[%s8592 + $0x4] sm:$0xf]
  %v8595 = vld [vmem:[%s8592 + $0x8] sm:$0xf]
  %v8596 = vld [vmem:[%s8592 + $0xc] sm:$0xf]
  %v8597 = vlaneseq
  %v8598 = vshrl.u32 %v8597, 7
  %v8599 = vsub.s32 6, %v8598
  %v8600 = vrot.slane %v4902, %v8599
  %v8605 = vunpack.c.l.b16 %v8593
  %v8606 = vunpack.c.l.b16 %v8594
  %v8607 = vunpack.c.l.b16 %v8595
  %v8608 = vunpack.c.l.b16 %v8596
  %v8609 = vpack.c.b16 %v8606, %v8605
  %v8610 = vpack.c.b16 %v8608, %v8607
  %v8614 = vsel %vm454, %v8576, 0
  %v8617 = vsel %vm454, %v8577, 0
  %v8620 = vsel %vm454, %v8578, 0
  %v8623 = vsel %vm454, %v8579, 0
  %v8626 = vsel %vm454, %v8580, 0
  %v8629 = vsel %vm454, %v8581, 0
  %v8632 = vsel %vm454, %v8582, 0
  %v8635 = vsel %vm454, %v8583, 0
  %v8638 = vsel %vm454, %v8584, 0
  %v8641 = vsel %vm454, %v8585, 0
  %v8644 = vsel %vm454, %v8586, 0
  %v8647 = vsel %vm454, %v8587, 0
  %v8650 = vsel %vm454, %v8588, 0
  %v8653 = vsel %vm454, %v8589, 0
  %v8656 = vsel %vm454, %v8590, 0
  %v8659 = vsel %vm454, %v8591, 0
  %8661 = vmatprep.subr.bf16.mxu0 0
  %8662 = vmatpush1.bf16.msra.mxu0 %v8609
  %8663 = vmatprep.subr.bf16.mxu0 0
  %8664 = vmatpush1.bf16.msra.mxu0 %v8610
  %8665 = vmatprep.subr.bf16.mxu0 0
  %8666 = vmatpush1.bf16.msra.mxu0 0
  %8667 = vmatprep.subr.bf16.mxu0 0
  %8668 = vmatpush1.bf16.msra.mxu0 0
  %8669 = vmatprep.subr.bf16.mxu0 0
  %8670 = vmatpush1.bf16.msra.mxu0 0
  %8671 = vmatprep.subr.bf16.mxu0 0
  %8672 = vmatpush1.bf16.msra.mxu0 0
  %8673 = vmatprep.subr.bf16.mxu0 0
  %8674 = vmatpush1.bf16.msra.mxu0 0
  %8675 = vmatprep.subr.bf16.mxu0 0
  %8676 = vmatpush1.bf16.msra.mxu0 0
  %8677 = vmatprep.subr.bf16.mxu0 0
  %8678 = vmatpush1.bf16.msra.mxu0 0
  %8679 = vmatprep.subr.bf16.mxu0 0
  %8680 = vmatpush1.bf16.msra.mxu0 0
  %8681 = vmatprep.subr.bf16.mxu0 0
  %8682 = vmatpush1.bf16.msra.mxu0 0
  %8683 = vmatprep.subr.bf16.mxu0 0
  %8684 = vmatpush1.bf16.msra.mxu0 0
  %8685 = vmatprep.subr.bf16.mxu0 0
  %8686 = vmatpush1.bf16.msra.mxu0 0
  %8687 = vmatprep.subr.bf16.mxu0 0
  %8688 = vmatpush1.bf16.msra.mxu0 0
  %8689 = vmatprep.subr.bf16.mxu0 0
  %8690 = vmatpush1.bf16.msra.mxu0 0
  %8691 = vmatprep.subr.bf16.mxu0 0
  %8692 = vmatpush1.bf16.msra.mxu0 0
  %8693 = vmatprep.mubr.bf16.mxu0 0
  %8694 = vmatmul.mubr.bf16.gmra.mrb[0].mxu0 %v8614
  %v8695 = vpop.f32.mrb[0].mxu0
  %v8696 = vadd.f32 %v8600, %v8695
  %v8697 = vpop.f32.mrb[0].mxu0
  %v8698 = vpop.f32.mrb[0].mxu0
  %v8699 = vadd.f32 %v8600, %v8698
  %v8700 = vpop.f32.mrb[0].mxu0
  %8701 = vmatprep.mubr.bf16.mxu0 0
  %8702 = vmatmul.mubr.bf16.gmra.mrb[0].mxu0 %v8617
  %v8703 = vpop.f32.mrb[0].mxu0
  %v8704 = vadd.f32 %v8600, %v8703
  %v8705 = vpop.f32.mrb[0].mxu0
  %v8706 = vpop.f32.mrb[0].mxu0
  %v8707 = vadd.f32 %v8600, %v8706
  %v8708 = vpop.f32.mrb[0].mxu0
  %8709 = vmatprep.mubr.bf16.mxu0 0
  %8710 = vmatmul.mubr.bf16.gmra.mrb[0].mxu0 %v8620
  %v8711 = vpop.f32.mrb[0].mxu0
  %v8712 = vadd.f32 %v8600, %v8711
  %v8713 = vpop.f32.mrb[0].mxu0
  %v8714 = vpop.f32.mrb[0].mxu0
  %v8715 = vadd.f32 %v8600, %v8714
  %v8716 = vpop.f32.mrb[0].mxu0
  %8717 = vmatprep.mubr.bf16.mxu0 0
  %8718 = vmatmul.mubr.bf16.gmra.mrb[0].mxu0 %v8623
  %v8719 = vpop.f32.mrb[0].mxu0
  %v8720 = vadd.f32 %v8600, %v8719
  %v8721 = vpop.f32.mrb[0].mxu0
  %v8722 = vpop.f32.mrb[0].mxu0
  %v8723 = vadd.f32 %v8600, %v8722
  %v8724 = vpop.f32.mrb[0].mxu0
  %8725 = vmatprep.mubr.bf16.mxu0 0
  %8726 = vmatmul.mubr.bf16.gmra.mrb[0].mxu0 %v8626
  %v8727 = vpop.f32.mrb[0].mxu0
  %v8728 = vadd.f32 %v8600, %v8727
  %v8729 = vpop.f32.mrb[0].mxu0
  %v8730 = vpop.f32.mrb[0].mxu0
  %v8731 = vadd.f32 %v8600, %v8730
  %v8732 = vpop.f32.mrb[0].mxu0
  %8733 = vmatprep.mubr.bf16.mxu0 0
  %8734 = vmatmul.mubr.bf16.gmra.mrb[0].mxu0 %v8629
  %v8735 = vpop.f32.mrb[0].mxu0
  %v8736 = vadd.f32 %v8600, %v8735
  %v8737 = vpop.f32.mrb[0].mxu0
  %v8738 = vpop.f32.mrb[0].mxu0
  %v8739 = vadd.f32 %v8600, %v8738
  %v8740 = vpop.f32.mrb[0].mxu0
  %8741 = vmatprep.mubr.bf16.mxu0 0
  %8742 = vmatmul.mubr.bf16.gmra.mrb[0].mxu0 %v8632
  %v8743 = vpop.f32.mrb[0].mxu0
  %v8744 = vadd.f32 %v8600, %v8743
  %v8745 = vpop.f32.mrb[0].mxu0
  %v8746 = vpop.f32.mrb[0].mxu0
  %v8747 = vadd.f32 %v8600, %v8746
  %v8748 = vpop.f32.mrb[0].mxu0
  %8749 = vmatprep.mubr.bf16.mxu0 0
  %8750 = vmatmul.mubr.bf16.gmra.mrb[0].mxu0 %v8635
  %v8751 = vpop.f32.mrb[0].mxu0
  %v8752 = vadd.f32 %v8600, %v8751
  %v8753 = vpop.f32.mrb[0].mxu0
  %v8754 = vpop.f32.mrb[0].mxu0
  %v8755 = vadd.f32 %v8600, %v8754
  %v8756 = vpop.f32.mrb[0].mxu0
  %8757 = vmatprep.mubr.bf16.mxu0 0
  %8758 = vmatmul.mubr.bf16.gmra.mrb[0].mxu0 %v8638
  %v8759 = vpop.f32.mrb[0].mxu0
  %v8760 = vadd.f32 %v8600, %v8759
  %v8761 = vpop.f32.mrb[0].mxu0
  %v8762 = vpop.f32.mrb[0].mxu0
  %v8763 = vadd.f32 %v8600, %v8762
  %v8764 = vpop.f32.mrb[0].mxu0
  %8765 = vmatprep.mubr.bf16.mxu0 0
  %8766 = vmatmul.mubr.bf16.gmra.mrb[0].mxu0 %v8641
  %v8767 = vpop.f32.mrb[0].mxu0
  %v8768 = vadd.f32 %v8600, %v8767
  %v8769 = vpop.f32.mrb[0].mxu0
  %v8770 = vpop.f32.mrb[0].mxu0
  %v8771 = vadd.f32 %v8600, %v8770
  %v8772 = vpop.f32.mrb[0].mxu0
  %8773 = vmatprep.mubr.bf16.mxu0 0
  %8774 = vmatmul.mubr.bf16.gmra.mrb[0].mxu0 %v8644
  %v8775 = vpop.f32.mrb[0].mxu0
  %v8776 = vadd.f32 %v8600, %v8775
  %v8777 = vpop.f32.mrb[0].mxu0
  %v8778 = vpop.f32.mrb[0].mxu0
  %v8779 = vadd.f32 %v8600, %v8778
  %v8780 = vpop.f32.mrb[0].mxu0
  %8781 = vmatprep.mubr.bf16.mxu0 0
  %8782 = vmatmul.mubr.bf16.gmra.mrb[0].mxu0 %v8647
  %v8783 = vpop.f32.mrb[0].mxu0
  %v8784 = vadd.f32 %v8600, %v8783
  %v8785 = vpop.f32.mrb[0].mxu0
  %v8786 = vpop.f32.mrb[0].mxu0
  %v8787 = vadd.f32 %v8600, %v8786
  %v8788 = vpop.f32.mrb[0].mxu0
  %8789 = vmatprep.mubr.bf16.mxu0 0
  %8790 = vmatmul.mubr.bf16.gmra.mrb[0].mxu0 %v8650
  %v8791 = vpop.f32.mrb[0].mxu0
  %v8792 = vadd.f32 %v8600, %v8791
  %v8793 = vpop.f32.mrb[0].mxu0
  %v8794 = vpop.f32.mrb[0].mxu0
  %v8795 = vadd.f32 %v8600, %v8794
  %v8796 = vpop.f32.mrb[0].mxu0
  %8797 = vmatprep.mubr.bf16.mxu0 0
  %8798 = vmatmul.mubr.bf16.gmra.mrb[0].mxu0 %v8653
  %v8799 = vpop.f32.mrb[0].mxu0
  %v8800 = vadd.f32 %v8600, %v8799
  %v8801 = vpop.f32.mrb[0].mxu0
  %v8802 = vpop.f32.mrb[0].mxu0
  %v8803 = vadd.f32 %v8600, %v8802
  %v8804 = vpop.f32.mrb[0].mxu0
  %8805 = vmatprep.mubr.bf16.mxu0 0
  %8806 = vmatmul.mubr.bf16.gmra.mrb[0].mxu0 %v8656
  %v8807 = vpop.f32.mrb[0].mxu0
  %v8808 = vadd.f32 %v8600, %v8807
  %v8809 = vpop.f32.mrb[0].mxu0
  %v8810 = vpop.f32.mrb[0].mxu0
  %v8811 = vadd.f32 %v8600, %v8810
  %v8812 = vpop.f32.mrb[0].mxu0
  %8813 = vmatprep.mubr.bf16.mxu0 0
  %8814 = vmatmul.mubr.bf16.gmra.mrb[0].mxu0 %v8659
  %v8815 = vpop.f32.mrb[0].mxu0
  %v8816 = vadd.f32 %v8600, %v8815
  %v8817 = vpop.f32.mrb[0].mxu0
  %v8818 = vpop.f32.mrb[0].mxu0
  %v8819 = vadd.f32 %v8600, %v8818
  %v8820 = vpop.f32.mrb[0].mxu0
  %8821 = vdwg.mxu0
  %v8822 = vmul.f32 %v8696, 0.5
  %v8823 = vmul.f32 %v8699, 0.5
  %v8824 = vmul.f32 %v8704, 0.5
  %v8825 = vmul.f32 %v8707, 0.5
  %v8826 = vmul.f32 %v8712, 0.5
  %v8827 = vmul.f32 %v8715, 0.5
  %v8828 = vmul.f32 %v8720, 0.5
  %v8829 = vmul.f32 %v8723, 0.5
  %v8830 = vmul.f32 %v8728, 0.5
  %v8831 = vmul.f32 %v8731, 0.5
  %v8832 = vmul.f32 %v8736, 0.5
  %v8833 = vmul.f32 %v8739, 0.5
  %v8834 = vmul.f32 %v8744, 0.5
  %v8835 = vmul.f32 %v8747, 0.5
  %v8836 = vmul.f32 %v8752, 0.5
  %v8837 = vmul.f32 %v8755, 0.5
  %v8838 = vmul.f32 %v8760, 0.5
  %v8839 = vmul.f32 %v8763, 0.5
  %v8840 = vmul.f32 %v8768, 0.5
  %v8841 = vmul.f32 %v8771, 0.5
  %v8842 = vmul.f32 %v8776, 0.5
  %v8843 = vmul.f32 %v8779, 0.5
  %v8844 = vmul.f32 %v8784, 0.5
  %v8845 = vmul.f32 %v8787, 0.5
  %v8846 = vmul.f32 %v8792, 0.5
  %v8847 = vmul.f32 %v8795, 0.5
  %v8848 = vmul.f32 %v8800, 0.5
  %v8849 = vmul.f32 %v8803, 0.5
  %v8850 = vmul.f32 %v8808, 0.5
  %v8851 = vmul.f32 %v8811, 0.5
  %v8852 = vmul.f32 %v8816, 0.5
  %v8853 = vmul.f32 %v8819, 0.5
  %v8854 = vmul.f32 %v8696, 0.70710677
  %v8855 = vmul.f32 %v8699, 0.70710677
  %v8856 = vmul.f32 %v8704, 0.70710677
  %v8857 = vmul.f32 %v8707, 0.70710677
  %v8858 = vmul.f32 %v8712, 0.70710677
  %v8859 = vmul.f32 %v8715, 0.70710677
  %v8860 = vmul.f32 %v8720, 0.70710677
  %v8861 = vmul.f32 %v8723, 0.70710677
  %v8862 = vmul.f32 %v8728, 0.70710677
  %v8863 = vmul.f32 %v8731, 0.70710677
  %v8864 = vmul.f32 %v8736, 0.70710677
  %v8865 = vmul.f32 %v8739, 0.70710677
  %v8866 = vmul.f32 %v8744, 0.70710677
  %v8867 = vmul.f32 %v8747, 0.70710677
  %v8868 = vmul.f32 %v8752, 0.70710677
  %v8869 = vmul.f32 %v8755, 0.70710677
  %v8870 = vmul.f32 %v8760, 0.70710677
  %v8871 = vmul.f32 %v8763, 0.70710677
  %v8872 = vmul.f32 %v8768, 0.70710677
  %v8873 = vmul.f32 %v8771, 0.70710677
  %v8874 = vmul.f32 %v8776, 0.70710677
  %v8875 = vmul.f32 %v8779, 0.70710677
  %v8876 = vmul.f32 %v8784, 0.70710677
  %v8877 = vmul.f32 %v8787, 0.70710677
  %v8878 = vmul.f32 %v8792, 0.70710677
  %v8879 = vmul.f32 %v8795, 0.70710677
  %v8880 = vmul.f32 %v8800, 0.70710677
  %v8881 = vmul.f32 %v8803, 0.70710677
  %v8882 = vmul.f32 %v8808, 0.70710677
  %v8883 = vmul.f32 %v8811, 0.70710677
  %v8884 = vmul.f32 %v8816, 0.70710677
  %v8885 = vmul.f32 %v8819, 0.70710677
  %v8886 = verf.f32.pop %v8854
  %v8887 = verf.f32.pop %v8855
  %v8888 = verf.f32.pop %v8856
  %v8889 = verf.f32.pop %v8857
  %v8890 = verf.f32.pop %v8858
  %v8891 = verf.f32.pop %v8859
  %v8892 = verf.f32.pop %v8860
  %v8893 = verf.f32.pop %v8861
  %v8894 = verf.f32.pop %v8862
  %v8895 = verf.f32.pop %v8863
  %v8896 = verf.f32.pop %v8864
  %v8897 = verf.f32.pop %v8865
  %v8898 = verf.f32.pop %v8866
  %v8899 = verf.f32.pop %v8867
  %v8900 = verf.f32.pop %v8868
  %v8901 = verf.f32.pop %v8869
  %v8902 = verf.f32.pop %v8870
  %v8903 = verf.f32.pop %v8871
  %v8904 = verf.f32.pop %v8872
  %v8905 = verf.f32.pop %v8873
  %v8906 = verf.f32.pop %v8874
  %v8907 = verf.f32.pop %v8875
  %v8908 = verf.f32.pop %v8876
  %v8909 = verf.f32.pop %v8877
  %v8910 = verf.f32.pop %v8878
  %v8911 = verf.f32.pop %v8879
  %v8912 = verf.f32.pop %v8880
  %v8913 = verf.f32.pop %v8881
  %v8914 = verf.f32.pop %v8882
  %v8915 = verf.f32.pop %v8883
  %v8916 = verf.f32.pop %v8884
  %v8917 = verf.f32.pop %v8885
  %v8918 = vadd.f32 %v8886, 1.0
  %v8919 = vadd.f32 %v8887, 1.0
  %v8920 = vadd.f32 %v8888, 1.0
  %v8921 = vadd.f32 %v8889, 1.0
  %v8922 = vadd.f32 %v8890, 1.0
  %v8923 = vadd.f32 %v8891, 1.0
  %v8924 = vadd.f32 %v8892, 1.0
  %v8925 = vadd.f32 %v8893, 1.0
  %v8926 = vadd.f32 %v8894, 1.0
  %v8927 = vadd.f32 %v8895, 1.0
  %v8928 = vadd.f32 %v8896, 1.0
  %v8929 = vadd.f32 %v8897, 1.0
  %v8930 = vadd.f32 %v8898, 1.0
  %v8931 = vadd.f32 %v8899, 1.0
  %v8932 = vadd.f32 %v8900, 1.0
  %v8933 = vadd.f32 %v8901, 1.0
  %v8934 = vadd.f32 %v8902, 1.0
  %v8935 = vadd.f32 %v8903, 1.0
  %v8936 = vadd.f32 %v8904, 1.0
  %v8937 = vadd.f32 %v8905, 1.0
  %v8938 = vadd.f32 %v8906, 1.0
  %v8939 = vadd.f32 %v8907, 1.0
  %v8940 = vadd.f32 %v8908, 1.0
  %v8941 = vadd.f32 %v8909, 1.0
  %v8942 = vadd.f32 %v8910, 1.0
  %v8943 = vadd.f32 %v8911, 1.0
  %v8944 = vadd.f32 %v8912, 1.0
  %v8945 = vadd.f32 %v8913, 1.0
  %v8946 = vadd.f32 %v8914, 1.0
  %v8947 = vadd.f32 %v8915, 1.0
  %v8948 = vadd.f32 %v8916, 1.0
  %v8949 = vadd.f32 %v8917, 1.0
  %v8950 = vmul.f32 %v8822, %v8918
  %v8951 = vmul.f32 %v8823, %v8919
  %v8952 = vmul.f32 %v8824, %v8920
  %v8953 = vmul.f32 %v8825, %v8921
  %v8954 = vmul.f32 %v8826, %v8922
  %v8955 = vmul.f32 %v8827, %v8923
  %v8956 = vmul.f32 %v8828, %v8924
  %v8957 = vmul.f32 %v8829, %v8925
  %v8958 = vmul.f32 %v8830, %v8926
  %v8959 = vmul.f32 %v8831, %v8927
  %v8960 = vmul.f32 %v8832, %v8928
  %v8961 = vmul.f32 %v8833, %v8929
  %v8962 = vmul.f32 %v8834, %v8930
  %v8963 = vmul.f32 %v8835, %v8931
  %v8964 = vmul.f32 %v8836, %v8932
  %v8965 = vmul.f32 %v8837, %v8933
  %v8966 = vmul.f32 %v8838, %v8934
  %v8967 = vmul.f32 %v8839, %v8935
  %v8968 = vmul.f32 %v8840, %v8936
  %v8969 = vmul.f32 %v8841, %v8937
  %v8970 = vmul.f32 %v8842, %v8938
  %v8971 = vmul.f32 %v8843, %v8939
  %v8972 = vmul.f32 %v8844, %v8940
  %v8973 = vmul.f32 %v8845, %v8941
  %v8974 = vmul.f32 %v8846, %v8942
  %v8975 = vmul.f32 %v8847, %v8943
  %v8976 = vmul.f32 %v8848, %v8944
  %v8977 = vmul.f32 %v8849, %v8945
  %v8978 = vmul.f32 %v8850, %v8946
  %v8979 = vmul.f32 %v8851, %v8947
  %v8980 = vmul.f32 %v8852, %v8948
  %v8981 = vmul.f32 %v8853, %v8949
  %v8982 = vpack.c.bf16 %v8951, %v8950
  %v8983 = vpack.c.bf16 %v8953, %v8952
  %v8984 = vpack.c.bf16 %v8955, %v8954
  %v8985 = vpack.c.bf16 %v8957, %v8956
  %v8986 = vpack.c.bf16 %v8959, %v8958
  %v8987 = vpack.c.bf16 %v8961, %v8960
  %v8988 = vpack.c.bf16 %v8963, %v8962
  %v8989 = vpack.c.bf16 %v8965, %v8964
  %v8990 = vpack.c.bf16 %v8967, %v8966
  %v8991 = vpack.c.bf16 %v8969, %v8968
  %v8992 = vpack.c.bf16 %v8971, %v8970
  %v8993 = vpack.c.bf16 %v8973, %v8972
  %v8994 = vpack.c.bf16 %v8975, %v8974
  %v8995 = vpack.c.bf16 %v8977, %v8976
  %v8996 = vpack.c.bf16 %v8979, %v8978
  %v8997 = vpack.c.bf16 %v8981, %v8980
  %s8998 = scalar_lea.vmem %s6, 64
  %v8999 = vld [vmem:[%s8998] sm:$0xf]
  %v9000 = vld [vmem:[%s8998 + $0x4] sm:$0xf]
  %v9001 = vld [vmem:[%s8998 + $0x8] sm:$0xf]
  %v9002 = vld [vmem:[%s8998 + $0xc] sm:$0xf]
  %v9003 = vld [vmem:[%s8998 + $0x10] sm:$0xf]
  %v9004 = vld [vmem:[%s8998 + $0x14] sm:$0xf]
  %v9005 = vld [vmem:[%s8998 + $0x18] sm:$0xf]
  %v9006 = vld [vmem:[%s8998 + $0x1c] sm:$0xf]
  %v9007 = vld [vmem:[%s8998 + $0x20] sm:$0xf]
  %v9008 = vld [vmem:[%s8998 + $0x24] sm:$0xf]
  %v9009 = vld [vmem:[%s8998 + $0x28] sm:$0xf]
  %v9010 = vld [vmem:[%s8998 + $0x2c] sm:$0xf]
  %v9011 = vld [vmem:[%s8998 + $0x30] sm:$0xf]
  %v9012 = vld [vmem:[%s8998 + $0x34] sm:$0xf]
  %v9013 = vld [vmem:[%s8998 + $0x38] sm:$0xf]
  %v9014 = vld [vmem:[%s8998 + $0x3c] sm:$0xf]
  %v9015 = vlaneseq
  %v9016 = vshrl.u32 %v9015, 7
  %v9017 = vsub.s32 5, %v9016
  %v9018 = vrot.slane %v4902, %v9017
  %v9035 = vunpack.c.l.b16 %v8999
  %v9036 = vunpack.c.l.b16 %v9000
  %v9037 = vunpack.c.l.b16 %v9001
  %v9038 = vunpack.c.l.b16 %v9002
  %v9039 = vunpack.c.l.b16 %v9003
  %v9040 = vunpack.c.l.b16 %v9004
  %v9041 = vunpack.c.l.b16 %v9005
  %v9042 = vunpack.c.l.b16 %v9006
  %v9043 = vunpack.c.l.b16 %v9007
  %v9044 = vunpack.c.l.b16 %v9008
  %v9045 = vunpack.c.l.b16 %v9009
  %v9046 = vunpack.c.l.b16 %v9010
  %v9047 = vunpack.c.l.b16 %v9011
  %v9048 = vunpack.c.l.b16 %v9012
  %v9049 = vunpack.c.l.b16 %v9013
  %v9050 = vunpack.c.l.b16 %v9014
  %v9051 = vpack.c.b16 %v9036, %v9035
  %v9052 = vpack.c.b16 %v9038, %v9037
  %v9053 = vpack.c.b16 %v9040, %v9039
  %v9054 = vpack.c.b16 %v9042, %v9041
  %v9055 = vpack.c.b16 %v9044, %v9043
  %v9056 = vpack.c.b16 %v9046, %v9045
  %v9057 = vpack.c.b16 %v9048, %v9047
  %v9058 = vpack.c.b16 %v9050, %v9049
  %9067 = vmatprep.subr.bf16.mxu0 0
  %9068 = vmatpush1.bf16.msra.mxu0 %v9051
  %9069 = vmatprep.subr.bf16.mxu0 0
  %9070 = vmatpush1.bf16.msra.mxu0 %v9052
  %9071 = vmatprep.subr.bf16.mxu0 0
  %9072 = vmatpush1.bf16.msra.mxu0 %v9053
  %9073 = vmatprep.subr.bf16.mxu0 0
  %9074 = vmatpush1.bf16.msra.mxu0 %v9054
  %9075 = vmatprep.subr.bf16.mxu0 0
  %9076 = vmatpush1.bf16.msra.mxu0 %v9055
  %9077 = vmatprep.subr.bf16.mxu0 0
  %9078 = vmatpush1.bf16.msra.mxu0 %v9056
  %9079 = vmatprep.subr.bf16.mxu0 0
  %9080 = vmatpush1.bf16.msra.mxu0 %v9057
  %9081 = vmatprep.subr.bf16.mxu0 0
  %9082 = vmatpush1.bf16.msra.mxu0 %v9058
  %9083 = vmatprep.subr.bf16.mxu0 0
  %9084 = vmatpush1.bf16.msra.mxu0 0
  %9085 = vmatprep.subr.bf16.mxu0 0
  %9086 = vmatpush1.bf16.msra.mxu0 0
  %9087 = vmatprep.subr.bf16.mxu0 0
  %9088 = vmatpush1.bf16.msra.mxu0 0
  %9089 = vmatprep.subr.bf16.mxu0 0
  %9090 = vmatpush1.bf16.msra.mxu0 0
  %9091 = vmatprep.subr.bf16.mxu0 0
  %9092 = vmatpush1.bf16.msra.mxu0 0
  %9093 = vmatprep.subr.bf16.mxu0 0
  %9094 = vmatpush1.bf16.msra.mxu0 0
  %9095 = vmatprep.subr.bf16.mxu0 0
  %9096 = vmatpush1.bf16.msra.mxu0 0
  %9097 = vmatprep.subr.bf16.mxu0 0
  %9098 = vmatpush1.bf16.msra.mxu0 0
  %9099 = vmatprep.mubr.bf16.mxu0 0
  %9100 = vmatmul.mubr.bf16.gmra.mrb[0].mxu0 %v8982
  %v9101 = vpop.f32.mrb[0].mxu0
  %v9102 = vadd.f32 %v9018, %v9101
  %v9103 = vpop.f32.mrb[0].mxu0
  %v9104 = vpop.f32.mrb[0].mxu0
  %v9105 = vpop.f32.mrb[0].mxu0
  %9106 = vmatprep.mubr.bf16.mxu0 0
  %9107 = vmatmul.mubr.bf16.gmra.mrb[0].mxu0 %v8983
  %v9108 = vpop.f32.mrb[0].mxu0
  %v9109 = vpop.f32.mrb[0].mxu0
  %v9110 = vpop.f32.mrb[0].mxu0
  %v9111 = vpop.f32.mrb[0].mxu0
  %9112 = vmatprep.mubr.bf16.mxu0 0
  %9113 = vmatmul.mubr.bf16.gmra.mrb[0].mxu0 %v8984
  %v9114 = vpop.f32.mrb[0].mxu0
  %v9115 = vadd.f32 %v9018, %v9114
  %v9116 = vpop.f32.mrb[0].mxu0
  %v9117 = vpop.f32.mrb[0].mxu0
  %v9118 = vpop.f32.mrb[0].mxu0
  %9119 = vmatprep.mubr.bf16.mxu0 0
  %9120 = vmatmul.mubr.bf16.gmra.mrb[0].mxu0 %v8985
  %v9121 = vpop.f32.mrb[0].mxu0
  %v9122 = vpop.f32.mrb[0].mxu0
  %v9123 = vpop.f32.mrb[0].mxu0
  %v9124 = vpop.f32.mrb[0].mxu0
  %9125 = vmatprep.mubr.bf16.mxu0 0
  %9126 = vmatmul.mubr.bf16.gmra.mrb[0].mxu0 %v8986
  %v9127 = vpop.f32.mrb[0].mxu0
  %v9128 = vadd.f32 %v9018, %v9127
  %v9129 = vpop.f32.mrb[0].mxu0
  %v9130 = vpop.f32.mrb[0].mxu0
  %v9131 = vpop.f32.mrb[0].mxu0
  %9132 = vmatprep.mubr.bf16.mxu0 0
  %9133 = vmatmul.mubr.bf16.gmra.mrb[0].mxu0 %v8987
  %v9134 = vpop.f32.mrb[0].mxu0
  %v9135 = vpop.f32.mrb[0].mxu0
  %v9136 = vpop.f32.mrb[0].mxu0
  %v9137 = vpop.f32.mrb[0].mxu0
  %9138 = vmatprep.mubr.bf16.mxu0 0
  %9139 = vmatmul.mubr.bf16.gmra.mrb[0].mxu0 %v8988
  %v9140 = vpop.f32.mrb[0].mxu0
  %v9141 = vadd.f32 %v9018, %v9140
  %v9142 = vpop.f32.mrb[0].mxu0
  %v9143 = vpop.f32.mrb[0].mxu0
  %v9144 = vpop.f32.mrb[0].mxu0
  %9145 = vmatprep.mubr.bf16.mxu0 0
  %9146 = vmatmul.mubr.bf16.gmra.mrb[0].mxu0 %v8989
  %v9147 = vpop.f32.mrb[0].mxu0
  %v9148 = vpop.f32.mrb[0].mxu0
  %v9149 = vpop.f32.mrb[0].mxu0
  %v9150 = vpop.f32.mrb[0].mxu0
  %9151 = vmatprep.mubr.bf16.mxu0 0
  %9152 = vmatmul.mubr.bf16.gmra.mrb[0].mxu0 %v8990
  %v9153 = vpop.f32.mrb[0].mxu0
  %v9154 = vadd.f32 %v9018, %v9153
  %v9155 = vpop.f32.mrb[0].mxu0
  %v9156 = vpop.f32.mrb[0].mxu0
  %v9157 = vpop.f32.mrb[0].mxu0
  %9158 = vmatprep.mubr.bf16.mxu0 0
  %9159 = vmatmul.mubr.bf16.gmra.mrb[0].mxu0 %v8991
  %v9160 = vpop.f32.mrb[0].mxu0
  %v9161 = vpop.f32.mrb[0].mxu0
  %v9162 = vpop.f32.mrb[0].mxu0
  %v9163 = vpop.f32.mrb[0].mxu0
  %9164 = vmatprep.mubr.bf16.mxu0 0
  %9165 = vmatmul.mubr.bf16.gmra.mrb[0].mxu0 %v8992
  %v9166 = vpop.f32.mrb[0].mxu0
  %v9167 = vadd.f32 %v9018, %v9166
  %v9168 = vpop.f32.mrb[0].mxu0
  %v9169 = vpop.f32.mrb[0].mxu0
  %v9170 = vpop.f32.mrb[0].mxu0
  %9171 = vmatprep.mubr.bf16.mxu0 0
  %9172 = vmatmul.mubr.bf16.gmra.mrb[0].mxu0 %v8993
  %v9173 = vpop.f32.mrb[0].mxu0
  %v9174 = vpop.f32.mrb[0].mxu0
  %v9175 = vpop.f32.mrb[0].mxu0
  %v9176 = vpop.f32.mrb[0].mxu0
  %9177 = vmatprep.mubr.bf16.mxu0 0
  %9178 = vmatmul.mubr.bf16.gmra.mrb[0].mxu0 %v8994
  %v9179 = vpop.f32.mrb[0].mxu0
  %v9180 = vadd.f32 %v9018, %v9179
  %v9181 = vpop.f32.mrb[0].mxu0
  %v9182 = vpop.f32.mrb[0].mxu0
  %v9183 = vpop.f32.mrb[0].mxu0
  %9184 = vmatprep.mubr.bf16.mxu0 0
  %9185 = vmatmul.mubr.bf16.gmra.mrb[0].mxu0 %v8995
  %v9186 = vpop.f32.mrb[0].mxu0
  %v9187 = vpop.f32.mrb[0].mxu0
  %v9188 = vpop.f32.mrb[0].mxu0
  %v9189 = vpop.f32.mrb[0].mxu0
  %9190 = vmatprep.mubr.bf16.mxu0 0
  %9191 = vmatmul.mubr.bf16.gmra.mrb[0].mxu0 %v8996
  %v9192 = vpop.f32.mrb[0].mxu0
  %v9193 = vadd.f32 %v9018, %v9192
  %v9194 = vpop.f32.mrb[0].mxu0
  %v9195 = vpop.f32.mrb[0].mxu0
  %v9196 = vpop.f32.mrb[0].mxu0
  %9197 = vmatprep.mubr.bf16.mxu0 0
  %9198 = vmatmul.mubr.bf16.gmra.mrb[0].mxu0 %v8997
  %v9199 = vpop.f32.mrb[0].mxu0
  %v9200 = vpop.f32.mrb[0].mxu0
  %v9201 = vpop.f32.mrb[0].mxu0
  %v9202 = vpop.f32.mrb[0].mxu0
  %9203 = vdwg.mxu0
  %v9204 = vadd.f32 %v8056, %v9102
  %v9205 = vadd.f32 %v8060, %v9115
  %v9206 = vadd.f32 %v8064, %v9128
  %v9207 = vadd.f32 %v8068, %v9141
  %v9208 = vadd.f32 %v8072, %v9154
  %v9209 = vadd.f32 %v8076, %v9167
  %v9210 = vadd.f32 %v8080, %v9180
  %v9211 = vadd.f32 %v8084, %v9193
  %v9212 = vld [vmem:[%s8] sm:$0x1]
  %v9213 = vld [vmem:[%s8 + $0x1] sm:$0x1]
  %v9214 = vld [vmem:[%s8 + $0x2] sm:$0x1]
  %v9223 = vrot.slane %v9205, 7
  %vm9224 = vcmask 1041409
  %v9225 = vsel %vm9224, %v9223, %v9204
  %v9226 = vrot.slane %v9206, 6
  %vm9227 = vcmask 1042434
  %v9228 = vsel %vm9227, %v9226, %v9225
  %v9229 = vrot.slane %v9207, 5
  %vm9230 = vcmask 1043459
  %v9231 = vsel %vm9230, %v9229, %v9228
  %v9232 = vrot.slane %v9208, 4
  %vm9233 = vcmask 1044484
  %v9234 = vsel %vm9233, %v9232, %v9231
  %v9235 = vrot.slane %v9209, 3
  %vm9236 = vcmask 1045509
  %v9237 = vsel %vm9236, %v9235, %v9234
  %v9238 = vrot.slane %v9210, 2
  %vm9239 = vcmask 1046534
  %v9240 = vsel %vm9239, %v9238, %v9237
  %v9241 = vrot.slane %v9211, 1
  %vm9242 = vcmask 1047559
  %v9243 = vsel %vm9242, %v9241, %v9240
  %v9245 = vsel %vm454, %v9243, 0.0
  %9246 = vadd.xlane.f32.xlu0 %v9245
  %v9247 = vpop.xlane.xlu0 %9246
  %v9248 = vmul.f32 %v9247, %v551
  %v9250 = vrot.slane %v9248, 1
  %v9251 = vrot.slane %v9248, 2
  %v9252 = vrot.slane %v9248, 3
  %v9253 = vrot.slane %v9248, 4
  %v9254 = vrot.slane %v9248, 5
  %v9255 = vrot.slane %v9248, 6
  %v9256 = vrot.slane %v9248, 7
  %v9265 = vsub.f32 %v9204, %v9248
  %v9266 = vsub.f32 %v9205, %v9250
  %v9267 = vsub.f32 %v9206, %v9251
  %v9268 = vsub.f32 %v9207, %v9252
  %v9269 = vsub.f32 %v9208, %v9253
  %v9270 = vsub.f32 %v9209, %v9254
  %v9271 = vsub.f32 %v9210, %v9255
  %v9272 = vsub.f32 %v9211, %v9256
  %v9273 = vmul.f32 %v9265, %v9265
  %v9274 = vmul.f32 %v9266, %v9266
  %v9275 = vmul.f32 %v9267, %v9267
  %v9276 = vmul.f32 %v9268, %v9268
  %v9277 = vmul.f32 %v9269, %v9269
  %v9278 = vmul.f32 %v9270, %v9270
  %v9279 = vmul.f32 %v9271, %v9271
  %v9280 = vmul.f32 %v9272, %v9272
  %v9289 = vrot.slane %v9274, 7
  %v9290 = vsel %vm9224, %v9289, %v9273
  %v9291 = vrot.slane %v9275, 6
  %v9292 = vsel %vm9227, %v9291, %v9290
  %v9293 = vrot.slane %v9276, 5
  %v9294 = vsel %vm9230, %v9293, %v9292
  %v9295 = vrot.slane %v9277, 4
  %v9296 = vsel %vm9233, %v9295, %v9294
  %v9297 = vrot.slane %v9278, 3
  %v9298 = vsel %vm9236, %v9297, %v9296
  %v9299 = vrot.slane %v9279, 2
  %v9300 = vsel %vm9239, %v9299, %v9298
  %v9301 = vrot.slane %v9280, 1
  %v9302 = vsel %vm9242, %v9301, %v9300
  %v9304 = vsel %vm454, %v9302, 0.0
  %9305 = vadd.xlane.f32.xlu0 %v9304
  %v9306 = vpop.xlane.xlu0 %9305
  %v9307 = vmul.f32 %v9306, %v551
  %v9308 = vadd.f32 %v9307, 1e-05
  %v9309 = vrsqrt.pop %v9308
  %v9311 = vrot.slane %v9309, 1
  %v9312 = vrot.slane %v9309, 2
  %v9313 = vrot.slane %v9309, 3
  %v9314 = vrot.slane %v9309, 4
  %v9315 = vrot.slane %v9309, 5
  %v9316 = vrot.slane %v9309, 6
  %v9317 = vrot.slane %v9309, 7
  %v9326 = vmul.f32 %v9265, %v9309
  %v9327 = vmul.f32 %v9266, %v9311
  %v9328 = vmul.f32 %v9267, %v9312
  %v9329 = vmul.f32 %v9268, %v9313
  %v9330 = vmul.f32 %v9269, %v9314
  %v9331 = vmul.f32 %v9270, %v9315
  %v9332 = vmul.f32 %v9271, %v9316
  %v9333 = vmul.f32 %v9272, %v9317
  %v9334 = vlaneseq
  %v9335 = vshrl.u32 %v9334, 7
  %v9336 = vsub.s32 0, %v9335
  %v9337 = vrot.slane %v9212, %v9336
  %v9338 = vmul.f32 %v9326, %v9337
  %v9339 = vmul.f32 %v9327, %v9337
  %v9340 = vmul.f32 %v9328, %v9337
  %v9341 = vmul.f32 %v9329, %v9337
  %v9342 = vmul.f32 %v9330, %v9337
  %v9343 = vmul.f32 %v9331, %v9337
  %v9344 = vmul.f32 %v9332, %v9337
  %v9345 = vmul.f32 %v9333, %v9337
  %v9346 = vlaneseq
  %v9347 = vshrl.u32 %v9346, 7
  %v9348 = vsub.s32 0, %v9347
  %v9349 = vrot.slane %v9213, %v9348
  %v9350 = vadd.f32 %v9338, %v9349
  %v9351 = vadd.f32 %v9339, %v9349
  %v9352 = vadd.f32 %v9340, %v9349
  %v9353 = vadd.f32 %v9341, %v9349
  %v9354 = vadd.f32 %v9342, %v9349
  %v9355 = vadd.f32 %v9343, %v9349
  %v9356 = vadd.f32 %v9344, %v9349
  %v9357 = vadd.f32 %v9345, %v9349
  %v9358 = vpack.c.bf16 %v9350, %v9350
  %v9359 = vpack.c.bf16 %v9351, %v9351
  %v9360 = vpack.c.bf16 %v9352, %v9352
  %v9361 = vpack.c.bf16 %v9353, %v9353
  %v9362 = vpack.c.bf16 %v9354, %v9354
  %v9363 = vpack.c.bf16 %v9355, %v9355
  %v9364 = vpack.c.bf16 %v9356, %v9356
  %v9365 = vpack.c.bf16 %v9357, %v9357
  %v9366 = vld [vmem:[%s9] sm:$0xf]
  %v9367 = vld [vmem:[%s9 + $0x4] sm:$0xf]
  %v9368 = vld [vmem:[%s9 + $0x8] sm:$0xf]
  %v9369 = vld [vmem:[%s9 + $0xc] sm:$0xf]
  %v9370 = vlaneseq
  %v9371 = vshrl.u32 %v9370, 7
  %v9372 = vsub.s32 0, %v9371
  %v9373 = vrot.slane %v9214, %v9372
  %v9382 = vunpack.c.l.b16 %v9358
  %v9383 = vunpack.c.l.b16 %v9359
  %v9384 = vunpack.c.l.b16 %v9360
  %v9385 = vunpack.c.l.b16 %v9361
  %v9386 = vunpack.c.l.b16 %v9362
  %v9387 = vunpack.c.l.b16 %v9363
  %v9388 = vunpack.c.l.b16 %v9364
  %v9389 = vunpack.c.l.b16 %v9365
  %v9390 = vrot.slane %v9383, 7
  %v9391 = vsel %vm9224, %v9390, %v9382
  %v9392 = vrot.slane %v9384, 6
  %v9393 = vsel %vm9227, %v9392, %v9391
  %v9394 = vrot.slane %v9385, 5
  %v9395 = vsel %vm9230, %v9394, %v9393
  %v9396 = vrot.slane %v9386, 4
  %v9397 = vsel %vm9233, %v9396, %v9395
  %v9398 = vrot.slane %v9387, 3
  %v9399 = vsel %vm9236, %v9398, %v9397
  %v9400 = vrot.slane %v9388, 2
  %v9401 = vsel %vm9239, %v9400, %v9399
  %v9402 = vrot.slane %v9389, 1
  %v9403 = vsel %vm9242, %v9402, %v9401
  %v9404 = vpack.c.b16 %v9403, %v9403
  %v9409 = vunpack.c.l.b16 %v9366
  %v9410 = vunpack.c.l.b16 %v9367
  %v9411 = vunpack.c.l.b16 %v9368
  %v9412 = vunpack.c.l.b16 %v9369
  %v9413 = vpack.c.b16 %v9410, %v9409
  %v9414 = vpack.c.b16 %v9412, %v9411
  %v9418 = vsel %vm454, %v9404, 0
  %9420 = vmatprep.subr.bf16.mxu0 0
  %9421 = vmatpush1.bf16.msra.mxu0 %v9413
  %9422 = vmatprep.subr.bf16.mxu0 0
  %9423 = vmatpush1.bf16.msra.mxu0 %v9414
  %9424 = vmatprep.subr.bf16.mxu0 0
  %9425 = vmatpush1.bf16.msra.mxu0 0
  %9426 = vmatprep.subr.bf16.mxu0 0
  %9427 = vmatpush1.bf16.msra.mxu0 0
  %9428 = vmatprep.subr.bf16.mxu0 0
  %9429 = vmatpush1.bf16.msra.mxu0 0
  %9430 = vmatprep.subr.bf16.mxu0 0
  %9431 = vmatpush1.bf16.msra.mxu0 0
  %9432 = vmatprep.subr.bf16.mxu0 0
  %9433 = vmatpush1.bf16.msra.mxu0 0
  %9434 = vmatprep.subr.bf16.mxu0 0
  %9435 = vmatpush1.bf16.msra.mxu0 0
  %9436 = vmatprep.subr.bf16.mxu0 0
  %9437 = vmatpush1.bf16.msra.mxu0 0
  %9438 = vmatprep.subr.bf16.mxu0 0
  %9439 = vmatpush1.bf16.msra.mxu0 0
  %9440 = vmatprep.subr.bf16.mxu0 0
  %9441 = vmatpush1.bf16.msra.mxu0 0
  %9442 = vmatprep.subr.bf16.mxu0 0
  %9443 = vmatpush1.bf16.msra.mxu0 0
  %9444 = vmatprep.subr.bf16.mxu0 0
  %9445 = vmatpush1.bf16.msra.mxu0 0
  %9446 = vmatprep.subr.bf16.mxu0 0
  %9447 = vmatpush1.bf16.msra.mxu0 0
  %9448 = vmatprep.subr.bf16.mxu0 0
  %9449 = vmatpush1.bf16.msra.mxu0 0
  %9450 = vmatprep.subr.bf16.mxu0 0
  %9451 = vmatpush1.bf16.msra.mxu0 0
  %9452 = vmatprep.mubr.bf16.mxu0 0
  %9453 = vmatmul.mubr.bf16.gmra.mrb[0].mxu0 %v9418
  %v9454 = vpop.f32.mrb[0].mxu0
  %v9455 = vadd.f32 %v9373, %v9454
  %v9456 = vpop.f32.mrb[0].mxu0
  %v9457 = vpop.f32.mrb[0].mxu0
  %v9458 = vpop.f32.mrb[0].mxu0
  %9459 = vdwg.mxu0
  %9460 = vst [vmem:[%s12] sm:$0xff] %v9455
  // Predicated region
  $region50: #{t2t_vit_forward.1} parent=0 // pred_check
    _
  $region51: #{t2t_vit_forward.1} parent=0 // pred_check_branch
    %9462 = sbr.rel (0) target = $region53
  $region52: #{t2t_vit_forward.1} parent=0 // pred_region
    _
  $region53: #{t2t_vit_forward.1} parent=0 // pred_fallthru
    _
  // Predicated region
  $region54: #{t2t_vit_forward.1} parent=0 // pred_check
    _
  $region55: #{t2t_vit_forward.1} parent=0 // pred_check_branch
    %9464 = sbr.rel (0) target = $region57
  $region56: #{t2t_vit_forward.1} parent=0 // pred_region
    _
  $region57: #{t2t_vit_forward.1} parent=0 // pred_fallthru
    _

</llo_original>
